<compile_context>
chip_gen: v6e
topology: v6e:2x2x1
jax: 0.10.0
libtpu: 0.0.40
codegen_flags: <defaults>
</compile_context>

<pallas_src>
import jax
import jax.numpy as jnp
from jax import lax
from jax.experimental import pallas as pl
from jax.experimental.pallas import tpu as pltpu


H_IN, W_IN, C_IN = 10, 10, 3
KS = 3
H1, W1, C1 = 8, 8, 32        # conv1 output
H2, W2, C2 = 6, 6, 64        # conv2 output
HW2 = H2 * W2                # 36
F_FC1 = C2 * HW2             # 2304
H_FC1 = 128


# ------------------------- fused Pallas kernel -------------------------

def fused_cnn_kernel(p1_ref, w1_ref, b1_ref, w2_ref, b2_ref,
                     wf1_ref, bf1_ref, wf2_ref, bf2_ref,
                     o_ref, a1_ref, a2_ref):
    # p1_ref : (tn*64, 27)   im2col patches of the input, cols (kh, kw, cin)
    # w1_ref : (27, 32)      b1_ref : (1, 32)
    # w2_ref : (288, 64)     rows (kh, kw, cin)          b2_ref : (1, 64)
    # wf1_ref: (2304, 128)   bf16, rows pre-permuted to (h, w, c) order
    # bf1_ref: (1, 128)      wf2_ref: (128, C) f32       bf2_ref: (1, C)
    # o_ref  : (tn, C)
    # a1_ref : VMEM scratch (tn, 8, 8, 32) f32
    # a2_ref : VMEM scratch (tn, 36, 64)  f32
    tn = o_ref.shape[0]      # samples in this batch tile

    # ---- conv1 + ReLU: one im2col matmul (K=27), staged to VMEM ----
    a1 = jnp.dot(p1_ref[...], w1_ref[...], preferred_element_type=jnp.float32)
    a1 = jnp.maximum(a1 + b1_ref[...], 0.0)                     # (tn*64, 32)
    a1_ref[...] = a1.reshape(tn, H1, W1, C1)

    # ---- conv2 + ReLU: 9-tap accumulation; patches are strided ref loads ----
    acc2 = jnp.zeros((tn * HW2, C2), jnp.float32)
    for kh in range(KS):
        for kw in range(KS):
            tap = kh * KS + kw
            patch = a1_ref[:, kh:kh + H2, kw:kw + W2, :].reshape(tn * HW2, C1)
            acc2 = acc2 + jnp.dot(patch,
                                  w2_ref[tap * C1:(tap + 1) * C1, :],
                                  preferred_element_type=jnp.float32)
    a2 = jnp.maximum(acc2 + b2_ref[...], 0.0)                   # (tn*36, 64)
    a2_ref[...] = a2.reshape(tn, HW2, C2)

    # ---- fc1 + ReLU: accumulate over the 36 spatial positions ----
    # (fc1 weight rows were pre-permuted to (h, w, c) order, so PyTorch's NCHW
    #  flatten is absorbed; replaces the old flatten scratch + masked stores.)
    h1 = jnp.zeros((tn, H_FC1), jnp.float32)
    for hw in range(HW2):
        lhs = a2_ref[:, hw, :].astype(jnp.bfloat16)             # (tn, 64)
        rhs = wf1_ref[hw * C2:(hw + 1) * C2, :]                 # (64, 128) bf16
        h1 = h1 + jnp.dot(lhs, rhs, preferred_element_type=jnp.float32)
    h1 = jnp.maximum(h1 + bf1_ref[...], 0.0)

    # ---- fc2 ----
    out = jnp.dot(h1, wf2_ref[...], preferred_element_type=jnp.float32) + bf2_ref[...]
    o_ref[...] = out.astype(o_ref.dtype)


# ------------------------- wrapper -------------------------

def cnn_forward(x_nchw, params, *, batch_tile=8):
    wc1, bc1, wc2, bc2, wf1, bf1, wf2, bf2 = params
    n = x_nchw.shape[0]
    num_classes = wf2.shape[1]
    tn = min(batch_tile, n)
    grid = (pl.cdiv(n, tn),)

    # Trace-time input/weight formatting (tiny one-shot XLA ops):
    x = jnp.transpose(x_nchw, (0, 2, 3, 1))                     # NCHW -> NHWC
    # im2col for conv1: (N*Ho*Wo, KH*KW*Cin), column order (kh, kw, cin).
    # TODO(synk): for large batches move this im2col into the kernel (pass x
    # NHWC directly) to avoid the ~6x patch read amplification over HBM.
    patches = jnp.concatenate(
        [x[:, kh:kh + H1, kw:kw + W1, :]
         for kh in range(KS) for kw in range(KS)],
        axis=-1).reshape(n * H1 * W1, KS * KS * C_IN)
    w1mat = wc1.reshape(KS * KS * C_IN, C1)                     # (27, 32)
    w2mat = wc2.reshape(KS * KS * C1, C2)                       # (288, 64)
    # permute fc1 rows from torch's (C,H,W) flatten order to (H,W,C) order and
    # cast to bf16 (dominant HBM->VMEM traffic; f32 accumulation in-kernel).
    wf1_hwc = wf1.reshape(C2, H2, W2, H_FC1).transpose(1, 2, 0, 3)
    wf1_hwc = wf1_hwc.reshape(F_FC1, H_FC1).astype(jnp.bfloat16)

    return pl.pallas_call(
        fused_cnn_kernel,
        out_shape=jax.ShapeDtypeStruct((n, num_classes), x_nchw.dtype),
        grid=grid,
        in_specs=[
            pl.BlockSpec((tn * H1 * W1, KS * KS * C_IN), lambda i: (i, 0)),
            pl.BlockSpec((KS * KS * C_IN, C1), lambda i: (0, 0)),
            pl.BlockSpec((1, C1), lambda i: (0, 0)),
            pl.BlockSpec((KS * KS * C1, C2), lambda i: (0, 0)),
            pl.BlockSpec((1, C2), lambda i: (0, 0)),
            pl.BlockSpec((F_FC1, H_FC1), lambda i: (0, 0)),
            pl.BlockSpec((1, H_FC1), lambda i: (0, 0)),
            pl.BlockSpec((H_FC1, num_classes), lambda i: (0, 0)),
            pl.BlockSpec((1, num_classes), lambda i: (0, 0)),
        ],
        out_specs=pl.BlockSpec((tn, num_classes), lambda i: (i, 0)),
        scratch_shapes=[
            pltpu.VMEM((tn, H1, W1, C1), jnp.float32),   # staged conv1 output
            pltpu.VMEM((tn, HW2, C2), jnp.float32),      # staged conv2 output
        ],
        compiler_params=pltpu.CompilerParams(
            dimension_semantics=("parallel",)),
    )(patches, w1mat, bc1.reshape(1, C1), w2mat, bc2.reshape(1, C2),
      wf1_hwc, bf1.reshape(1, H_FC1), wf2, bf2.reshape(1, num_classes))


# ------------------------- pure-JAX reference -------------------------

def reference(x_nchw, params):
    wc1, bc1, wc2, bc2, wf1, bf1, wf2, bf2 = params
    x = jnp.transpose(x_nchw, (0, 2, 3, 1))
    dn = ("NHWC", "HWIO", "NHWC")
    y = lax.conv_general_dilated(x, wc1, (1, 1), "VALID",
                                 dimension_numbers=dn) + bc1
    y = jnp.maximum(y, 0.0)
    y = lax.conv_general_dilated(y, wc2, (1, 1), "VALID",
                                 dimension_numbers=dn) + bc2
    y = jnp.maximum(y, 0.0)
    y = jnp.transpose(y, (0, 3, 1, 2)).reshape(y.shape[0], -1)   # torch NCHW flatten
    y = jnp.maximum(y @ wf1 + bf1, 0.0)
    return y @ wf2 + bf2


# ------------------------- main -------------------------

if __name__ == "__main__":
    num_classes = 10
    key = jax.random.PRNGKey(0)
    keys = jax.random.split(key, 9)

    # batch=2, channels=3, spatial=10 (required by fc1 = 64*6*6)
    x = jax.random.normal(keys[0], (2, 3, 10, 10), jnp.float32)

    wc1 = jax.random.normal(keys[1], (3, 3, 3, 32), jnp.float32) * 0.10
    bc1 = jax.random.normal(keys[2], (32,), jnp.float32) * 0.10
    wc2 = jax.random.normal(keys[3], (3, 3, 32, 64), jnp.float32) * 0.05
    bc2 = jax.random.normal(keys[4], (64,), jnp.float32) * 0.10
    wf1 = jax.random.normal(keys[5], (64 * 6 * 6, 128), jnp.float32) * 0.02
    bf1 = jax.random.normal(keys[6], (128,), jnp.float32) * 0.10
    wf2 = jax.random.normal(keys[7], (128, num_classes), jnp.float32) * 0.05
    bf2 = jax.random.normal(keys[8], (num_classes,), jnp.float32) * 0.10
    params = (wc1, bc1, wc2, bc2, wf1, bf1, wf2, bf2)

    fwd = jax.jit(cnn_forward)
    out = jax.block_until_ready(fwd(x, params))
    assert out.shape == (2, num_classes), out.shape

    ref = reference(x, params)
    assert jnp.allclose(out, ref, rtol=1e-2, atol=1e-2), \
        float(jnp.max(jnp.abs(out - ref)))

    print("KERNEL_OK")
</pallas_src>

<mosaic_0001>
module attributes {stable_mosaic.version = 11 : i64} {
  func.func @fused_cnn_kernel(%arg0: i32, %arg1: memref<128x27xf32, #tpu.memory_space<vmem>>, %arg2: memref<27x32xf32, #tpu.memory_space<vmem>>, %arg3: memref<1x32xf32, #tpu.memory_space<vmem>>, %arg4: memref<288x64xf32, #tpu.memory_space<vmem>>, %arg5: memref<1x64xf32, #tpu.memory_space<vmem>>, %arg6: memref<2304x128xbf16, #tpu.memory_space<vmem>>, %arg7: memref<1x128xf32, #tpu.memory_space<vmem>>, %arg8: memref<128x10xf32, #tpu.memory_space<vmem>>, %arg9: memref<1x10xf32, #tpu.memory_space<vmem>>, %arg10: memref<2x10xf32, #tpu.memory_space<vmem>>, %arg11: memref<2x8x8x32xf32, #tpu.memory_space<vmem>>, %arg12: memref<2x36x64xf32, #tpu.memory_space<vmem>>) attributes {dimension_semantics = [#tpu.dimension_semantics<parallel>], iteration_bounds = array<i64: 1>, scalar_prefetch = 0 : i64, scratch_operands = 2 : i64, tpu.core_type = #tpu.core_type<tc>, window_params = [{transform_indices = @transform_0, window_bounds = array<i64: 128, 27>}, {pipeline_mode = #tpu.pipeline_mode<synchronous>, transform_indices = @transform_1, window_bounds = array<i64: 27, 32>}, {pipeline_mode = #tpu.pipeline_mode<synchronous>, transform_indices = @transform_2, window_bounds = array<i64: 1, 32>}, {pipeline_mode = #tpu.pipeline_mode<synchronous>, transform_indices = @transform_3, window_bounds = array<i64: 288, 64>}, {pipeline_mode = #tpu.pipeline_mode<synchronous>, transform_indices = @transform_4, window_bounds = array<i64: 1, 64>}, {pipeline_mode = #tpu.pipeline_mode<synchronous>, transform_indices = @transform_5, window_bounds = array<i64: 2304, 128>}, {pipeline_mode = #tpu.pipeline_mode<synchronous>, transform_indices = @transform_6, window_bounds = array<i64: 1, 128>}, {pipeline_mode = #tpu.pipeline_mode<synchronous>, transform_indices = @transform_7, window_bounds = array<i64: 128, 10>}, {pipeline_mode = #tpu.pipeline_mode<synchronous>, transform_indices = @transform_8, window_bounds = array<i64: 1, 10>}, {transform_indices = @transform_9, window_bounds = array<i64: 2, 10>}]} {
    %c0 = arith.constant 0 : index
    %c0_0 = arith.constant 0 : index
    %0 = vector.load %arg1[%c0, %c0_0] : memref<128x27xf32, #tpu.memory_space<vmem>>, vector<128x27xf32>
    %c0_1 = arith.constant 0 : index
    %c0_2 = arith.constant 0 : index
    %1 = vector.load %arg2[%c0_1, %c0_2] : memref<27x32xf32, #tpu.memory_space<vmem>>, vector<27x32xf32>
    %cst = arith.constant dense<0.000000e+00> : vector<128x32xf32>
    %2 = tpu.matmul %0, %1, %cst {dimension_numbers = #tpu.dot_dimension_numbers<[1], [0], [0], [1], [0, 0, 1, 1], [], []>} : vector<128x27xf32>, vector<27x32xf32>, vector<128x32xf32> -> vector<128x32xf32>
    %c0_3 = arith.constant 0 : index
    %c0_4 = arith.constant 0 : index
    %3 = vector.load %arg3[%c0_3, %c0_4] : memref<1x32xf32, #tpu.memory_space<vmem>>, vector<1x32xf32>
    %4 = vector.broadcast %3 : vector<1x32xf32> to vector<128x32xf32>
    %5 = arith.addf %2, %4 : vector<128x32xf32>
    %cst_5 = arith.constant 0.000000e+00 : f32
    %6 = vector.broadcast %cst_5 : f32 to vector<128x32xf32>
    %7 = arith.maximumf %5, %6 : vector<128x32xf32>
    %8 = vector.shape_cast %7 : vector<128x32xf32> to vector<2x8x8x32xf32>
    %c0_6 = arith.constant 0 : index
    %c0_7 = arith.constant 0 : index
    %c0_8 = arith.constant 0 : index
    %c0_9 = arith.constant 0 : index
    %9 = vector.load %arg11[%c0_6, %c0_7, %c0_8, %c0_9] : memref<2x8x8x32xf32, #tpu.memory_space<vmem>>, vector<2x8x8x32xf32>
    tpu.vector_store %arg11[%c0_6, %c0_7, %c0_8, %c0_9], %8 {strides = array<i32>} : memref<2x8x8x32xf32, #tpu.memory_space<vmem>>, vector<2x8x8x32xf32>,
    %cst_10 = arith.constant 0.000000e+00 : f32
    %10 = vector.broadcast %cst_10 : f32 to vector<72x64xf32>
    %c0_11 = arith.constant 0 : index
    %c0_12 = arith.constant 0 : index
    %c0_13 = arith.constant 0 : index
    %c0_14 = arith.constant 0 : index
    %11 = vector.load %arg11[%c0_11, %c0_12, %c0_13, %c0_14] : memref<2x8x8x32xf32, #tpu.memory_space<vmem>>, vector<2x6x6x32xf32>
    %12 = vector.shape_cast %11 : vector<2x6x6x32xf32> to vector<72x32xf32>
    %c0_15 = arith.constant 0 : index
    %c0_16 = arith.constant 0 : index
    %13 = vector.load %arg4[%c0_15, %c0_16] : memref<288x64xf32, #tpu.memory_space<vmem>>, vector<32x64xf32>
    %cst_17 = arith.constant dense<0.000000e+00> : vector<72x64xf32>
    %14 = tpu.matmul %12, %13, %cst_17 {dimension_numbers = #tpu.dot_dimension_numbers<[1], [0], [0], [1], [0, 0, 1, 1], [], []>} : vector<72x32xf32>, vector<32x64xf32>, vector<72x64xf32> -> vector<72x64xf32>
    %15 = arith.addf %10, %14 : vector<72x64xf32>
    %c0_18 = arith.constant 0 : index
    %c0_19 = arith.constant 0 : index
    %c1 = arith.constant 1 : index
    %c0_20 = arith.constant 0 : index
    %16 = vector.load %arg11[%c0_18, %c0_19, %c1, %c0_20] : memref<2x8x8x32xf32, #tpu.memory_space<vmem>>, vector<2x6x6x32xf32>
    %17 = vector.shape_cast %16 : vector<2x6x6x32xf32> to vector<72x32xf32>
    %c32 = arith.constant 32 : index
    %c0_21 = arith.constant 0 : index
    %18 = vector.load %arg4[%c32, %c0_21] : memref<288x64xf32, #tpu.memory_space<vmem>>, vector<32x64xf32>
    %cst_22 = arith.constant dense<0.000000e+00> : vector<72x64xf32>
    %19 = tpu.matmul %17, %18, %cst_22 {dimension_numbers = #tpu.dot_dimension_numbers<[1], [0], [0], [1], [0, 0, 1, 1], [], []>} : vector<72x32xf32>, vector<32x64xf32>, vector<72x64xf32> -> vector<72x64xf32>
    %20 = arith.addf %15, %19 : vector<72x64xf32>
    %c0_23 = arith.constant 0 : index
    %c0_24 = arith.constant 0 : index
    %c2 = arith.constant 2 : index
    %c0_25 = arith.constant 0 : index
    %21 = vector.load %arg11[%c0_23, %c0_24, %c2, %c0_25] : memref<2x8x8x32xf32, #tpu.memory_space<vmem>>, vector<2x6x6x32xf32>
    %22 = vector.shape_cast %21 : vector<2x6x6x32xf32> to vector<72x32xf32>
    %c64 = arith.constant 64 : index
    %c0_26 = arith.constant 0 : index
    %23 = vector.load %arg4[%c64, %c0_26] : memref<288x64xf32, #tpu.memory_space<vmem>>, vector<32x64xf32>
    %cst_27 = arith.constant dense<0.000000e+00> : vector<72x64xf32>
    %24 = tpu.matmul %22, %23, %cst_27 {dimension_numbers = #tpu.dot_dimension_numbers<[1], [0], [0], [1], [0, 0, 1, 1], [], []>} : vector<72x32xf32>, vector<32x64xf32>, vector<72x64xf32> -> vector<72x64xf32>
    %25 = arith.addf %20, %24 : vector<72x64xf32>
    %c0_28 = arith.constant 0 : index
    %c1_29 = arith.constant 1 : index
    %c0_30 = arith.constant 0 : index
    %c0_31 = arith.constant 0 : index
    %26 = vector.load %arg11[%c0_28, %c1_29, %c0_30, %c0_31] : memref<2x8x8x32xf32, #tpu.memory_space<vmem>>, vector<2x6x6x32xf32>
    %27 = vector.shape_cast %26 : vector<2x6x6x32xf32> to vector<72x32xf32>
    %c96 = arith.constant 96 : index
    %c0_32 = arith.constant 0 : index
    %28 = vector.load %arg4[%c96, %c0_32] : memref<288x64xf32, #tpu.memory_space<vmem>>, vector<32x64xf32>
    %cst_33 = arith.constant dense<0.000000e+00> : vector<72x64xf32>
    %29 = tpu.matmul %27, %28, %cst_33 {dimension_numbers = #tpu.dot_dimension_numbers<[1], [0], [0], [1], [0, 0, 1, 1], [], []>} : vector<72x32xf32>, vector<32x64xf32>, vector<72x64xf32> -> vector<72x64xf32>
    %30 = arith.addf %25, %29 : vector<72x64xf32>
    %c0_34 = arith.constant 0 : index
    %c1_35 = arith.constant 1 : index
    %c1_36 = arith.constant 1 : index
    %c0_37 = arith.constant 0 : index
    %31 = vector.load %arg11[%c0_34, %c1_35, %c1_36, %c0_37] : memref<2x8x8x32xf32, #tpu.memory_space<vmem>>, vector<2x6x6x32xf32>
    %32 = vector.shape_cast %31 : vector<2x6x6x32xf32> to vector<72x32xf32>
    %c128 = arith.constant 128 : index
    %c0_38 = arith.constant 0 : index
    %33 = vector.load %arg4[%c128, %c0_38] : memref<288x64xf32, #tpu.memory_space<vmem>>, vector<32x64xf32>
    %cst_39 = arith.constant dense<0.000000e+00> : vector<72x64xf32>
    %34 = tpu.matmul %32, %33, %cst_39 {dimension_numbers = #tpu.dot_dimension_numbers<[1], [0], [0], [1], [0, 0, 1, 1], [], []>} : vector<72x32xf32>, vector<32x64xf32>, vector<72x64xf32> -> vector<72x64xf32>
    %35 = arith.addf %30, %34 : vector<72x64xf32>
    %c0_40 = arith.constant 0 : index
    %c1_41 = arith.constant 1 : index
    %c2_42 = arith.constant 2 : index
    %c0_43 = arith.constant 0 : index
    %36 = vector.load %arg11[%c0_40, %c1_41, %c2_42, %c0_43] : memref<2x8x8x32xf32, #tpu.memory_space<vmem>>, vector<2x6x6x32xf32>
    %37 = vector.shape_cast %36 : vector<2x6x6x32xf32> to vector<72x32xf32>
    %c160 = arith.constant 160 : index
    %c0_44 = arith.constant 0 : index
    %38 = vector.load %arg4[%c160, %c0_44] : memref<288x64xf32, #tpu.memory_space<vmem>>, vector<32x64xf32>
    %cst_45 = arith.constant dense<0.000000e+00> : vector<72x64xf32>
    %39 = tpu.matmul %37, %38, %cst_45 {dimension_numbers = #tpu.dot_dimension_numbers<[1], [0], [0], [1], [0, 0, 1, 1], [], []>} : vector<72x32xf32>, vector<32x64xf32>, vector<72x64xf32> -> vector<72x64xf32>
    %40 = arith.addf %35, %39 : vector<72x64xf32>
    %c0_46 = arith.constant 0 : index
    %c2_47 = arith.constant 2 : index
    %c0_48 = arith.constant 0 : index
    %c0_49 = arith.constant 0 : index
    %41 = vector.load %arg11[%c0_46, %c2_47, %c0_48, %c0_49] : memref<2x8x8x32xf32, #tpu.memory_space<vmem>>, vector<2x6x6x32xf32>
    %42 = vector.shape_cast %41 : vector<2x6x6x32xf32> to vector<72x32xf32>
    %c192 = arith.constant 192 : index
    %c0_50 = arith.constant 0 : index
    %43 = vector.load %arg4[%c192, %c0_50] : memref<288x64xf32, #tpu.memory_space<vmem>>, vector<32x64xf32>
    %cst_51 = arith.constant dense<0.000000e+00> : vector<72x64xf32>
    %44 = tpu.matmul %42, %43, %cst_51 {dimension_numbers = #tpu.dot_dimension_numbers<[1], [0], [0], [1], [0, 0, 1, 1], [], []>} : vector<72x32xf32>, vector<32x64xf32>, vector<72x64xf32> -> vector<72x64xf32>
    %45 = arith.addf %40, %44 : vector<72x64xf32>
    %c0_52 = arith.constant 0 : index
    %c2_53 = arith.constant 2 : index
    %c1_54 = arith.constant 1 : index
    %c0_55 = arith.constant 0 : index
    %46 = vector.load %arg11[%c0_52, %c2_53, %c1_54, %c0_55] : memref<2x8x8x32xf32, #tpu.memory_space<vmem>>, vector<2x6x6x32xf32>
    %47 = vector.shape_cast %46 : vector<2x6x6x32xf32> to vector<72x32xf32>
    %c224 = arith.constant 224 : index
    %c0_56 = arith.constant 0 : index
    %48 = vector.load %arg4[%c224, %c0_56] : memref<288x64xf32, #tpu.memory_space<vmem>>, vector<32x64xf32>
    %cst_57 = arith.constant dense<0.000000e+00> : vector<72x64xf32>
    %49 = tpu.matmul %47, %48, %cst_57 {dimension_numbers = #tpu.dot_dimension_numbers<[1], [0], [0], [1], [0, 0, 1, 1], [], []>} : vector<72x32xf32>, vector<32x64xf32>, vector<72x64xf32> -> vector<72x64xf32>
    %50 = arith.addf %45, %49 : vector<72x64xf32>
    %c0_58 = arith.constant 0 : index
    %c2_59 = arith.constant 2 : index
    %c2_60 = arith.constant 2 : index
    %c0_61 = arith.constant 0 : index
    %51 = vector.load %arg11[%c0_58, %c2_59, %c2_60, %c0_61] : memref<2x8x8x32xf32, #tpu.memory_space<vmem>>, vector<2x6x6x32xf32>
    %52 = vector.shape_cast %51 : vector<2x6x6x32xf32> to vector<72x32xf32>
    %c256 = arith.constant 256 : index
    %c0_62 = arith.constant 0 : index
    %53 = vector.load %arg4[%c256, %c0_62] : memref<288x64xf32, #tpu.memory_space<vmem>>, vector<32x64xf32>
    %cst_63 = arith.constant dense<0.000000e+00> : vector<72x64xf32>
    %54 = tpu.matmul %52, %53, %cst_63 {dimension_numbers = #tpu.dot_dimension_numbers<[1], [0], [0], [1], [0, 0, 1, 1], [], []>} : vector<72x32xf32>, vector<32x64xf32>, vector<72x64xf32> -> vector<72x64xf32>
    %55 = arith.addf %50, %54 : vector<72x64xf32>
    %c0_64 = arith.constant 0 : index
    %c0_65 = arith.constant 0 : index
    %56 = vector.load %arg5[%c0_64, %c0_65] : memref<1x64xf32, #tpu.memory_space<vmem>>, vector<1x64xf32>
    %57 = vector.broadcast %56 : vector<1x64xf32> to vector<72x64xf32>
    %58 = arith.addf %55, %57 : vector<72x64xf32>
    %cst_66 = arith.constant 0.000000e+00 : f32
    %59 = vector.broadcast %cst_66 : f32 to vector<72x64xf32>
    %60 = arith.maximumf %58, %59 : vector<72x64xf32>
    %61 = vector.shape_cast %60 : vector<72x64xf32> to vector<2x36x64xf32>
    %c0_67 = arith.constant 0 : index
    %c0_68 = arith.constant 0 : index
    %c0_69 = arith.constant 0 : index
    %62 = vector.load %arg12[%c0_67, %c0_68, %c0_69] : memref<2x36x64xf32, #tpu.memory_space<vmem>>, vector<2x36x64xf32>
    tpu.vector_store %arg12[%c0_67, %c0_68, %c0_69], %61 {strides = array<i32>} : memref<2x36x64xf32, #tpu.memory_space<vmem>>, vector<2x36x64xf32>,
    %cst_70 = arith.constant 0.000000e+00 : f32
    %63 = vector.broadcast %cst_70 : f32 to vector<2x128xf32>
    %c0_71 = arith.constant 0 : index
    %c0_72 = arith.constant 0 : index
    %c0_73 = arith.constant 0 : index
    %64 = vector.load %arg12[%c0_71, %c0_72, %c0_73] : memref<2x36x64xf32, #tpu.memory_space<vmem>>, vector<2x1x64xf32>
    %65 = vector.shape_cast %64 : vector<2x1x64xf32> to vector<2x64xf32>
    %66 = arith.truncf %65 : vector<2x64xf32> to vector<2x64xbf16>
    %c0_74 = arith.constant 0 : index
    %c0_75 = arith.constant 0 : index
    %67 = vector.load %arg6[%c0_74, %c0_75] : memref<2304x128xbf16, #tpu.memory_space<vmem>>, vector<64x128xbf16>
    %cst_76 = arith.constant dense<0.000000e+00> : vector<2x128xf32>
    %68 = tpu.matmul %66, %67, %cst_76 {dimension_numbers = #tpu.dot_dimension_numbers<[1], [0], [0], [1], [0, 0, 1, 1], [], []>} : vector<2x64xbf16>, vector<64x128xbf16>, vector<2x128xf32> -> vector<2x128xf32>
    %69 = arith.addf %63, %68 : vector<2x128xf32>
    %c0_77 = arith.constant 0 : index
    %c1_78 = arith.constant 1 : index
    %c0_79 = arith.constant 0 : index
    %70 = vector.load %arg12[%c0_77, %c1_78, %c0_79] : memref<2x36x64xf32, #tpu.memory_space<vmem>>, vector<2x1x64xf32>
    %71 = vector.shape_cast %70 : vector<2x1x64xf32> to vector<2x64xf32>
    %72 = arith.truncf %71 : vector<2x64xf32> to vector<2x64xbf16>
    %c64_80 = arith.constant 64 : index
    %c0_81 = arith.constant 0 : index
    %73 = vector.load %arg6[%c64_80, %c0_81] : memref<2304x128xbf16, #tpu.memory_space<vmem>>, vector<64x128xbf16>
    %cst_82 = arith.constant dense<0.000000e+00> : vector<2x128xf32>
    %74 = tpu.matmul %72, %73, %cst_82 {dimension_numbers = #tpu.dot_dimension_numbers<[1], [0], [0], [1], [0, 0, 1, 1], [], []>} : vector<2x64xbf16>, vector<64x128xbf16>, vector<2x128xf32> -> vector<2x128xf32>
    %75 = arith.addf %69, %74 : vector<2x128xf32>
    %c0_83 = arith.constant 0 : index
    %c2_84 = arith.constant 2 : index
    %c0_85 = arith.constant 0 : index
    %76 = vector.load %arg12[%c0_83, %c2_84, %c0_85] : memref<2x36x64xf32, #tpu.memory_space<vmem>>, vector<2x1x64xf32>
    %77 = vector.shape_cast %76 : vector<2x1x64xf32> to vector<2x64xf32>
    %78 = arith.truncf %77 : vector<2x64xf32> to vector<2x64xbf16>
    %c128_86 = arith.constant 128 : index
    %c0_87 = arith.constant 0 : index
    %79 = vector.load %arg6[%c128_86, %c0_87] : memref<2304x128xbf16, #tpu.memory_space<vmem>>, vector<64x128xbf16>
    %cst_88 = arith.constant dense<0.000000e+00> : vector<2x128xf32>
    %80 = tpu.matmul %78, %79, %cst_88 {dimension_numbers = #tpu.dot_dimension_numbers<[1], [0], [0], [1], [0, 0, 1, 1], [], []>} : vector<2x64xbf16>, vector<64x128xbf16>, vector<2x128xf32> -> vector<2x128xf32>
    %81 = arith.addf %75, %80 : vector<2x128xf32>
    %c0_89 = arith.constant 0 : index
    %c3 = arith.constant 3 : index
    %c0_90 = arith.constant 0 : index
    %82 = vector.load %arg12[%c0_89, %c3, %c0_90] : memref<2x36x64xf32, #tpu.memory_space<vmem>>, vector<2x1x64xf32>
    %83 = vector.shape_cast %82 : vector<2x1x64xf32> to vector<2x64xf32>
    %84 = arith.truncf %83 : vector<2x64xf32> to vector<2x64xbf16>
    %c192_91 = arith.constant 192 : index
    %c0_92 = arith.constant 0 : index
    %85 = vector.load %arg6[%c192_91, %c0_92] : memref<2304x128xbf16, #tpu.memory_space<vmem>>, vector<64x128xbf16>
    %cst_93 = arith.constant dense<0.000000e+00> : vector<2x128xf32>
    %86 = tpu.matmul %84, %85, %cst_93 {dimension_numbers = #tpu.dot_dimension_numbers<[1], [0], [0], [1], [0, 0, 1, 1], [], []>} : vector<2x64xbf16>, vector<64x128xbf16>, vector<2x128xf32> -> vector<2x128xf32>
    %87 = arith.addf %81, %86 : vector<2x128xf32>
    %c0_94 = arith.constant 0 : index
    %c4 = arith.constant 4 : index
    %c0_95 = arith.constant 0 : index
    %88 = vector.load %arg12[%c0_94, %c4, %c0_95] : memref<2x36x64xf32, #tpu.memory_space<vmem>>, vector<2x1x64xf32>
    %89 = vector.shape_cast %88 : vector<2x1x64xf32> to vector<2x64xf32>
    %90 = arith.truncf %89 : vector<2x64xf32> to vector<2x64xbf16>
    %c256_96 = arith.constant 256 : index
    %c0_97 = arith.constant 0 : index
    %91 = vector.load %arg6[%c256_96, %c0_97] : memref<2304x128xbf16, #tpu.memory_space<vmem>>, vector<64x128xbf16>
    %cst_98 = arith.constant dense<0.000000e+00> : vector<2x128xf32>
    %92 = tpu.matmul %90, %91, %cst_98 {dimension_numbers = #tpu.dot_dimension_numbers<[1], [0], [0], [1], [0, 0, 1, 1], [], []>} : vector<2x64xbf16>, vector<64x128xbf16>, vector<2x128xf32> -> vector<2x128xf32>
    %93 = arith.addf %87, %92 : vector<2x128xf32>
    %c0_99 = arith.constant 0 : index
    %c5 = arith.constant 5 : index
    %c0_100 = arith.constant 0 : index
    %94 = vector.load %arg12[%c0_99, %c5, %c0_100] : memref<2x36x64xf32, #tpu.memory_space<vmem>>, vector<2x1x64xf32>
    %95 = vector.shape_cast %94 : vector<2x1x64xf32> to vector<2x64xf32>
    %96 = arith.truncf %95 : vector<2x64xf32> to vector<2x64xbf16>
    %c320 = arith.constant 320 : index
    %c0_101 = arith.constant 0 : index
    %97 = vector.load %arg6[%c320, %c0_101] : memref<2304x128xbf16, #tpu.memory_space<vmem>>, vector<64x128xbf16>
    %cst_102 = arith.constant dense<0.000000e+00> : vector<2x128xf32>
    %98 = tpu.matmul %96, %97, %cst_102 {dimension_numbers = #tpu.dot_dimension_numbers<[1], [0], [0], [1], [0, 0, 1, 1], [], []>} : vector<2x64xbf16>, vector<64x128xbf16>, vector<2x128xf32> -> vector<2x128xf32>
    %99 = arith.addf %93, %98 : vector<2x128xf32>
    %c0_103 = arith.constant 0 : index
    %c6 = arith.constant 6 : index
    %c0_104 = arith.constant 0 : index
    %100 = vector.load %arg12[%c0_103, %c6, %c0_104] : memref<2x36x64xf32, #tpu.memory_space<vmem>>, vector<2x1x64xf32>
    %101 = vector.shape_cast %100 : vector<2x1x64xf32> to vector<2x64xf32>
    %102 = arith.truncf %101 : vector<2x64xf32> to vector<2x64xbf16>
    %c384 = arith.constant 384 : index
    %c0_105 = arith.constant 0 : index
    %103 = vector.load %arg6[%c384, %c0_105] : memref<2304x128xbf16, #tpu.memory_space<vmem>>, vector<64x128xbf16>
    %cst_106 = arith.constant dense<0.000000e+00> : vector<2x128xf32>
    %104 = tpu.matmul %102, %103, %cst_106 {dimension_numbers = #tpu.dot_dimension_numbers<[1], [0], [0], [1], [0, 0, 1, 1], [], []>} : vector<2x64xbf16>, vector<64x128xbf16>, vector<2x128xf32> -> vector<2x128xf32>
    %105 = arith.addf %99, %104 : vector<2x128xf32>
    %c0_107 = arith.constant 0 : index
    %c7 = arith.constant 7 : index
    %c0_108 = arith.constant 0 : index
    %106 = vector.load %arg12[%c0_107, %c7, %c0_108] : memref<2x36x64xf32, #tpu.memory_space<vmem>>, vector<2x1x64xf32>
    %107 = vector.shape_cast %106 : vector<2x1x64xf32> to vector<2x64xf32>
    %108 = arith.truncf %107 : vector<2x64xf32> to vector<2x64xbf16>
    %c448 = arith.constant 448 : index
    %c0_109 = arith.constant 0 : index
    %109 = vector.load %arg6[%c448, %c0_109] : memref<2304x128xbf16, #tpu.memory_space<vmem>>, vector<64x128xbf16>
    %cst_110 = arith.constant dense<0.000000e+00> : vector<2x128xf32>
    %110 = tpu.matmul %108, %109, %cst_110 {dimension_numbers = #tpu.dot_dimension_numbers<[1], [0], [0], [1], [0, 0, 1, 1], [], []>} : vector<2x64xbf16>, vector<64x128xbf16>, vector<2x128xf32> -> vector<2x128xf32>
    %111 = arith.addf %105, %110 : vector<2x128xf32>
    %c0_111 = arith.constant 0 : index
    %c8 = arith.constant 8 : index
    %c0_112 = arith.constant 0 : index
    %112 = vector.load %arg12[%c0_111, %c8, %c0_112] : memref<2x36x64xf32, #tpu.memory_space<vmem>>, vector<2x1x64xf32>
    %113 = vector.shape_cast %112 : vector<2x1x64xf32> to vector<2x64xf32>
    %114 = arith.truncf %113 : vector<2x64xf32> to vector<2x64xbf16>
    %c512 = arith.constant 512 : index
    %c0_113 = arith.constant 0 : index
    %115 = vector.load %arg6[%c512, %c0_113] : memref<2304x128xbf16, #tpu.memory_space<vmem>>, vector<64x128xbf16>
    %cst_114 = arith.constant dense<0.000000e+00> : vector<2x128xf32>
    %116 = tpu.matmul %114, %115, %cst_114 {dimension_numbers = #tpu.dot_dimension_numbers<[1], [0], [0], [1], [0, 0, 1, 1], [], []>} : vector<2x64xbf16>, vector<64x128xbf16>, vector<2x128xf32> -> vector<2x128xf32>
    %117 = arith.addf %111, %116 : vector<2x128xf32>
    %c0_115 = arith.constant 0 : index
    %c9 = arith.constant 9 : index
    %c0_116 = arith.constant 0 : index
    %118 = vector.load %arg12[%c0_115, %c9, %c0_116] : memref<2x36x64xf32, #tpu.memory_space<vmem>>, vector<2x1x64xf32>
    %119 = vector.shape_cast %118 : vector<2x1x64xf32> to vector<2x64xf32>
    %120 = arith.truncf %119 : vector<2x64xf32> to vector<2x64xbf16>
    %c576 = arith.constant 576 : index
    %c0_117 = arith.constant 0 : index
    %121 = vector.load %arg6[%c576, %c0_117] : memref<2304x128xbf16, #tpu.memory_space<vmem>>, vector<64x128xbf16>
    %cst_118 = arith.constant dense<0.000000e+00> : vector<2x128xf32>
    %122 = tpu.matmul %120, %121, %cst_118 {dimension_numbers = #tpu.dot_dimension_numbers<[1], [0], [0], [1], [0, 0, 1, 1], [], []>} : vector<2x64xbf16>, vector<64x128xbf16>, vector<2x128xf32> -> vector<2x128xf32>
    %123 = arith.addf %117, %122 : vector<2x128xf32>
    %c0_119 = arith.constant 0 : index
    %c10 = arith.constant 10 : index
    %c0_120 = arith.constant 0 : index
    %124 = vector.load %arg12[%c0_119, %c10, %c0_120] : memref<2x36x64xf32, #tpu.memory_space<vmem>>, vector<2x1x64xf32>
    %125 = vector.shape_cast %124 : vector<2x1x64xf32> to vector<2x64xf32>
    %126 = arith.truncf %125 : vector<2x64xf32> to vector<2x64xbf16>
    %c640 = arith.constant 640 : index
    %c0_121 = arith.constant 0 : index
    %127 = vector.load %arg6[%c640, %c0_121] : memref<2304x128xbf16, #tpu.memory_space<vmem>>, vector<64x128xbf16>
    %cst_122 = arith.constant dense<0.000000e+00> : vector<2x128xf32>
    %128 = tpu.matmul %126, %127, %cst_122 {dimension_numbers = #tpu.dot_dimension_numbers<[1], [0], [0], [1], [0, 0, 1, 1], [], []>} : vector<2x64xbf16>, vector<64x128xbf16>, vector<2x128xf32> -> vector<2x128xf32>
    %129 = arith.addf %123, %128 : vector<2x128xf32>
    %c0_123 = arith.constant 0 : index
    %c11 = arith.constant 11 : index
    %c0_124 = arith.constant 0 : index
    %130 = vector.load %arg12[%c0_123, %c11, %c0_124] : memref<2x36x64xf32, #tpu.memory_space<vmem>>, vector<2x1x64xf32>
    %131 = vector.shape_cast %130 : vector<2x1x64xf32> to vector<2x64xf32>
    %132 = arith.truncf %131 : vector<2x64xf32> to vector<2x64xbf16>
    %c704 = arith.constant 704 : index
    %c0_125 = arith.constant 0 : index
    %133 = vector.load %arg6[%c704, %c0_125] : memref<2304x128xbf16, #tpu.memory_space<vmem>>, vector<64x128xbf16>
    %cst_126 = arith.constant dense<0.000000e+00> : vector<2x128xf32>
    %134 = tpu.matmul %132, %133, %cst_126 {dimension_numbers = #tpu.dot_dimension_numbers<[1], [0], [0], [1], [0, 0, 1, 1], [], []>} : vector<2x64xbf16>, vector<64x128xbf16>, vector<2x128xf32> -> vector<2x128xf32>
    %135 = arith.addf %129, %134 : vector<2x128xf32>
    %c0_127 = arith.constant 0 : index
    %c12 = arith.constant 12 : index
    %c0_128 = arith.constant 0 : index
    %136 = vector.load %arg12[%c0_127, %c12, %c0_128] : memref<2x36x64xf32, #tpu.memory_space<vmem>>, vector<2x1x64xf32>
    %137 = vector.shape_cast %136 : vector<2x1x64xf32> to vector<2x64xf32>
    %138 = arith.truncf %137 : vector<2x64xf32> to vector<2x64xbf16>
    %c768 = arith.constant 768 : index
    %c0_129 = arith.constant 0 : index
    %139 = vector.load %arg6[%c768, %c0_129] : memref<2304x128xbf16, #tpu.memory_space<vmem>>, vector<64x128xbf16>
    %cst_130 = arith.constant dense<0.000000e+00> : vector<2x128xf32>
    %140 = tpu.matmul %138, %139, %cst_130 {dimension_numbers = #tpu.dot_dimension_numbers<[1], [0], [0], [1], [0, 0, 1, 1], [], []>} : vector<2x64xbf16>, vector<64x128xbf16>, vector<2x128xf32> -> vector<2x128xf32>
    %141 = arith.addf %135, %140 : vector<2x128xf32>
    %c0_131 = arith.constant 0 : index
    %c13 = arith.constant 13 : index
    %c0_132 = arith.constant 0 : index
    %142 = vector.load %arg12[%c0_131, %c13, %c0_132] : memref<2x36x64xf32, #tpu.memory_space<vmem>>, vector<2x1x64xf32>
    %143 = vector.shape_cast %142 : vector<2x1x64xf32> to vector<2x64xf32>
    %144 = arith.truncf %143 : vector<2x64xf32> to vector<2x64xbf16>
    %c832 = arith.constant 832 : index
    %c0_133 = arith.constant 0 : index
    %145 = vector.load %arg6[%c832, %c0_133] : memref<2304x128xbf16, #tpu.memory_space<vmem>>, vector<64x128xbf16>
    %cst_134 = arith.constant dense<0.000000e+00> : vector<2x128xf32>
    %146 = tpu.matmul %144, %145, %cst_134 {dimension_numbers = #tpu.dot_dimension_numbers<[1], [0], [0], [1], [0, 0, 1, 1], [], []>} : vector<2x64xbf16>, vector<64x128xbf16>, vector<2x128xf32> -> vector<2x128xf32>
    %147 = arith.addf %141, %146 : vector<2x128xf32>
    %c0_135 = arith.constant 0 : index
    %c14 = arith.constant 14 : index
    %c0_136 = arith.constant 0 : index
    %148 = vector.load %arg12[%c0_135, %c14, %c0_136] : memref<2x36x64xf32, #tpu.memory_space<vmem>>, vector<2x1x64xf32>
    %149 = vector.shape_cast %148 : vector<2x1x64xf32> to vector<2x64xf32>
    %150 = arith.truncf %149 : vector<2x64xf32> to vector<2x64xbf16>
    %c896 = arith.constant 896 : index
    %c0_137 = arith.constant 0 : index
    %151 = vector.load %arg6[%c896, %c0_137] : memref<2304x128xbf16, #tpu.memory_space<vmem>>, vector<64x128xbf16>
    %cst_138 = arith.constant dense<0.000000e+00> : vector<2x128xf32>
    %152 = tpu.matmul %150, %151, %cst_138 {dimension_numbers = #tpu.dot_dimension_numbers<[1], [0], [0], [1], [0, 0, 1, 1], [], []>} : vector<2x64xbf16>, vector<64x128xbf16>, vector<2x128xf32> -> vector<2x128xf32>
    %153 = arith.addf %147, %152 : vector<2x128xf32>
    %c0_139 = arith.constant 0 : index
    %c15 = arith.constant 15 : index
    %c0_140 = arith.constant 0 : index
    %154 = vector.load %arg12[%c0_139, %c15, %c0_140] : memref<2x36x64xf32, #tpu.memory_space<vmem>>, vector<2x1x64xf32>
    %155 = vector.shape_cast %154 : vector<2x1x64xf32> to vector<2x64xf32>
    %156 = arith.truncf %155 : vector<2x64xf32> to vector<2x64xbf16>
    %c960 = arith.constant 960 : index
    %c0_141 = arith.constant 0 : index
    %157 = vector.load %arg6[%c960, %c0_141] : memref<2304x128xbf16, #tpu.memory_space<vmem>>, vector<64x128xbf16>
    %cst_142 = arith.constant dense<0.000000e+00> : vector<2x128xf32>
    %158 = tpu.matmul %156, %157, %cst_142 {dimension_numbers = #tpu.dot_dimension_numbers<[1], [0], [0], [1], [0, 0, 1, 1], [], []>} : vector<2x64xbf16>, vector<64x128xbf16>, vector<2x128xf32> -> vector<2x128xf32>
    %159 = arith.addf %153, %158 : vector<2x128xf32>
    %c0_143 = arith.constant 0 : index
    %c16 = arith.constant 16 : index
    %c0_144 = arith.constant 0 : index
    %160 = vector.load %arg12[%c0_143, %c16, %c0_144] : memref<2x36x64xf32, #tpu.memory_space<vmem>>, vector<2x1x64xf32>
    %161 = vector.shape_cast %160 : vector<2x1x64xf32> to vector<2x64xf32>
    %162 = arith.truncf %161 : vector<2x64xf32> to vector<2x64xbf16>
    %c1024 = arith.constant 1024 : index
    %c0_145 = arith.constant 0 : index
    %163 = vector.load %arg6[%c1024, %c0_145] : memref<2304x128xbf16, #tpu.memory_space<vmem>>, vector<64x128xbf16>
    %cst_146 = arith.constant dense<0.000000e+00> : vector<2x128xf32>
    %164 = tpu.matmul %162, %163, %cst_146 {dimension_numbers = #tpu.dot_dimension_numbers<[1], [0], [0], [1], [0, 0, 1, 1], [], []>} : vector<2x64xbf16>, vector<64x128xbf16>, vector<2x128xf32> -> vector<2x128xf32>
    %165 = arith.addf %159, %164 : vector<2x128xf32>
    %c0_147 = arith.constant 0 : index
    %c17 = arith.constant 17 : index
    %c0_148 = arith.constant 0 : index
    %166 = vector.load %arg12[%c0_147, %c17, %c0_148] : memref<2x36x64xf32, #tpu.memory_space<vmem>>, vector<2x1x64xf32>
    %167 = vector.shape_cast %166 : vector<2x1x64xf32> to vector<2x64xf32>
    %168 = arith.truncf %167 : vector<2x64xf32> to vector<2x64xbf16>
    %c1088 = arith.constant 1088 : index
    %c0_149 = arith.constant 0 : index
    %169 = vector.load %arg6[%c1088, %c0_149] : memref<2304x128xbf16, #tpu.memory_space<vmem>>, vector<64x128xbf16>
    %cst_150 = arith.constant dense<0.000000e+00> : vector<2x128xf32>
    %170 = tpu.matmul %168, %169, %cst_150 {dimension_numbers = #tpu.dot_dimension_numbers<[1], [0], [0], [1], [0, 0, 1, 1], [], []>} : vector<2x64xbf16>, vector<64x128xbf16>, vector<2x128xf32> -> vector<2x128xf32>
    %171 = arith.addf %165, %170 : vector<2x128xf32>
    %c0_151 = arith.constant 0 : index
    %c18 = arith.constant 18 : index
    %c0_152 = arith.constant 0 : index
    %172 = vector.load %arg12[%c0_151, %c18, %c0_152] : memref<2x36x64xf32, #tpu.memory_space<vmem>>, vector<2x1x64xf32>
    %173 = vector.shape_cast %172 : vector<2x1x64xf32> to vector<2x64xf32>
    %174 = arith.truncf %173 : vector<2x64xf32> to vector<2x64xbf16>
    %c1152 = arith.constant 1152 : index
    %c0_153 = arith.constant 0 : index
    %175 = vector.load %arg6[%c1152, %c0_153] : memref<2304x128xbf16, #tpu.memory_space<vmem>>, vector<64x128xbf16>
    %cst_154 = arith.constant dense<0.000000e+00> : vector<2x128xf32>
    %176 = tpu.matmul %174, %175, %cst_154 {dimension_numbers = #tpu.dot_dimension_numbers<[1], [0], [0], [1], [0, 0, 1, 1], [], []>} : vector<2x64xbf16>, vector<64x128xbf16>, vector<2x128xf32> -> vector<2x128xf32>
    %177 = arith.addf %171, %176 : vector<2x128xf32>
    %c0_155 = arith.constant 0 : index
    %c19 = arith.constant 19 : index
    %c0_156 = arith.constant 0 : index
    %178 = vector.load %arg12[%c0_155, %c19, %c0_156] : memref<2x36x64xf32, #tpu.memory_space<vmem>>, vector<2x1x64xf32>
    %179 = vector.shape_cast %178 : vector<2x1x64xf32> to vector<2x64xf32>
    %180 = arith.truncf %179 : vector<2x64xf32> to vector<2x64xbf16>
    %c1216 = arith.constant 1216 : index
    %c0_157 = arith.constant 0 : index
    %181 = vector.load %arg6[%c1216, %c0_157] : memref<2304x128xbf16, #tpu.memory_space<vmem>>, vector<64x128xbf16>
    %cst_158 = arith.constant dense<0.000000e+00> : vector<2x128xf32>
    %182 = tpu.matmul %180, %181, %cst_158 {dimension_numbers = #tpu.dot_dimension_numbers<[1], [0], [0], [1], [0, 0, 1, 1], [], []>} : vector<2x64xbf16>, vector<64x128xbf16>, vector<2x128xf32> -> vector<2x128xf32>
    %183 = arith.addf %177, %182 : vector<2x128xf32>
    %c0_159 = arith.constant 0 : index
    %c20 = arith.constant 20 : index
    %c0_160 = arith.constant 0 : index
    %184 = vector.load %arg12[%c0_159, %c20, %c0_160] : memref<2x36x64xf32, #tpu.memory_space<vmem>>, vector<2x1x64xf32>
    %185 = vector.shape_cast %184 : vector<2x1x64xf32> to vector<2x64xf32>
    %186 = arith.truncf %185 : vector<2x64xf32> to vector<2x64xbf16>
    %c1280 = arith.constant 1280 : index
    %c0_161 = arith.constant 0 : index
    %187 = vector.load %arg6[%c1280, %c0_161] : memref<2304x128xbf16, #tpu.memory_space<vmem>>, vector<64x128xbf16>
    %cst_162 = arith.constant dense<0.000000e+00> : vector<2x128xf32>
    %188 = tpu.matmul %186, %187, %cst_162 {dimension_numbers = #tpu.dot_dimension_numbers<[1], [0], [0], [1], [0, 0, 1, 1], [], []>} : vector<2x64xbf16>, vector<64x128xbf16>, vector<2x128xf32> -> vector<2x128xf32>
    %189 = arith.addf %183, %188 : vector<2x128xf32>
    %c0_163 = arith.constant 0 : index
    %c21 = arith.constant 21 : index
    %c0_164 = arith.constant 0 : index
    %190 = vector.load %arg12[%c0_163, %c21, %c0_164] : memref<2x36x64xf32, #tpu.memory_space<vmem>>, vector<2x1x64xf32>
    %191 = vector.shape_cast %190 : vector<2x1x64xf32> to vector<2x64xf32>
    %192 = arith.truncf %191 : vector<2x64xf32> to vector<2x64xbf16>
    %c1344 = arith.constant 1344 : index
    %c0_165 = arith.constant 0 : index
    %193 = vector.load %arg6[%c1344, %c0_165] : memref<2304x128xbf16, #tpu.memory_space<vmem>>, vector<64x128xbf16>
    %cst_166 = arith.constant dense<0.000000e+00> : vector<2x128xf32>
    %194 = tpu.matmul %192, %193, %cst_166 {dimension_numbers = #tpu.dot_dimension_numbers<[1], [0], [0], [1], [0, 0, 1, 1], [], []>} : vector<2x64xbf16>, vector<64x128xbf16>, vector<2x128xf32> -> vector<2x128xf32>
    %195 = arith.addf %189, %194 : vector<2x128xf32>
    %c0_167 = arith.constant 0 : index
    %c22 = arith.constant 22 : index
    %c0_168 = arith.constant 0 : index
    %196 = vector.load %arg12[%c0_167, %c22, %c0_168] : memref<2x36x64xf32, #tpu.memory_space<vmem>>, vector<2x1x64xf32>
    %197 = vector.shape_cast %196 : vector<2x1x64xf32> to vector<2x64xf32>
    %198 = arith.truncf %197 : vector<2x64xf32> to vector<2x64xbf16>
    %c1408 = arith.constant 1408 : index
    %c0_169 = arith.constant 0 : index
    %199 = vector.load %arg6[%c1408, %c0_169] : memref<2304x128xbf16, #tpu.memory_space<vmem>>, vector<64x128xbf16>
    %cst_170 = arith.constant dense<0.000000e+00> : vector<2x128xf32>
    %200 = tpu.matmul %198, %199, %cst_170 {dimension_numbers = #tpu.dot_dimension_numbers<[1], [0], [0], [1], [0, 0, 1, 1], [], []>} : vector<2x64xbf16>, vector<64x128xbf16>, vector<2x128xf32> -> vector<2x128xf32>
    %201 = arith.addf %195, %200 : vector<2x128xf32>
    %c0_171 = arith.constant 0 : index
    %c23 = arith.constant 23 : index
    %c0_172 = arith.constant 0 : index
    %202 = vector.load %arg12[%c0_171, %c23, %c0_172] : memref<2x36x64xf32, #tpu.memory_space<vmem>>, vector<2x1x64xf32>
    %203 = vector.shape_cast %202 : vector<2x1x64xf32> to vector<2x64xf32>
    %204 = arith.truncf %203 : vector<2x64xf32> to vector<2x64xbf16>
    %c1472 = arith.constant 1472 : index
    %c0_173 = arith.constant 0 : index
    %205 = vector.load %arg6[%c1472, %c0_173] : memref<2304x128xbf16, #tpu.memory_space<vmem>>, vector<64x128xbf16>
    %cst_174 = arith.constant dense<0.000000e+00> : vector<2x128xf32>
    %206 = tpu.matmul %204, %205, %cst_174 {dimension_numbers = #tpu.dot_dimension_numbers<[1], [0], [0], [1], [0, 0, 1, 1], [], []>} : vector<2x64xbf16>, vector<64x128xbf16>, vector<2x128xf32> -> vector<2x128xf32>
    %207 = arith.addf %201, %206 : vector<2x128xf32>
    %c0_175 = arith.constant 0 : index
    %c24 = arith.constant 24 : index
    %c0_176 = arith.constant 0 : index
    %208 = vector.load %arg12[%c0_175, %c24, %c0_176] : memref<2x36x64xf32, #tpu.memory_space<vmem>>, vector<2x1x64xf32>
    %209 = vector.shape_cast %208 : vector<2x1x64xf32> to vector<2x64xf32>
    %210 = arith.truncf %209 : vector<2x64xf32> to vector<2x64xbf16>
    %c1536 = arith.constant 1536 : index
    %c0_177 = arith.constant 0 : index
    %211 = vector.load %arg6[%c1536, %c0_177] : memref<2304x128xbf16, #tpu.memory_space<vmem>>, vector<64x128xbf16>
    %cst_178 = arith.constant dense<0.000000e+00> : vector<2x128xf32>
    %212 = tpu.matmul %210, %211, %cst_178 {dimension_numbers = #tpu.dot_dimension_numbers<[1], [0], [0], [1], [0, 0, 1, 1], [], []>} : vector<2x64xbf16>, vector<64x128xbf16>, vector<2x128xf32> -> vector<2x128xf32>
    %213 = arith.addf %207, %212 : vector<2x128xf32>
    %c0_179 = arith.constant 0 : index
    %c25 = arith.constant 25 : index
    %c0_180 = arith.constant 0 : index
    %214 = vector.load %arg12[%c0_179, %c25, %c0_180] : memref<2x36x64xf32, #tpu.memory_space<vmem>>, vector<2x1x64xf32>
    %215 = vector.shape_cast %214 : vector<2x1x64xf32> to vector<2x64xf32>
    %216 = arith.truncf %215 : vector<2x64xf32> to vector<2x64xbf16>
    %c1600 = arith.constant 1600 : index
    %c0_181 = arith.constant 0 : index
    %217 = vector.load %arg6[%c1600, %c0_181] : memref<2304x128xbf16, #tpu.memory_space<vmem>>, vector<64x128xbf16>
    %cst_182 = arith.constant dense<0.000000e+00> : vector<2x128xf32>
    %218 = tpu.matmul %216, %217, %cst_182 {dimension_numbers = #tpu.dot_dimension_numbers<[1], [0], [0], [1], [0, 0, 1, 1], [], []>} : vector<2x64xbf16>, vector<64x128xbf16>, vector<2x128xf32> -> vector<2x128xf32>
    %219 = arith.addf %213, %218 : vector<2x128xf32>
    %c0_183 = arith.constant 0 : index
    %c26 = arith.constant 26 : index
    %c0_184 = arith.constant 0 : index
    %220 = vector.load %arg12[%c0_183, %c26, %c0_184] : memref<2x36x64xf32, #tpu.memory_space<vmem>>, vector<2x1x64xf32>
    %221 = vector.shape_cast %220 : vector<2x1x64xf32> to vector<2x64xf32>
    %222 = arith.truncf %221 : vector<2x64xf32> to vector<2x64xbf16>
    %c1664 = arith.constant 1664 : index
    %c0_185 = arith.constant 0 : index
    %223 = vector.load %arg6[%c1664, %c0_185] : memref<2304x128xbf16, #tpu.memory_space<vmem>>, vector<64x128xbf16>
    %cst_186 = arith.constant dense<0.000000e+00> : vector<2x128xf32>
    %224 = tpu.matmul %222, %223, %cst_186 {dimension_numbers = #tpu.dot_dimension_numbers<[1], [0], [0], [1], [0, 0, 1, 1], [], []>} : vector<2x64xbf16>, vector<64x128xbf16>, vector<2x128xf32> -> vector<2x128xf32>
    %225 = arith.addf %219, %224 : vector<2x128xf32>
    %c0_187 = arith.constant 0 : index
    %c27 = arith.constant 27 : index
    %c0_188 = arith.constant 0 : index
    %226 = vector.load %arg12[%c0_187, %c27, %c0_188] : memref<2x36x64xf32, #tpu.memory_space<vmem>>, vector<2x1x64xf32>
    %227 = vector.shape_cast %226 : vector<2x1x64xf32> to vector<2x64xf32>
    %228 = arith.truncf %227 : vector<2x64xf32> to vector<2x64xbf16>
    %c1728 = arith.constant 1728 : index
    %c0_189 = arith.constant 0 : index
    %229 = vector.load %arg6[%c1728, %c0_189] : memref<2304x128xbf16, #tpu.memory_space<vmem>>, vector<64x128xbf16>
    %cst_190 = arith.constant dense<0.000000e+00> : vector<2x128xf32>
    %230 = tpu.matmul %228, %229, %cst_190 {dimension_numbers = #tpu.dot_dimension_numbers<[1], [0], [0], [1], [0, 0, 1, 1], [], []>} : vector<2x64xbf16>, vector<64x128xbf16>, vector<2x128xf32> -> vector<2x128xf32>
    %231 = arith.addf %225, %230 : vector<2x128xf32>
    %c0_191 = arith.constant 0 : index
    %c28 = arith.constant 28 : index
    %c0_192 = arith.constant 0 : index
    %232 = vector.load %arg12[%c0_191, %c28, %c0_192] : memref<2x36x64xf32, #tpu.memory_space<vmem>>, vector<2x1x64xf32>
    %233 = vector.shape_cast %232 : vector<2x1x64xf32> to vector<2x64xf32>
    %234 = arith.truncf %233 : vector<2x64xf32> to vector<2x64xbf16>
    %c1792 = arith.constant 1792 : index
    %c0_193 = arith.constant 0 : index
    %235 = vector.load %arg6[%c1792, %c0_193] : memref<2304x128xbf16, #tpu.memory_space<vmem>>, vector<64x128xbf16>
    %cst_194 = arith.constant dense<0.000000e+00> : vector<2x128xf32>
    %236 = tpu.matmul %234, %235, %cst_194 {dimension_numbers = #tpu.dot_dimension_numbers<[1], [0], [0], [1], [0, 0, 1, 1], [], []>} : vector<2x64xbf16>, vector<64x128xbf16>, vector<2x128xf32> -> vector<2x128xf32>
    %237 = arith.addf %231, %236 : vector<2x128xf32>
    %c0_195 = arith.constant 0 : index
    %c29 = arith.constant 29 : index
    %c0_196 = arith.constant 0 : index
    %238 = vector.load %arg12[%c0_195, %c29, %c0_196] : memref<2x36x64xf32, #tpu.memory_space<vmem>>, vector<2x1x64xf32>
    %239 = vector.shape_cast %238 : vector<2x1x64xf32> to vector<2x64xf32>
    %240 = arith.truncf %239 : vector<2x64xf32> to vector<2x64xbf16>
    %c1856 = arith.constant 1856 : index
    %c0_197 = arith.constant 0 : index
    %241 = vector.load %arg6[%c1856, %c0_197] : memref<2304x128xbf16, #tpu.memory_space<vmem>>, vector<64x128xbf16>
    %cst_198 = arith.constant dense<0.000000e+00> : vector<2x128xf32>
    %242 = tpu.matmul %240, %241, %cst_198 {dimension_numbers = #tpu.dot_dimension_numbers<[1], [0], [0], [1], [0, 0, 1, 1], [], []>} : vector<2x64xbf16>, vector<64x128xbf16>, vector<2x128xf32> -> vector<2x128xf32>
    %243 = arith.addf %237, %242 : vector<2x128xf32>
    %c0_199 = arith.constant 0 : index
    %c30 = arith.constant 30 : index
    %c0_200 = arith.constant 0 : index
    %244 = vector.load %arg12[%c0_199, %c30, %c0_200] : memref<2x36x64xf32, #tpu.memory_space<vmem>>, vector<2x1x64xf32>
    %245 = vector.shape_cast %244 : vector<2x1x64xf32> to vector<2x64xf32>
    %246 = arith.truncf %245 : vector<2x64xf32> to vector<2x64xbf16>
    %c1920 = arith.constant 1920 : index
    %c0_201 = arith.constant 0 : index
    %247 = vector.load %arg6[%c1920, %c0_201] : memref<2304x128xbf16, #tpu.memory_space<vmem>>, vector<64x128xbf16>
    %cst_202 = arith.constant dense<0.000000e+00> : vector<2x128xf32>
    %248 = tpu.matmul %246, %247, %cst_202 {dimension_numbers = #tpu.dot_dimension_numbers<[1], [0], [0], [1], [0, 0, 1, 1], [], []>} : vector<2x64xbf16>, vector<64x128xbf16>, vector<2x128xf32> -> vector<2x128xf32>
    %249 = arith.addf %243, %248 : vector<2x128xf32>
    %c0_203 = arith.constant 0 : index
    %c31 = arith.constant 31 : index
    %c0_204 = arith.constant 0 : index
    %250 = vector.load %arg12[%c0_203, %c31, %c0_204] : memref<2x36x64xf32, #tpu.memory_space<vmem>>, vector<2x1x64xf32>
    %251 = vector.shape_cast %250 : vector<2x1x64xf32> to vector<2x64xf32>
    %252 = arith.truncf %251 : vector<2x64xf32> to vector<2x64xbf16>
    %c1984 = arith.constant 1984 : index
    %c0_205 = arith.constant 0 : index
    %253 = vector.load %arg6[%c1984, %c0_205] : memref<2304x128xbf16, #tpu.memory_space<vmem>>, vector<64x128xbf16>
    %cst_206 = arith.constant dense<0.000000e+00> : vector<2x128xf32>
    %254 = tpu.matmul %252, %253, %cst_206 {dimension_numbers = #tpu.dot_dimension_numbers<[1], [0], [0], [1], [0, 0, 1, 1], [], []>} : vector<2x64xbf16>, vector<64x128xbf16>, vector<2x128xf32> -> vector<2x128xf32>
    %255 = arith.addf %249, %254 : vector<2x128xf32>
    %c0_207 = arith.constant 0 : index
    %c32_208 = arith.constant 32 : index
    %c0_209 = arith.constant 0 : index
    %256 = vector.load %arg12[%c0_207, %c32_208, %c0_209] : memref<2x36x64xf32, #tpu.memory_space<vmem>>, vector<2x1x64xf32>
    %257 = vector.shape_cast %256 : vector<2x1x64xf32> to vector<2x64xf32>
    %258 = arith.truncf %257 : vector<2x64xf32> to vector<2x64xbf16>
    %c2048 = arith.constant 2048 : index
    %c0_210 = arith.constant 0 : index
    %259 = vector.load %arg6[%c2048, %c0_210] : memref<2304x128xbf16, #tpu.memory_space<vmem>>, vector<64x128xbf16>
    %cst_211 = arith.constant dense<0.000000e+00> : vector<2x128xf32>
    %260 = tpu.matmul %258, %259, %cst_211 {dimension_numbers = #tpu.dot_dimension_numbers<[1], [0], [0], [1], [0, 0, 1, 1], [], []>} : vector<2x64xbf16>, vector<64x128xbf16>, vector<2x128xf32> -> vector<2x128xf32>
    %261 = arith.addf %255, %260 : vector<2x128xf32>
    %c0_212 = arith.constant 0 : index
    %c33 = arith.constant 33 : index
    %c0_213 = arith.constant 0 : index
    %262 = vector.load %arg12[%c0_212, %c33, %c0_213] : memref<2x36x64xf32, #tpu.memory_space<vmem>>, vector<2x1x64xf32>
    %263 = vector.shape_cast %262 : vector<2x1x64xf32> to vector<2x64xf32>
    %264 = arith.truncf %263 : vector<2x64xf32> to vector<2x64xbf16>
    %c2112 = arith.constant 2112 : index
    %c0_214 = arith.constant 0 : index
    %265 = vector.load %arg6[%c2112, %c0_214] : memref<2304x128xbf16, #tpu.memory_space<vmem>>, vector<64x128xbf16>
    %cst_215 = arith.constant dense<0.000000e+00> : vector<2x128xf32>
    %266 = tpu.matmul %264, %265, %cst_215 {dimension_numbers = #tpu.dot_dimension_numbers<[1], [0], [0], [1], [0, 0, 1, 1], [], []>} : vector<2x64xbf16>, vector<64x128xbf16>, vector<2x128xf32> -> vector<2x128xf32>
    %267 = arith.addf %261, %266 : vector<2x128xf32>
    %c0_216 = arith.constant 0 : index
    %c34 = arith.constant 34 : index
    %c0_217 = arith.constant 0 : index
    %268 = vector.load %arg12[%c0_216, %c34, %c0_217] : memref<2x36x64xf32, #tpu.memory_space<vmem>>, vector<2x1x64xf32>
    %269 = vector.shape_cast %268 : vector<2x1x64xf32> to vector<2x64xf32>
    %270 = arith.truncf %269 : vector<2x64xf32> to vector<2x64xbf16>
    %c2176 = arith.constant 2176 : index
    %c0_218 = arith.constant 0 : index
    %271 = vector.load %arg6[%c2176, %c0_218] : memref<2304x128xbf16, #tpu.memory_space<vmem>>, vector<64x128xbf16>
    %cst_219 = arith.constant dense<0.000000e+00> : vector<2x128xf32>
    %272 = tpu.matmul %270, %271, %cst_219 {dimension_numbers = #tpu.dot_dimension_numbers<[1], [0], [0], [1], [0, 0, 1, 1], [], []>} : vector<2x64xbf16>, vector<64x128xbf16>, vector<2x128xf32> -> vector<2x128xf32>
    %273 = arith.addf %267, %272 : vector<2x128xf32>
    %c0_220 = arith.constant 0 : index
    %c35 = arith.constant 35 : index
    %c0_221 = arith.constant 0 : index
    %274 = vector.load %arg12[%c0_220, %c35, %c0_221] : memref<2x36x64xf32, #tpu.memory_space<vmem>>, vector<2x1x64xf32>
    %275 = vector.shape_cast %274 : vector<2x1x64xf32> to vector<2x64xf32>
    %276 = arith.truncf %275 : vector<2x64xf32> to vector<2x64xbf16>
    %c2240 = arith.constant 2240 : index
    %c0_222 = arith.constant 0 : index
    %277 = vector.load %arg6[%c2240, %c0_222] : memref<2304x128xbf16, #tpu.memory_space<vmem>>, vector<64x128xbf16>
    %cst_223 = arith.constant dense<0.000000e+00> : vector<2x128xf32>
    %278 = tpu.matmul %276, %277, %cst_223 {dimension_numbers = #tpu.dot_dimension_numbers<[1], [0], [0], [1], [0, 0, 1, 1], [], []>} : vector<2x64xbf16>, vector<64x128xbf16>, vector<2x128xf32> -> vector<2x128xf32>
    %279 = arith.addf %273, %278 : vector<2x128xf32>
    %c0_224 = arith.constant 0 : index
    %c0_225 = arith.constant 0 : index
    %280 = vector.load %arg7[%c0_224, %c0_225] : memref<1x128xf32, #tpu.memory_space<vmem>>, vector<1x128xf32>
    %281 = vector.broadcast %280 : vector<1x128xf32> to vector<2x128xf32>
    %282 = arith.addf %279, %281 : vector<2x128xf32>
    %cst_226 = arith.constant 0.000000e+00 : f32
    %283 = vector.broadcast %cst_226 : f32 to vector<2x128xf32>
    %284 = arith.maximumf %282, %283 : vector<2x128xf32>
    %c0_227 = arith.constant 0 : index
    %c0_228 = arith.constant 0 : index
    %285 = vector.load %arg8[%c0_227, %c0_228] : memref<128x10xf32, #tpu.memory_space<vmem>>, vector<128x10xf32>
    %cst_229 = arith.constant dense<0.000000e+00> : vector<2x10xf32>
    %286 = tpu.matmul %284, %285, %cst_229 {dimension_numbers = #tpu.dot_dimension_numbers<[1], [0], [0], [1], [0, 0, 1, 1], [], []>} : vector<2x128xf32>, vector<128x10xf32>, vector<2x10xf32> -> vector<2x10xf32>
    %c0_230 = arith.constant 0 : index
    %c0_231 = arith.constant 0 : index
    %287 = vector.load %arg9[%c0_230, %c0_231] : memref<1x10xf32, #tpu.memory_space<vmem>>, vector<1x10xf32>
    %288 = vector.broadcast %287 : vector<1x10xf32> to vector<2x10xf32>
    %289 = arith.addf %286, %288 : vector<2x10xf32>
    %c0_232 = arith.constant 0 : index
    %c0_233 = arith.constant 0 : index
    %290 = vector.load %arg10[%c0_232, %c0_233] : memref<2x10xf32, #tpu.memory_space<vmem>>, vector<2x10xf32>
    tpu.vector_store %arg10[%c0_232, %c0_233], %289 {strides = array<i32>} : memref<2x10xf32, #tpu.memory_space<vmem>>, vector<2x10xf32>,
    return
  }
  func.func @transform_0(%arg0: i32) -> (i32, i32) {
    %c0_i32 = arith.constant 0 : i32
    %c0_i32_0 = arith.constant 0 : i32
    return %arg0, %c0_i32 : i32, i32
  }
  func.func @transform_1(%arg0: i32) -> (i32, i32) {
    %c0_i32 = arith.constant 0 : i32
    %c0_i32_0 = arith.constant 0 : i32
    %c0_i32_1 = arith.constant 0 : i32
    return %c0_i32, %c0_i32_0 : i32, i32
  }
  func.func @transform_2(%arg0: i32) -> (i32, i32) {
    %c0_i32 = arith.constant 0 : i32
    %c0_i32_0 = arith.constant 0 : i32
    %c0_i32_1 = arith.constant 0 : i32
    return %c0_i32, %c0_i32_0 : i32, i32
  }
  func.func @transform_3(%arg0: i32) -> (i32, i32) {
    %c0_i32 = arith.constant 0 : i32
    %c0_i32_0 = arith.constant 0 : i32
    %c0_i32_1 = arith.constant 0 : i32
    return %c0_i32, %c0_i32_0 : i32, i32
  }
  func.func @transform_4(%arg0: i32) -> (i32, i32) {
    %c0_i32 = arith.constant 0 : i32
    %c0_i32_0 = arith.constant 0 : i32
    %c0_i32_1 = arith.constant 0 : i32
    return %c0_i32, %c0_i32_0 : i32, i32
  }
  func.func @transform_5(%arg0: i32) -> (i32, i32) {
    %c0_i32 = arith.constant 0 : i32
    %c0_i32_0 = arith.constant 0 : i32
    %c0_i32_1 = arith.constant 0 : i32
    return %c0_i32, %c0_i32_0 : i32, i32
  }
  func.func @transform_6(%arg0: i32) -> (i32, i32) {
    %c0_i32 = arith.constant 0 : i32
    %c0_i32_0 = arith.constant 0 : i32
    %c0_i32_1 = arith.constant 0 : i32
    return %c0_i32, %c0_i32_0 : i32, i32
  }
  func.func @transform_7(%arg0: i32) -> (i32, i32) {
    %c0_i32 = arith.constant 0 : i32
    %c0_i32_0 = arith.constant 0 : i32
    %c0_i32_1 = arith.constant 0 : i32
    return %c0_i32, %c0_i32_0 : i32, i32
  }
  func.func @transform_8(%arg0: i32) -> (i32, i32) {
    %c0_i32 = arith.constant 0 : i32
    %c0_i32_0 = arith.constant 0 : i32
    %c0_i32_1 = arith.constant 0 : i32
    return %c0_i32, %c0_i32_0 : i32, i32
  }
  func.func @transform_9(%arg0: i32) -> (i32, i32) {
    %c0_i32 = arith.constant 0 : i32
    %c0_i32_0 = arith.constant 0 : i32
    return %arg0, %c0_i32 : i32, i32
  }
}

</mosaic_0001>

<llo_original>
// kernel: cnn_forward.1
$region0: #{cnn_forward.1}
  #allocation0 [shape = 'u32[]', space=smem, size = 0x4, offset = 0x4, fixed_abs, tag = 'smem constant byte address 0x4 - core index']
  #allocation1 [shape = 'u32[144,128]{1,0:T(1,128)}', space=vmem, size = 0x12000, scoped, tag = 'internal scratch']
  #allocation2 [shape = 'f32[2,8,8,32]{3,2,1,0:T(8,128)}', space=vmem, size = 0x10000, scoped, tag = 'scratch operand']
  #allocation3 [shape = 'f32[2,36,64]{2,1,0:T(8,128)}', space=vmem, size = 0xa000, scoped, tag = 'scratch operand']
  %s0 = inlined_call_operand.vmem [shape: f32[128,27], index: 0, kind: input, shape index: {}]
  %s1 = inlined_call_operand.vmem [shape: f32[27,32], index: 1, kind: input, shape index: {}]
  %s2 = inlined_call_operand.vmem [shape: f32[1,32], index: 2, kind: input, shape index: {}]
  %s3 = inlined_call_operand.vmem [shape: f32[288,64], index: 3, kind: input, shape index: {}]
  %s4 = inlined_call_operand.vmem [shape: f32[1,64], index: 4, kind: input, shape index: {}]
  %s5 = inlined_call_operand.vmem [shape: bf16[2304,128], index: 5, kind: input, shape index: {}]
  %s6 = inlined_call_operand.vmem [shape: f32[1,128], index: 6, kind: input, shape index: {}]
  %s7 = inlined_call_operand.vmem [shape: f32[128,10], index: 7, kind: input, shape index: {}]
  %s8 = inlined_call_operand.vmem [shape: f32[1,10], index: 8, kind: input, shape index: {}]
  %s9 = inlined_call_operand.hbm [shape: f32[2,10], index: 9, kind: output, shape index: {}]
  %s10 = sld [smem:[#allocation0]]
  $region46: #{cnn_forward.1} parent=0
    _
  %s12 = ssub.s32 1, %s10
  %s13 = scalar_select 0, %s12, %s10
  $region1: #{cnn_forward.1} parent=0
    #allocation4 [shape = 'u8[1024]{0}', space=vmem, size = 0x400, scoped, tag = 'output window, operand 0, single buffered']
    #allocation5 [shape = 's32[1]{0}', space=sflag, size = 0x4, scoped, tag = 'scoped memory for cnn_forward.1']
    %14 = vsyncpa [#allocation5], 0
    // Predicated region
    $region2: #{cnn_forward.1} parent=1 // pred_check
      _
    $region3: #{cnn_forward.1} parent=1 // pred_check_branch
      %16 = sbr.rel (0) target = $region5
    $region4: #{cnn_forward.1} parent=1 // pred_region
      _
    $region5: #{cnn_forward.1} parent=1 // pred_fallthru
      _
    // Predicated region
    $region6: #{cnn_forward.1} parent=1 // pred_check
      _
    $region7: #{cnn_forward.1} parent=1 // pred_check_branch
      %18 = sbr.rel (0) target = $region9
    $region8: #{cnn_forward.1} parent=1 // pred_region
      _
    $region9: #{cnn_forward.1} parent=1 // pred_fallthru
      _
    // Predicated region
    $region10: #{cnn_forward.1} parent=1 // pred_check
      _
    $region11: #{cnn_forward.1} parent=1 // pred_check_branch
      %20 = sbr.rel (0) target = $region13
    $region12: #{cnn_forward.1} parent=1 // pred_region
      _
    $region13: #{cnn_forward.1} parent=1 // pred_fallthru
      _
    // Predicated region
    $region14: #{cnn_forward.1} parent=1 // pred_check
      _
    $region15: #{cnn_forward.1} parent=1 // pred_check_branch
      %22 = sbr.rel (0) target = $region17
    $region16: #{cnn_forward.1} parent=1 // pred_region
      _
    $region17: #{cnn_forward.1} parent=1 // pred_fallthru
      _
    // Predicated region
    $region18: #{cnn_forward.1} parent=1 // pred_check
      _
    $region19: #{cnn_forward.1} parent=1 // pred_check_branch
      %24 = sbr.rel (0) target = $region21
    $region20: #{cnn_forward.1} parent=1 // pred_region
      _
    $region21: #{cnn_forward.1} parent=1 // pred_fallthru
      _
    // Predicated region
    $region22: #{cnn_forward.1} parent=1 // pred_check
      _
    $region23: #{cnn_forward.1} parent=1 // pred_check_branch
      %26 = sbr.rel (0) target = $region25
    $region24: #{cnn_forward.1} parent=1 // pred_region
      _
    $region25: #{cnn_forward.1} parent=1 // pred_fallthru
      _
    // Predicated region
    $region26: #{cnn_forward.1} parent=1 // pred_check
      _
    $region27: #{cnn_forward.1} parent=1 // pred_check_branch
      %28 = sbr.rel (0) target = $region29
    $region28: #{cnn_forward.1} parent=1 // pred_region
      _
    $region29: #{cnn_forward.1} parent=1 // pred_fallthru
      _
    // Predicated region
    $region30: #{cnn_forward.1} parent=1 // pred_check
      _
    $region31: #{cnn_forward.1} parent=1 // pred_check_branch
      %30 = sbr.rel (0) target = $region33
    $region32: #{cnn_forward.1} parent=1 // pred_region
      _
    $region33: #{cnn_forward.1} parent=1 // pred_fallthru
      _
    // Predicated region
    $region34: #{cnn_forward.1} parent=1 // pred_check
      _
    $region35: #{cnn_forward.1} parent=1 // pred_check_branch
      %32 = sbr.rel (0) target = $region37
    $region36: #{cnn_forward.1} parent=1 // pred_region
      _
    $region37: #{cnn_forward.1} parent=1 // pred_fallthru
      _
    %v34 = vld [vmem:[%s0] sm:$0xff]
    %v35 = vld [vmem:[%s0 + $0x8] sm:$0xff]
    %v36 = vld [vmem:[%s0 + $0x10] sm:$0xff]
    %v37 = vld [vmem:[%s0 + $0x18] sm:$0xff]
    %v38 = vld [vmem:[%s0 + $0x20] sm:$0xff]
    %v39 = vld [vmem:[%s0 + $0x28] sm:$0xff]
    %v40 = vld [vmem:[%s0 + $0x30] sm:$0xff]
    %v41 = vld [vmem:[%s0 + $0x38] sm:$0xff]
    %v42 = vld [vmem:[%s0 + $0x40] sm:$0xff]
    %v43 = vld [vmem:[%s0 + $0x48] sm:$0xff]
    %v44 = vld [vmem:[%s0 + $0x50] sm:$0xff]
    %v45 = vld [vmem:[%s0 + $0x58] sm:$0xff]
    %v46 = vld [vmem:[%s0 + $0x60] sm:$0xff]
    %v47 = vld [vmem:[%s0 + $0x68] sm:$0xff]
    %v48 = vld [vmem:[%s0 + $0x70] sm:$0xff]
    %v49 = vld [vmem:[%s0 + $0x78] sm:$0xff]
    %v50 = vld [vmem:[%s1] sm:$0xff]
    %v51 = vld [vmem:[%s1 + $0x8] sm:$0xff]
    %v52 = vld [vmem:[%s1 + $0x10] sm:$0xff]
    %v53 = vld [vmem:[%s1 + $0x18] sm:$0x7]
    %v54 = vld [vmem:[%s2] sm:$0x1]
    %v56 = vlaneseq
    %v57 = vshrl.u32 %v56, 7
    %v58 = vsub.s32 0, %v57
    %v59 = vrot.slane %v54, %v58
    %vm61 = vcmask 220160
    %v63 = vsel %vm61, %v34, 0
    %v66 = vsel %vm61, %v35, 0
    %v69 = vsel %vm61, %v36, 0
    %v72 = vsel %vm61, %v37, 0
    %v75 = vsel %vm61, %v38, 0
    %v78 = vsel %vm61, %v39, 0
    %v81 = vsel %vm61, %v40, 0
    %v84 = vsel %vm61, %v41, 0
    %v87 = vsel %vm61, %v42, 0
    %v90 = vsel %vm61, %v43, 0
    %v93 = vsel %vm61, %v44, 0
    %v96 = vsel %vm61, %v45, 0
    %v99 = vsel %vm61, %v46, 0
    %v102 = vsel %vm61, %v47, 0
    %v105 = vsel %vm61, %v48, 0
    %v108 = vsel %vm61, %v49, 0
    %vm110 = vcmask 1042432
    %v112 = vsel %vm110, %v53, 0
    %114 = vmatprep.subr.mxu0 0.0
    %115 = vmatpush1.msra.mxu0 0.0
    %116 = vmatprep.subr.mxu0 0.0
    %117 = vmatpush1.msra.mxu0 0.0
    %118 = vmatprep.subr.mxu0 0.0
    %119 = vmatpush1.msra.mxu0 0.0
    %120 = vmatprep.subr.mxu0 0.0
    %121 = vmatpush1.msra.mxu0 0.0
    %122 = vmatprep.subr.mxu0 0.0
    %123 = vmatpush1.msra.mxu0 0.0
    %124 = vmatprep.subr.mxu0 0.0
    %125 = vmatpush1.msra.mxu0 0.0
    %126 = vmatprep.subr.mxu0 0.0
    %127 = vmatpush1.msra.mxu0 0.0
    %128 = vmatprep.subr.mxu0 0.0
    %129 = vmatpush1.msra.mxu0 0.0
    %130 = vmatprep.subr.mxu0 0.0
    %131 = vmatpush1.msra.mxu0 0.0
    %132 = vmatprep.subr.mxu0 0.0
    %133 = vmatpush1.msra.mxu0 0.0
    %134 = vmatprep.subr.mxu0 0.0
    %135 = vmatpush1.msra.mxu0 0.0
    %136 = vmatprep.subr.mxu0 0.0
    %137 = vmatpush1.msra.mxu0 0.0
    %138 = vmatprep.subr.mxu0 0.0
    %139 = vmatpush1.msra.mxu0 %v112
    %140 = vmatprep.subr.mxu0 0.0
    %141 = vmatpush1.msra.mxu0 %v52
    %142 = vmatprep.subr.mxu0 0.0
    %143 = vmatpush1.msra.mxu0 %v51
    %144 = vmatprep.subr.mxu0 0.0
    %145 = vmatpush1.msra.mxu0 %v50
    %146 = vmatprep.subr.mxu0 0.0
    %147 = vmatpush2.msra.mxu0 0.0
    %148 = vmatprep.subr.mxu0 0.0
    %149 = vmatpush2.msra.mxu0 0.0
    %150 = vmatprep.subr.mxu0 0.0
    %151 = vmatpush2.msra.mxu0 0.0
    %152 = vmatprep.subr.mxu0 0.0
    %153 = vmatpush2.msra.mxu0 0.0
    %154 = vmatprep.subr.mxu0 0.0
    %155 = vmatpush2.msra.mxu0 0.0
    %156 = vmatprep.subr.mxu0 0.0
    %157 = vmatpush2.msra.mxu0 0.0
    %158 = vmatprep.subr.mxu0 0.0
    %159 = vmatpush2.msra.mxu0 0.0
    %160 = vmatprep.subr.mxu0 0.0
    %161 = vmatpush2.msra.mxu0 0.0
    %162 = vmatprep.subr.mxu0 0.0
    %163 = vmatpush2.msra.mxu0 0.0
    %164 = vmatprep.subr.mxu0 0.0
    %165 = vmatpush2.msra.mxu0 0.0
    %166 = vmatprep.subr.mxu0 0.0
    %167 = vmatpush2.msra.mxu0 0.0
    %168 = vmatprep.subr.mxu0 0.0
    %169 = vmatpush2.msra.mxu0 0.0
    %170 = vmatprep.subr.mxu0 0.0
    %171 = vmatpush2.msra.mxu0 0.0
    %172 = vmatprep.subr.mxu0 0.0
    %173 = vmatpush2.msra.mxu0 0.0
    %174 = vmatprep.subr.mxu0 0.0
    %175 = vmatpush2.msra.mxu0 0.0
    %176 = vmatprep.subr.mxu0 0.0
    %177 = vmatpush2.msra.mxu0 0.0
    %178 = vmatprep.mubr.f32.mxu0 0.0
    %179 = vmatmul.mubr.f32.gmra.mxu0 %v63
    %v180 = vpop.f32.mrf.mxu0
    %v181 = vadd.f32 %v59, %v180
    %v182 = vpop.f32.mrf.mxu0
    %183 = vmatprep.mubr.f32.mxu0 0.0
    %184 = vmatmul.mubr.f32.gmra.mxu0 %v66
    %v185 = vpop.f32.mrf.mxu0
    %v186 = vadd.f32 %v59, %v185
    %v187 = vpop.f32.mrf.mxu0
    %188 = vmatprep.mubr.f32.mxu0 0.0
    %189 = vmatmul.mubr.f32.gmra.mxu0 %v69
    %v190 = vpop.f32.mrf.mxu0
    %v191 = vadd.f32 %v59, %v190
    %v192 = vpop.f32.mrf.mxu0
    %193 = vmatprep.mubr.f32.mxu0 0.0
    %194 = vmatmul.mubr.f32.gmra.mxu0 %v72
    %v195 = vpop.f32.mrf.mxu0
    %v196 = vadd.f32 %v59, %v195
    %v197 = vpop.f32.mrf.mxu0
    %198 = vmatprep.mubr.f32.mxu0 0.0
    %199 = vmatmul.mubr.f32.gmra.mxu0 %v75
    %v200 = vpop.f32.mrf.mxu0
    %v201 = vadd.f32 %v59, %v200
    %v202 = vpop.f32.mrf.mxu0
    %203 = vmatprep.mubr.f32.mxu0 0.0
    %204 = vmatmul.mubr.f32.gmra.mxu0 %v78
    %v205 = vpop.f32.mrf.mxu0
    %v206 = vadd.f32 %v59, %v205
    %v207 = vpop.f32.mrf.mxu0
    %208 = vmatprep.mubr.f32.mxu0 0.0
    %209 = vmatmul.mubr.f32.gmra.mxu0 %v81
    %v210 = vpop.f32.mrf.mxu0
    %v211 = vadd.f32 %v59, %v210
    %v212 = vpop.f32.mrf.mxu0
    %213 = vmatprep.mubr.f32.mxu0 0.0
    %214 = vmatmul.mubr.f32.gmra.mxu0 %v84
    %v215 = vpop.f32.mrf.mxu0
    %v216 = vadd.f32 %v59, %v215
    %v217 = vpop.f32.mrf.mxu0
    %218 = vmatprep.mubr.f32.mxu0 0.0
    %219 = vmatmul.mubr.f32.gmra.mxu0 %v87
    %v220 = vpop.f32.mrf.mxu0
    %v221 = vadd.f32 %v59, %v220
    %v222 = vpop.f32.mrf.mxu0
    %223 = vmatprep.mubr.f32.mxu0 0.0
    %224 = vmatmul.mubr.f32.gmra.mxu0 %v90
    %v225 = vpop.f32.mrf.mxu0
    %v226 = vadd.f32 %v59, %v225
    %v227 = vpop.f32.mrf.mxu0
    %228 = vmatprep.mubr.f32.mxu0 0.0
    %229 = vmatmul.mubr.f32.gmra.mxu0 %v93
    %v230 = vpop.f32.mrf.mxu0
    %v231 = vadd.f32 %v59, %v230
    %v232 = vpop.f32.mrf.mxu0
    %233 = vmatprep.mubr.f32.mxu0 0.0
    %234 = vmatmul.mubr.f32.gmra.mxu0 %v96
    %v235 = vpop.f32.mrf.mxu0
    %v236 = vadd.f32 %v59, %v235
    %v237 = vpop.f32.mrf.mxu0
    %238 = vmatprep.mubr.f32.mxu0 0.0
    %239 = vmatmul.mubr.f32.gmra.mxu0 %v99
    %v240 = vpop.f32.mrf.mxu0
    %v241 = vadd.f32 %v59, %v240
    %v242 = vpop.f32.mrf.mxu0
    %243 = vmatprep.mubr.f32.mxu0 0.0
    %244 = vmatmul.mubr.f32.gmra.mxu0 %v102
    %v245 = vpop.f32.mrf.mxu0
    %v246 = vadd.f32 %v59, %v245
    %v247 = vpop.f32.mrf.mxu0
    %248 = vmatprep.mubr.f32.mxu0 0.0
    %249 = vmatmul.mubr.f32.gmra.mxu0 %v105
    %v250 = vpop.f32.mrf.mxu0
    %v251 = vadd.f32 %v59, %v250
    %v252 = vpop.f32.mrf.mxu0
    %253 = vmatprep.mubr.f32.mxu0 0.0
    %254 = vmatmul.mubr.f32.gmra.mxu0 %v108
    %v255 = vpop.f32.mrf.mxu0
    %v256 = vadd.f32 %v59, %v255
    %v257 = vpop.f32.mrf.mxu0
    %258 = vdwg.mxu0
    %v259 = vmax.f32 %v181, 0.0
    %v260 = vmax.f32 %v186, 0.0
    %v261 = vmax.f32 %v191, 0.0
    %v262 = vmax.f32 %v196, 0.0
    %v263 = vmax.f32 %v201, 0.0
    %v264 = vmax.f32 %v206, 0.0
    %v265 = vmax.f32 %v211, 0.0
    %v266 = vmax.f32 %v216, 0.0
    %v267 = vmax.f32 %v221, 0.0
    %v268 = vmax.f32 %v226, 0.0
    %v269 = vmax.f32 %v231, 0.0
    %v270 = vmax.f32 %v236, 0.0
    %v271 = vmax.f32 %v241, 0.0
    %v272 = vmax.f32 %v246, 0.0
    %v273 = vmax.f32 %v251, 0.0
    %v274 = vmax.f32 %v256, 0.0
    %vm275 = vcmask 261120
    %276 = vst.msk [vmem:[#allocation2] sm:$0xff] %vm275, %v259
    %277 = vst.msk [vmem:[#allocation2 + $0x8] sm:$0xff] %vm275, %v260
    %278 = vst.msk [vmem:[#allocation2 + $0x10] sm:$0xff] %vm275, %v261
    %279 = vst.msk [vmem:[#allocation2 + $0x18] sm:$0xff] %vm275, %v262
    %280 = vst.msk [vmem:[#allocation2 + $0x20] sm:$0xff] %vm275, %v263
    %281 = vst.msk [vmem:[#allocation2 + $0x28] sm:$0xff] %vm275, %v264
    %282 = vst.msk [vmem:[#allocation2 + $0x30] sm:$0xff] %vm275, %v265
    %283 = vst.msk [vmem:[#allocation2 + $0x38] sm:$0xff] %vm275, %v266
    %284 = vst.msk [vmem:[#allocation2 + $0x40] sm:$0xff] %vm275, %v267
    %285 = vst.msk [vmem:[#allocation2 + $0x48] sm:$0xff] %vm275, %v268
    %286 = vst.msk [vmem:[#allocation2 + $0x50] sm:$0xff] %vm275, %v269
    %287 = vst.msk [vmem:[#allocation2 + $0x58] sm:$0xff] %vm275, %v270
    %288 = vst.msk [vmem:[#allocation2 + $0x60] sm:$0xff] %vm275, %v271
    %289 = vst.msk [vmem:[#allocation2 + $0x68] sm:$0xff] %vm275, %v272
    %290 = vst.msk [vmem:[#allocation2 + $0x70] sm:$0xff] %vm275, %v273
    %291 = vst.msk [vmem:[#allocation2 + $0x78] sm:$0xff] %vm275, %v274
    %v292 = vld [vmem:[#allocation2] sm:$0x3f]
    %v293 = vld [vmem:[#allocation2 + $0x8] sm:$0x3f]
    %v294 = vld [vmem:[#allocation2 + $0x10] sm:$0x3f]
    %v295 = vld [vmem:[#allocation2 + $0x18] sm:$0x3f]
    %v296 = vld [vmem:[#allocation2 + $0x20] sm:$0x3f]
    %v297 = vld [vmem:[#allocation2 + $0x28] sm:$0x3f]
    %v298 = vld [vmem:[#allocation2 + $0x40] sm:$0x3f]
    %v299 = vld [vmem:[#allocation2 + $0x48] sm:$0x3f]
    %v300 = vld [vmem:[#allocation2 + $0x50] sm:$0x3f]
    %v301 = vld [vmem:[#allocation2 + $0x58] sm:$0x3f]
    %v302 = vld [vmem:[#allocation2 + $0x60] sm:$0x3f]
    %v303 = vld [vmem:[#allocation2 + $0x68] sm:$0x3f]
    %v316 = vcombine.high %v292, %v292
    %v318 = vunpack.c.l.s4 1983009808
    %v319 = vunpack.c.0.s8 %v318
    %v320 = vlaneseq
    %v321 = vshrl.u32 %v320, 7
    %v322 = vsub.s32 %v319, %v321
    %v323 = vrot.slane %v292, %v322
    %v325 = vunpack.c.l.s4 1983009808
    %v326 = vunpack.c.0.s8 %v325
    %v327 = vlaneseq
    %v328 = vshrl.u32 %v327, 7
    %v329 = vsub.s32 %v326, %v328
    %v330 = vrot.slane %v316, %v329
    %v331 = vcombine.high %v323, %v323
    %v332 = vcombine.high %v293, %v293
    %v334 = vunpack.c.l.s4 1983009808
    %v335 = vunpack.c.0.s8 %v334
    %v336 = vlaneseq
    %v337 = vshrl.u32 %v336, 7
    %v338 = vsub.s32 %v335, %v337
    %v339 = vrot.slane %v293, %v338
    %v341 = vunpack.c.l.s4 1983009808
    %v342 = vunpack.c.0.s8 %v341
    %v343 = vlaneseq
    %v344 = vshrl.u32 %v343, 7
    %v345 = vsub.s32 %v342, %v344
    %v346 = vrot.slane %v332, %v345
    %v347 = vcombine.high %v339, %v339
    %v348 = vcombine.high %v294, %v294
    %v350 = vunpack.c.l.s4 1983009808
    %v351 = vunpack.c.0.s8 %v350
    %v352 = vlaneseq
    %v353 = vshrl.u32 %v352, 7
    %v354 = vsub.s32 %v351, %v353
    %v355 = vrot.slane %v294, %v354
    %v357 = vunpack.c.l.s4 1983009808
    %v358 = vunpack.c.0.s8 %v357
    %v359 = vlaneseq
    %v360 = vshrl.u32 %v359, 7
    %v361 = vsub.s32 %v358, %v360
    %v362 = vrot.slane %v348, %v361
    %v363 = vcombine.high %v355, %v355
    %v364 = vcombine.high %v295, %v295
    %v366 = vunpack.c.l.s4 1983009808
    %v367 = vunpack.c.0.s8 %v366
    %v368 = vlaneseq
    %v369 = vshrl.u32 %v368, 7
    %v370 = vsub.s32 %v367, %v369
    %v371 = vrot.slane %v295, %v370
    %v373 = vunpack.c.l.s4 1983009808
    %v374 = vunpack.c.0.s8 %v373
    %v375 = vlaneseq
    %v376 = vshrl.u32 %v375, 7
    %v377 = vsub.s32 %v374, %v376
    %v378 = vrot.slane %v364, %v377
    %v379 = vcombine.high %v371, %v371
    %v380 = vcombine.high %v296, %v296
    %v382 = vunpack.c.l.s4 1983009808
    %v383 = vunpack.c.0.s8 %v382
    %v384 = vlaneseq
    %v385 = vshrl.u32 %v384, 7
    %v386 = vsub.s32 %v383, %v385
    %v387 = vrot.slane %v296, %v386
    %v389 = vunpack.c.l.s4 1983009808
    %v390 = vunpack.c.0.s8 %v389
    %v391 = vlaneseq
    %v392 = vshrl.u32 %v391, 7
    %v393 = vsub.s32 %v390, %v392
    %v394 = vrot.slane %v380, %v393
    %v395 = vcombine.high %v387, %v387
    %v396 = vcombine.high %v297, %v297
    %v398 = vunpack.c.l.s4 1983009808
    %v399 = vunpack.c.0.s8 %v398
    %v400 = vlaneseq
    %v401 = vshrl.u32 %v400, 7
    %v402 = vsub.s32 %v399, %v401
    %v403 = vrot.slane %v297, %v402
    %v405 = vunpack.c.l.s4 1983009808
    %v406 = vunpack.c.0.s8 %v405
    %v407 = vlaneseq
    %v408 = vshrl.u32 %v407, 7
    %v409 = vsub.s32 %v406, %v408
    %v410 = vrot.slane %v396, %v409
    %v411 = vcombine.high %v403, %v403
    %v412 = vcombine.high %v298, %v298
    %v414 = vunpack.c.l.s4 1983009808
    %v415 = vunpack.c.0.s8 %v414
    %v416 = vlaneseq
    %v417 = vshrl.u32 %v416, 7
    %v418 = vsub.s32 %v415, %v417
    %v419 = vrot.slane %v298, %v418
    %v421 = vunpack.c.l.s4 1983009808
    %v422 = vunpack.c.0.s8 %v421
    %v423 = vlaneseq
    %v424 = vshrl.u32 %v423, 7
    %v425 = vsub.s32 %v422, %v424
    %v426 = vrot.slane %v412, %v425
    %v427 = vcombine.high %v419, %v419
    %v428 = vcombine.high %v299, %v299
    %v430 = vunpack.c.l.s4 1983009808
    %v431 = vunpack.c.0.s8 %v430
    %v432 = vlaneseq
    %v433 = vshrl.u32 %v432, 7
    %v434 = vsub.s32 %v431, %v433
    %v435 = vrot.slane %v299, %v434
    %v437 = vunpack.c.l.s4 1983009808
    %v438 = vunpack.c.0.s8 %v437
    %v439 = vlaneseq
    %v440 = vshrl.u32 %v439, 7
    %v441 = vsub.s32 %v438, %v440
    %v442 = vrot.slane %v428, %v441
    %v443 = vcombine.high %v435, %v435
    %v444 = vcombine.high %v300, %v300
    %v446 = vunpack.c.l.s4 1983009808
    %v447 = vunpack.c.0.s8 %v446
    %v448 = vlaneseq
    %v449 = vshrl.u32 %v448, 7
    %v450 = vsub.s32 %v447, %v449
    %v451 = vrot.slane %v300, %v450
    %v453 = vunpack.c.l.s4 1983009808
    %v454 = vunpack.c.0.s8 %v453
    %v455 = vlaneseq
    %v456 = vshrl.u32 %v455, 7
    %v457 = vsub.s32 %v454, %v456
    %v458 = vrot.slane %v444, %v457
    %v459 = vcombine.high %v451, %v451
    %v460 = vcombine.high %v301, %v301
    %v462 = vunpack.c.l.s4 1983009808
    %v463 = vunpack.c.0.s8 %v462
    %v464 = vlaneseq
    %v465 = vshrl.u32 %v464, 7
    %v466 = vsub.s32 %v463, %v465
    %v467 = vrot.slane %v301, %v466
    %v469 = vunpack.c.l.s4 1983009808
    %v470 = vunpack.c.0.s8 %v469
    %v471 = vlaneseq
    %v472 = vshrl.u32 %v471, 7
    %v473 = vsub.s32 %v470, %v472
    %v474 = vrot.slane %v460, %v473
    %v475 = vcombine.high %v467, %v467
    %v476 = vcombine.high %v302, %v302
    %v478 = vunpack.c.l.s4 1983009808
    %v479 = vunpack.c.0.s8 %v478
    %v480 = vlaneseq
    %v481 = vshrl.u32 %v480, 7
    %v482 = vsub.s32 %v479, %v481
    %v483 = vrot.slane %v302, %v482
    %v485 = vunpack.c.l.s4 1983009808
    %v486 = vunpack.c.0.s8 %v485
    %v487 = vlaneseq
    %v488 = vshrl.u32 %v487, 7
    %v489 = vsub.s32 %v486, %v488
    %v490 = vrot.slane %v476, %v489
    %v491 = vcombine.high %v483, %v483
    %v492 = vcombine.high %v303, %v303
    %v494 = vunpack.c.l.s4 1983009808
    %v495 = vunpack.c.0.s8 %v494
    %v496 = vlaneseq
    %v497 = vshrl.u32 %v496, 7
    %v498 = vsub.s32 %v495, %v497
    %v499 = vrot.slane %v303, %v498
    %v501 = vunpack.c.l.s4 1983009808
    %v502 = vunpack.c.0.s8 %v501
    %v503 = vlaneseq
    %v504 = vshrl.u32 %v503, 7
    %v505 = vsub.s32 %v502, %v504
    %v506 = vrot.slane %v492, %v505
    %v507 = vcombine.high %v499, %v499
    %v508 = vld [vmem:[%s3] sm:$0xff]
    %v509 = vld [vmem:[%s3 + $0x8] sm:$0xff]
    %v510 = vld [vmem:[%s3 + $0x10] sm:$0xff]
    %v511 = vld [vmem:[%s3 + $0x18] sm:$0xff]
    %v512 = vld [vmem:[#allocation2 + $0x1] sm:$0x3f]
    %v513 = vld [vmem:[#allocation2 + $0x9] sm:$0x3f]
    %v514 = vld [vmem:[#allocation2 + $0x11] sm:$0x3f]
    %v515 = vld [vmem:[#allocation2 + $0x19] sm:$0x3f]
    %v516 = vld [vmem:[#allocation2 + $0x21] sm:$0x3f]
    %v517 = vld [vmem:[#allocation2 + $0x29] sm:$0x3f]
    %v518 = vld [vmem:[#allocation2 + $0x41] sm:$0x3f]
    %v519 = vld [vmem:[#allocation2 + $0x49] sm:$0x3f]
    %v520 = vld [vmem:[#allocation2 + $0x51] sm:$0x3f]
    %v521 = vld [vmem:[#allocation2 + $0x59] sm:$0x3f]
    %v522 = vld [vmem:[#allocation2 + $0x61] sm:$0x3f]
    %v523 = vld [vmem:[#allocation2 + $0x69] sm:$0x3f]
    %v536 = vcombine.high %v512, %v512
    %v538 = vunpack.c.l.s4 1983009808
    %v539 = vunpack.c.0.s8 %v538
    %v540 = vlaneseq
    %v541 = vshrl.u32 %v540, 7
    %v542 = vsub.s32 %v539, %v541
    %v543 = vrot.slane %v512, %v542
    %v545 = vunpack.c.l.s4 1983009808
    %v546 = vunpack.c.0.s8 %v545
    %v547 = vlaneseq
    %v548 = vshrl.u32 %v547, 7
    %v549 = vsub.s32 %v546, %v548
    %v550 = vrot.slane %v536, %v549
    %v551 = vcombine.high %v543, %v543
    %v552 = vcombine.high %v513, %v513
    %v554 = vunpack.c.l.s4 1983009808
    %v555 = vunpack.c.0.s8 %v554
    %v556 = vlaneseq
    %v557 = vshrl.u32 %v556, 7
    %v558 = vsub.s32 %v555, %v557
    %v559 = vrot.slane %v513, %v558
    %v561 = vunpack.c.l.s4 1983009808
    %v562 = vunpack.c.0.s8 %v561
    %v563 = vlaneseq
    %v564 = vshrl.u32 %v563, 7
    %v565 = vsub.s32 %v562, %v564
    %v566 = vrot.slane %v552, %v565
    %v567 = vcombine.high %v559, %v559
    %v568 = vcombine.high %v514, %v514
    %v570 = vunpack.c.l.s4 1983009808
    %v571 = vunpack.c.0.s8 %v570
    %v572 = vlaneseq
    %v573 = vshrl.u32 %v572, 7
    %v574 = vsub.s32 %v571, %v573
    %v575 = vrot.slane %v514, %v574
    %v577 = vunpack.c.l.s4 1983009808
    %v578 = vunpack.c.0.s8 %v577
    %v579 = vlaneseq
    %v580 = vshrl.u32 %v579, 7
    %v581 = vsub.s32 %v578, %v580
    %v582 = vrot.slane %v568, %v581
    %v583 = vcombine.high %v575, %v575
    %v584 = vcombine.high %v515, %v515
    %v586 = vunpack.c.l.s4 1983009808
    %v587 = vunpack.c.0.s8 %v586
    %v588 = vlaneseq
    %v589 = vshrl.u32 %v588, 7
    %v590 = vsub.s32 %v587, %v589
    %v591 = vrot.slane %v515, %v590
    %v593 = vunpack.c.l.s4 1983009808
    %v594 = vunpack.c.0.s8 %v593
    %v595 = vlaneseq
    %v596 = vshrl.u32 %v595, 7
    %v597 = vsub.s32 %v594, %v596
    %v598 = vrot.slane %v584, %v597
    %v599 = vcombine.high %v591, %v591
    %v600 = vcombine.high %v516, %v516
    %v602 = vunpack.c.l.s4 1983009808
    %v603 = vunpack.c.0.s8 %v602
    %v604 = vlaneseq
    %v605 = vshrl.u32 %v604, 7
    %v606 = vsub.s32 %v603, %v605
    %v607 = vrot.slane %v516, %v606
    %v609 = vunpack.c.l.s4 1983009808
    %v610 = vunpack.c.0.s8 %v609
    %v611 = vlaneseq
    %v612 = vshrl.u32 %v611, 7
    %v613 = vsub.s32 %v610, %v612
    %v614 = vrot.slane %v600, %v613
    %v615 = vcombine.high %v607, %v607
    %v616 = vcombine.high %v517, %v517
    %v618 = vunpack.c.l.s4 1983009808
    %v619 = vunpack.c.0.s8 %v618
    %v620 = vlaneseq
    %v621 = vshrl.u32 %v620, 7
    %v622 = vsub.s32 %v619, %v621
    %v623 = vrot.slane %v517, %v622
    %v625 = vunpack.c.l.s4 1983009808
    %v626 = vunpack.c.0.s8 %v625
    %v627 = vlaneseq
    %v628 = vshrl.u32 %v627, 7
    %v629 = vsub.s32 %v626, %v628
    %v630 = vrot.slane %v616, %v629
    %v631 = vcombine.high %v623, %v623
    %v632 = vcombine.high %v518, %v518
    %v634 = vunpack.c.l.s4 1983009808
    %v635 = vunpack.c.0.s8 %v634
    %v636 = vlaneseq
    %v637 = vshrl.u32 %v636, 7
    %v638 = vsub.s32 %v635, %v637
    %v639 = vrot.slane %v518, %v638
    %v641 = vunpack.c.l.s4 1983009808
    %v642 = vunpack.c.0.s8 %v641
    %v643 = vlaneseq
    %v644 = vshrl.u32 %v643, 7
    %v645 = vsub.s32 %v642, %v644
    %v646 = vrot.slane %v632, %v645
    %v647 = vcombine.high %v639, %v639
    %v648 = vcombine.high %v519, %v519
    %v650 = vunpack.c.l.s4 1983009808
    %v651 = vunpack.c.0.s8 %v650
    %v652 = vlaneseq
    %v653 = vshrl.u32 %v652, 7
    %v654 = vsub.s32 %v651, %v653
    %v655 = vrot.slane %v519, %v654
    %v657 = vunpack.c.l.s4 1983009808
    %v658 = vunpack.c.0.s8 %v657
    %v659 = vlaneseq
    %v660 = vshrl.u32 %v659, 7
    %v661 = vsub.s32 %v658, %v660
    %v662 = vrot.slane %v648, %v661
    %v663 = vcombine.high %v655, %v655
    %v664 = vcombine.high %v520, %v520
    %v666 = vunpack.c.l.s4 1983009808
    %v667 = vunpack.c.0.s8 %v666
    %v668 = vlaneseq
    %v669 = vshrl.u32 %v668, 7
    %v670 = vsub.s32 %v667, %v669
    %v671 = vrot.slane %v520, %v670
    %v673 = vunpack.c.l.s4 1983009808
    %v674 = vunpack.c.0.s8 %v673
    %v675 = vlaneseq
    %v676 = vshrl.u32 %v675, 7
    %v677 = vsub.s32 %v674, %v676
    %v678 = vrot.slane %v664, %v677
    %v679 = vcombine.high %v671, %v671
    %v680 = vcombine.high %v521, %v521
    %v682 = vunpack.c.l.s4 1983009808
    %v683 = vunpack.c.0.s8 %v682
    %v684 = vlaneseq
    %v685 = vshrl.u32 %v684, 7
    %v686 = vsub.s32 %v683, %v685
    %v687 = vrot.slane %v521, %v686
    %v689 = vunpack.c.l.s4 1983009808
    %v690 = vunpack.c.0.s8 %v689
    %v691 = vlaneseq
    %v692 = vshrl.u32 %v691, 7
    %v693 = vsub.s32 %v690, %v692
    %v694 = vrot.slane %v680, %v693
    %v695 = vcombine.high %v687, %v687
    %v696 = vcombine.high %v522, %v522
    %v698 = vunpack.c.l.s4 1983009808
    %v699 = vunpack.c.0.s8 %v698
    %v700 = vlaneseq
    %v701 = vshrl.u32 %v700, 7
    %v702 = vsub.s32 %v699, %v701
    %v703 = vrot.slane %v522, %v702
    %v705 = vunpack.c.l.s4 1983009808
    %v706 = vunpack.c.0.s8 %v705
    %v707 = vlaneseq
    %v708 = vshrl.u32 %v707, 7
    %v709 = vsub.s32 %v706, %v708
    %v710 = vrot.slane %v696, %v709
    %v711 = vcombine.high %v703, %v703
    %v712 = vcombine.high %v523, %v523
    %v714 = vunpack.c.l.s4 1983009808
    %v715 = vunpack.c.0.s8 %v714
    %v716 = vlaneseq
    %v717 = vshrl.u32 %v716, 7
    %v718 = vsub.s32 %v715, %v717
    %v719 = vrot.slane %v523, %v718
    %v721 = vunpack.c.l.s4 1983009808
    %v722 = vunpack.c.0.s8 %v721
    %v723 = vlaneseq
    %v724 = vshrl.u32 %v723, 7
    %v725 = vsub.s32 %v722, %v724
    %v726 = vrot.slane %v712, %v725
    %v727 = vcombine.high %v719, %v719
    %v728 = vld [vmem:[%s3 + $0x20] sm:$0xff]
    %v729 = vld [vmem:[%s3 + $0x28] sm:$0xff]
    %v730 = vld [vmem:[%s3 + $0x30] sm:$0xff]
    %v731 = vld [vmem:[%s3 + $0x38] sm:$0xff]
    %v732 = vcombine.low %v543, %v551
    %v733 = vcombine.low %v550, %v559
    %v735 = vunpack.c.l.s4 1983009808
    %v736 = vunpack.c.0.s8 %v735
    %v737 = vlaneseq
    %v738 = vshrl.u32 %v737, 7
    %v739 = vsub.s32 %v736, %v738
    %v740 = vrot.slane %v732, %v739
    %v742 = vunpack.c.l.s4 1983009808
    %v743 = vunpack.c.0.s8 %v742
    %v744 = vlaneseq
    %v745 = vshrl.u32 %v744, 7
    %v746 = vsub.s32 %v743, %v745
    %v747 = vrot.slane %v733, %v746
    %v748 = vcombine.low %v740, %v747
    %v749 = vcombine.low %v567, %v566
    %v750 = vcombine.low %v575, %v583
    %v752 = vunpack.c.l.s4 1983009808
    %v753 = vunpack.c.0.s8 %v752
    %v754 = vlaneseq
    %v755 = vshrl.u32 %v754, 7
    %v756 = vsub.s32 %v753, %v755
    %v757 = vrot.slane %v749, %v756
    %v759 = vunpack.c.l.s4 1983009808
    %v760 = vunpack.c.0.s8 %v759
    %v761 = vlaneseq
    %v762 = vshrl.u32 %v761, 7
    %v763 = vsub.s32 %v760, %v762
    %v764 = vrot.slane %v750, %v763
    %v765 = vcombine.low %v757, %v764
    %v766 = vcombine.low %v582, %v591
    %v767 = vcombine.low %v599, %v598
    %v769 = vunpack.c.l.s4 1983009808
    %v770 = vunpack.c.0.s8 %v769
    %v771 = vlaneseq
    %v772 = vshrl.u32 %v771, 7
    %v773 = vsub.s32 %v770, %v772
    %v774 = vrot.slane %v766, %v773
    %v776 = vunpack.c.l.s4 1983009808
    %v777 = vunpack.c.0.s8 %v776
    %v778 = vlaneseq
    %v779 = vshrl.u32 %v778, 7
    %v780 = vsub.s32 %v777, %v779
    %v781 = vrot.slane %v767, %v780
    %v782 = vcombine.low %v774, %v781
    %v783 = vcombine.low %v607, %v615
    %v784 = vcombine.low %v614, %v623
    %v786 = vunpack.c.l.s4 1983009808
    %v787 = vunpack.c.0.s8 %v786
    %v788 = vlaneseq
    %v789 = vshrl.u32 %v788, 7
    %v790 = vsub.s32 %v787, %v789
    %v791 = vrot.slane %v783, %v790
    %v793 = vunpack.c.l.s4 1983009808
    %v794 = vunpack.c.0.s8 %v793
    %v795 = vlaneseq
    %v796 = vshrl.u32 %v795, 7
    %v797 = vsub.s32 %v794, %v796
    %v798 = vrot.slane %v784, %v797
    %v799 = vcombine.low %v791, %v798
    %v800 = vcombine.low %v631, %v630
    %v801 = vcombine.low %v639, %v647
    %v803 = vunpack.c.l.s4 1983009808
    %v804 = vunpack.c.0.s8 %v803
    %v805 = vlaneseq
    %v806 = vshrl.u32 %v805, 7
    %v807 = vsub.s32 %v804, %v806
    %v808 = vrot.slane %v800, %v807
    %v810 = vunpack.c.l.s4 1983009808
    %v811 = vunpack.c.0.s8 %v810
    %v812 = vlaneseq
    %v813 = vshrl.u32 %v812, 7
    %v814 = vsub.s32 %v811, %v813
    %v815 = vrot.slane %v801, %v814
    %v816 = vcombine.low %v808, %v815
    %v817 = vcombine.low %v646, %v655
    %v818 = vcombine.low %v663, %v662
    %v820 = vunpack.c.l.s4 1983009808
    %v821 = vunpack.c.0.s8 %v820
    %v822 = vlaneseq
    %v823 = vshrl.u32 %v822, 7
    %v824 = vsub.s32 %v821, %v823
    %v825 = vrot.slane %v817, %v824
    %v827 = vunpack.c.l.s4 1983009808
    %v828 = vunpack.c.0.s8 %v827
    %v829 = vlaneseq
    %v830 = vshrl.u32 %v829, 7
    %v831 = vsub.s32 %v828, %v830
    %v832 = vrot.slane %v818, %v831
    %v833 = vcombine.low %v825, %v832
    %v834 = vcombine.low %v671, %v679
    %v835 = vcombine.low %v678, %v687
    %v837 = vunpack.c.l.s4 1983009808
    %v838 = vunpack.c.0.s8 %v837
    %v839 = vlaneseq
    %v840 = vshrl.u32 %v839, 7
    %v841 = vsub.s32 %v838, %v840
    %v842 = vrot.slane %v834, %v841
    %v844 = vunpack.c.l.s4 1983009808
    %v845 = vunpack.c.0.s8 %v844
    %v846 = vlaneseq
    %v847 = vshrl.u32 %v846, 7
    %v848 = vsub.s32 %v845, %v847
    %v849 = vrot.slane %v835, %v848
    %v850 = vcombine.low %v842, %v849
    %v851 = vcombine.low %v695, %v694
    %v852 = vcombine.low %v703, %v711
    %v854 = vunpack.c.l.s4 1983009808
    %v855 = vunpack.c.0.s8 %v854
    %v856 = vlaneseq
    %v857 = vshrl.u32 %v856, 7
    %v858 = vsub.s32 %v855, %v857
    %v859 = vrot.slane %v851, %v858
    %v861 = vunpack.c.l.s4 1983009808
    %v862 = vunpack.c.0.s8 %v861
    %v863 = vlaneseq
    %v864 = vshrl.u32 %v863, 7
    %v865 = vsub.s32 %v862, %v864
    %v866 = vrot.slane %v852, %v865
    %v867 = vcombine.low %v859, %v866
    %v868 = vcombine.low %v710, %v719
    %v869 = vcombine.low %v727, %v726
    %v871 = vunpack.c.l.s4 1983009808
    %v872 = vunpack.c.0.s8 %v871
    %v873 = vlaneseq
    %v874 = vshrl.u32 %v873, 7
    %v875 = vsub.s32 %v872, %v874
    %v876 = vrot.slane %v868, %v875
    %v878 = vunpack.c.l.s4 1983009808
    %v879 = vunpack.c.0.s8 %v878
    %v880 = vlaneseq
    %v881 = vshrl.u32 %v880, 7
    %v882 = vsub.s32 %v879, %v881
    %v883 = vrot.slane %v869, %v882
    %v884 = vcombine.low %v876, %v883
    %v885 = vsel %vm275, %v748, 0
    %v887 = vsel %vm275, %v765, 0
    %v889 = vsel %vm275, %v782, 0
    %v891 = vsel %vm275, %v799, 0
    %v893 = vsel %vm275, %v816, 0
    %v895 = vsel %vm275, %v833, 0
    %v897 = vsel %vm275, %v850, 0
    %v899 = vsel %vm275, %v867, 0
    %v901 = vsel %vm275, %v884, 0
    %903 = vmatprep.subr.mxu0 0.0
    %904 = vmatpush1.msra.mxu0 0.0
    %905 = vmatprep.subr.mxu0 0.0
    %906 = vmatpush1.msra.mxu0 0.0
    %907 = vmatprep.subr.mxu0 0.0
    %908 = vmatpush1.msra.mxu0 0.0
    %909 = vmatprep.subr.mxu0 0.0
    %910 = vmatpush1.msra.mxu0 0.0
    %911 = vmatprep.subr.mxu0 0.0
    %912 = vmatpush1.msra.mxu0 0.0
    %913 = vmatprep.subr.mxu0 0.0
    %914 = vmatpush1.msra.mxu0 0.0
    %915 = vmatprep.subr.mxu0 0.0
    %916 = vmatpush1.msra.mxu0 0.0
    %917 = vmatprep.subr.mxu0 0.0
    %918 = vmatpush1.msra.mxu0 0.0
    %919 = vmatprep.subr.mxu0 0.0
    %920 = vmatpush1.msra.mxu0 0.0
    %921 = vmatprep.subr.mxu0 0.0
    %922 = vmatpush1.msra.mxu0 0.0
    %923 = vmatprep.subr.mxu0 0.0
    %924 = vmatpush1.msra.mxu0 0.0
    %925 = vmatprep.subr.mxu0 0.0
    %926 = vmatpush1.msra.mxu0 0.0
    %927 = vmatprep.subr.mxu0 0.0
    %928 = vmatpush1.msra.mxu0 %v731
    %929 = vmatprep.subr.mxu0 0.0
    %930 = vmatpush1.msra.mxu0 %v730
    %931 = vmatprep.subr.mxu0 0.0
    %932 = vmatpush1.msra.mxu0 %v729
    %933 = vmatprep.subr.mxu0 0.0
    %934 = vmatpush1.msra.mxu0 %v728
    %935 = vmatprep.subr.mxu0 0.0
    %936 = vmatpush2.msra.mxu0 0.0
    %937 = vmatprep.subr.mxu0 0.0
    %938 = vmatpush2.msra.mxu0 0.0
    %939 = vmatprep.subr.mxu0 0.0
    %940 = vmatpush2.msra.mxu0 0.0
    %941 = vmatprep.subr.mxu0 0.0
    %942 = vmatpush2.msra.mxu0 0.0
    %943 = vmatprep.subr.mxu0 0.0
    %944 = vmatpush2.msra.mxu0 0.0
    %945 = vmatprep.subr.mxu0 0.0
    %946 = vmatpush2.msra.mxu0 0.0
    %947 = vmatprep.subr.mxu0 0.0
    %948 = vmatpush2.msra.mxu0 0.0
    %949 = vmatprep.subr.mxu0 0.0
    %950 = vmatpush2.msra.mxu0 0.0
    %951 = vmatprep.subr.mxu0 0.0
    %952 = vmatpush2.msra.mxu0 0.0
    %953 = vmatprep.subr.mxu0 0.0
    %954 = vmatpush2.msra.mxu0 0.0
    %955 = vmatprep.subr.mxu0 0.0
    %956 = vmatpush2.msra.mxu0 0.0
    %957 = vmatprep.subr.mxu0 0.0
    %958 = vmatpush2.msra.mxu0 0.0
    %959 = vmatprep.subr.mxu0 0.0
    %960 = vmatpush2.msra.mxu0 0.0
    %961 = vmatprep.subr.mxu0 0.0
    %962 = vmatpush2.msra.mxu0 0.0
    %963 = vmatprep.subr.mxu0 0.0
    %964 = vmatpush2.msra.mxu0 0.0
    %965 = vmatprep.subr.mxu0 0.0
    %966 = vmatpush2.msra.mxu0 0.0
    %967 = vmatprep.mubr.f32.mxu0 0.0
    %968 = vmatmul.mubr.f32.gmra.mxu0 %v885
    %v969 = vpop.f32.mrf.mxu0
    %v970 = vadd.f32 0.0, %v969
    %v971 = vpop.f32.mrf.mxu0
    %972 = vmatprep.mubr.f32.mxu0 0.0
    %973 = vmatmul.mubr.f32.gmra.mxu0 %v887
    %v974 = vpop.f32.mrf.mxu0
    %v975 = vadd.f32 0.0, %v974
    %v976 = vpop.f32.mrf.mxu0
    %977 = vmatprep.mubr.f32.mxu0 0.0
    %978 = vmatmul.mubr.f32.gmra.mxu0 %v889
    %v979 = vpop.f32.mrf.mxu0
    %v980 = vadd.f32 0.0, %v979
    %v981 = vpop.f32.mrf.mxu0
    %982 = vmatprep.mubr.f32.mxu0 0.0
    %983 = vmatmul.mubr.f32.gmra.mxu0 %v891
    %v984 = vpop.f32.mrf.mxu0
    %v985 = vadd.f32 0.0, %v984
    %v986 = vpop.f32.mrf.mxu0
    %987 = vmatprep.mubr.f32.mxu0 0.0
    %988 = vmatmul.mubr.f32.gmra.mxu0 %v893
    %v989 = vpop.f32.mrf.mxu0
    %v990 = vadd.f32 0.0, %v989
    %v991 = vpop.f32.mrf.mxu0
    %992 = vmatprep.mubr.f32.mxu0 0.0
    %993 = vmatmul.mubr.f32.gmra.mxu0 %v895
    %v994 = vpop.f32.mrf.mxu0
    %v995 = vadd.f32 0.0, %v994
    %v996 = vpop.f32.mrf.mxu0
    %997 = vmatprep.mubr.f32.mxu0 0.0
    %998 = vmatmul.mubr.f32.gmra.mxu0 %v897
    %v999 = vpop.f32.mrf.mxu0
    %v1000 = vadd.f32 0.0, %v999
    %v1001 = vpop.f32.mrf.mxu0
    %1002 = vmatprep.mubr.f32.mxu0 0.0
    %1003 = vmatmul.mubr.f32.gmra.mxu0 %v899
    %v1004 = vpop.f32.mrf.mxu0
    %v1005 = vadd.f32 0.0, %v1004
    %v1006 = vpop.f32.mrf.mxu0
    %1007 = vmatprep.mubr.f32.mxu0 0.0
    %1008 = vmatmul.mubr.f32.gmra.mxu0 %v901
    %v1009 = vpop.f32.mrf.mxu0
    %v1010 = vadd.f32 0.0, %v1009
    %v1011 = vpop.f32.mrf.mxu0
    %1012 = vdwg.mxu0
    %v1013 = vcombine.low %v323, %v331
    %v1014 = vcombine.low %v330, %v339
    %v1016 = vunpack.c.l.s4 1983009808
    %v1017 = vunpack.c.0.s8 %v1016
    %v1018 = vlaneseq
    %v1019 = vshrl.u32 %v1018, 7
    %v1020 = vsub.s32 %v1017, %v1019
    %v1021 = vrot.slane %v1013, %v1020
    %v1023 = vunpack.c.l.s4 1983009808
    %v1024 = vunpack.c.0.s8 %v1023
    %v1025 = vlaneseq
    %v1026 = vshrl.u32 %v1025, 7
    %v1027 = vsub.s32 %v1024, %v1026
    %v1028 = vrot.slane %v1014, %v1027
    %v1029 = vcombine.low %v1021, %v1028
    %v1030 = vcombine.low %v347, %v346
    %v1031 = vcombine.low %v355, %v363
    %v1033 = vunpack.c.l.s4 1983009808
    %v1034 = vunpack.c.0.s8 %v1033
    %v1035 = vlaneseq
    %v1036 = vshrl.u32 %v1035, 7
    %v1037 = vsub.s32 %v1034, %v1036
    %v1038 = vrot.slane %v1030, %v1037
    %v1040 = vunpack.c.l.s4 1983009808
    %v1041 = vunpack.c.0.s8 %v1040
    %v1042 = vlaneseq
    %v1043 = vshrl.u32 %v1042, 7
    %v1044 = vsub.s32 %v1041, %v1043
    %v1045 = vrot.slane %v1031, %v1044
    %v1046 = vcombine.low %v1038, %v1045
    %v1047 = vcombine.low %v362, %v371
    %v1048 = vcombine.low %v379, %v378
    %v1050 = vunpack.c.l.s4 1983009808
    %v1051 = vunpack.c.0.s8 %v1050
    %v1052 = vlaneseq
    %v1053 = vshrl.u32 %v1052, 7
    %v1054 = vsub.s32 %v1051, %v1053
    %v1055 = vrot.slane %v1047, %v1054
    %v1057 = vunpack.c.l.s4 1983009808
    %v1058 = vunpack.c.0.s8 %v1057
    %v1059 = vlaneseq
    %v1060 = vshrl.u32 %v1059, 7
    %v1061 = vsub.s32 %v1058, %v1060
    %v1062 = vrot.slane %v1048, %v1061
    %v1063 = vcombine.low %v1055, %v1062
    %v1064 = vcombine.low %v387, %v395
    %v1065 = vcombine.low %v394, %v403
    %v1067 = vunpack.c.l.s4 1983009808
    %v1068 = vunpack.c.0.s8 %v1067
    %v1069 = vlaneseq
    %v1070 = vshrl.u32 %v1069, 7
    %v1071 = vsub.s32 %v1068, %v1070
    %v1072 = vrot.slane %v1064, %v1071
    %v1074 = vunpack.c.l.s4 1983009808
    %v1075 = vunpack.c.0.s8 %v1074
    %v1076 = vlaneseq
    %v1077 = vshrl.u32 %v1076, 7
    %v1078 = vsub.s32 %v1075, %v1077
    %v1079 = vrot.slane %v1065, %v1078
    %v1080 = vcombine.low %v1072, %v1079
    %v1081 = vcombine.low %v411, %v410
    %v1082 = vcombine.low %v419, %v427
    %v1084 = vunpack.c.l.s4 1983009808
    %v1085 = vunpack.c.0.s8 %v1084
    %v1086 = vlaneseq
    %v1087 = vshrl.u32 %v1086, 7
    %v1088 = vsub.s32 %v1085, %v1087
    %v1089 = vrot.slane %v1081, %v1088
    %v1091 = vunpack.c.l.s4 1983009808
    %v1092 = vunpack.c.0.s8 %v1091
    %v1093 = vlaneseq
    %v1094 = vshrl.u32 %v1093, 7
    %v1095 = vsub.s32 %v1092, %v1094
    %v1096 = vrot.slane %v1082, %v1095
    %v1097 = vcombine.low %v1089, %v1096
    %v1098 = vcombine.low %v426, %v435
    %v1099 = vcombine.low %v443, %v442
    %v1101 = vunpack.c.l.s4 1983009808
    %v1102 = vunpack.c.0.s8 %v1101
    %v1103 = vlaneseq
    %v1104 = vshrl.u32 %v1103, 7
    %v1105 = vsub.s32 %v1102, %v1104
    %v1106 = vrot.slane %v1098, %v1105
    %v1108 = vunpack.c.l.s4 1983009808
    %v1109 = vunpack.c.0.s8 %v1108
    %v1110 = vlaneseq
    %v1111 = vshrl.u32 %v1110, 7
    %v1112 = vsub.s32 %v1109, %v1111
    %v1113 = vrot.slane %v1099, %v1112
    %v1114 = vcombine.low %v1106, %v1113
    %v1115 = vcombine.low %v451, %v459
    %v1116 = vcombine.low %v458, %v467
    %v1118 = vunpack.c.l.s4 1983009808
    %v1119 = vunpack.c.0.s8 %v1118
    %v1120 = vlaneseq
    %v1121 = vshrl.u32 %v1120, 7
    %v1122 = vsub.s32 %v1119, %v1121
    %v1123 = vrot.slane %v1115, %v1122
    %v1125 = vunpack.c.l.s4 1983009808
    %v1126 = vunpack.c.0.s8 %v1125
    %v1127 = vlaneseq
    %v1128 = vshrl.u32 %v1127, 7
    %v1129 = vsub.s32 %v1126, %v1128
    %v1130 = vrot.slane %v1116, %v1129
    %v1131 = vcombine.low %v1123, %v1130
    %v1132 = vcombine.low %v475, %v474
    %v1133 = vcombine.low %v483, %v491
    %v1135 = vunpack.c.l.s4 1983009808
    %v1136 = vunpack.c.0.s8 %v1135
    %v1137 = vlaneseq
    %v1138 = vshrl.u32 %v1137, 7
    %v1139 = vsub.s32 %v1136, %v1138
    %v1140 = vrot.slane %v1132, %v1139
    %v1142 = vunpack.c.l.s4 1983009808
    %v1143 = vunpack.c.0.s8 %v1142
    %v1144 = vlaneseq
    %v1145 = vshrl.u32 %v1144, 7
    %v1146 = vsub.s32 %v1143, %v1145
    %v1147 = vrot.slane %v1133, %v1146
    %v1148 = vcombine.low %v1140, %v1147
    %v1149 = vcombine.low %v490, %v499
    %v1150 = vcombine.low %v507, %v506
    %v1152 = vunpack.c.l.s4 1983009808
    %v1153 = vunpack.c.0.s8 %v1152
    %v1154 = vlaneseq
    %v1155 = vshrl.u32 %v1154, 7
    %v1156 = vsub.s32 %v1153, %v1155
    %v1157 = vrot.slane %v1149, %v1156
    %v1159 = vunpack.c.l.s4 1983009808
    %v1160 = vunpack.c.0.s8 %v1159
    %v1161 = vlaneseq
    %v1162 = vshrl.u32 %v1161, 7
    %v1163 = vsub.s32 %v1160, %v1162
    %v1164 = vrot.slane %v1150, %v1163
    %v1165 = vcombine.low %v1157, %v1164
    %v1166 = vsel %vm275, %v1029, 0
    %v1168 = vsel %vm275, %v1046, 0
    %v1170 = vsel %vm275, %v1063, 0
    %v1172 = vsel %vm275, %v1080, 0
    %v1174 = vsel %vm275, %v1097, 0
    %v1176 = vsel %vm275, %v1114, 0
    %v1178 = vsel %vm275, %v1131, 0
    %v1180 = vsel %vm275, %v1148, 0
    %v1182 = vsel %vm275, %v1165, 0
    %1184 = vmatprep.subr.mxu0 0.0
    %1185 = vmatpush1.msra.mxu0 0.0
    %1186 = vmatprep.subr.mxu0 0.0
    %1187 = vmatpush1.msra.mxu0 0.0
    %1188 = vmatprep.subr.mxu0 0.0
    %1189 = vmatpush1.msra.mxu0 0.0
    %1190 = vmatprep.subr.mxu0 0.0
    %1191 = vmatpush1.msra.mxu0 0.0
    %1192 = vmatprep.subr.mxu0 0.0
    %1193 = vmatpush1.msra.mxu0 0.0
    %1194 = vmatprep.subr.mxu0 0.0
    %1195 = vmatpush1.msra.mxu0 0.0
    %1196 = vmatprep.subr.mxu0 0.0
    %1197 = vmatpush1.msra.mxu0 0.0
    %1198 = vmatprep.subr.mxu0 0.0
    %1199 = vmatpush1.msra.mxu0 0.0
    %1200 = vmatprep.subr.mxu0 0.0
    %1201 = vmatpush1.msra.mxu0 0.0
    %1202 = vmatprep.subr.mxu0 0.0
    %1203 = vmatpush1.msra.mxu0 0.0
    %1204 = vmatprep.subr.mxu0 0.0
    %1205 = vmatpush1.msra.mxu0 0.0
    %1206 = vmatprep.subr.mxu0 0.0
    %1207 = vmatpush1.msra.mxu0 0.0
    %1208 = vmatprep.subr.mxu0 0.0
    %1209 = vmatpush1.msra.mxu0 %v511
    %1210 = vmatprep.subr.mxu0 0.0
    %1211 = vmatpush1.msra.mxu0 %v510
    %1212 = vmatprep.subr.mxu0 0.0
    %1213 = vmatpush1.msra.mxu0 %v509
    %1214 = vmatprep.subr.mxu0 0.0
    %1215 = vmatpush1.msra.mxu0 %v508
    %1216 = vmatprep.subr.mxu0 0.0
    %1217 = vmatpush2.msra.mxu0 0.0
    %1218 = vmatprep.subr.mxu0 0.0
    %1219 = vmatpush2.msra.mxu0 0.0
    %1220 = vmatprep.subr.mxu0 0.0
    %1221 = vmatpush2.msra.mxu0 0.0
    %1222 = vmatprep.subr.mxu0 0.0
    %1223 = vmatpush2.msra.mxu0 0.0
    %1224 = vmatprep.subr.mxu0 0.0
    %1225 = vmatpush2.msra.mxu0 0.0
    %1226 = vmatprep.subr.mxu0 0.0
    %1227 = vmatpush2.msra.mxu0 0.0
    %1228 = vmatprep.subr.mxu0 0.0
    %1229 = vmatpush2.msra.mxu0 0.0
    %1230 = vmatprep.subr.mxu0 0.0
    %1231 = vmatpush2.msra.mxu0 0.0
    %1232 = vmatprep.subr.mxu0 0.0
    %1233 = vmatpush2.msra.mxu0 0.0
    %1234 = vmatprep.subr.mxu0 0.0
    %1235 = vmatpush2.msra.mxu0 0.0
    %1236 = vmatprep.subr.mxu0 0.0
    %1237 = vmatpush2.msra.mxu0 0.0
    %1238 = vmatprep.subr.mxu0 0.0
    %1239 = vmatpush2.msra.mxu0 0.0
    %1240 = vmatprep.subr.mxu0 0.0
    %1241 = vmatpush2.msra.mxu0 0.0
    %1242 = vmatprep.subr.mxu0 0.0
    %1243 = vmatpush2.msra.mxu0 0.0
    %1244 = vmatprep.subr.mxu0 0.0
    %1245 = vmatpush2.msra.mxu0 0.0
    %1246 = vmatprep.subr.mxu0 0.0
    %1247 = vmatpush2.msra.mxu0 0.0
    %1248 = vmatprep.mubr.f32.mxu0 0.0
    %1249 = vmatmul.mubr.f32.gmra.mxu0 %v1166
    %v1250 = vpop.f32.mrf.mxu0
    %v1251 = vadd.f32 %v970, %v1250
    %v1252 = vpop.f32.mrf.mxu0
    %1253 = vmatprep.mubr.f32.mxu0 0.0
    %1254 = vmatmul.mubr.f32.gmra.mxu0 %v1168
    %v1255 = vpop.f32.mrf.mxu0
    %v1256 = vadd.f32 %v975, %v1255
    %v1257 = vpop.f32.mrf.mxu0
    %1258 = vmatprep.mubr.f32.mxu0 0.0
    %1259 = vmatmul.mubr.f32.gmra.mxu0 %v1170
    %v1260 = vpop.f32.mrf.mxu0
    %v1261 = vadd.f32 %v980, %v1260
    %v1262 = vpop.f32.mrf.mxu0
    %1263 = vmatprep.mubr.f32.mxu0 0.0
    %1264 = vmatmul.mubr.f32.gmra.mxu0 %v1172
    %v1265 = vpop.f32.mrf.mxu0
    %v1266 = vadd.f32 %v985, %v1265
    %v1267 = vpop.f32.mrf.mxu0
    %1268 = vmatprep.mubr.f32.mxu0 0.0
    %1269 = vmatmul.mubr.f32.gmra.mxu0 %v1174
    %v1270 = vpop.f32.mrf.mxu0
    %v1271 = vadd.f32 %v990, %v1270
    %v1272 = vpop.f32.mrf.mxu0
    %1273 = vmatprep.mubr.f32.mxu0 0.0
    %1274 = vmatmul.mubr.f32.gmra.mxu0 %v1176
    %v1275 = vpop.f32.mrf.mxu0
    %v1276 = vadd.f32 %v995, %v1275
    %v1277 = vpop.f32.mrf.mxu0
    %1278 = vmatprep.mubr.f32.mxu0 0.0
    %1279 = vmatmul.mubr.f32.gmra.mxu0 %v1178
    %v1280 = vpop.f32.mrf.mxu0
    %v1281 = vadd.f32 %v1000, %v1280
    %v1282 = vpop.f32.mrf.mxu0
    %1283 = vmatprep.mubr.f32.mxu0 0.0
    %1284 = vmatmul.mubr.f32.gmra.mxu0 %v1180
    %v1285 = vpop.f32.mrf.mxu0
    %v1286 = vadd.f32 %v1005, %v1285
    %v1287 = vpop.f32.mrf.mxu0
    %1288 = vmatprep.mubr.f32.mxu0 0.0
    %1289 = vmatmul.mubr.f32.gmra.mxu0 %v1182
    %v1290 = vpop.f32.mrf.mxu0
    %v1291 = vadd.f32 %v1010, %v1290
    %v1292 = vpop.f32.mrf.mxu0
    %1293 = vdwg.mxu0
    %v1294 = vld [vmem:[#allocation2 + $0x2] sm:$0x3f]
    %v1295 = vld [vmem:[#allocation2 + $0xa] sm:$0x3f]
    %v1296 = vld [vmem:[#allocation2 + $0x12] sm:$0x3f]
    %v1297 = vld [vmem:[#allocation2 + $0x1a] sm:$0x3f]
    %v1298 = vld [vmem:[#allocation2 + $0x22] sm:$0x3f]
    %v1299 = vld [vmem:[#allocation2 + $0x2a] sm:$0x3f]
    %v1300 = vld [vmem:[#allocation2 + $0x42] sm:$0x3f]
    %v1301 = vld [vmem:[#allocation2 + $0x4a] sm:$0x3f]
    %v1302 = vld [vmem:[#allocation2 + $0x52] sm:$0x3f]
    %v1303 = vld [vmem:[#allocation2 + $0x5a] sm:$0x3f]
    %v1304 = vld [vmem:[#allocation2 + $0x62] sm:$0x3f]
    %v1305 = vld [vmem:[#allocation2 + $0x6a] sm:$0x3f]
    %v1318 = vcombine.high %v1294, %v1294
    %v1320 = vunpack.c.l.s4 1983009808
    %v1321 = vunpack.c.0.s8 %v1320
    %v1322 = vlaneseq
    %v1323 = vshrl.u32 %v1322, 7
    %v1324 = vsub.s32 %v1321, %v1323
    %v1325 = vrot.slane %v1294, %v1324
    %v1327 = vunpack.c.l.s4 1983009808
    %v1328 = vunpack.c.0.s8 %v1327
    %v1329 = vlaneseq
    %v1330 = vshrl.u32 %v1329, 7
    %v1331 = vsub.s32 %v1328, %v1330
    %v1332 = vrot.slane %v1318, %v1331
    %v1333 = vcombine.high %v1325, %v1325
    %v1334 = vcombine.high %v1295, %v1295
    %v1336 = vunpack.c.l.s4 1983009808
    %v1337 = vunpack.c.0.s8 %v1336
    %v1338 = vlaneseq
    %v1339 = vshrl.u32 %v1338, 7
    %v1340 = vsub.s32 %v1337, %v1339
    %v1341 = vrot.slane %v1295, %v1340
    %v1343 = vunpack.c.l.s4 1983009808
    %v1344 = vunpack.c.0.s8 %v1343
    %v1345 = vlaneseq
    %v1346 = vshrl.u32 %v1345, 7
    %v1347 = vsub.s32 %v1344, %v1346
    %v1348 = vrot.slane %v1334, %v1347
    %v1349 = vcombine.high %v1341, %v1341
    %v1350 = vcombine.high %v1296, %v1296
    %v1352 = vunpack.c.l.s4 1983009808
    %v1353 = vunpack.c.0.s8 %v1352
    %v1354 = vlaneseq
    %v1355 = vshrl.u32 %v1354, 7
    %v1356 = vsub.s32 %v1353, %v1355
    %v1357 = vrot.slane %v1296, %v1356
    %v1359 = vunpack.c.l.s4 1983009808
    %v1360 = vunpack.c.0.s8 %v1359
    %v1361 = vlaneseq
    %v1362 = vshrl.u32 %v1361, 7
    %v1363 = vsub.s32 %v1360, %v1362
    %v1364 = vrot.slane %v1350, %v1363
    %v1365 = vcombine.high %v1357, %v1357
    %v1366 = vcombine.high %v1297, %v1297
    %v1368 = vunpack.c.l.s4 1983009808
    %v1369 = vunpack.c.0.s8 %v1368
    %v1370 = vlaneseq
    %v1371 = vshrl.u32 %v1370, 7
    %v1372 = vsub.s32 %v1369, %v1371
    %v1373 = vrot.slane %v1297, %v1372
    %v1375 = vunpack.c.l.s4 1983009808
    %v1376 = vunpack.c.0.s8 %v1375
    %v1377 = vlaneseq
    %v1378 = vshrl.u32 %v1377, 7
    %v1379 = vsub.s32 %v1376, %v1378
    %v1380 = vrot.slane %v1366, %v1379
    %v1381 = vcombine.high %v1373, %v1373
    %v1382 = vcombine.high %v1298, %v1298
    %v1384 = vunpack.c.l.s4 1983009808
    %v1385 = vunpack.c.0.s8 %v1384
    %v1386 = vlaneseq
    %v1387 = vshrl.u32 %v1386, 7
    %v1388 = vsub.s32 %v1385, %v1387
    %v1389 = vrot.slane %v1298, %v1388
    %v1391 = vunpack.c.l.s4 1983009808
    %v1392 = vunpack.c.0.s8 %v1391
    %v1393 = vlaneseq
    %v1394 = vshrl.u32 %v1393, 7
    %v1395 = vsub.s32 %v1392, %v1394
    %v1396 = vrot.slane %v1382, %v1395
    %v1397 = vcombine.high %v1389, %v1389
    %v1398 = vcombine.high %v1299, %v1299
    %v1400 = vunpack.c.l.s4 1983009808
    %v1401 = vunpack.c.0.s8 %v1400
    %v1402 = vlaneseq
    %v1403 = vshrl.u32 %v1402, 7
    %v1404 = vsub.s32 %v1401, %v1403
    %v1405 = vrot.slane %v1299, %v1404
    %v1407 = vunpack.c.l.s4 1983009808
    %v1408 = vunpack.c.0.s8 %v1407
    %v1409 = vlaneseq
    %v1410 = vshrl.u32 %v1409, 7
    %v1411 = vsub.s32 %v1408, %v1410
    %v1412 = vrot.slane %v1398, %v1411
    %v1413 = vcombine.high %v1405, %v1405
    %v1414 = vcombine.high %v1300, %v1300
    %v1416 = vunpack.c.l.s4 1983009808
    %v1417 = vunpack.c.0.s8 %v1416
    %v1418 = vlaneseq
    %v1419 = vshrl.u32 %v1418, 7
    %v1420 = vsub.s32 %v1417, %v1419
    %v1421 = vrot.slane %v1300, %v1420
    %v1423 = vunpack.c.l.s4 1983009808
    %v1424 = vunpack.c.0.s8 %v1423
    %v1425 = vlaneseq
    %v1426 = vshrl.u32 %v1425, 7
    %v1427 = vsub.s32 %v1424, %v1426
    %v1428 = vrot.slane %v1414, %v1427
    %v1429 = vcombine.high %v1421, %v1421
    %v1430 = vcombine.high %v1301, %v1301
    %v1432 = vunpack.c.l.s4 1983009808
    %v1433 = vunpack.c.0.s8 %v1432
    %v1434 = vlaneseq
    %v1435 = vshrl.u32 %v1434, 7
    %v1436 = vsub.s32 %v1433, %v1435
    %v1437 = vrot.slane %v1301, %v1436
    %v1439 = vunpack.c.l.s4 1983009808
    %v1440 = vunpack.c.0.s8 %v1439
    %v1441 = vlaneseq
    %v1442 = vshrl.u32 %v1441, 7
    %v1443 = vsub.s32 %v1440, %v1442
    %v1444 = vrot.slane %v1430, %v1443
    %v1445 = vcombine.high %v1437, %v1437
    %v1446 = vcombine.high %v1302, %v1302
    %v1448 = vunpack.c.l.s4 1983009808
    %v1449 = vunpack.c.0.s8 %v1448
    %v1450 = vlaneseq
    %v1451 = vshrl.u32 %v1450, 7
    %v1452 = vsub.s32 %v1449, %v1451
    %v1453 = vrot.slane %v1302, %v1452
    %v1455 = vunpack.c.l.s4 1983009808
    %v1456 = vunpack.c.0.s8 %v1455
    %v1457 = vlaneseq
    %v1458 = vshrl.u32 %v1457, 7
    %v1459 = vsub.s32 %v1456, %v1458
    %v1460 = vrot.slane %v1446, %v1459
    %v1461 = vcombine.high %v1453, %v1453
    %v1462 = vcombine.high %v1303, %v1303
    %v1464 = vunpack.c.l.s4 1983009808
    %v1465 = vunpack.c.0.s8 %v1464
    %v1466 = vlaneseq
    %v1467 = vshrl.u32 %v1466, 7
    %v1468 = vsub.s32 %v1465, %v1467
    %v1469 = vrot.slane %v1303, %v1468
    %v1471 = vunpack.c.l.s4 1983009808
    %v1472 = vunpack.c.0.s8 %v1471
    %v1473 = vlaneseq
    %v1474 = vshrl.u32 %v1473, 7
    %v1475 = vsub.s32 %v1472, %v1474
    %v1476 = vrot.slane %v1462, %v1475
    %v1477 = vcombine.high %v1469, %v1469
    %v1478 = vcombine.high %v1304, %v1304
    %v1480 = vunpack.c.l.s4 1983009808
    %v1481 = vunpack.c.0.s8 %v1480
    %v1482 = vlaneseq
    %v1483 = vshrl.u32 %v1482, 7
    %v1484 = vsub.s32 %v1481, %v1483
    %v1485 = vrot.slane %v1304, %v1484
    %v1487 = vunpack.c.l.s4 1983009808
    %v1488 = vunpack.c.0.s8 %v1487
    %v1489 = vlaneseq
    %v1490 = vshrl.u32 %v1489, 7
    %v1491 = vsub.s32 %v1488, %v1490
    %v1492 = vrot.slane %v1478, %v1491
    %v1493 = vcombine.high %v1485, %v1485
    %v1494 = vcombine.high %v1305, %v1305
    %v1496 = vunpack.c.l.s4 1983009808
    %v1497 = vunpack.c.0.s8 %v1496
    %v1498 = vlaneseq
    %v1499 = vshrl.u32 %v1498, 7
    %v1500 = vsub.s32 %v1497, %v1499
    %v1501 = vrot.slane %v1305, %v1500
    %v1503 = vunpack.c.l.s4 1983009808
    %v1504 = vunpack.c.0.s8 %v1503
    %v1505 = vlaneseq
    %v1506 = vshrl.u32 %v1505, 7
    %v1507 = vsub.s32 %v1504, %v1506
    %v1508 = vrot.slane %v1494, %v1507
    %v1509 = vcombine.high %v1501, %v1501
    %v1510 = vld [vmem:[%s3 + $0x40] sm:$0xff]
    %v1511 = vld [vmem:[%s3 + $0x48] sm:$0xff]
    %v1512 = vld [vmem:[%s3 + $0x50] sm:$0xff]
    %v1513 = vld [vmem:[%s3 + $0x58] sm:$0xff]
    %v1514 = vcombine.low %v1325, %v1333
    %v1515 = vcombine.low %v1332, %v1341
    %v1517 = vunpack.c.l.s4 1983009808
    %v1518 = vunpack.c.0.s8 %v1517
    %v1519 = vlaneseq
    %v1520 = vshrl.u32 %v1519, 7
    %v1521 = vsub.s32 %v1518, %v1520
    %v1522 = vrot.slane %v1514, %v1521
    %v1524 = vunpack.c.l.s4 1983009808
    %v1525 = vunpack.c.0.s8 %v1524
    %v1526 = vlaneseq
    %v1527 = vshrl.u32 %v1526, 7
    %v1528 = vsub.s32 %v1525, %v1527
    %v1529 = vrot.slane %v1515, %v1528
    %v1530 = vcombine.low %v1522, %v1529
    %v1531 = vcombine.low %v1349, %v1348
    %v1532 = vcombine.low %v1357, %v1365
    %v1534 = vunpack.c.l.s4 1983009808
    %v1535 = vunpack.c.0.s8 %v1534
    %v1536 = vlaneseq
    %v1537 = vshrl.u32 %v1536, 7
    %v1538 = vsub.s32 %v1535, %v1537
    %v1539 = vrot.slane %v1531, %v1538
    %v1541 = vunpack.c.l.s4 1983009808
    %v1542 = vunpack.c.0.s8 %v1541
    %v1543 = vlaneseq
    %v1544 = vshrl.u32 %v1543, 7
    %v1545 = vsub.s32 %v1542, %v1544
    %v1546 = vrot.slane %v1532, %v1545
    %v1547 = vcombine.low %v1539, %v1546
    %v1548 = vcombine.low %v1364, %v1373
    %v1549 = vcombine.low %v1381, %v1380
    %v1551 = vunpack.c.l.s4 1983009808
    %v1552 = vunpack.c.0.s8 %v1551
    %v1553 = vlaneseq
    %v1554 = vshrl.u32 %v1553, 7
    %v1555 = vsub.s32 %v1552, %v1554
    %v1556 = vrot.slane %v1548, %v1555
    %v1558 = vunpack.c.l.s4 1983009808
    %v1559 = vunpack.c.0.s8 %v1558
    %v1560 = vlaneseq
    %v1561 = vshrl.u32 %v1560, 7
    %v1562 = vsub.s32 %v1559, %v1561
    %v1563 = vrot.slane %v1549, %v1562
    %v1564 = vcombine.low %v1556, %v1563
    %v1565 = vcombine.low %v1389, %v1397
    %v1566 = vcombine.low %v1396, %v1405
    %v1568 = vunpack.c.l.s4 1983009808
    %v1569 = vunpack.c.0.s8 %v1568
    %v1570 = vlaneseq
    %v1571 = vshrl.u32 %v1570, 7
    %v1572 = vsub.s32 %v1569, %v1571
    %v1573 = vrot.slane %v1565, %v1572
    %v1575 = vunpack.c.l.s4 1983009808
    %v1576 = vunpack.c.0.s8 %v1575
    %v1577 = vlaneseq
    %v1578 = vshrl.u32 %v1577, 7
    %v1579 = vsub.s32 %v1576, %v1578
    %v1580 = vrot.slane %v1566, %v1579
    %v1581 = vcombine.low %v1573, %v1580
    %v1582 = vcombine.low %v1413, %v1412
    %v1583 = vcombine.low %v1421, %v1429
    %v1585 = vunpack.c.l.s4 1983009808
    %v1586 = vunpack.c.0.s8 %v1585
    %v1587 = vlaneseq
    %v1588 = vshrl.u32 %v1587, 7
    %v1589 = vsub.s32 %v1586, %v1588
    %v1590 = vrot.slane %v1582, %v1589
    %v1592 = vunpack.c.l.s4 1983009808
    %v1593 = vunpack.c.0.s8 %v1592
    %v1594 = vlaneseq
    %v1595 = vshrl.u32 %v1594, 7
    %v1596 = vsub.s32 %v1593, %v1595
    %v1597 = vrot.slane %v1583, %v1596
    %v1598 = vcombine.low %v1590, %v1597
    %v1599 = vcombine.low %v1428, %v1437
    %v1600 = vcombine.low %v1445, %v1444
    %v1602 = vunpack.c.l.s4 1983009808
    %v1603 = vunpack.c.0.s8 %v1602
    %v1604 = vlaneseq
    %v1605 = vshrl.u32 %v1604, 7
    %v1606 = vsub.s32 %v1603, %v1605
    %v1607 = vrot.slane %v1599, %v1606
    %v1609 = vunpack.c.l.s4 1983009808
    %v1610 = vunpack.c.0.s8 %v1609
    %v1611 = vlaneseq
    %v1612 = vshrl.u32 %v1611, 7
    %v1613 = vsub.s32 %v1610, %v1612
    %v1614 = vrot.slane %v1600, %v1613
    %v1615 = vcombine.low %v1607, %v1614
    %v1616 = vcombine.low %v1453, %v1461
    %v1617 = vcombine.low %v1460, %v1469
    %v1619 = vunpack.c.l.s4 1983009808
    %v1620 = vunpack.c.0.s8 %v1619
    %v1621 = vlaneseq
    %v1622 = vshrl.u32 %v1621, 7
    %v1623 = vsub.s32 %v1620, %v1622
    %v1624 = vrot.slane %v1616, %v1623
    %v1626 = vunpack.c.l.s4 1983009808
    %v1627 = vunpack.c.0.s8 %v1626
    %v1628 = vlaneseq
    %v1629 = vshrl.u32 %v1628, 7
    %v1630 = vsub.s32 %v1627, %v1629
    %v1631 = vrot.slane %v1617, %v1630
    %v1632 = vcombine.low %v1624, %v1631
    %v1633 = vcombine.low %v1477, %v1476
    %v1634 = vcombine.low %v1485, %v1493
    %v1636 = vunpack.c.l.s4 1983009808
    %v1637 = vunpack.c.0.s8 %v1636
    %v1638 = vlaneseq
    %v1639 = vshrl.u32 %v1638, 7
    %v1640 = vsub.s32 %v1637, %v1639
    %v1641 = vrot.slane %v1633, %v1640
    %v1643 = vunpack.c.l.s4 1983009808
    %v1644 = vunpack.c.0.s8 %v1643
    %v1645 = vlaneseq
    %v1646 = vshrl.u32 %v1645, 7
    %v1647 = vsub.s32 %v1644, %v1646
    %v1648 = vrot.slane %v1634, %v1647
    %v1649 = vcombine.low %v1641, %v1648
    %v1650 = vcombine.low %v1492, %v1501
    %v1651 = vcombine.low %v1509, %v1508
    %v1653 = vunpack.c.l.s4 1983009808
    %v1654 = vunpack.c.0.s8 %v1653
    %v1655 = vlaneseq
    %v1656 = vshrl.u32 %v1655, 7
    %v1657 = vsub.s32 %v1654, %v1656
    %v1658 = vrot.slane %v1650, %v1657
    %v1660 = vunpack.c.l.s4 1983009808
    %v1661 = vunpack.c.0.s8 %v1660
    %v1662 = vlaneseq
    %v1663 = vshrl.u32 %v1662, 7
    %v1664 = vsub.s32 %v1661, %v1663
    %v1665 = vrot.slane %v1651, %v1664
    %v1666 = vcombine.low %v1658, %v1665
    %v1667 = vsel %vm275, %v1530, 0
    %v1669 = vsel %vm275, %v1547, 0
    %v1671 = vsel %vm275, %v1564, 0
    %v1673 = vsel %vm275, %v1581, 0
    %v1675 = vsel %vm275, %v1598, 0
    %v1677 = vsel %vm275, %v1615, 0
    %v1679 = vsel %vm275, %v1632, 0
    %v1681 = vsel %vm275, %v1649, 0
    %v1683 = vsel %vm275, %v1666, 0
    %1685 = vmatprep.subr.mxu0 0.0
    %1686 = vmatpush1.msra.mxu0 0.0
    %1687 = vmatprep.subr.mxu0 0.0
    %1688 = vmatpush1.msra.mxu0 0.0
    %1689 = vmatprep.subr.mxu0 0.0
    %1690 = vmatpush1.msra.mxu0 0.0
    %1691 = vmatprep.subr.mxu0 0.0
    %1692 = vmatpush1.msra.mxu0 0.0
    %1693 = vmatprep.subr.mxu0 0.0
    %1694 = vmatpush1.msra.mxu0 0.0
    %1695 = vmatprep.subr.mxu0 0.0
    %1696 = vmatpush1.msra.mxu0 0.0
    %1697 = vmatprep.subr.mxu0 0.0
    %1698 = vmatpush1.msra.mxu0 0.0
    %1699 = vmatprep.subr.mxu0 0.0
    %1700 = vmatpush1.msra.mxu0 0.0
    %1701 = vmatprep.subr.mxu0 0.0
    %1702 = vmatpush1.msra.mxu0 0.0
    %1703 = vmatprep.subr.mxu0 0.0
    %1704 = vmatpush1.msra.mxu0 0.0
    %1705 = vmatprep.subr.mxu0 0.0
    %1706 = vmatpush1.msra.mxu0 0.0
    %1707 = vmatprep.subr.mxu0 0.0
    %1708 = vmatpush1.msra.mxu0 0.0
    %1709 = vmatprep.subr.mxu0 0.0
    %1710 = vmatpush1.msra.mxu0 %v1513
    %1711 = vmatprep.subr.mxu0 0.0
    %1712 = vmatpush1.msra.mxu0 %v1512
    %1713 = vmatprep.subr.mxu0 0.0
    %1714 = vmatpush1.msra.mxu0 %v1511
    %1715 = vmatprep.subr.mxu0 0.0
    %1716 = vmatpush1.msra.mxu0 %v1510
    %1717 = vmatprep.subr.mxu0 0.0
    %1718 = vmatpush2.msra.mxu0 0.0
    %1719 = vmatprep.subr.mxu0 0.0
    %1720 = vmatpush2.msra.mxu0 0.0
    %1721 = vmatprep.subr.mxu0 0.0
    %1722 = vmatpush2.msra.mxu0 0.0
    %1723 = vmatprep.subr.mxu0 0.0
    %1724 = vmatpush2.msra.mxu0 0.0
    %1725 = vmatprep.subr.mxu0 0.0
    %1726 = vmatpush2.msra.mxu0 0.0
    %1727 = vmatprep.subr.mxu0 0.0
    %1728 = vmatpush2.msra.mxu0 0.0
    %1729 = vmatprep.subr.mxu0 0.0
    %1730 = vmatpush2.msra.mxu0 0.0
    %1731 = vmatprep.subr.mxu0 0.0
    %1732 = vmatpush2.msra.mxu0 0.0
    %1733 = vmatprep.subr.mxu0 0.0
    %1734 = vmatpush2.msra.mxu0 0.0
    %1735 = vmatprep.subr.mxu0 0.0
    %1736 = vmatpush2.msra.mxu0 0.0
    %1737 = vmatprep.subr.mxu0 0.0
    %1738 = vmatpush2.msra.mxu0 0.0
    %1739 = vmatprep.subr.mxu0 0.0
    %1740 = vmatpush2.msra.mxu0 0.0
    %1741 = vmatprep.subr.mxu0 0.0
    %1742 = vmatpush2.msra.mxu0 0.0
    %1743 = vmatprep.subr.mxu0 0.0
    %1744 = vmatpush2.msra.mxu0 0.0
    %1745 = vmatprep.subr.mxu0 0.0
    %1746 = vmatpush2.msra.mxu0 0.0
    %1747 = vmatprep.subr.mxu0 0.0
    %1748 = vmatpush2.msra.mxu0 0.0
    %1749 = vmatprep.mubr.f32.mxu0 0.0
    %1750 = vmatmul.mubr.f32.gmra.mxu0 %v1667
    %v1751 = vpop.f32.mrf.mxu0
    %v1752 = vadd.f32 0.0, %v1751
    %v1753 = vpop.f32.mrf.mxu0
    %1754 = vmatprep.mubr.f32.mxu0 0.0
    %1755 = vmatmul.mubr.f32.gmra.mxu0 %v1669
    %v1756 = vpop.f32.mrf.mxu0
    %v1757 = vadd.f32 0.0, %v1756
    %v1758 = vpop.f32.mrf.mxu0
    %1759 = vmatprep.mubr.f32.mxu0 0.0
    %1760 = vmatmul.mubr.f32.gmra.mxu0 %v1671
    %v1761 = vpop.f32.mrf.mxu0
    %v1762 = vadd.f32 0.0, %v1761
    %v1763 = vpop.f32.mrf.mxu0
    %1764 = vmatprep.mubr.f32.mxu0 0.0
    %1765 = vmatmul.mubr.f32.gmra.mxu0 %v1673
    %v1766 = vpop.f32.mrf.mxu0
    %v1767 = vadd.f32 0.0, %v1766
    %v1768 = vpop.f32.mrf.mxu0
    %1769 = vmatprep.mubr.f32.mxu0 0.0
    %1770 = vmatmul.mubr.f32.gmra.mxu0 %v1675
    %v1771 = vpop.f32.mrf.mxu0
    %v1772 = vadd.f32 0.0, %v1771
    %v1773 = vpop.f32.mrf.mxu0
    %1774 = vmatprep.mubr.f32.mxu0 0.0
    %1775 = vmatmul.mubr.f32.gmra.mxu0 %v1677
    %v1776 = vpop.f32.mrf.mxu0
    %v1777 = vadd.f32 0.0, %v1776
    %v1778 = vpop.f32.mrf.mxu0
    %1779 = vmatprep.mubr.f32.mxu0 0.0
    %1780 = vmatmul.mubr.f32.gmra.mxu0 %v1679
    %v1781 = vpop.f32.mrf.mxu0
    %v1782 = vadd.f32 0.0, %v1781
    %v1783 = vpop.f32.mrf.mxu0
    %1784 = vmatprep.mubr.f32.mxu0 0.0
    %1785 = vmatmul.mubr.f32.gmra.mxu0 %v1681
    %v1786 = vpop.f32.mrf.mxu0
    %v1787 = vadd.f32 0.0, %v1786
    %v1788 = vpop.f32.mrf.mxu0
    %1789 = vmatprep.mubr.f32.mxu0 0.0
    %1790 = vmatmul.mubr.f32.gmra.mxu0 %v1683
    %v1791 = vpop.f32.mrf.mxu0
    %v1792 = vadd.f32 0.0, %v1791
    %v1793 = vpop.f32.mrf.mxu0
    %1794 = vdwg.mxu0
    %v1795 = vadd.f32 %v1251, %v1752
    %v1796 = vadd.f32 %v1256, %v1757
    %v1797 = vadd.f32 %v1261, %v1762
    %v1798 = vadd.f32 %v1266, %v1767
    %v1799 = vadd.f32 %v1271, %v1772
    %v1800 = vadd.f32 %v1276, %v1777
    %v1801 = vadd.f32 %v1281, %v1782
    %v1802 = vadd.f32 %v1286, %v1787
    %v1803 = vadd.f32 %v1291, %v1792
    %s1804 = scalar_lea.vmem [#allocation2], 8
    %v1805 = vld [vmem:[%s1804] sm:$0x3f]
    %v1806 = vld [vmem:[%s1804 + $0x8] sm:$0x3f]
    %v1807 = vld [vmem:[%s1804 + $0x10] sm:$0x3f]
    %v1808 = vld [vmem:[%s1804 + $0x18] sm:$0x3f]
    %v1809 = vld [vmem:[%s1804 + $0x20] sm:$0x3f]
    %v1810 = vld [vmem:[%s1804 + $0x28] sm:$0x3f]
    %v1811 = vld [vmem:[%s1804 + $0x40] sm:$0x3f]
    %v1812 = vld [vmem:[%s1804 + $0x48] sm:$0x3f]
    %v1813 = vld [vmem:[%s1804 + $0x50] sm:$0x3f]
    %v1814 = vld [vmem:[%s1804 + $0x58] sm:$0x3f]
    %v1815 = vld [vmem:[%s1804 + $0x60] sm:$0x3f]
    %v1816 = vld [vmem:[%s1804 + $0x68] sm:$0x3f]
    %v1829 = vcombine.high %v1805, %v1805
    %v1831 = vunpack.c.l.s4 1983009808
    %v1832 = vunpack.c.0.s8 %v1831
    %v1833 = vlaneseq
    %v1834 = vshrl.u32 %v1833, 7
    %v1835 = vsub.s32 %v1832, %v1834
    %v1836 = vrot.slane %v1805, %v1835
    %v1838 = vunpack.c.l.s4 1983009808
    %v1839 = vunpack.c.0.s8 %v1838
    %v1840 = vlaneseq
    %v1841 = vshrl.u32 %v1840, 7
    %v1842 = vsub.s32 %v1839, %v1841
    %v1843 = vrot.slane %v1829, %v1842
    %v1844 = vcombine.high %v1836, %v1836
    %v1845 = vcombine.high %v1806, %v1806
    %v1847 = vunpack.c.l.s4 1983009808
    %v1848 = vunpack.c.0.s8 %v1847
    %v1849 = vlaneseq
    %v1850 = vshrl.u32 %v1849, 7
    %v1851 = vsub.s32 %v1848, %v1850
    %v1852 = vrot.slane %v1806, %v1851
    %v1854 = vunpack.c.l.s4 1983009808
    %v1855 = vunpack.c.0.s8 %v1854
    %v1856 = vlaneseq
    %v1857 = vshrl.u32 %v1856, 7
    %v1858 = vsub.s32 %v1855, %v1857
    %v1859 = vrot.slane %v1845, %v1858
    %v1860 = vcombine.high %v1852, %v1852
    %v1861 = vcombine.high %v1807, %v1807
    %v1863 = vunpack.c.l.s4 1983009808
    %v1864 = vunpack.c.0.s8 %v1863
    %v1865 = vlaneseq
    %v1866 = vshrl.u32 %v1865, 7
    %v1867 = vsub.s32 %v1864, %v1866
    %v1868 = vrot.slane %v1807, %v1867
    %v1870 = vunpack.c.l.s4 1983009808
    %v1871 = vunpack.c.0.s8 %v1870
    %v1872 = vlaneseq
    %v1873 = vshrl.u32 %v1872, 7
    %v1874 = vsub.s32 %v1871, %v1873
    %v1875 = vrot.slane %v1861, %v1874
    %v1876 = vcombine.high %v1868, %v1868
    %v1877 = vcombine.high %v1808, %v1808
    %v1879 = vunpack.c.l.s4 1983009808
    %v1880 = vunpack.c.0.s8 %v1879
    %v1881 = vlaneseq
    %v1882 = vshrl.u32 %v1881, 7
    %v1883 = vsub.s32 %v1880, %v1882
    %v1884 = vrot.slane %v1808, %v1883
    %v1886 = vunpack.c.l.s4 1983009808
    %v1887 = vunpack.c.0.s8 %v1886
    %v1888 = vlaneseq
    %v1889 = vshrl.u32 %v1888, 7
    %v1890 = vsub.s32 %v1887, %v1889
    %v1891 = vrot.slane %v1877, %v1890
    %v1892 = vcombine.high %v1884, %v1884
    %v1893 = vcombine.high %v1809, %v1809
    %v1895 = vunpack.c.l.s4 1983009808
    %v1896 = vunpack.c.0.s8 %v1895
    %v1897 = vlaneseq
    %v1898 = vshrl.u32 %v1897, 7
    %v1899 = vsub.s32 %v1896, %v1898
    %v1900 = vrot.slane %v1809, %v1899
    %v1902 = vunpack.c.l.s4 1983009808
    %v1903 = vunpack.c.0.s8 %v1902
    %v1904 = vlaneseq
    %v1905 = vshrl.u32 %v1904, 7
    %v1906 = vsub.s32 %v1903, %v1905
    %v1907 = vrot.slane %v1893, %v1906
    %v1908 = vcombine.high %v1900, %v1900
    %v1909 = vcombine.high %v1810, %v1810
    %v1911 = vunpack.c.l.s4 1983009808
    %v1912 = vunpack.c.0.s8 %v1911
    %v1913 = vlaneseq
    %v1914 = vshrl.u32 %v1913, 7
    %v1915 = vsub.s32 %v1912, %v1914
    %v1916 = vrot.slane %v1810, %v1915
    %v1918 = vunpack.c.l.s4 1983009808
    %v1919 = vunpack.c.0.s8 %v1918
    %v1920 = vlaneseq
    %v1921 = vshrl.u32 %v1920, 7
    %v1922 = vsub.s32 %v1919, %v1921
    %v1923 = vrot.slane %v1909, %v1922
    %v1924 = vcombine.high %v1916, %v1916
    %v1925 = vcombine.high %v1811, %v1811
    %v1927 = vunpack.c.l.s4 1983009808
    %v1928 = vunpack.c.0.s8 %v1927
    %v1929 = vlaneseq
    %v1930 = vshrl.u32 %v1929, 7
    %v1931 = vsub.s32 %v1928, %v1930
    %v1932 = vrot.slane %v1811, %v1931
    %v1934 = vunpack.c.l.s4 1983009808
    %v1935 = vunpack.c.0.s8 %v1934
    %v1936 = vlaneseq
    %v1937 = vshrl.u32 %v1936, 7
    %v1938 = vsub.s32 %v1935, %v1937
    %v1939 = vrot.slane %v1925, %v1938
    %v1940 = vcombine.high %v1932, %v1932
    %v1941 = vcombine.high %v1812, %v1812
    %v1943 = vunpack.c.l.s4 1983009808
    %v1944 = vunpack.c.0.s8 %v1943
    %v1945 = vlaneseq
    %v1946 = vshrl.u32 %v1945, 7
    %v1947 = vsub.s32 %v1944, %v1946
    %v1948 = vrot.slane %v1812, %v1947
    %v1950 = vunpack.c.l.s4 1983009808
    %v1951 = vunpack.c.0.s8 %v1950
    %v1952 = vlaneseq
    %v1953 = vshrl.u32 %v1952, 7
    %v1954 = vsub.s32 %v1951, %v1953
    %v1955 = vrot.slane %v1941, %v1954
    %v1956 = vcombine.high %v1948, %v1948
    %v1957 = vcombine.high %v1813, %v1813
    %v1959 = vunpack.c.l.s4 1983009808
    %v1960 = vunpack.c.0.s8 %v1959
    %v1961 = vlaneseq
    %v1962 = vshrl.u32 %v1961, 7
    %v1963 = vsub.s32 %v1960, %v1962
    %v1964 = vrot.slane %v1813, %v1963
    %v1966 = vunpack.c.l.s4 1983009808
    %v1967 = vunpack.c.0.s8 %v1966
    %v1968 = vlaneseq
    %v1969 = vshrl.u32 %v1968, 7
    %v1970 = vsub.s32 %v1967, %v1969
    %v1971 = vrot.slane %v1957, %v1970
    %v1972 = vcombine.high %v1964, %v1964
    %v1973 = vcombine.high %v1814, %v1814
    %v1975 = vunpack.c.l.s4 1983009808
    %v1976 = vunpack.c.0.s8 %v1975
    %v1977 = vlaneseq
    %v1978 = vshrl.u32 %v1977, 7
    %v1979 = vsub.s32 %v1976, %v1978
    %v1980 = vrot.slane %v1814, %v1979
    %v1982 = vunpack.c.l.s4 1983009808
    %v1983 = vunpack.c.0.s8 %v1982
    %v1984 = vlaneseq
    %v1985 = vshrl.u32 %v1984, 7
    %v1986 = vsub.s32 %v1983, %v1985
    %v1987 = vrot.slane %v1973, %v1986
    %v1988 = vcombine.high %v1980, %v1980
    %v1989 = vcombine.high %v1815, %v1815
    %v1991 = vunpack.c.l.s4 1983009808
    %v1992 = vunpack.c.0.s8 %v1991
    %v1993 = vlaneseq
    %v1994 = vshrl.u32 %v1993, 7
    %v1995 = vsub.s32 %v1992, %v1994
    %v1996 = vrot.slane %v1815, %v1995
    %v1998 = vunpack.c.l.s4 1983009808
    %v1999 = vunpack.c.0.s8 %v1998
    %v2000 = vlaneseq
    %v2001 = vshrl.u32 %v2000, 7
    %v2002 = vsub.s32 %v1999, %v2001
    %v2003 = vrot.slane %v1989, %v2002
    %v2004 = vcombine.high %v1996, %v1996
    %v2005 = vcombine.high %v1816, %v1816
    %v2007 = vunpack.c.l.s4 1983009808
    %v2008 = vunpack.c.0.s8 %v2007
    %v2009 = vlaneseq
    %v2010 = vshrl.u32 %v2009, 7
    %v2011 = vsub.s32 %v2008, %v2010
    %v2012 = vrot.slane %v1816, %v2011
    %v2014 = vunpack.c.l.s4 1983009808
    %v2015 = vunpack.c.0.s8 %v2014
    %v2016 = vlaneseq
    %v2017 = vshrl.u32 %v2016, 7
    %v2018 = vsub.s32 %v2015, %v2017
    %v2019 = vrot.slane %v2005, %v2018
    %v2020 = vcombine.high %v2012, %v2012
    %v2021 = vld [vmem:[%s3 + $0x60] sm:$0xff]
    %v2022 = vld [vmem:[%s3 + $0x68] sm:$0xff]
    %v2023 = vld [vmem:[%s3 + $0x70] sm:$0xff]
    %v2024 = vld [vmem:[%s3 + $0x78] sm:$0xff]
    %v2025 = vcombine.low %v1836, %v1844
    %v2026 = vcombine.low %v1843, %v1852
    %v2028 = vunpack.c.l.s4 1983009808
    %v2029 = vunpack.c.0.s8 %v2028
    %v2030 = vlaneseq
    %v2031 = vshrl.u32 %v2030, 7
    %v2032 = vsub.s32 %v2029, %v2031
    %v2033 = vrot.slane %v2025, %v2032
    %v2035 = vunpack.c.l.s4 1983009808
    %v2036 = vunpack.c.0.s8 %v2035
    %v2037 = vlaneseq
    %v2038 = vshrl.u32 %v2037, 7
    %v2039 = vsub.s32 %v2036, %v2038
    %v2040 = vrot.slane %v2026, %v2039
    %v2041 = vcombine.low %v2033, %v2040
    %v2042 = vcombine.low %v1860, %v1859
    %v2043 = vcombine.low %v1868, %v1876
    %v2045 = vunpack.c.l.s4 1983009808
    %v2046 = vunpack.c.0.s8 %v2045
    %v2047 = vlaneseq
    %v2048 = vshrl.u32 %v2047, 7
    %v2049 = vsub.s32 %v2046, %v2048
    %v2050 = vrot.slane %v2042, %v2049
    %v2052 = vunpack.c.l.s4 1983009808
    %v2053 = vunpack.c.0.s8 %v2052
    %v2054 = vlaneseq
    %v2055 = vshrl.u32 %v2054, 7
    %v2056 = vsub.s32 %v2053, %v2055
    %v2057 = vrot.slane %v2043, %v2056
    %v2058 = vcombine.low %v2050, %v2057
    %v2059 = vcombine.low %v1875, %v1884
    %v2060 = vcombine.low %v1892, %v1891
    %v2062 = vunpack.c.l.s4 1983009808
    %v2063 = vunpack.c.0.s8 %v2062
    %v2064 = vlaneseq
    %v2065 = vshrl.u32 %v2064, 7
    %v2066 = vsub.s32 %v2063, %v2065
    %v2067 = vrot.slane %v2059, %v2066
    %v2069 = vunpack.c.l.s4 1983009808
    %v2070 = vunpack.c.0.s8 %v2069
    %v2071 = vlaneseq
    %v2072 = vshrl.u32 %v2071, 7
    %v2073 = vsub.s32 %v2070, %v2072
    %v2074 = vrot.slane %v2060, %v2073
    %v2075 = vcombine.low %v2067, %v2074
    %v2076 = vcombine.low %v1900, %v1908
    %v2077 = vcombine.low %v1907, %v1916
    %v2079 = vunpack.c.l.s4 1983009808
    %v2080 = vunpack.c.0.s8 %v2079
    %v2081 = vlaneseq
    %v2082 = vshrl.u32 %v2081, 7
    %v2083 = vsub.s32 %v2080, %v2082
    %v2084 = vrot.slane %v2076, %v2083
    %v2086 = vunpack.c.l.s4 1983009808
    %v2087 = vunpack.c.0.s8 %v2086
    %v2088 = vlaneseq
    %v2089 = vshrl.u32 %v2088, 7
    %v2090 = vsub.s32 %v2087, %v2089
    %v2091 = vrot.slane %v2077, %v2090
    %v2092 = vcombine.low %v2084, %v2091
    %v2093 = vcombine.low %v1924, %v1923
    %v2094 = vcombine.low %v1932, %v1940
    %v2096 = vunpack.c.l.s4 1983009808
    %v2097 = vunpack.c.0.s8 %v2096
    %v2098 = vlaneseq
    %v2099 = vshrl.u32 %v2098, 7
    %v2100 = vsub.s32 %v2097, %v2099
    %v2101 = vrot.slane %v2093, %v2100
    %v2103 = vunpack.c.l.s4 1983009808
    %v2104 = vunpack.c.0.s8 %v2103
    %v2105 = vlaneseq
    %v2106 = vshrl.u32 %v2105, 7
    %v2107 = vsub.s32 %v2104, %v2106
    %v2108 = vrot.slane %v2094, %v2107
    %v2109 = vcombine.low %v2101, %v2108
    %v2110 = vcombine.low %v1939, %v1948
    %v2111 = vcombine.low %v1956, %v1955
    %v2113 = vunpack.c.l.s4 1983009808
    %v2114 = vunpack.c.0.s8 %v2113
    %v2115 = vlaneseq
    %v2116 = vshrl.u32 %v2115, 7
    %v2117 = vsub.s32 %v2114, %v2116
    %v2118 = vrot.slane %v2110, %v2117
    %v2120 = vunpack.c.l.s4 1983009808
    %v2121 = vunpack.c.0.s8 %v2120
    %v2122 = vlaneseq
    %v2123 = vshrl.u32 %v2122, 7
    %v2124 = vsub.s32 %v2121, %v2123
    %v2125 = vrot.slane %v2111, %v2124
    %v2126 = vcombine.low %v2118, %v2125
    %v2127 = vcombine.low %v1964, %v1972
    %v2128 = vcombine.low %v1971, %v1980
    %v2130 = vunpack.c.l.s4 1983009808
    %v2131 = vunpack.c.0.s8 %v2130
    %v2132 = vlaneseq
    %v2133 = vshrl.u32 %v2132, 7
    %v2134 = vsub.s32 %v2131, %v2133
    %v2135 = vrot.slane %v2127, %v2134
    %v2137 = vunpack.c.l.s4 1983009808
    %v2138 = vunpack.c.0.s8 %v2137
    %v2139 = vlaneseq
    %v2140 = vshrl.u32 %v2139, 7
    %v2141 = vsub.s32 %v2138, %v2140
    %v2142 = vrot.slane %v2128, %v2141
    %v2143 = vcombine.low %v2135, %v2142
    %v2144 = vcombine.low %v1988, %v1987
    %v2145 = vcombine.low %v1996, %v2004
    %v2147 = vunpack.c.l.s4 1983009808
    %v2148 = vunpack.c.0.s8 %v2147
    %v2149 = vlaneseq
    %v2150 = vshrl.u32 %v2149, 7
    %v2151 = vsub.s32 %v2148, %v2150
    %v2152 = vrot.slane %v2144, %v2151
    %v2154 = vunpack.c.l.s4 1983009808
    %v2155 = vunpack.c.0.s8 %v2154
    %v2156 = vlaneseq
    %v2157 = vshrl.u32 %v2156, 7
    %v2158 = vsub.s32 %v2155, %v2157
    %v2159 = vrot.slane %v2145, %v2158
    %v2160 = vcombine.low %v2152, %v2159
    %v2161 = vcombine.low %v2003, %v2012
    %v2162 = vcombine.low %v2020, %v2019
    %v2164 = vunpack.c.l.s4 1983009808
    %v2165 = vunpack.c.0.s8 %v2164
    %v2166 = vlaneseq
    %v2167 = vshrl.u32 %v2166, 7
    %v2168 = vsub.s32 %v2165, %v2167
    %v2169 = vrot.slane %v2161, %v2168
    %v2171 = vunpack.c.l.s4 1983009808
    %v2172 = vunpack.c.0.s8 %v2171
    %v2173 = vlaneseq
    %v2174 = vshrl.u32 %v2173, 7
    %v2175 = vsub.s32 %v2172, %v2174
    %v2176 = vrot.slane %v2162, %v2175
    %v2177 = vcombine.low %v2169, %v2176
    %v2178 = vsel %vm275, %v2041, 0
    %v2180 = vsel %vm275, %v2058, 0
    %v2182 = vsel %vm275, %v2075, 0
    %v2184 = vsel %vm275, %v2092, 0
    %v2186 = vsel %vm275, %v2109, 0
    %v2188 = vsel %vm275, %v2126, 0
    %v2190 = vsel %vm275, %v2143, 0
    %v2192 = vsel %vm275, %v2160, 0
    %v2194 = vsel %vm275, %v2177, 0
    %2196 = vmatprep.subr.mxu0 0.0
    %2197 = vmatpush1.msra.mxu0 0.0
    %2198 = vmatprep.subr.mxu0 0.0
    %2199 = vmatpush1.msra.mxu0 0.0
    %2200 = vmatprep.subr.mxu0 0.0
    %2201 = vmatpush1.msra.mxu0 0.0
    %2202 = vmatprep.subr.mxu0 0.0
    %2203 = vmatpush1.msra.mxu0 0.0
    %2204 = vmatprep.subr.mxu0 0.0
    %2205 = vmatpush1.msra.mxu0 0.0
    %2206 = vmatprep.subr.mxu0 0.0
    %2207 = vmatpush1.msra.mxu0 0.0
    %2208 = vmatprep.subr.mxu0 0.0
    %2209 = vmatpush1.msra.mxu0 0.0
    %2210 = vmatprep.subr.mxu0 0.0
    %2211 = vmatpush1.msra.mxu0 0.0
    %2212 = vmatprep.subr.mxu0 0.0
    %2213 = vmatpush1.msra.mxu0 0.0
    %2214 = vmatprep.subr.mxu0 0.0
    %2215 = vmatpush1.msra.mxu0 0.0
    %2216 = vmatprep.subr.mxu0 0.0
    %2217 = vmatpush1.msra.mxu0 0.0
    %2218 = vmatprep.subr.mxu0 0.0
    %2219 = vmatpush1.msra.mxu0 0.0
    %2220 = vmatprep.subr.mxu0 0.0
    %2221 = vmatpush1.msra.mxu0 %v2024
    %2222 = vmatprep.subr.mxu0 0.0
    %2223 = vmatpush1.msra.mxu0 %v2023
    %2224 = vmatprep.subr.mxu0 0.0
    %2225 = vmatpush1.msra.mxu0 %v2022
    %2226 = vmatprep.subr.mxu0 0.0
    %2227 = vmatpush1.msra.mxu0 %v2021
    %2228 = vmatprep.subr.mxu0 0.0
    %2229 = vmatpush2.msra.mxu0 0.0
    %2230 = vmatprep.subr.mxu0 0.0
    %2231 = vmatpush2.msra.mxu0 0.0
    %2232 = vmatprep.subr.mxu0 0.0
    %2233 = vmatpush2.msra.mxu0 0.0
    %2234 = vmatprep.subr.mxu0 0.0
    %2235 = vmatpush2.msra.mxu0 0.0
    %2236 = vmatprep.subr.mxu0 0.0
    %2237 = vmatpush2.msra.mxu0 0.0
    %2238 = vmatprep.subr.mxu0 0.0
    %2239 = vmatpush2.msra.mxu0 0.0
    %2240 = vmatprep.subr.mxu0 0.0
    %2241 = vmatpush2.msra.mxu0 0.0
    %2242 = vmatprep.subr.mxu0 0.0
    %2243 = vmatpush2.msra.mxu0 0.0
    %2244 = vmatprep.subr.mxu0 0.0
    %2245 = vmatpush2.msra.mxu0 0.0
    %2246 = vmatprep.subr.mxu0 0.0
    %2247 = vmatpush2.msra.mxu0 0.0
    %2248 = vmatprep.subr.mxu0 0.0
    %2249 = vmatpush2.msra.mxu0 0.0
    %2250 = vmatprep.subr.mxu0 0.0
    %2251 = vmatpush2.msra.mxu0 0.0
    %2252 = vmatprep.subr.mxu0 0.0
    %2253 = vmatpush2.msra.mxu0 0.0
    %2254 = vmatprep.subr.mxu0 0.0
    %2255 = vmatpush2.msra.mxu0 0.0
    %2256 = vmatprep.subr.mxu0 0.0
    %2257 = vmatpush2.msra.mxu0 0.0
    %2258 = vmatprep.subr.mxu0 0.0
    %2259 = vmatpush2.msra.mxu0 0.0
    %2260 = vmatprep.mubr.f32.mxu0 0.0
    %2261 = vmatmul.mubr.f32.gmra.mxu0 %v2178
    %v2262 = vpop.f32.mrf.mxu0
    %v2263 = vadd.f32 0.0, %v2262
    %v2264 = vpop.f32.mrf.mxu0
    %2265 = vmatprep.mubr.f32.mxu0 0.0
    %2266 = vmatmul.mubr.f32.gmra.mxu0 %v2180
    %v2267 = vpop.f32.mrf.mxu0
    %v2268 = vadd.f32 0.0, %v2267
    %v2269 = vpop.f32.mrf.mxu0
    %2270 = vmatprep.mubr.f32.mxu0 0.0
    %2271 = vmatmul.mubr.f32.gmra.mxu0 %v2182
    %v2272 = vpop.f32.mrf.mxu0
    %v2273 = vadd.f32 0.0, %v2272
    %v2274 = vpop.f32.mrf.mxu0
    %2275 = vmatprep.mubr.f32.mxu0 0.0
    %2276 = vmatmul.mubr.f32.gmra.mxu0 %v2184
    %v2277 = vpop.f32.mrf.mxu0
    %v2278 = vadd.f32 0.0, %v2277
    %v2279 = vpop.f32.mrf.mxu0
    %2280 = vmatprep.mubr.f32.mxu0 0.0
    %2281 = vmatmul.mubr.f32.gmra.mxu0 %v2186
    %v2282 = vpop.f32.mrf.mxu0
    %v2283 = vadd.f32 0.0, %v2282
    %v2284 = vpop.f32.mrf.mxu0
    %2285 = vmatprep.mubr.f32.mxu0 0.0
    %2286 = vmatmul.mubr.f32.gmra.mxu0 %v2188
    %v2287 = vpop.f32.mrf.mxu0
    %v2288 = vadd.f32 0.0, %v2287
    %v2289 = vpop.f32.mrf.mxu0
    %2290 = vmatprep.mubr.f32.mxu0 0.0
    %2291 = vmatmul.mubr.f32.gmra.mxu0 %v2190
    %v2292 = vpop.f32.mrf.mxu0
    %v2293 = vadd.f32 0.0, %v2292
    %v2294 = vpop.f32.mrf.mxu0
    %2295 = vmatprep.mubr.f32.mxu0 0.0
    %2296 = vmatmul.mubr.f32.gmra.mxu0 %v2192
    %v2297 = vpop.f32.mrf.mxu0
    %v2298 = vadd.f32 0.0, %v2297
    %v2299 = vpop.f32.mrf.mxu0
    %2300 = vmatprep.mubr.f32.mxu0 0.0
    %2301 = vmatmul.mubr.f32.gmra.mxu0 %v2194
    %v2302 = vpop.f32.mrf.mxu0
    %v2303 = vadd.f32 0.0, %v2302
    %v2304 = vpop.f32.mrf.mxu0
    %2305 = vdwg.mxu0
    %v2306 = vadd.f32 %v1795, %v2263
    %v2307 = vadd.f32 %v1796, %v2268
    %v2308 = vadd.f32 %v1797, %v2273
    %v2309 = vadd.f32 %v1798, %v2278
    %v2310 = vadd.f32 %v1799, %v2283
    %v2311 = vadd.f32 %v1800, %v2288
    %v2312 = vadd.f32 %v1801, %v2293
    %v2313 = vadd.f32 %v1802, %v2298
    %v2314 = vadd.f32 %v1803, %v2303
    %v2315 = vld [vmem:[%s1804 + $0x1] sm:$0x3f]
    %v2316 = vld [vmem:[%s1804 + $0x9] sm:$0x3f]
    %v2317 = vld [vmem:[%s1804 + $0x11] sm:$0x3f]
    %v2318 = vld [vmem:[%s1804 + $0x19] sm:$0x3f]
    %v2319 = vld [vmem:[%s1804 + $0x21] sm:$0x3f]
    %v2320 = vld [vmem:[%s1804 + $0x29] sm:$0x3f]
    %v2321 = vld [vmem:[%s1804 + $0x41] sm:$0x3f]
    %v2322 = vld [vmem:[%s1804 + $0x49] sm:$0x3f]
    %v2323 = vld [vmem:[%s1804 + $0x51] sm:$0x3f]
    %v2324 = vld [vmem:[%s1804 + $0x59] sm:$0x3f]
    %v2325 = vld [vmem:[%s1804 + $0x61] sm:$0x3f]
    %v2326 = vld [vmem:[%s1804 + $0x69] sm:$0x3f]
    %v2339 = vcombine.high %v2315, %v2315
    %v2341 = vunpack.c.l.s4 1983009808
    %v2342 = vunpack.c.0.s8 %v2341
    %v2343 = vlaneseq
    %v2344 = vshrl.u32 %v2343, 7
    %v2345 = vsub.s32 %v2342, %v2344
    %v2346 = vrot.slane %v2315, %v2345
    %v2348 = vunpack.c.l.s4 1983009808
    %v2349 = vunpack.c.0.s8 %v2348
    %v2350 = vlaneseq
    %v2351 = vshrl.u32 %v2350, 7
    %v2352 = vsub.s32 %v2349, %v2351
    %v2353 = vrot.slane %v2339, %v2352
    %v2354 = vcombine.high %v2346, %v2346
    %v2355 = vcombine.high %v2316, %v2316
    %v2357 = vunpack.c.l.s4 1983009808
    %v2358 = vunpack.c.0.s8 %v2357
    %v2359 = vlaneseq
    %v2360 = vshrl.u32 %v2359, 7
    %v2361 = vsub.s32 %v2358, %v2360
    %v2362 = vrot.slane %v2316, %v2361
    %v2364 = vunpack.c.l.s4 1983009808
    %v2365 = vunpack.c.0.s8 %v2364
    %v2366 = vlaneseq
    %v2367 = vshrl.u32 %v2366, 7
    %v2368 = vsub.s32 %v2365, %v2367
    %v2369 = vrot.slane %v2355, %v2368
    %v2370 = vcombine.high %v2362, %v2362
    %v2371 = vcombine.high %v2317, %v2317
    %v2373 = vunpack.c.l.s4 1983009808
    %v2374 = vunpack.c.0.s8 %v2373
    %v2375 = vlaneseq
    %v2376 = vshrl.u32 %v2375, 7
    %v2377 = vsub.s32 %v2374, %v2376
    %v2378 = vrot.slane %v2317, %v2377
    %v2380 = vunpack.c.l.s4 1983009808
    %v2381 = vunpack.c.0.s8 %v2380
    %v2382 = vlaneseq
    %v2383 = vshrl.u32 %v2382, 7
    %v2384 = vsub.s32 %v2381, %v2383
    %v2385 = vrot.slane %v2371, %v2384
    %v2386 = vcombine.high %v2378, %v2378
    %v2387 = vcombine.high %v2318, %v2318
    %v2389 = vunpack.c.l.s4 1983009808
    %v2390 = vunpack.c.0.s8 %v2389
    %v2391 = vlaneseq
    %v2392 = vshrl.u32 %v2391, 7
    %v2393 = vsub.s32 %v2390, %v2392
    %v2394 = vrot.slane %v2318, %v2393
    %v2396 = vunpack.c.l.s4 1983009808
    %v2397 = vunpack.c.0.s8 %v2396
    %v2398 = vlaneseq
    %v2399 = vshrl.u32 %v2398, 7
    %v2400 = vsub.s32 %v2397, %v2399
    %v2401 = vrot.slane %v2387, %v2400
    %v2402 = vcombine.high %v2394, %v2394
    %v2403 = vcombine.high %v2319, %v2319
    %v2405 = vunpack.c.l.s4 1983009808
    %v2406 = vunpack.c.0.s8 %v2405
    %v2407 = vlaneseq
    %v2408 = vshrl.u32 %v2407, 7
    %v2409 = vsub.s32 %v2406, %v2408
    %v2410 = vrot.slane %v2319, %v2409
    %v2412 = vunpack.c.l.s4 1983009808
    %v2413 = vunpack.c.0.s8 %v2412
    %v2414 = vlaneseq
    %v2415 = vshrl.u32 %v2414, 7
    %v2416 = vsub.s32 %v2413, %v2415
    %v2417 = vrot.slane %v2403, %v2416
    %v2418 = vcombine.high %v2410, %v2410
    %v2419 = vcombine.high %v2320, %v2320
    %v2421 = vunpack.c.l.s4 1983009808
    %v2422 = vunpack.c.0.s8 %v2421
    %v2423 = vlaneseq
    %v2424 = vshrl.u32 %v2423, 7
    %v2425 = vsub.s32 %v2422, %v2424
    %v2426 = vrot.slane %v2320, %v2425
    %v2428 = vunpack.c.l.s4 1983009808
    %v2429 = vunpack.c.0.s8 %v2428
    %v2430 = vlaneseq
    %v2431 = vshrl.u32 %v2430, 7
    %v2432 = vsub.s32 %v2429, %v2431
    %v2433 = vrot.slane %v2419, %v2432
    %v2434 = vcombine.high %v2426, %v2426
    %v2435 = vcombine.high %v2321, %v2321
    %v2437 = vunpack.c.l.s4 1983009808
    %v2438 = vunpack.c.0.s8 %v2437
    %v2439 = vlaneseq
    %v2440 = vshrl.u32 %v2439, 7
    %v2441 = vsub.s32 %v2438, %v2440
    %v2442 = vrot.slane %v2321, %v2441
    %v2444 = vunpack.c.l.s4 1983009808
    %v2445 = vunpack.c.0.s8 %v2444
    %v2446 = vlaneseq
    %v2447 = vshrl.u32 %v2446, 7
    %v2448 = vsub.s32 %v2445, %v2447
    %v2449 = vrot.slane %v2435, %v2448
    %v2450 = vcombine.high %v2442, %v2442
    %v2451 = vcombine.high %v2322, %v2322
    %v2453 = vunpack.c.l.s4 1983009808
    %v2454 = vunpack.c.0.s8 %v2453
    %v2455 = vlaneseq
    %v2456 = vshrl.u32 %v2455, 7
    %v2457 = vsub.s32 %v2454, %v2456
    %v2458 = vrot.slane %v2322, %v2457
    %v2460 = vunpack.c.l.s4 1983009808
    %v2461 = vunpack.c.0.s8 %v2460
    %v2462 = vlaneseq
    %v2463 = vshrl.u32 %v2462, 7
    %v2464 = vsub.s32 %v2461, %v2463
    %v2465 = vrot.slane %v2451, %v2464
    %v2466 = vcombine.high %v2458, %v2458
    %v2467 = vcombine.high %v2323, %v2323
    %v2469 = vunpack.c.l.s4 1983009808
    %v2470 = vunpack.c.0.s8 %v2469
    %v2471 = vlaneseq
    %v2472 = vshrl.u32 %v2471, 7
    %v2473 = vsub.s32 %v2470, %v2472
    %v2474 = vrot.slane %v2323, %v2473
    %v2476 = vunpack.c.l.s4 1983009808
    %v2477 = vunpack.c.0.s8 %v2476
    %v2478 = vlaneseq
    %v2479 = vshrl.u32 %v2478, 7
    %v2480 = vsub.s32 %v2477, %v2479
    %v2481 = vrot.slane %v2467, %v2480
    %v2482 = vcombine.high %v2474, %v2474
    %v2483 = vcombine.high %v2324, %v2324
    %v2485 = vunpack.c.l.s4 1983009808
    %v2486 = vunpack.c.0.s8 %v2485
    %v2487 = vlaneseq
    %v2488 = vshrl.u32 %v2487, 7
    %v2489 = vsub.s32 %v2486, %v2488
    %v2490 = vrot.slane %v2324, %v2489
    %v2492 = vunpack.c.l.s4 1983009808
    %v2493 = vunpack.c.0.s8 %v2492
    %v2494 = vlaneseq
    %v2495 = vshrl.u32 %v2494, 7
    %v2496 = vsub.s32 %v2493, %v2495
    %v2497 = vrot.slane %v2483, %v2496
    %v2498 = vcombine.high %v2490, %v2490
    %v2499 = vcombine.high %v2325, %v2325
    %v2501 = vunpack.c.l.s4 1983009808
    %v2502 = vunpack.c.0.s8 %v2501
    %v2503 = vlaneseq
    %v2504 = vshrl.u32 %v2503, 7
    %v2505 = vsub.s32 %v2502, %v2504
    %v2506 = vrot.slane %v2325, %v2505
    %v2508 = vunpack.c.l.s4 1983009808
    %v2509 = vunpack.c.0.s8 %v2508
    %v2510 = vlaneseq
    %v2511 = vshrl.u32 %v2510, 7
    %v2512 = vsub.s32 %v2509, %v2511
    %v2513 = vrot.slane %v2499, %v2512
    %v2514 = vcombine.high %v2506, %v2506
    %v2515 = vcombine.high %v2326, %v2326
    %v2517 = vunpack.c.l.s4 1983009808
    %v2518 = vunpack.c.0.s8 %v2517
    %v2519 = vlaneseq
    %v2520 = vshrl.u32 %v2519, 7
    %v2521 = vsub.s32 %v2518, %v2520
    %v2522 = vrot.slane %v2326, %v2521
    %v2524 = vunpack.c.l.s4 1983009808
    %v2525 = vunpack.c.0.s8 %v2524
    %v2526 = vlaneseq
    %v2527 = vshrl.u32 %v2526, 7
    %v2528 = vsub.s32 %v2525, %v2527
    %v2529 = vrot.slane %v2515, %v2528
    %v2530 = vcombine.high %v2522, %v2522
    %v2531 = vld [vmem:[%s3 + $0x80] sm:$0xff]
    %v2532 = vld [vmem:[%s3 + $0x88] sm:$0xff]
    %v2533 = vld [vmem:[%s3 + $0x90] sm:$0xff]
    %v2534 = vld [vmem:[%s3 + $0x98] sm:$0xff]
    %v2535 = vcombine.low %v2346, %v2354
    %v2536 = vcombine.low %v2353, %v2362
    %v2538 = vunpack.c.l.s4 1983009808
    %v2539 = vunpack.c.0.s8 %v2538
    %v2540 = vlaneseq
    %v2541 = vshrl.u32 %v2540, 7
    %v2542 = vsub.s32 %v2539, %v2541
    %v2543 = vrot.slane %v2535, %v2542
    %v2545 = vunpack.c.l.s4 1983009808
    %v2546 = vunpack.c.0.s8 %v2545
    %v2547 = vlaneseq
    %v2548 = vshrl.u32 %v2547, 7
    %v2549 = vsub.s32 %v2546, %v2548
    %v2550 = vrot.slane %v2536, %v2549
    %v2551 = vcombine.low %v2543, %v2550
    %v2552 = vcombine.low %v2370, %v2369
    %v2553 = vcombine.low %v2378, %v2386
    %v2555 = vunpack.c.l.s4 1983009808
    %v2556 = vunpack.c.0.s8 %v2555
    %v2557 = vlaneseq
    %v2558 = vshrl.u32 %v2557, 7
    %v2559 = vsub.s32 %v2556, %v2558
    %v2560 = vrot.slane %v2552, %v2559
    %v2562 = vunpack.c.l.s4 1983009808
    %v2563 = vunpack.c.0.s8 %v2562
    %v2564 = vlaneseq
    %v2565 = vshrl.u32 %v2564, 7
    %v2566 = vsub.s32 %v2563, %v2565
    %v2567 = vrot.slane %v2553, %v2566
    %v2568 = vcombine.low %v2560, %v2567
    %v2569 = vcombine.low %v2385, %v2394
    %v2570 = vcombine.low %v2402, %v2401
    %v2572 = vunpack.c.l.s4 1983009808
    %v2573 = vunpack.c.0.s8 %v2572
    %v2574 = vlaneseq
    %v2575 = vshrl.u32 %v2574, 7
    %v2576 = vsub.s32 %v2573, %v2575
    %v2577 = vrot.slane %v2569, %v2576
    %v2579 = vunpack.c.l.s4 1983009808
    %v2580 = vunpack.c.0.s8 %v2579
    %v2581 = vlaneseq
    %v2582 = vshrl.u32 %v2581, 7
    %v2583 = vsub.s32 %v2580, %v2582
    %v2584 = vrot.slane %v2570, %v2583
    %v2585 = vcombine.low %v2577, %v2584
    %v2586 = vcombine.low %v2410, %v2418
    %v2587 = vcombine.low %v2417, %v2426
    %v2589 = vunpack.c.l.s4 1983009808
    %v2590 = vunpack.c.0.s8 %v2589
    %v2591 = vlaneseq
    %v2592 = vshrl.u32 %v2591, 7
    %v2593 = vsub.s32 %v2590, %v2592
    %v2594 = vrot.slane %v2586, %v2593
    %v2596 = vunpack.c.l.s4 1983009808
    %v2597 = vunpack.c.0.s8 %v2596
    %v2598 = vlaneseq
    %v2599 = vshrl.u32 %v2598, 7
    %v2600 = vsub.s32 %v2597, %v2599
    %v2601 = vrot.slane %v2587, %v2600
    %v2602 = vcombine.low %v2594, %v2601
    %v2603 = vcombine.low %v2434, %v2433
    %v2604 = vcombine.low %v2442, %v2450
    %v2606 = vunpack.c.l.s4 1983009808
    %v2607 = vunpack.c.0.s8 %v2606
    %v2608 = vlaneseq
    %v2609 = vshrl.u32 %v2608, 7
    %v2610 = vsub.s32 %v2607, %v2609
    %v2611 = vrot.slane %v2603, %v2610
    %v2613 = vunpack.c.l.s4 1983009808
    %v2614 = vunpack.c.0.s8 %v2613
    %v2615 = vlaneseq
    %v2616 = vshrl.u32 %v2615, 7
    %v2617 = vsub.s32 %v2614, %v2616
    %v2618 = vrot.slane %v2604, %v2617
    %v2619 = vcombine.low %v2611, %v2618
    %v2620 = vcombine.low %v2449, %v2458
    %v2621 = vcombine.low %v2466, %v2465
    %v2623 = vunpack.c.l.s4 1983009808
    %v2624 = vunpack.c.0.s8 %v2623
    %v2625 = vlaneseq
    %v2626 = vshrl.u32 %v2625, 7
    %v2627 = vsub.s32 %v2624, %v2626
    %v2628 = vrot.slane %v2620, %v2627
    %v2630 = vunpack.c.l.s4 1983009808
    %v2631 = vunpack.c.0.s8 %v2630
    %v2632 = vlaneseq
    %v2633 = vshrl.u32 %v2632, 7
    %v2634 = vsub.s32 %v2631, %v2633
    %v2635 = vrot.slane %v2621, %v2634
    %v2636 = vcombine.low %v2628, %v2635
    %v2637 = vcombine.low %v2474, %v2482
    %v2638 = vcombine.low %v2481, %v2490
    %v2640 = vunpack.c.l.s4 1983009808
    %v2641 = vunpack.c.0.s8 %v2640
    %v2642 = vlaneseq
    %v2643 = vshrl.u32 %v2642, 7
    %v2644 = vsub.s32 %v2641, %v2643
    %v2645 = vrot.slane %v2637, %v2644
    %v2647 = vunpack.c.l.s4 1983009808
    %v2648 = vunpack.c.0.s8 %v2647
    %v2649 = vlaneseq
    %v2650 = vshrl.u32 %v2649, 7
    %v2651 = vsub.s32 %v2648, %v2650
    %v2652 = vrot.slane %v2638, %v2651
    %v2653 = vcombine.low %v2645, %v2652
    %v2654 = vcombine.low %v2498, %v2497
    %v2655 = vcombine.low %v2506, %v2514
    %v2657 = vunpack.c.l.s4 1983009808
    %v2658 = vunpack.c.0.s8 %v2657
    %v2659 = vlaneseq
    %v2660 = vshrl.u32 %v2659, 7
    %v2661 = vsub.s32 %v2658, %v2660
    %v2662 = vrot.slane %v2654, %v2661
    %v2664 = vunpack.c.l.s4 1983009808
    %v2665 = vunpack.c.0.s8 %v2664
    %v2666 = vlaneseq
    %v2667 = vshrl.u32 %v2666, 7
    %v2668 = vsub.s32 %v2665, %v2667
    %v2669 = vrot.slane %v2655, %v2668
    %v2670 = vcombine.low %v2662, %v2669
    %v2671 = vcombine.low %v2513, %v2522
    %v2672 = vcombine.low %v2530, %v2529
    %v2674 = vunpack.c.l.s4 1983009808
    %v2675 = vunpack.c.0.s8 %v2674
    %v2676 = vlaneseq
    %v2677 = vshrl.u32 %v2676, 7
    %v2678 = vsub.s32 %v2675, %v2677
    %v2679 = vrot.slane %v2671, %v2678
    %v2681 = vunpack.c.l.s4 1983009808
    %v2682 = vunpack.c.0.s8 %v2681
    %v2683 = vlaneseq
    %v2684 = vshrl.u32 %v2683, 7
    %v2685 = vsub.s32 %v2682, %v2684
    %v2686 = vrot.slane %v2672, %v2685
    %v2687 = vcombine.low %v2679, %v2686
    %v2688 = vsel %vm275, %v2551, 0
    %v2690 = vsel %vm275, %v2568, 0
    %v2692 = vsel %vm275, %v2585, 0
    %v2694 = vsel %vm275, %v2602, 0
    %v2696 = vsel %vm275, %v2619, 0
    %v2698 = vsel %vm275, %v2636, 0
    %v2700 = vsel %vm275, %v2653, 0
    %v2702 = vsel %vm275, %v2670, 0
    %v2704 = vsel %vm275, %v2687, 0
    %2706 = vmatprep.subr.mxu0 0.0
    %2707 = vmatpush1.msra.mxu0 0.0
    %2708 = vmatprep.subr.mxu0 0.0
    %2709 = vmatpush1.msra.mxu0 0.0
    %2710 = vmatprep.subr.mxu0 0.0
    %2711 = vmatpush1.msra.mxu0 0.0
    %2712 = vmatprep.subr.mxu0 0.0
    %2713 = vmatpush1.msra.mxu0 0.0
    %2714 = vmatprep.subr.mxu0 0.0
    %2715 = vmatpush1.msra.mxu0 0.0
    %2716 = vmatprep.subr.mxu0 0.0
    %2717 = vmatpush1.msra.mxu0 0.0
    %2718 = vmatprep.subr.mxu0 0.0
    %2719 = vmatpush1.msra.mxu0 0.0
    %2720 = vmatprep.subr.mxu0 0.0
    %2721 = vmatpush1.msra.mxu0 0.0
    %2722 = vmatprep.subr.mxu0 0.0
    %2723 = vmatpush1.msra.mxu0 0.0
    %2724 = vmatprep.subr.mxu0 0.0
    %2725 = vmatpush1.msra.mxu0 0.0
    %2726 = vmatprep.subr.mxu0 0.0
    %2727 = vmatpush1.msra.mxu0 0.0
    %2728 = vmatprep.subr.mxu0 0.0
    %2729 = vmatpush1.msra.mxu0 0.0
    %2730 = vmatprep.subr.mxu0 0.0
    %2731 = vmatpush1.msra.mxu0 %v2534
    %2732 = vmatprep.subr.mxu0 0.0
    %2733 = vmatpush1.msra.mxu0 %v2533
    %2734 = vmatprep.subr.mxu0 0.0
    %2735 = vmatpush1.msra.mxu0 %v2532
    %2736 = vmatprep.subr.mxu0 0.0
    %2737 = vmatpush1.msra.mxu0 %v2531
    %2738 = vmatprep.subr.mxu0 0.0
    %2739 = vmatpush2.msra.mxu0 0.0
    %2740 = vmatprep.subr.mxu0 0.0
    %2741 = vmatpush2.msra.mxu0 0.0
    %2742 = vmatprep.subr.mxu0 0.0
    %2743 = vmatpush2.msra.mxu0 0.0
    %2744 = vmatprep.subr.mxu0 0.0
    %2745 = vmatpush2.msra.mxu0 0.0
    %2746 = vmatprep.subr.mxu0 0.0
    %2747 = vmatpush2.msra.mxu0 0.0
    %2748 = vmatprep.subr.mxu0 0.0
    %2749 = vmatpush2.msra.mxu0 0.0
    %2750 = vmatprep.subr.mxu0 0.0
    %2751 = vmatpush2.msra.mxu0 0.0
    %2752 = vmatprep.subr.mxu0 0.0
    %2753 = vmatpush2.msra.mxu0 0.0
    %2754 = vmatprep.subr.mxu0 0.0
    %2755 = vmatpush2.msra.mxu0 0.0
    %2756 = vmatprep.subr.mxu0 0.0
    %2757 = vmatpush2.msra.mxu0 0.0
    %2758 = vmatprep.subr.mxu0 0.0
    %2759 = vmatpush2.msra.mxu0 0.0
    %2760 = vmatprep.subr.mxu0 0.0
    %2761 = vmatpush2.msra.mxu0 0.0
    %2762 = vmatprep.subr.mxu0 0.0
    %2763 = vmatpush2.msra.mxu0 0.0
    %2764 = vmatprep.subr.mxu0 0.0
    %2765 = vmatpush2.msra.mxu0 0.0
    %2766 = vmatprep.subr.mxu0 0.0
    %2767 = vmatpush2.msra.mxu0 0.0
    %2768 = vmatprep.subr.mxu0 0.0
    %2769 = vmatpush2.msra.mxu0 0.0
    %2770 = vmatprep.mubr.f32.mxu0 0.0
    %2771 = vmatmul.mubr.f32.gmra.mxu0 %v2688
    %v2772 = vpop.f32.mrf.mxu0
    %v2773 = vadd.f32 0.0, %v2772
    %v2774 = vpop.f32.mrf.mxu0
    %2775 = vmatprep.mubr.f32.mxu0 0.0
    %2776 = vmatmul.mubr.f32.gmra.mxu0 %v2690
    %v2777 = vpop.f32.mrf.mxu0
    %v2778 = vadd.f32 0.0, %v2777
    %v2779 = vpop.f32.mrf.mxu0
    %2780 = vmatprep.mubr.f32.mxu0 0.0
    %2781 = vmatmul.mubr.f32.gmra.mxu0 %v2692
    %v2782 = vpop.f32.mrf.mxu0
    %v2783 = vadd.f32 0.0, %v2782
    %v2784 = vpop.f32.mrf.mxu0
    %2785 = vmatprep.mubr.f32.mxu0 0.0
    %2786 = vmatmul.mubr.f32.gmra.mxu0 %v2694
    %v2787 = vpop.f32.mrf.mxu0
    %v2788 = vadd.f32 0.0, %v2787
    %v2789 = vpop.f32.mrf.mxu0
    %2790 = vmatprep.mubr.f32.mxu0 0.0
    %2791 = vmatmul.mubr.f32.gmra.mxu0 %v2696
    %v2792 = vpop.f32.mrf.mxu0
    %v2793 = vadd.f32 0.0, %v2792
    %v2794 = vpop.f32.mrf.mxu0
    %2795 = vmatprep.mubr.f32.mxu0 0.0
    %2796 = vmatmul.mubr.f32.gmra.mxu0 %v2698
    %v2797 = vpop.f32.mrf.mxu0
    %v2798 = vadd.f32 0.0, %v2797
    %v2799 = vpop.f32.mrf.mxu0
    %2800 = vmatprep.mubr.f32.mxu0 0.0
    %2801 = vmatmul.mubr.f32.gmra.mxu0 %v2700
    %v2802 = vpop.f32.mrf.mxu0
    %v2803 = vadd.f32 0.0, %v2802
    %v2804 = vpop.f32.mrf.mxu0
    %2805 = vmatprep.mubr.f32.mxu0 0.0
    %2806 = vmatmul.mubr.f32.gmra.mxu0 %v2702
    %v2807 = vpop.f32.mrf.mxu0
    %v2808 = vadd.f32 0.0, %v2807
    %v2809 = vpop.f32.mrf.mxu0
    %2810 = vmatprep.mubr.f32.mxu0 0.0
    %2811 = vmatmul.mubr.f32.gmra.mxu0 %v2704
    %v2812 = vpop.f32.mrf.mxu0
    %v2813 = vadd.f32 0.0, %v2812
    %v2814 = vpop.f32.mrf.mxu0
    %2815 = vdwg.mxu0
    %v2816 = vadd.f32 %v2306, %v2773
    %v2817 = vadd.f32 %v2307, %v2778
    %v2818 = vadd.f32 %v2308, %v2783
    %v2819 = vadd.f32 %v2309, %v2788
    %v2820 = vadd.f32 %v2310, %v2793
    %v2821 = vadd.f32 %v2311, %v2798
    %v2822 = vadd.f32 %v2312, %v2803
    %v2823 = vadd.f32 %v2313, %v2808
    %v2824 = vadd.f32 %v2314, %v2813
    %v2825 = vld [vmem:[%s1804 + $0x2] sm:$0x3f]
    %v2826 = vld [vmem:[%s1804 + $0xa] sm:$0x3f]
    %v2827 = vld [vmem:[%s1804 + $0x12] sm:$0x3f]
    %v2828 = vld [vmem:[%s1804 + $0x1a] sm:$0x3f]
    %v2829 = vld [vmem:[%s1804 + $0x22] sm:$0x3f]
    %v2830 = vld [vmem:[%s1804 + $0x2a] sm:$0x3f]
    %v2831 = vld [vmem:[%s1804 + $0x42] sm:$0x3f]
    %v2832 = vld [vmem:[%s1804 + $0x4a] sm:$0x3f]
    %v2833 = vld [vmem:[%s1804 + $0x52] sm:$0x3f]
    %v2834 = vld [vmem:[%s1804 + $0x5a] sm:$0x3f]
    %v2835 = vld [vmem:[%s1804 + $0x62] sm:$0x3f]
    %v2836 = vld [vmem:[%s1804 + $0x6a] sm:$0x3f]
    %v2849 = vcombine.high %v2825, %v2825
    %v2851 = vunpack.c.l.s4 1983009808
    %v2852 = vunpack.c.0.s8 %v2851
    %v2853 = vlaneseq
    %v2854 = vshrl.u32 %v2853, 7
    %v2855 = vsub.s32 %v2852, %v2854
    %v2856 = vrot.slane %v2825, %v2855
    %v2858 = vunpack.c.l.s4 1983009808
    %v2859 = vunpack.c.0.s8 %v2858
    %v2860 = vlaneseq
    %v2861 = vshrl.u32 %v2860, 7
    %v2862 = vsub.s32 %v2859, %v2861
    %v2863 = vrot.slane %v2849, %v2862
    %v2864 = vcombine.high %v2856, %v2856
    %v2865 = vcombine.high %v2826, %v2826
    %v2867 = vunpack.c.l.s4 1983009808
    %v2868 = vunpack.c.0.s8 %v2867
    %v2869 = vlaneseq
    %v2870 = vshrl.u32 %v2869, 7
    %v2871 = vsub.s32 %v2868, %v2870
    %v2872 = vrot.slane %v2826, %v2871
    %v2874 = vunpack.c.l.s4 1983009808
    %v2875 = vunpack.c.0.s8 %v2874
    %v2876 = vlaneseq
    %v2877 = vshrl.u32 %v2876, 7
    %v2878 = vsub.s32 %v2875, %v2877
    %v2879 = vrot.slane %v2865, %v2878
    %v2880 = vcombine.high %v2872, %v2872
    %v2881 = vcombine.high %v2827, %v2827
    %v2883 = vunpack.c.l.s4 1983009808
    %v2884 = vunpack.c.0.s8 %v2883
    %v2885 = vlaneseq
    %v2886 = vshrl.u32 %v2885, 7
    %v2887 = vsub.s32 %v2884, %v2886
    %v2888 = vrot.slane %v2827, %v2887
    %v2890 = vunpack.c.l.s4 1983009808
    %v2891 = vunpack.c.0.s8 %v2890
    %v2892 = vlaneseq
    %v2893 = vshrl.u32 %v2892, 7
    %v2894 = vsub.s32 %v2891, %v2893
    %v2895 = vrot.slane %v2881, %v2894
    %v2896 = vcombine.high %v2888, %v2888
    %v2897 = vcombine.high %v2828, %v2828
    %v2899 = vunpack.c.l.s4 1983009808
    %v2900 = vunpack.c.0.s8 %v2899
    %v2901 = vlaneseq
    %v2902 = vshrl.u32 %v2901, 7
    %v2903 = vsub.s32 %v2900, %v2902
    %v2904 = vrot.slane %v2828, %v2903
    %v2906 = vunpack.c.l.s4 1983009808
    %v2907 = vunpack.c.0.s8 %v2906
    %v2908 = vlaneseq
    %v2909 = vshrl.u32 %v2908, 7
    %v2910 = vsub.s32 %v2907, %v2909
    %v2911 = vrot.slane %v2897, %v2910
    %v2912 = vcombine.high %v2904, %v2904
    %v2913 = vcombine.high %v2829, %v2829
    %v2915 = vunpack.c.l.s4 1983009808
    %v2916 = vunpack.c.0.s8 %v2915
    %v2917 = vlaneseq
    %v2918 = vshrl.u32 %v2917, 7
    %v2919 = vsub.s32 %v2916, %v2918
    %v2920 = vrot.slane %v2829, %v2919
    %v2922 = vunpack.c.l.s4 1983009808
    %v2923 = vunpack.c.0.s8 %v2922
    %v2924 = vlaneseq
    %v2925 = vshrl.u32 %v2924, 7
    %v2926 = vsub.s32 %v2923, %v2925
    %v2927 = vrot.slane %v2913, %v2926
    %v2928 = vcombine.high %v2920, %v2920
    %v2929 = vcombine.high %v2830, %v2830
    %v2931 = vunpack.c.l.s4 1983009808
    %v2932 = vunpack.c.0.s8 %v2931
    %v2933 = vlaneseq
    %v2934 = vshrl.u32 %v2933, 7
    %v2935 = vsub.s32 %v2932, %v2934
    %v2936 = vrot.slane %v2830, %v2935
    %v2938 = vunpack.c.l.s4 1983009808
    %v2939 = vunpack.c.0.s8 %v2938
    %v2940 = vlaneseq
    %v2941 = vshrl.u32 %v2940, 7
    %v2942 = vsub.s32 %v2939, %v2941
    %v2943 = vrot.slane %v2929, %v2942
    %v2944 = vcombine.high %v2936, %v2936
    %v2945 = vcombine.high %v2831, %v2831
    %v2947 = vunpack.c.l.s4 1983009808
    %v2948 = vunpack.c.0.s8 %v2947
    %v2949 = vlaneseq
    %v2950 = vshrl.u32 %v2949, 7
    %v2951 = vsub.s32 %v2948, %v2950
    %v2952 = vrot.slane %v2831, %v2951
    %v2954 = vunpack.c.l.s4 1983009808
    %v2955 = vunpack.c.0.s8 %v2954
    %v2956 = vlaneseq
    %v2957 = vshrl.u32 %v2956, 7
    %v2958 = vsub.s32 %v2955, %v2957
    %v2959 = vrot.slane %v2945, %v2958
    %v2960 = vcombine.high %v2952, %v2952
    %v2961 = vcombine.high %v2832, %v2832
    %v2963 = vunpack.c.l.s4 1983009808
    %v2964 = vunpack.c.0.s8 %v2963
    %v2965 = vlaneseq
    %v2966 = vshrl.u32 %v2965, 7
    %v2967 = vsub.s32 %v2964, %v2966
    %v2968 = vrot.slane %v2832, %v2967
    %v2970 = vunpack.c.l.s4 1983009808
    %v2971 = vunpack.c.0.s8 %v2970
    %v2972 = vlaneseq
    %v2973 = vshrl.u32 %v2972, 7
    %v2974 = vsub.s32 %v2971, %v2973
    %v2975 = vrot.slane %v2961, %v2974
    %v2976 = vcombine.high %v2968, %v2968
    %v2977 = vcombine.high %v2833, %v2833
    %v2979 = vunpack.c.l.s4 1983009808
    %v2980 = vunpack.c.0.s8 %v2979
    %v2981 = vlaneseq
    %v2982 = vshrl.u32 %v2981, 7
    %v2983 = vsub.s32 %v2980, %v2982
    %v2984 = vrot.slane %v2833, %v2983
    %v2986 = vunpack.c.l.s4 1983009808
    %v2987 = vunpack.c.0.s8 %v2986
    %v2988 = vlaneseq
    %v2989 = vshrl.u32 %v2988, 7
    %v2990 = vsub.s32 %v2987, %v2989
    %v2991 = vrot.slane %v2977, %v2990
    %v2992 = vcombine.high %v2984, %v2984
    %v2993 = vcombine.high %v2834, %v2834
    %v2995 = vunpack.c.l.s4 1983009808
    %v2996 = vunpack.c.0.s8 %v2995
    %v2997 = vlaneseq
    %v2998 = vshrl.u32 %v2997, 7
    %v2999 = vsub.s32 %v2996, %v2998
    %v3000 = vrot.slane %v2834, %v2999
    %v3002 = vunpack.c.l.s4 1983009808
    %v3003 = vunpack.c.0.s8 %v3002
    %v3004 = vlaneseq
    %v3005 = vshrl.u32 %v3004, 7
    %v3006 = vsub.s32 %v3003, %v3005
    %v3007 = vrot.slane %v2993, %v3006
    %v3008 = vcombine.high %v3000, %v3000
    %v3009 = vcombine.high %v2835, %v2835
    %v3011 = vunpack.c.l.s4 1983009808
    %v3012 = vunpack.c.0.s8 %v3011
    %v3013 = vlaneseq
    %v3014 = vshrl.u32 %v3013, 7
    %v3015 = vsub.s32 %v3012, %v3014
    %v3016 = vrot.slane %v2835, %v3015
    %v3018 = vunpack.c.l.s4 1983009808
    %v3019 = vunpack.c.0.s8 %v3018
    %v3020 = vlaneseq
    %v3021 = vshrl.u32 %v3020, 7
    %v3022 = vsub.s32 %v3019, %v3021
    %v3023 = vrot.slane %v3009, %v3022
    %v3024 = vcombine.high %v3016, %v3016
    %v3025 = vcombine.high %v2836, %v2836
    %v3027 = vunpack.c.l.s4 1983009808
    %v3028 = vunpack.c.0.s8 %v3027
    %v3029 = vlaneseq
    %v3030 = vshrl.u32 %v3029, 7
    %v3031 = vsub.s32 %v3028, %v3030
    %v3032 = vrot.slane %v2836, %v3031
    %v3034 = vunpack.c.l.s4 1983009808
    %v3035 = vunpack.c.0.s8 %v3034
    %v3036 = vlaneseq
    %v3037 = vshrl.u32 %v3036, 7
    %v3038 = vsub.s32 %v3035, %v3037
    %v3039 = vrot.slane %v3025, %v3038
    %v3040 = vcombine.high %v3032, %v3032
    %v3041 = vld [vmem:[%s3 + $0xa0] sm:$0xff]
    %v3042 = vld [vmem:[%s3 + $0xa8] sm:$0xff]
    %v3043 = vld [vmem:[%s3 + $0xb0] sm:$0xff]
    %v3044 = vld [vmem:[%s3 + $0xb8] sm:$0xff]
    %v3045 = vcombine.low %v2856, %v2864
    %v3046 = vcombine.low %v2863, %v2872
    %v3048 = vunpack.c.l.s4 1983009808
    %v3049 = vunpack.c.0.s8 %v3048
    %v3050 = vlaneseq
    %v3051 = vshrl.u32 %v3050, 7
    %v3052 = vsub.s32 %v3049, %v3051
    %v3053 = vrot.slane %v3045, %v3052
    %v3055 = vunpack.c.l.s4 1983009808
    %v3056 = vunpack.c.0.s8 %v3055
    %v3057 = vlaneseq
    %v3058 = vshrl.u32 %v3057, 7
    %v3059 = vsub.s32 %v3056, %v3058
    %v3060 = vrot.slane %v3046, %v3059
    %v3061 = vcombine.low %v3053, %v3060
    %v3062 = vcombine.low %v2880, %v2879
    %v3063 = vcombine.low %v2888, %v2896
    %v3065 = vunpack.c.l.s4 1983009808
    %v3066 = vunpack.c.0.s8 %v3065
    %v3067 = vlaneseq
    %v3068 = vshrl.u32 %v3067, 7
    %v3069 = vsub.s32 %v3066, %v3068
    %v3070 = vrot.slane %v3062, %v3069
    %v3072 = vunpack.c.l.s4 1983009808
    %v3073 = vunpack.c.0.s8 %v3072
    %v3074 = vlaneseq
    %v3075 = vshrl.u32 %v3074, 7
    %v3076 = vsub.s32 %v3073, %v3075
    %v3077 = vrot.slane %v3063, %v3076
    %v3078 = vcombine.low %v3070, %v3077
    %v3079 = vcombine.low %v2895, %v2904
    %v3080 = vcombine.low %v2912, %v2911
    %v3082 = vunpack.c.l.s4 1983009808
    %v3083 = vunpack.c.0.s8 %v3082
    %v3084 = vlaneseq
    %v3085 = vshrl.u32 %v3084, 7
    %v3086 = vsub.s32 %v3083, %v3085
    %v3087 = vrot.slane %v3079, %v3086
    %v3089 = vunpack.c.l.s4 1983009808
    %v3090 = vunpack.c.0.s8 %v3089
    %v3091 = vlaneseq
    %v3092 = vshrl.u32 %v3091, 7
    %v3093 = vsub.s32 %v3090, %v3092
    %v3094 = vrot.slane %v3080, %v3093
    %v3095 = vcombine.low %v3087, %v3094
    %v3096 = vcombine.low %v2920, %v2928
    %v3097 = vcombine.low %v2927, %v2936
    %v3099 = vunpack.c.l.s4 1983009808
    %v3100 = vunpack.c.0.s8 %v3099
    %v3101 = vlaneseq
    %v3102 = vshrl.u32 %v3101, 7
    %v3103 = vsub.s32 %v3100, %v3102
    %v3104 = vrot.slane %v3096, %v3103
    %v3106 = vunpack.c.l.s4 1983009808
    %v3107 = vunpack.c.0.s8 %v3106
    %v3108 = vlaneseq
    %v3109 = vshrl.u32 %v3108, 7
    %v3110 = vsub.s32 %v3107, %v3109
    %v3111 = vrot.slane %v3097, %v3110
    %v3112 = vcombine.low %v3104, %v3111
    %v3113 = vcombine.low %v2944, %v2943
    %v3114 = vcombine.low %v2952, %v2960
    %v3116 = vunpack.c.l.s4 1983009808
    %v3117 = vunpack.c.0.s8 %v3116
    %v3118 = vlaneseq
    %v3119 = vshrl.u32 %v3118, 7
    %v3120 = vsub.s32 %v3117, %v3119
    %v3121 = vrot.slane %v3113, %v3120
    %v3123 = vunpack.c.l.s4 1983009808
    %v3124 = vunpack.c.0.s8 %v3123
    %v3125 = vlaneseq
    %v3126 = vshrl.u32 %v3125, 7
    %v3127 = vsub.s32 %v3124, %v3126
    %v3128 = vrot.slane %v3114, %v3127
    %v3129 = vcombine.low %v3121, %v3128
    %v3130 = vcombine.low %v2959, %v2968
    %v3131 = vcombine.low %v2976, %v2975
    %v3133 = vunpack.c.l.s4 1983009808
    %v3134 = vunpack.c.0.s8 %v3133
    %v3135 = vlaneseq
    %v3136 = vshrl.u32 %v3135, 7
    %v3137 = vsub.s32 %v3134, %v3136
    %v3138 = vrot.slane %v3130, %v3137
    %v3140 = vunpack.c.l.s4 1983009808
    %v3141 = vunpack.c.0.s8 %v3140
    %v3142 = vlaneseq
    %v3143 = vshrl.u32 %v3142, 7
    %v3144 = vsub.s32 %v3141, %v3143
    %v3145 = vrot.slane %v3131, %v3144
    %v3146 = vcombine.low %v3138, %v3145
    %v3147 = vcombine.low %v2984, %v2992
    %v3148 = vcombine.low %v2991, %v3000
    %v3150 = vunpack.c.l.s4 1983009808
    %v3151 = vunpack.c.0.s8 %v3150
    %v3152 = vlaneseq
    %v3153 = vshrl.u32 %v3152, 7
    %v3154 = vsub.s32 %v3151, %v3153
    %v3155 = vrot.slane %v3147, %v3154
    %v3157 = vunpack.c.l.s4 1983009808
    %v3158 = vunpack.c.0.s8 %v3157
    %v3159 = vlaneseq
    %v3160 = vshrl.u32 %v3159, 7
    %v3161 = vsub.s32 %v3158, %v3160
    %v3162 = vrot.slane %v3148, %v3161
    %v3163 = vcombine.low %v3155, %v3162
    %v3164 = vcombine.low %v3008, %v3007
    %v3165 = vcombine.low %v3016, %v3024
    %v3167 = vunpack.c.l.s4 1983009808
    %v3168 = vunpack.c.0.s8 %v3167
    %v3169 = vlaneseq
    %v3170 = vshrl.u32 %v3169, 7
    %v3171 = vsub.s32 %v3168, %v3170
    %v3172 = vrot.slane %v3164, %v3171
    %v3174 = vunpack.c.l.s4 1983009808
    %v3175 = vunpack.c.0.s8 %v3174
    %v3176 = vlaneseq
    %v3177 = vshrl.u32 %v3176, 7
    %v3178 = vsub.s32 %v3175, %v3177
    %v3179 = vrot.slane %v3165, %v3178
    %v3180 = vcombine.low %v3172, %v3179
    %v3181 = vcombine.low %v3023, %v3032
    %v3182 = vcombine.low %v3040, %v3039
    %v3184 = vunpack.c.l.s4 1983009808
    %v3185 = vunpack.c.0.s8 %v3184
    %v3186 = vlaneseq
    %v3187 = vshrl.u32 %v3186, 7
    %v3188 = vsub.s32 %v3185, %v3187
    %v3189 = vrot.slane %v3181, %v3188
    %v3191 = vunpack.c.l.s4 1983009808
    %v3192 = vunpack.c.0.s8 %v3191
    %v3193 = vlaneseq
    %v3194 = vshrl.u32 %v3193, 7
    %v3195 = vsub.s32 %v3192, %v3194
    %v3196 = vrot.slane %v3182, %v3195
    %v3197 = vcombine.low %v3189, %v3196
    %v3198 = vsel %vm275, %v3061, 0
    %v3200 = vsel %vm275, %v3078, 0
    %v3202 = vsel %vm275, %v3095, 0
    %v3204 = vsel %vm275, %v3112, 0
    %v3206 = vsel %vm275, %v3129, 0
    %v3208 = vsel %vm275, %v3146, 0
    %v3210 = vsel %vm275, %v3163, 0
    %v3212 = vsel %vm275, %v3180, 0
    %v3214 = vsel %vm275, %v3197, 0
    %3216 = vmatprep.subr.mxu0 0.0
    %3217 = vmatpush1.msra.mxu0 0.0
    %3218 = vmatprep.subr.mxu0 0.0
    %3219 = vmatpush1.msra.mxu0 0.0
    %3220 = vmatprep.subr.mxu0 0.0
    %3221 = vmatpush1.msra.mxu0 0.0
    %3222 = vmatprep.subr.mxu0 0.0
    %3223 = vmatpush1.msra.mxu0 0.0
    %3224 = vmatprep.subr.mxu0 0.0
    %3225 = vmatpush1.msra.mxu0 0.0
    %3226 = vmatprep.subr.mxu0 0.0
    %3227 = vmatpush1.msra.mxu0 0.0
    %3228 = vmatprep.subr.mxu0 0.0
    %3229 = vmatpush1.msra.mxu0 0.0
    %3230 = vmatprep.subr.mxu0 0.0
    %3231 = vmatpush1.msra.mxu0 0.0
    %3232 = vmatprep.subr.mxu0 0.0
    %3233 = vmatpush1.msra.mxu0 0.0
    %3234 = vmatprep.subr.mxu0 0.0
    %3235 = vmatpush1.msra.mxu0 0.0
    %3236 = vmatprep.subr.mxu0 0.0
    %3237 = vmatpush1.msra.mxu0 0.0
    %3238 = vmatprep.subr.mxu0 0.0
    %3239 = vmatpush1.msra.mxu0 0.0
    %3240 = vmatprep.subr.mxu0 0.0
    %3241 = vmatpush1.msra.mxu0 %v3044
    %3242 = vmatprep.subr.mxu0 0.0
    %3243 = vmatpush1.msra.mxu0 %v3043
    %3244 = vmatprep.subr.mxu0 0.0
    %3245 = vmatpush1.msra.mxu0 %v3042
    %3246 = vmatprep.subr.mxu0 0.0
    %3247 = vmatpush1.msra.mxu0 %v3041
    %3248 = vmatprep.subr.mxu0 0.0
    %3249 = vmatpush2.msra.mxu0 0.0
    %3250 = vmatprep.subr.mxu0 0.0
    %3251 = vmatpush2.msra.mxu0 0.0
    %3252 = vmatprep.subr.mxu0 0.0
    %3253 = vmatpush2.msra.mxu0 0.0
    %3254 = vmatprep.subr.mxu0 0.0
    %3255 = vmatpush2.msra.mxu0 0.0
    %3256 = vmatprep.subr.mxu0 0.0
    %3257 = vmatpush2.msra.mxu0 0.0
    %3258 = vmatprep.subr.mxu0 0.0
    %3259 = vmatpush2.msra.mxu0 0.0
    %3260 = vmatprep.subr.mxu0 0.0
    %3261 = vmatpush2.msra.mxu0 0.0
    %3262 = vmatprep.subr.mxu0 0.0
    %3263 = vmatpush2.msra.mxu0 0.0
    %3264 = vmatprep.subr.mxu0 0.0
    %3265 = vmatpush2.msra.mxu0 0.0
    %3266 = vmatprep.subr.mxu0 0.0
    %3267 = vmatpush2.msra.mxu0 0.0
    %3268 = vmatprep.subr.mxu0 0.0
    %3269 = vmatpush2.msra.mxu0 0.0
    %3270 = vmatprep.subr.mxu0 0.0
    %3271 = vmatpush2.msra.mxu0 0.0
    %3272 = vmatprep.subr.mxu0 0.0
    %3273 = vmatpush2.msra.mxu0 0.0
    %3274 = vmatprep.subr.mxu0 0.0
    %3275 = vmatpush2.msra.mxu0 0.0
    %3276 = vmatprep.subr.mxu0 0.0
    %3277 = vmatpush2.msra.mxu0 0.0
    %3278 = vmatprep.subr.mxu0 0.0
    %3279 = vmatpush2.msra.mxu0 0.0
    %3280 = vmatprep.mubr.f32.mxu0 0.0
    %3281 = vmatmul.mubr.f32.gmra.mxu0 %v3198
    %v3282 = vpop.f32.mrf.mxu0
    %v3283 = vadd.f32 0.0, %v3282
    %v3284 = vpop.f32.mrf.mxu0
    %3285 = vmatprep.mubr.f32.mxu0 0.0
    %3286 = vmatmul.mubr.f32.gmra.mxu0 %v3200
    %v3287 = vpop.f32.mrf.mxu0
    %v3288 = vadd.f32 0.0, %v3287
    %v3289 = vpop.f32.mrf.mxu0
    %3290 = vmatprep.mubr.f32.mxu0 0.0
    %3291 = vmatmul.mubr.f32.gmra.mxu0 %v3202
    %v3292 = vpop.f32.mrf.mxu0
    %v3293 = vadd.f32 0.0, %v3292
    %v3294 = vpop.f32.mrf.mxu0
    %3295 = vmatprep.mubr.f32.mxu0 0.0
    %3296 = vmatmul.mubr.f32.gmra.mxu0 %v3204
    %v3297 = vpop.f32.mrf.mxu0
    %v3298 = vadd.f32 0.0, %v3297
    %v3299 = vpop.f32.mrf.mxu0
    %3300 = vmatprep.mubr.f32.mxu0 0.0
    %3301 = vmatmul.mubr.f32.gmra.mxu0 %v3206
    %v3302 = vpop.f32.mrf.mxu0
    %v3303 = vadd.f32 0.0, %v3302
    %v3304 = vpop.f32.mrf.mxu0
    %3305 = vmatprep.mubr.f32.mxu0 0.0
    %3306 = vmatmul.mubr.f32.gmra.mxu0 %v3208
    %v3307 = vpop.f32.mrf.mxu0
    %v3308 = vadd.f32 0.0, %v3307
    %v3309 = vpop.f32.mrf.mxu0
    %3310 = vmatprep.mubr.f32.mxu0 0.0
    %3311 = vmatmul.mubr.f32.gmra.mxu0 %v3210
    %v3312 = vpop.f32.mrf.mxu0
    %v3313 = vadd.f32 0.0, %v3312
    %v3314 = vpop.f32.mrf.mxu0
    %3315 = vmatprep.mubr.f32.mxu0 0.0
    %3316 = vmatmul.mubr.f32.gmra.mxu0 %v3212
    %v3317 = vpop.f32.mrf.mxu0
    %v3318 = vadd.f32 0.0, %v3317
    %v3319 = vpop.f32.mrf.mxu0
    %3320 = vmatprep.mubr.f32.mxu0 0.0
    %3321 = vmatmul.mubr.f32.gmra.mxu0 %v3214
    %v3322 = vpop.f32.mrf.mxu0
    %v3323 = vadd.f32 0.0, %v3322
    %v3324 = vpop.f32.mrf.mxu0
    %3325 = vdwg.mxu0
    %v3326 = vadd.f32 %v2816, %v3283
    %v3327 = vadd.f32 %v2817, %v3288
    %v3328 = vadd.f32 %v2818, %v3293
    %v3329 = vadd.f32 %v2819, %v3298
    %v3330 = vadd.f32 %v2820, %v3303
    %v3331 = vadd.f32 %v2821, %v3308
    %v3332 = vadd.f32 %v2822, %v3313
    %v3333 = vadd.f32 %v2823, %v3318
    %v3334 = vadd.f32 %v2824, %v3323
    %s3335 = scalar_lea.vmem [#allocation2], 16
    %v3336 = vld [vmem:[%s3335] sm:$0x3f]
    %v3337 = vld [vmem:[%s3335 + $0x8] sm:$0x3f]
    %v3338 = vld [vmem:[%s3335 + $0x10] sm:$0x3f]
    %v3339 = vld [vmem:[%s3335 + $0x18] sm:$0x3f]
    %v3340 = vld [vmem:[%s3335 + $0x20] sm:$0x3f]
    %v3341 = vld [vmem:[%s3335 + $0x28] sm:$0x3f]
    %v3342 = vld [vmem:[%s3335 + $0x40] sm:$0x3f]
    %v3343 = vld [vmem:[%s3335 + $0x48] sm:$0x3f]
    %v3344 = vld [vmem:[%s3335 + $0x50] sm:$0x3f]
    %v3345 = vld [vmem:[%s3335 + $0x58] sm:$0x3f]
    %v3346 = vld [vmem:[%s3335 + $0x60] sm:$0x3f]
    %v3347 = vld [vmem:[%s3335 + $0x68] sm:$0x3f]
    %v3360 = vcombine.high %v3336, %v3336
    %v3362 = vunpack.c.l.s4 1983009808
    %v3363 = vunpack.c.0.s8 %v3362
    %v3364 = vlaneseq
    %v3365 = vshrl.u32 %v3364, 7
    %v3366 = vsub.s32 %v3363, %v3365
    %v3367 = vrot.slane %v3336, %v3366
    %v3369 = vunpack.c.l.s4 1983009808
    %v3370 = vunpack.c.0.s8 %v3369
    %v3371 = vlaneseq
    %v3372 = vshrl.u32 %v3371, 7
    %v3373 = vsub.s32 %v3370, %v3372
    %v3374 = vrot.slane %v3360, %v3373
    %v3375 = vcombine.high %v3367, %v3367
    %v3376 = vcombine.high %v3337, %v3337
    %v3378 = vunpack.c.l.s4 1983009808
    %v3379 = vunpack.c.0.s8 %v3378
    %v3380 = vlaneseq
    %v3381 = vshrl.u32 %v3380, 7
    %v3382 = vsub.s32 %v3379, %v3381
    %v3383 = vrot.slane %v3337, %v3382
    %v3385 = vunpack.c.l.s4 1983009808
    %v3386 = vunpack.c.0.s8 %v3385
    %v3387 = vlaneseq
    %v3388 = vshrl.u32 %v3387, 7
    %v3389 = vsub.s32 %v3386, %v3388
    %v3390 = vrot.slane %v3376, %v3389
    %v3391 = vcombine.high %v3383, %v3383
    %v3392 = vcombine.high %v3338, %v3338
    %v3394 = vunpack.c.l.s4 1983009808
    %v3395 = vunpack.c.0.s8 %v3394
    %v3396 = vlaneseq
    %v3397 = vshrl.u32 %v3396, 7
    %v3398 = vsub.s32 %v3395, %v3397
    %v3399 = vrot.slane %v3338, %v3398
    %v3401 = vunpack.c.l.s4 1983009808
    %v3402 = vunpack.c.0.s8 %v3401
    %v3403 = vlaneseq
    %v3404 = vshrl.u32 %v3403, 7
    %v3405 = vsub.s32 %v3402, %v3404
    %v3406 = vrot.slane %v3392, %v3405
    %v3407 = vcombine.high %v3399, %v3399
    %v3408 = vcombine.high %v3339, %v3339
    %v3410 = vunpack.c.l.s4 1983009808
    %v3411 = vunpack.c.0.s8 %v3410
    %v3412 = vlaneseq
    %v3413 = vshrl.u32 %v3412, 7
    %v3414 = vsub.s32 %v3411, %v3413
    %v3415 = vrot.slane %v3339, %v3414
    %v3417 = vunpack.c.l.s4 1983009808
    %v3418 = vunpack.c.0.s8 %v3417
    %v3419 = vlaneseq
    %v3420 = vshrl.u32 %v3419, 7
    %v3421 = vsub.s32 %v3418, %v3420
    %v3422 = vrot.slane %v3408, %v3421
    %v3423 = vcombine.high %v3415, %v3415
    %v3424 = vcombine.high %v3340, %v3340
    %v3426 = vunpack.c.l.s4 1983009808
    %v3427 = vunpack.c.0.s8 %v3426
    %v3428 = vlaneseq
    %v3429 = vshrl.u32 %v3428, 7
    %v3430 = vsub.s32 %v3427, %v3429
    %v3431 = vrot.slane %v3340, %v3430
    %v3433 = vunpack.c.l.s4 1983009808
    %v3434 = vunpack.c.0.s8 %v3433
    %v3435 = vlaneseq
    %v3436 = vshrl.u32 %v3435, 7
    %v3437 = vsub.s32 %v3434, %v3436
    %v3438 = vrot.slane %v3424, %v3437
    %v3439 = vcombine.high %v3431, %v3431
    %v3440 = vcombine.high %v3341, %v3341
    %v3442 = vunpack.c.l.s4 1983009808
    %v3443 = vunpack.c.0.s8 %v3442
    %v3444 = vlaneseq
    %v3445 = vshrl.u32 %v3444, 7
    %v3446 = vsub.s32 %v3443, %v3445
    %v3447 = vrot.slane %v3341, %v3446
    %v3449 = vunpack.c.l.s4 1983009808
    %v3450 = vunpack.c.0.s8 %v3449
    %v3451 = vlaneseq
    %v3452 = vshrl.u32 %v3451, 7
    %v3453 = vsub.s32 %v3450, %v3452
    %v3454 = vrot.slane %v3440, %v3453
    %v3455 = vcombine.high %v3447, %v3447
    %v3456 = vcombine.high %v3342, %v3342
    %v3458 = vunpack.c.l.s4 1983009808
    %v3459 = vunpack.c.0.s8 %v3458
    %v3460 = vlaneseq
    %v3461 = vshrl.u32 %v3460, 7
    %v3462 = vsub.s32 %v3459, %v3461
    %v3463 = vrot.slane %v3342, %v3462
    %v3465 = vunpack.c.l.s4 1983009808
    %v3466 = vunpack.c.0.s8 %v3465
    %v3467 = vlaneseq
    %v3468 = vshrl.u32 %v3467, 7
    %v3469 = vsub.s32 %v3466, %v3468
    %v3470 = vrot.slane %v3456, %v3469
    %v3471 = vcombine.high %v3463, %v3463
    %v3472 = vcombine.high %v3343, %v3343
    %v3474 = vunpack.c.l.s4 1983009808
    %v3475 = vunpack.c.0.s8 %v3474
    %v3476 = vlaneseq
    %v3477 = vshrl.u32 %v3476, 7
    %v3478 = vsub.s32 %v3475, %v3477
    %v3479 = vrot.slane %v3343, %v3478
    %v3481 = vunpack.c.l.s4 1983009808
    %v3482 = vunpack.c.0.s8 %v3481
    %v3483 = vlaneseq
    %v3484 = vshrl.u32 %v3483, 7
    %v3485 = vsub.s32 %v3482, %v3484
    %v3486 = vrot.slane %v3472, %v3485
    %v3487 = vcombine.high %v3479, %v3479
    %v3488 = vcombine.high %v3344, %v3344
    %v3490 = vunpack.c.l.s4 1983009808
    %v3491 = vunpack.c.0.s8 %v3490
    %v3492 = vlaneseq
    %v3493 = vshrl.u32 %v3492, 7
    %v3494 = vsub.s32 %v3491, %v3493
    %v3495 = vrot.slane %v3344, %v3494
    %v3497 = vunpack.c.l.s4 1983009808
    %v3498 = vunpack.c.0.s8 %v3497
    %v3499 = vlaneseq
    %v3500 = vshrl.u32 %v3499, 7
    %v3501 = vsub.s32 %v3498, %v3500
    %v3502 = vrot.slane %v3488, %v3501
    %v3503 = vcombine.high %v3495, %v3495
    %v3504 = vcombine.high %v3345, %v3345
    %v3506 = vunpack.c.l.s4 1983009808
    %v3507 = vunpack.c.0.s8 %v3506
    %v3508 = vlaneseq
    %v3509 = vshrl.u32 %v3508, 7
    %v3510 = vsub.s32 %v3507, %v3509
    %v3511 = vrot.slane %v3345, %v3510
    %v3513 = vunpack.c.l.s4 1983009808
    %v3514 = vunpack.c.0.s8 %v3513
    %v3515 = vlaneseq
    %v3516 = vshrl.u32 %v3515, 7
    %v3517 = vsub.s32 %v3514, %v3516
    %v3518 = vrot.slane %v3504, %v3517
    %v3519 = vcombine.high %v3511, %v3511
    %v3520 = vcombine.high %v3346, %v3346
    %v3522 = vunpack.c.l.s4 1983009808
    %v3523 = vunpack.c.0.s8 %v3522
    %v3524 = vlaneseq
    %v3525 = vshrl.u32 %v3524, 7
    %v3526 = vsub.s32 %v3523, %v3525
    %v3527 = vrot.slane %v3346, %v3526
    %v3529 = vunpack.c.l.s4 1983009808
    %v3530 = vunpack.c.0.s8 %v3529
    %v3531 = vlaneseq
    %v3532 = vshrl.u32 %v3531, 7
    %v3533 = vsub.s32 %v3530, %v3532
    %v3534 = vrot.slane %v3520, %v3533
    %v3535 = vcombine.high %v3527, %v3527
    %v3536 = vcombine.high %v3347, %v3347
    %v3538 = vunpack.c.l.s4 1983009808
    %v3539 = vunpack.c.0.s8 %v3538
    %v3540 = vlaneseq
    %v3541 = vshrl.u32 %v3540, 7
    %v3542 = vsub.s32 %v3539, %v3541
    %v3543 = vrot.slane %v3347, %v3542
    %v3545 = vunpack.c.l.s4 1983009808
    %v3546 = vunpack.c.0.s8 %v3545
    %v3547 = vlaneseq
    %v3548 = vshrl.u32 %v3547, 7
    %v3549 = vsub.s32 %v3546, %v3548
    %v3550 = vrot.slane %v3536, %v3549
    %v3551 = vcombine.high %v3543, %v3543
    %v3552 = vld [vmem:[%s3 + $0xc0] sm:$0xff]
    %v3553 = vld [vmem:[%s3 + $0xc8] sm:$0xff]
    %v3554 = vld [vmem:[%s3 + $0xd0] sm:$0xff]
    %v3555 = vld [vmem:[%s3 + $0xd8] sm:$0xff]
    %v3556 = vcombine.low %v3367, %v3375
    %v3557 = vcombine.low %v3374, %v3383
    %v3559 = vunpack.c.l.s4 1983009808
    %v3560 = vunpack.c.0.s8 %v3559
    %v3561 = vlaneseq
    %v3562 = vshrl.u32 %v3561, 7
    %v3563 = vsub.s32 %v3560, %v3562
    %v3564 = vrot.slane %v3556, %v3563
    %v3566 = vunpack.c.l.s4 1983009808
    %v3567 = vunpack.c.0.s8 %v3566
    %v3568 = vlaneseq
    %v3569 = vshrl.u32 %v3568, 7
    %v3570 = vsub.s32 %v3567, %v3569
    %v3571 = vrot.slane %v3557, %v3570
    %v3572 = vcombine.low %v3564, %v3571
    %v3573 = vcombine.low %v3391, %v3390
    %v3574 = vcombine.low %v3399, %v3407
    %v3576 = vunpack.c.l.s4 1983009808
    %v3577 = vunpack.c.0.s8 %v3576
    %v3578 = vlaneseq
    %v3579 = vshrl.u32 %v3578, 7
    %v3580 = vsub.s32 %v3577, %v3579
    %v3581 = vrot.slane %v3573, %v3580
    %v3583 = vunpack.c.l.s4 1983009808
    %v3584 = vunpack.c.0.s8 %v3583
    %v3585 = vlaneseq
    %v3586 = vshrl.u32 %v3585, 7
    %v3587 = vsub.s32 %v3584, %v3586
    %v3588 = vrot.slane %v3574, %v3587
    %v3589 = vcombine.low %v3581, %v3588
    %v3590 = vcombine.low %v3406, %v3415
    %v3591 = vcombine.low %v3423, %v3422
    %v3593 = vunpack.c.l.s4 1983009808
    %v3594 = vunpack.c.0.s8 %v3593
    %v3595 = vlaneseq
    %v3596 = vshrl.u32 %v3595, 7
    %v3597 = vsub.s32 %v3594, %v3596
    %v3598 = vrot.slane %v3590, %v3597
    %v3600 = vunpack.c.l.s4 1983009808
    %v3601 = vunpack.c.0.s8 %v3600
    %v3602 = vlaneseq
    %v3603 = vshrl.u32 %v3602, 7
    %v3604 = vsub.s32 %v3601, %v3603
    %v3605 = vrot.slane %v3591, %v3604
    %v3606 = vcombine.low %v3598, %v3605
    %v3607 = vcombine.low %v3431, %v3439
    %v3608 = vcombine.low %v3438, %v3447
    %v3610 = vunpack.c.l.s4 1983009808
    %v3611 = vunpack.c.0.s8 %v3610
    %v3612 = vlaneseq
    %v3613 = vshrl.u32 %v3612, 7
    %v3614 = vsub.s32 %v3611, %v3613
    %v3615 = vrot.slane %v3607, %v3614
    %v3617 = vunpack.c.l.s4 1983009808
    %v3618 = vunpack.c.0.s8 %v3617
    %v3619 = vlaneseq
    %v3620 = vshrl.u32 %v3619, 7
    %v3621 = vsub.s32 %v3618, %v3620
    %v3622 = vrot.slane %v3608, %v3621
    %v3623 = vcombine.low %v3615, %v3622
    %v3624 = vcombine.low %v3455, %v3454
    %v3625 = vcombine.low %v3463, %v3471
    %v3627 = vunpack.c.l.s4 1983009808
    %v3628 = vunpack.c.0.s8 %v3627
    %v3629 = vlaneseq
    %v3630 = vshrl.u32 %v3629, 7
    %v3631 = vsub.s32 %v3628, %v3630
    %v3632 = vrot.slane %v3624, %v3631
    %v3634 = vunpack.c.l.s4 1983009808
    %v3635 = vunpack.c.0.s8 %v3634
    %v3636 = vlaneseq
    %v3637 = vshrl.u32 %v3636, 7
    %v3638 = vsub.s32 %v3635, %v3637
    %v3639 = vrot.slane %v3625, %v3638
    %v3640 = vcombine.low %v3632, %v3639
    %v3641 = vcombine.low %v3470, %v3479
    %v3642 = vcombine.low %v3487, %v3486
    %v3644 = vunpack.c.l.s4 1983009808
    %v3645 = vunpack.c.0.s8 %v3644
    %v3646 = vlaneseq
    %v3647 = vshrl.u32 %v3646, 7
    %v3648 = vsub.s32 %v3645, %v3647
    %v3649 = vrot.slane %v3641, %v3648
    %v3651 = vunpack.c.l.s4 1983009808
    %v3652 = vunpack.c.0.s8 %v3651
    %v3653 = vlaneseq
    %v3654 = vshrl.u32 %v3653, 7
    %v3655 = vsub.s32 %v3652, %v3654
    %v3656 = vrot.slane %v3642, %v3655
    %v3657 = vcombine.low %v3649, %v3656
    %v3658 = vcombine.low %v3495, %v3503
    %v3659 = vcombine.low %v3502, %v3511
    %v3661 = vunpack.c.l.s4 1983009808
    %v3662 = vunpack.c.0.s8 %v3661
    %v3663 = vlaneseq
    %v3664 = vshrl.u32 %v3663, 7
    %v3665 = vsub.s32 %v3662, %v3664
    %v3666 = vrot.slane %v3658, %v3665
    %v3668 = vunpack.c.l.s4 1983009808
    %v3669 = vunpack.c.0.s8 %v3668
    %v3670 = vlaneseq
    %v3671 = vshrl.u32 %v3670, 7
    %v3672 = vsub.s32 %v3669, %v3671
    %v3673 = vrot.slane %v3659, %v3672
    %v3674 = vcombine.low %v3666, %v3673
    %v3675 = vcombine.low %v3519, %v3518
    %v3676 = vcombine.low %v3527, %v3535
    %v3678 = vunpack.c.l.s4 1983009808
    %v3679 = vunpack.c.0.s8 %v3678
    %v3680 = vlaneseq
    %v3681 = vshrl.u32 %v3680, 7
    %v3682 = vsub.s32 %v3679, %v3681
    %v3683 = vrot.slane %v3675, %v3682
    %v3685 = vunpack.c.l.s4 1983009808
    %v3686 = vunpack.c.0.s8 %v3685
    %v3687 = vlaneseq
    %v3688 = vshrl.u32 %v3687, 7
    %v3689 = vsub.s32 %v3686, %v3688
    %v3690 = vrot.slane %v3676, %v3689
    %v3691 = vcombine.low %v3683, %v3690
    %v3692 = vcombine.low %v3534, %v3543
    %v3693 = vcombine.low %v3551, %v3550
    %v3695 = vunpack.c.l.s4 1983009808
    %v3696 = vunpack.c.0.s8 %v3695
    %v3697 = vlaneseq
    %v3698 = vshrl.u32 %v3697, 7
    %v3699 = vsub.s32 %v3696, %v3698
    %v3700 = vrot.slane %v3692, %v3699
    %v3702 = vunpack.c.l.s4 1983009808
    %v3703 = vunpack.c.0.s8 %v3702
    %v3704 = vlaneseq
    %v3705 = vshrl.u32 %v3704, 7
    %v3706 = vsub.s32 %v3703, %v3705
    %v3707 = vrot.slane %v3693, %v3706
    %v3708 = vcombine.low %v3700, %v3707
    %v3709 = vsel %vm275, %v3572, 0
    %v3711 = vsel %vm275, %v3589, 0
    %v3713 = vsel %vm275, %v3606, 0
    %v3715 = vsel %vm275, %v3623, 0
    %v3717 = vsel %vm275, %v3640, 0
    %v3719 = vsel %vm275, %v3657, 0
    %v3721 = vsel %vm275, %v3674, 0
    %v3723 = vsel %vm275, %v3691, 0
    %v3725 = vsel %vm275, %v3708, 0
    %3727 = vmatprep.subr.mxu0 0.0
    %3728 = vmatpush1.msra.mxu0 0.0
    %3729 = vmatprep.subr.mxu0 0.0
    %3730 = vmatpush1.msra.mxu0 0.0
    %3731 = vmatprep.subr.mxu0 0.0
    %3732 = vmatpush1.msra.mxu0 0.0
    %3733 = vmatprep.subr.mxu0 0.0
    %3734 = vmatpush1.msra.mxu0 0.0
    %3735 = vmatprep.subr.mxu0 0.0
    %3736 = vmatpush1.msra.mxu0 0.0
    %3737 = vmatprep.subr.mxu0 0.0
    %3738 = vmatpush1.msra.mxu0 0.0
    %3739 = vmatprep.subr.mxu0 0.0
    %3740 = vmatpush1.msra.mxu0 0.0
    %3741 = vmatprep.subr.mxu0 0.0
    %3742 = vmatpush1.msra.mxu0 0.0
    %3743 = vmatprep.subr.mxu0 0.0
    %3744 = vmatpush1.msra.mxu0 0.0
    %3745 = vmatprep.subr.mxu0 0.0
    %3746 = vmatpush1.msra.mxu0 0.0
    %3747 = vmatprep.subr.mxu0 0.0
    %3748 = vmatpush1.msra.mxu0 0.0
    %3749 = vmatprep.subr.mxu0 0.0
    %3750 = vmatpush1.msra.mxu0 0.0
    %3751 = vmatprep.subr.mxu0 0.0
    %3752 = vmatpush1.msra.mxu0 %v3555
    %3753 = vmatprep.subr.mxu0 0.0
    %3754 = vmatpush1.msra.mxu0 %v3554
    %3755 = vmatprep.subr.mxu0 0.0
    %3756 = vmatpush1.msra.mxu0 %v3553
    %3757 = vmatprep.subr.mxu0 0.0
    %3758 = vmatpush1.msra.mxu0 %v3552
    %3759 = vmatprep.subr.mxu0 0.0
    %3760 = vmatpush2.msra.mxu0 0.0
    %3761 = vmatprep.subr.mxu0 0.0
    %3762 = vmatpush2.msra.mxu0 0.0
    %3763 = vmatprep.subr.mxu0 0.0
    %3764 = vmatpush2.msra.mxu0 0.0
    %3765 = vmatprep.subr.mxu0 0.0
    %3766 = vmatpush2.msra.mxu0 0.0
    %3767 = vmatprep.subr.mxu0 0.0
    %3768 = vmatpush2.msra.mxu0 0.0
    %3769 = vmatprep.subr.mxu0 0.0
    %3770 = vmatpush2.msra.mxu0 0.0
    %3771 = vmatprep.subr.mxu0 0.0
    %3772 = vmatpush2.msra.mxu0 0.0
    %3773 = vmatprep.subr.mxu0 0.0
    %3774 = vmatpush2.msra.mxu0 0.0
    %3775 = vmatprep.subr.mxu0 0.0
    %3776 = vmatpush2.msra.mxu0 0.0
    %3777 = vmatprep.subr.mxu0 0.0
    %3778 = vmatpush2.msra.mxu0 0.0
    %3779 = vmatprep.subr.mxu0 0.0
    %3780 = vmatpush2.msra.mxu0 0.0
    %3781 = vmatprep.subr.mxu0 0.0
    %3782 = vmatpush2.msra.mxu0 0.0
    %3783 = vmatprep.subr.mxu0 0.0
    %3784 = vmatpush2.msra.mxu0 0.0
    %3785 = vmatprep.subr.mxu0 0.0
    %3786 = vmatpush2.msra.mxu0 0.0
    %3787 = vmatprep.subr.mxu0 0.0
    %3788 = vmatpush2.msra.mxu0 0.0
    %3789 = vmatprep.subr.mxu0 0.0
    %3790 = vmatpush2.msra.mxu0 0.0
    %3791 = vmatprep.mubr.f32.mxu0 0.0
    %3792 = vmatmul.mubr.f32.gmra.mxu0 %v3709
    %v3793 = vpop.f32.mrf.mxu0
    %v3794 = vadd.f32 0.0, %v3793
    %v3795 = vpop.f32.mrf.mxu0
    %3796 = vmatprep.mubr.f32.mxu0 0.0
    %3797 = vmatmul.mubr.f32.gmra.mxu0 %v3711
    %v3798 = vpop.f32.mrf.mxu0
    %v3799 = vadd.f32 0.0, %v3798
    %v3800 = vpop.f32.mrf.mxu0
    %3801 = vmatprep.mubr.f32.mxu0 0.0
    %3802 = vmatmul.mubr.f32.gmra.mxu0 %v3713
    %v3803 = vpop.f32.mrf.mxu0
    %v3804 = vadd.f32 0.0, %v3803
    %v3805 = vpop.f32.mrf.mxu0
    %3806 = vmatprep.mubr.f32.mxu0 0.0
    %3807 = vmatmul.mubr.f32.gmra.mxu0 %v3715
    %v3808 = vpop.f32.mrf.mxu0
    %v3809 = vadd.f32 0.0, %v3808
    %v3810 = vpop.f32.mrf.mxu0
    %3811 = vmatprep.mubr.f32.mxu0 0.0
    %3812 = vmatmul.mubr.f32.gmra.mxu0 %v3717
    %v3813 = vpop.f32.mrf.mxu0
    %v3814 = vadd.f32 0.0, %v3813
    %v3815 = vpop.f32.mrf.mxu0
    %3816 = vmatprep.mubr.f32.mxu0 0.0
    %3817 = vmatmul.mubr.f32.gmra.mxu0 %v3719
    %v3818 = vpop.f32.mrf.mxu0
    %v3819 = vadd.f32 0.0, %v3818
    %v3820 = vpop.f32.mrf.mxu0
    %3821 = vmatprep.mubr.f32.mxu0 0.0
    %3822 = vmatmul.mubr.f32.gmra.mxu0 %v3721
    %v3823 = vpop.f32.mrf.mxu0
    %v3824 = vadd.f32 0.0, %v3823
    %v3825 = vpop.f32.mrf.mxu0
    %3826 = vmatprep.mubr.f32.mxu0 0.0
    %3827 = vmatmul.mubr.f32.gmra.mxu0 %v3723
    %v3828 = vpop.f32.mrf.mxu0
    %v3829 = vadd.f32 0.0, %v3828
    %v3830 = vpop.f32.mrf.mxu0
    %3831 = vmatprep.mubr.f32.mxu0 0.0
    %3832 = vmatmul.mubr.f32.gmra.mxu0 %v3725
    %v3833 = vpop.f32.mrf.mxu0
    %v3834 = vadd.f32 0.0, %v3833
    %v3835 = vpop.f32.mrf.mxu0
    %3836 = vdwg.mxu0
    %v3837 = vadd.f32 %v3326, %v3794
    %v3838 = vadd.f32 %v3327, %v3799
    %v3839 = vadd.f32 %v3328, %v3804
    %v3840 = vadd.f32 %v3329, %v3809
    %v3841 = vadd.f32 %v3330, %v3814
    %v3842 = vadd.f32 %v3331, %v3819
    %v3843 = vadd.f32 %v3332, %v3824
    %v3844 = vadd.f32 %v3333, %v3829
    %v3845 = vadd.f32 %v3334, %v3834
    %v3846 = vld [vmem:[%s3335 + $0x1] sm:$0x3f]
    %v3847 = vld [vmem:[%s3335 + $0x9] sm:$0x3f]
    %v3848 = vld [vmem:[%s3335 + $0x11] sm:$0x3f]
    %v3849 = vld [vmem:[%s3335 + $0x19] sm:$0x3f]
    %v3850 = vld [vmem:[%s3335 + $0x21] sm:$0x3f]
    %v3851 = vld [vmem:[%s3335 + $0x29] sm:$0x3f]
    %v3852 = vld [vmem:[%s3335 + $0x41] sm:$0x3f]
    %v3853 = vld [vmem:[%s3335 + $0x49] sm:$0x3f]
    %v3854 = vld [vmem:[%s3335 + $0x51] sm:$0x3f]
    %v3855 = vld [vmem:[%s3335 + $0x59] sm:$0x3f]
    %v3856 = vld [vmem:[%s3335 + $0x61] sm:$0x3f]
    %v3857 = vld [vmem:[%s3335 + $0x69] sm:$0x3f]
    %v3870 = vcombine.high %v3846, %v3846
    %v3872 = vunpack.c.l.s4 1983009808
    %v3873 = vunpack.c.0.s8 %v3872
    %v3874 = vlaneseq
    %v3875 = vshrl.u32 %v3874, 7
    %v3876 = vsub.s32 %v3873, %v3875
    %v3877 = vrot.slane %v3846, %v3876
    %v3879 = vunpack.c.l.s4 1983009808
    %v3880 = vunpack.c.0.s8 %v3879
    %v3881 = vlaneseq
    %v3882 = vshrl.u32 %v3881, 7
    %v3883 = vsub.s32 %v3880, %v3882
    %v3884 = vrot.slane %v3870, %v3883
    %v3885 = vcombine.high %v3877, %v3877
    %v3886 = vcombine.high %v3847, %v3847
    %v3888 = vunpack.c.l.s4 1983009808
    %v3889 = vunpack.c.0.s8 %v3888
    %v3890 = vlaneseq
    %v3891 = vshrl.u32 %v3890, 7
    %v3892 = vsub.s32 %v3889, %v3891
    %v3893 = vrot.slane %v3847, %v3892
    %v3895 = vunpack.c.l.s4 1983009808
    %v3896 = vunpack.c.0.s8 %v3895
    %v3897 = vlaneseq
    %v3898 = vshrl.u32 %v3897, 7
    %v3899 = vsub.s32 %v3896, %v3898
    %v3900 = vrot.slane %v3886, %v3899
    %v3901 = vcombine.high %v3893, %v3893
    %v3902 = vcombine.high %v3848, %v3848
    %v3904 = vunpack.c.l.s4 1983009808
    %v3905 = vunpack.c.0.s8 %v3904
    %v3906 = vlaneseq
    %v3907 = vshrl.u32 %v3906, 7
    %v3908 = vsub.s32 %v3905, %v3907
    %v3909 = vrot.slane %v3848, %v3908
    %v3911 = vunpack.c.l.s4 1983009808
    %v3912 = vunpack.c.0.s8 %v3911
    %v3913 = vlaneseq
    %v3914 = vshrl.u32 %v3913, 7
    %v3915 = vsub.s32 %v3912, %v3914
    %v3916 = vrot.slane %v3902, %v3915
    %v3917 = vcombine.high %v3909, %v3909
    %v3918 = vcombine.high %v3849, %v3849
    %v3920 = vunpack.c.l.s4 1983009808
    %v3921 = vunpack.c.0.s8 %v3920
    %v3922 = vlaneseq
    %v3923 = vshrl.u32 %v3922, 7
    %v3924 = vsub.s32 %v3921, %v3923
    %v3925 = vrot.slane %v3849, %v3924
    %v3927 = vunpack.c.l.s4 1983009808
    %v3928 = vunpack.c.0.s8 %v3927
    %v3929 = vlaneseq
    %v3930 = vshrl.u32 %v3929, 7
    %v3931 = vsub.s32 %v3928, %v3930
    %v3932 = vrot.slane %v3918, %v3931
    %v3933 = vcombine.high %v3925, %v3925
    %v3934 = vcombine.high %v3850, %v3850
    %v3936 = vunpack.c.l.s4 1983009808
    %v3937 = vunpack.c.0.s8 %v3936
    %v3938 = vlaneseq
    %v3939 = vshrl.u32 %v3938, 7
    %v3940 = vsub.s32 %v3937, %v3939
    %v3941 = vrot.slane %v3850, %v3940
    %v3943 = vunpack.c.l.s4 1983009808
    %v3944 = vunpack.c.0.s8 %v3943
    %v3945 = vlaneseq
    %v3946 = vshrl.u32 %v3945, 7
    %v3947 = vsub.s32 %v3944, %v3946
    %v3948 = vrot.slane %v3934, %v3947
    %v3949 = vcombine.high %v3941, %v3941
    %v3950 = vcombine.high %v3851, %v3851
    %v3952 = vunpack.c.l.s4 1983009808
    %v3953 = vunpack.c.0.s8 %v3952
    %v3954 = vlaneseq
    %v3955 = vshrl.u32 %v3954, 7
    %v3956 = vsub.s32 %v3953, %v3955
    %v3957 = vrot.slane %v3851, %v3956
    %v3959 = vunpack.c.l.s4 1983009808
    %v3960 = vunpack.c.0.s8 %v3959
    %v3961 = vlaneseq
    %v3962 = vshrl.u32 %v3961, 7
    %v3963 = vsub.s32 %v3960, %v3962
    %v3964 = vrot.slane %v3950, %v3963
    %v3965 = vcombine.high %v3957, %v3957
    %v3966 = vcombine.high %v3852, %v3852
    %v3968 = vunpack.c.l.s4 1983009808
    %v3969 = vunpack.c.0.s8 %v3968
    %v3970 = vlaneseq
    %v3971 = vshrl.u32 %v3970, 7
    %v3972 = vsub.s32 %v3969, %v3971
    %v3973 = vrot.slane %v3852, %v3972
    %v3975 = vunpack.c.l.s4 1983009808
    %v3976 = vunpack.c.0.s8 %v3975
    %v3977 = vlaneseq
    %v3978 = vshrl.u32 %v3977, 7
    %v3979 = vsub.s32 %v3976, %v3978
    %v3980 = vrot.slane %v3966, %v3979
    %v3981 = vcombine.high %v3973, %v3973
    %v3982 = vcombine.high %v3853, %v3853
    %v3984 = vunpack.c.l.s4 1983009808
    %v3985 = vunpack.c.0.s8 %v3984
    %v3986 = vlaneseq
    %v3987 = vshrl.u32 %v3986, 7
    %v3988 = vsub.s32 %v3985, %v3987
    %v3989 = vrot.slane %v3853, %v3988
    %v3991 = vunpack.c.l.s4 1983009808
    %v3992 = vunpack.c.0.s8 %v3991
    %v3993 = vlaneseq
    %v3994 = vshrl.u32 %v3993, 7
    %v3995 = vsub.s32 %v3992, %v3994
    %v3996 = vrot.slane %v3982, %v3995
    %v3997 = vcombine.high %v3989, %v3989
    %v3998 = vcombine.high %v3854, %v3854
    %v4000 = vunpack.c.l.s4 1983009808
    %v4001 = vunpack.c.0.s8 %v4000
    %v4002 = vlaneseq
    %v4003 = vshrl.u32 %v4002, 7
    %v4004 = vsub.s32 %v4001, %v4003
    %v4005 = vrot.slane %v3854, %v4004
    %v4007 = vunpack.c.l.s4 1983009808
    %v4008 = vunpack.c.0.s8 %v4007
    %v4009 = vlaneseq
    %v4010 = vshrl.u32 %v4009, 7
    %v4011 = vsub.s32 %v4008, %v4010
    %v4012 = vrot.slane %v3998, %v4011
    %v4013 = vcombine.high %v4005, %v4005
    %v4014 = vcombine.high %v3855, %v3855
    %v4016 = vunpack.c.l.s4 1983009808
    %v4017 = vunpack.c.0.s8 %v4016
    %v4018 = vlaneseq
    %v4019 = vshrl.u32 %v4018, 7
    %v4020 = vsub.s32 %v4017, %v4019
    %v4021 = vrot.slane %v3855, %v4020
    %v4023 = vunpack.c.l.s4 1983009808
    %v4024 = vunpack.c.0.s8 %v4023
    %v4025 = vlaneseq
    %v4026 = vshrl.u32 %v4025, 7
    %v4027 = vsub.s32 %v4024, %v4026
    %v4028 = vrot.slane %v4014, %v4027
    %v4029 = vcombine.high %v4021, %v4021
    %v4030 = vcombine.high %v3856, %v3856
    %v4032 = vunpack.c.l.s4 1983009808
    %v4033 = vunpack.c.0.s8 %v4032
    %v4034 = vlaneseq
    %v4035 = vshrl.u32 %v4034, 7
    %v4036 = vsub.s32 %v4033, %v4035
    %v4037 = vrot.slane %v3856, %v4036
    %v4039 = vunpack.c.l.s4 1983009808
    %v4040 = vunpack.c.0.s8 %v4039
    %v4041 = vlaneseq
    %v4042 = vshrl.u32 %v4041, 7
    %v4043 = vsub.s32 %v4040, %v4042
    %v4044 = vrot.slane %v4030, %v4043
    %v4045 = vcombine.high %v4037, %v4037
    %v4046 = vcombine.high %v3857, %v3857
    %v4048 = vunpack.c.l.s4 1983009808
    %v4049 = vunpack.c.0.s8 %v4048
    %v4050 = vlaneseq
    %v4051 = vshrl.u32 %v4050, 7
    %v4052 = vsub.s32 %v4049, %v4051
    %v4053 = vrot.slane %v3857, %v4052
    %v4055 = vunpack.c.l.s4 1983009808
    %v4056 = vunpack.c.0.s8 %v4055
    %v4057 = vlaneseq
    %v4058 = vshrl.u32 %v4057, 7
    %v4059 = vsub.s32 %v4056, %v4058
    %v4060 = vrot.slane %v4046, %v4059
    %v4061 = vcombine.high %v4053, %v4053
    %v4062 = vld [vmem:[%s3 + $0xe0] sm:$0xff]
    %v4063 = vld [vmem:[%s3 + $0xe8] sm:$0xff]
    %v4064 = vld [vmem:[%s3 + $0xf0] sm:$0xff]
    %v4065 = vld [vmem:[%s3 + $0xf8] sm:$0xff]
    %v4066 = vcombine.low %v3877, %v3885
    %v4067 = vcombine.low %v3884, %v3893
    %v4069 = vunpack.c.l.s4 1983009808
    %v4070 = vunpack.c.0.s8 %v4069
    %v4071 = vlaneseq
    %v4072 = vshrl.u32 %v4071, 7
    %v4073 = vsub.s32 %v4070, %v4072
    %v4074 = vrot.slane %v4066, %v4073
    %v4076 = vunpack.c.l.s4 1983009808
    %v4077 = vunpack.c.0.s8 %v4076
    %v4078 = vlaneseq
    %v4079 = vshrl.u32 %v4078, 7
    %v4080 = vsub.s32 %v4077, %v4079
    %v4081 = vrot.slane %v4067, %v4080
    %v4082 = vcombine.low %v4074, %v4081
    %v4083 = vcombine.low %v3901, %v3900
    %v4084 = vcombine.low %v3909, %v3917
    %v4086 = vunpack.c.l.s4 1983009808
    %v4087 = vunpack.c.0.s8 %v4086
    %v4088 = vlaneseq
    %v4089 = vshrl.u32 %v4088, 7
    %v4090 = vsub.s32 %v4087, %v4089
    %v4091 = vrot.slane %v4083, %v4090
    %v4093 = vunpack.c.l.s4 1983009808
    %v4094 = vunpack.c.0.s8 %v4093
    %v4095 = vlaneseq
    %v4096 = vshrl.u32 %v4095, 7
    %v4097 = vsub.s32 %v4094, %v4096
    %v4098 = vrot.slane %v4084, %v4097
    %v4099 = vcombine.low %v4091, %v4098
    %v4100 = vcombine.low %v3916, %v3925
    %v4101 = vcombine.low %v3933, %v3932
    %v4103 = vunpack.c.l.s4 1983009808
    %v4104 = vunpack.c.0.s8 %v4103
    %v4105 = vlaneseq
    %v4106 = vshrl.u32 %v4105, 7
    %v4107 = vsub.s32 %v4104, %v4106
    %v4108 = vrot.slane %v4100, %v4107
    %v4110 = vunpack.c.l.s4 1983009808
    %v4111 = vunpack.c.0.s8 %v4110
    %v4112 = vlaneseq
    %v4113 = vshrl.u32 %v4112, 7
    %v4114 = vsub.s32 %v4111, %v4113
    %v4115 = vrot.slane %v4101, %v4114
    %v4116 = vcombine.low %v4108, %v4115
    %v4117 = vcombine.low %v3941, %v3949
    %v4118 = vcombine.low %v3948, %v3957
    %v4120 = vunpack.c.l.s4 1983009808
    %v4121 = vunpack.c.0.s8 %v4120
    %v4122 = vlaneseq
    %v4123 = vshrl.u32 %v4122, 7
    %v4124 = vsub.s32 %v4121, %v4123
    %v4125 = vrot.slane %v4117, %v4124
    %v4127 = vunpack.c.l.s4 1983009808
    %v4128 = vunpack.c.0.s8 %v4127
    %v4129 = vlaneseq
    %v4130 = vshrl.u32 %v4129, 7
    %v4131 = vsub.s32 %v4128, %v4130
    %v4132 = vrot.slane %v4118, %v4131
    %v4133 = vcombine.low %v4125, %v4132
    %v4134 = vcombine.low %v3965, %v3964
    %v4135 = vcombine.low %v3973, %v3981
    %v4137 = vunpack.c.l.s4 1983009808
    %v4138 = vunpack.c.0.s8 %v4137
    %v4139 = vlaneseq
    %v4140 = vshrl.u32 %v4139, 7
    %v4141 = vsub.s32 %v4138, %v4140
    %v4142 = vrot.slane %v4134, %v4141
    %v4144 = vunpack.c.l.s4 1983009808
    %v4145 = vunpack.c.0.s8 %v4144
    %v4146 = vlaneseq
    %v4147 = vshrl.u32 %v4146, 7
    %v4148 = vsub.s32 %v4145, %v4147
    %v4149 = vrot.slane %v4135, %v4148
    %v4150 = vcombine.low %v4142, %v4149
    %v4151 = vcombine.low %v3980, %v3989
    %v4152 = vcombine.low %v3997, %v3996
    %v4154 = vunpack.c.l.s4 1983009808
    %v4155 = vunpack.c.0.s8 %v4154
    %v4156 = vlaneseq
    %v4157 = vshrl.u32 %v4156, 7
    %v4158 = vsub.s32 %v4155, %v4157
    %v4159 = vrot.slane %v4151, %v4158
    %v4161 = vunpack.c.l.s4 1983009808
    %v4162 = vunpack.c.0.s8 %v4161
    %v4163 = vlaneseq
    %v4164 = vshrl.u32 %v4163, 7
    %v4165 = vsub.s32 %v4162, %v4164
    %v4166 = vrot.slane %v4152, %v4165
    %v4167 = vcombine.low %v4159, %v4166
    %v4168 = vcombine.low %v4005, %v4013
    %v4169 = vcombine.low %v4012, %v4021
    %v4171 = vunpack.c.l.s4 1983009808
    %v4172 = vunpack.c.0.s8 %v4171
    %v4173 = vlaneseq
    %v4174 = vshrl.u32 %v4173, 7
    %v4175 = vsub.s32 %v4172, %v4174
    %v4176 = vrot.slane %v4168, %v4175
    %v4178 = vunpack.c.l.s4 1983009808
    %v4179 = vunpack.c.0.s8 %v4178
    %v4180 = vlaneseq
    %v4181 = vshrl.u32 %v4180, 7
    %v4182 = vsub.s32 %v4179, %v4181
    %v4183 = vrot.slane %v4169, %v4182
    %v4184 = vcombine.low %v4176, %v4183
    %v4185 = vcombine.low %v4029, %v4028
    %v4186 = vcombine.low %v4037, %v4045
    %v4188 = vunpack.c.l.s4 1983009808
    %v4189 = vunpack.c.0.s8 %v4188
    %v4190 = vlaneseq
    %v4191 = vshrl.u32 %v4190, 7
    %v4192 = vsub.s32 %v4189, %v4191
    %v4193 = vrot.slane %v4185, %v4192
    %v4195 = vunpack.c.l.s4 1983009808
    %v4196 = vunpack.c.0.s8 %v4195
    %v4197 = vlaneseq
    %v4198 = vshrl.u32 %v4197, 7
    %v4199 = vsub.s32 %v4196, %v4198
    %v4200 = vrot.slane %v4186, %v4199
    %v4201 = vcombine.low %v4193, %v4200
    %v4202 = vcombine.low %v4044, %v4053
    %v4203 = vcombine.low %v4061, %v4060
    %v4205 = vunpack.c.l.s4 1983009808
    %v4206 = vunpack.c.0.s8 %v4205
    %v4207 = vlaneseq
    %v4208 = vshrl.u32 %v4207, 7
    %v4209 = vsub.s32 %v4206, %v4208
    %v4210 = vrot.slane %v4202, %v4209
    %v4212 = vunpack.c.l.s4 1983009808
    %v4213 = vunpack.c.0.s8 %v4212
    %v4214 = vlaneseq
    %v4215 = vshrl.u32 %v4214, 7
    %v4216 = vsub.s32 %v4213, %v4215
    %v4217 = vrot.slane %v4203, %v4216
    %v4218 = vcombine.low %v4210, %v4217
    %v4219 = vsel %vm275, %v4082, 0
    %v4221 = vsel %vm275, %v4099, 0
    %v4223 = vsel %vm275, %v4116, 0
    %v4225 = vsel %vm275, %v4133, 0
    %v4227 = vsel %vm275, %v4150, 0
    %v4229 = vsel %vm275, %v4167, 0
    %v4231 = vsel %vm275, %v4184, 0
    %v4233 = vsel %vm275, %v4201, 0
    %v4235 = vsel %vm275, %v4218, 0
    %4237 = vmatprep.subr.mxu0 0.0
    %4238 = vmatpush1.msra.mxu0 0.0
    %4239 = vmatprep.subr.mxu0 0.0
    %4240 = vmatpush1.msra.mxu0 0.0
    %4241 = vmatprep.subr.mxu0 0.0
    %4242 = vmatpush1.msra.mxu0 0.0
    %4243 = vmatprep.subr.mxu0 0.0
    %4244 = vmatpush1.msra.mxu0 0.0
    %4245 = vmatprep.subr.mxu0 0.0
    %4246 = vmatpush1.msra.mxu0 0.0
    %4247 = vmatprep.subr.mxu0 0.0
    %4248 = vmatpush1.msra.mxu0 0.0
    %4249 = vmatprep.subr.mxu0 0.0
    %4250 = vmatpush1.msra.mxu0 0.0
    %4251 = vmatprep.subr.mxu0 0.0
    %4252 = vmatpush1.msra.mxu0 0.0
    %4253 = vmatprep.subr.mxu0 0.0
    %4254 = vmatpush1.msra.mxu0 0.0
    %4255 = vmatprep.subr.mxu0 0.0
    %4256 = vmatpush1.msra.mxu0 0.0
    %4257 = vmatprep.subr.mxu0 0.0
    %4258 = vmatpush1.msra.mxu0 0.0
    %4259 = vmatprep.subr.mxu0 0.0
    %4260 = vmatpush1.msra.mxu0 0.0
    %4261 = vmatprep.subr.mxu0 0.0
    %4262 = vmatpush1.msra.mxu0 %v4065
    %4263 = vmatprep.subr.mxu0 0.0
    %4264 = vmatpush1.msra.mxu0 %v4064
    %4265 = vmatprep.subr.mxu0 0.0
    %4266 = vmatpush1.msra.mxu0 %v4063
    %4267 = vmatprep.subr.mxu0 0.0
    %4268 = vmatpush1.msra.mxu0 %v4062
    %4269 = vmatprep.subr.mxu0 0.0
    %4270 = vmatpush2.msra.mxu0 0.0
    %4271 = vmatprep.subr.mxu0 0.0
    %4272 = vmatpush2.msra.mxu0 0.0
    %4273 = vmatprep.subr.mxu0 0.0
    %4274 = vmatpush2.msra.mxu0 0.0
    %4275 = vmatprep.subr.mxu0 0.0
    %4276 = vmatpush2.msra.mxu0 0.0
    %4277 = vmatprep.subr.mxu0 0.0
    %4278 = vmatpush2.msra.mxu0 0.0
    %4279 = vmatprep.subr.mxu0 0.0
    %4280 = vmatpush2.msra.mxu0 0.0
    %4281 = vmatprep.subr.mxu0 0.0
    %4282 = vmatpush2.msra.mxu0 0.0
    %4283 = vmatprep.subr.mxu0 0.0
    %4284 = vmatpush2.msra.mxu0 0.0
    %4285 = vmatprep.subr.mxu0 0.0
    %4286 = vmatpush2.msra.mxu0 0.0
    %4287 = vmatprep.subr.mxu0 0.0
    %4288 = vmatpush2.msra.mxu0 0.0
    %4289 = vmatprep.subr.mxu0 0.0
    %4290 = vmatpush2.msra.mxu0 0.0
    %4291 = vmatprep.subr.mxu0 0.0
    %4292 = vmatpush2.msra.mxu0 0.0
    %4293 = vmatprep.subr.mxu0 0.0
    %4294 = vmatpush2.msra.mxu0 0.0
    %4295 = vmatprep.subr.mxu0 0.0
    %4296 = vmatpush2.msra.mxu0 0.0
    %4297 = vmatprep.subr.mxu0 0.0
    %4298 = vmatpush2.msra.mxu0 0.0
    %4299 = vmatprep.subr.mxu0 0.0
    %4300 = vmatpush2.msra.mxu0 0.0
    %4301 = vmatprep.mubr.f32.mxu0 0.0
    %4302 = vmatmul.mubr.f32.gmra.mxu0 %v4219
    %v4303 = vpop.f32.mrf.mxu0
    %v4304 = vadd.f32 0.0, %v4303
    %v4305 = vpop.f32.mrf.mxu0
    %4306 = vmatprep.mubr.f32.mxu0 0.0
    %4307 = vmatmul.mubr.f32.gmra.mxu0 %v4221
    %v4308 = vpop.f32.mrf.mxu0
    %v4309 = vadd.f32 0.0, %v4308
    %v4310 = vpop.f32.mrf.mxu0
    %4311 = vmatprep.mubr.f32.mxu0 0.0
    %4312 = vmatmul.mubr.f32.gmra.mxu0 %v4223
    %v4313 = vpop.f32.mrf.mxu0
    %v4314 = vadd.f32 0.0, %v4313
    %v4315 = vpop.f32.mrf.mxu0
    %4316 = vmatprep.mubr.f32.mxu0 0.0
    %4317 = vmatmul.mubr.f32.gmra.mxu0 %v4225
    %v4318 = vpop.f32.mrf.mxu0
    %v4319 = vadd.f32 0.0, %v4318
    %v4320 = vpop.f32.mrf.mxu0
    %4321 = vmatprep.mubr.f32.mxu0 0.0
    %4322 = vmatmul.mubr.f32.gmra.mxu0 %v4227
    %v4323 = vpop.f32.mrf.mxu0
    %v4324 = vadd.f32 0.0, %v4323
    %v4325 = vpop.f32.mrf.mxu0
    %4326 = vmatprep.mubr.f32.mxu0 0.0
    %4327 = vmatmul.mubr.f32.gmra.mxu0 %v4229
    %v4328 = vpop.f32.mrf.mxu0
    %v4329 = vadd.f32 0.0, %v4328
    %v4330 = vpop.f32.mrf.mxu0
    %4331 = vmatprep.mubr.f32.mxu0 0.0
    %4332 = vmatmul.mubr.f32.gmra.mxu0 %v4231
    %v4333 = vpop.f32.mrf.mxu0
    %v4334 = vadd.f32 0.0, %v4333
    %v4335 = vpop.f32.mrf.mxu0
    %4336 = vmatprep.mubr.f32.mxu0 0.0
    %4337 = vmatmul.mubr.f32.gmra.mxu0 %v4233
    %v4338 = vpop.f32.mrf.mxu0
    %v4339 = vadd.f32 0.0, %v4338
    %v4340 = vpop.f32.mrf.mxu0
    %4341 = vmatprep.mubr.f32.mxu0 0.0
    %4342 = vmatmul.mubr.f32.gmra.mxu0 %v4235
    %v4343 = vpop.f32.mrf.mxu0
    %v4344 = vadd.f32 0.0, %v4343
    %v4345 = vpop.f32.mrf.mxu0
    %4346 = vdwg.mxu0
    %v4347 = vadd.f32 %v3837, %v4304
    %v4348 = vadd.f32 %v3838, %v4309
    %v4349 = vadd.f32 %v3839, %v4314
    %v4350 = vadd.f32 %v3840, %v4319
    %v4351 = vadd.f32 %v3841, %v4324
    %v4352 = vadd.f32 %v3842, %v4329
    %v4353 = vadd.f32 %v3843, %v4334
    %v4354 = vadd.f32 %v3844, %v4339
    %v4355 = vadd.f32 %v3845, %v4344
    %v4356 = vld [vmem:[%s3335 + $0x2] sm:$0x3f]
    %v4357 = vld [vmem:[%s3335 + $0xa] sm:$0x3f]
    %v4358 = vld [vmem:[%s3335 + $0x12] sm:$0x3f]
    %v4359 = vld [vmem:[%s3335 + $0x1a] sm:$0x3f]
    %v4360 = vld [vmem:[%s3335 + $0x22] sm:$0x3f]
    %v4361 = vld [vmem:[%s3335 + $0x2a] sm:$0x3f]
    %v4362 = vld [vmem:[%s3335 + $0x42] sm:$0x3f]
    %v4363 = vld [vmem:[%s3335 + $0x4a] sm:$0x3f]
    %v4364 = vld [vmem:[%s3335 + $0x52] sm:$0x3f]
    %v4365 = vld [vmem:[%s3335 + $0x5a] sm:$0x3f]
    %v4366 = vld [vmem:[%s3335 + $0x62] sm:$0x3f]
    %v4367 = vld [vmem:[%s3335 + $0x6a] sm:$0x3f]
    %v4380 = vcombine.high %v4356, %v4356
    %v4382 = vunpack.c.l.s4 1983009808
    %v4383 = vunpack.c.0.s8 %v4382
    %v4384 = vlaneseq
    %v4385 = vshrl.u32 %v4384, 7
    %v4386 = vsub.s32 %v4383, %v4385
    %v4387 = vrot.slane %v4356, %v4386
    %v4389 = vunpack.c.l.s4 1983009808
    %v4390 = vunpack.c.0.s8 %v4389
    %v4391 = vlaneseq
    %v4392 = vshrl.u32 %v4391, 7
    %v4393 = vsub.s32 %v4390, %v4392
    %v4394 = vrot.slane %v4380, %v4393
    %v4395 = vcombine.high %v4387, %v4387
    %v4396 = vcombine.high %v4357, %v4357
    %v4398 = vunpack.c.l.s4 1983009808
    %v4399 = vunpack.c.0.s8 %v4398
    %v4400 = vlaneseq
    %v4401 = vshrl.u32 %v4400, 7
    %v4402 = vsub.s32 %v4399, %v4401
    %v4403 = vrot.slane %v4357, %v4402
    %v4405 = vunpack.c.l.s4 1983009808
    %v4406 = vunpack.c.0.s8 %v4405
    %v4407 = vlaneseq
    %v4408 = vshrl.u32 %v4407, 7
    %v4409 = vsub.s32 %v4406, %v4408
    %v4410 = vrot.slane %v4396, %v4409
    %v4411 = vcombine.high %v4403, %v4403
    %v4412 = vcombine.high %v4358, %v4358
    %v4414 = vunpack.c.l.s4 1983009808
    %v4415 = vunpack.c.0.s8 %v4414
    %v4416 = vlaneseq
    %v4417 = vshrl.u32 %v4416, 7
    %v4418 = vsub.s32 %v4415, %v4417
    %v4419 = vrot.slane %v4358, %v4418
    %v4421 = vunpack.c.l.s4 1983009808
    %v4422 = vunpack.c.0.s8 %v4421
    %v4423 = vlaneseq
    %v4424 = vshrl.u32 %v4423, 7
    %v4425 = vsub.s32 %v4422, %v4424
    %v4426 = vrot.slane %v4412, %v4425
    %v4427 = vcombine.high %v4419, %v4419
    %v4428 = vcombine.high %v4359, %v4359
    %v4430 = vunpack.c.l.s4 1983009808
    %v4431 = vunpack.c.0.s8 %v4430
    %v4432 = vlaneseq
    %v4433 = vshrl.u32 %v4432, 7
    %v4434 = vsub.s32 %v4431, %v4433
    %v4435 = vrot.slane %v4359, %v4434
    %v4437 = vunpack.c.l.s4 1983009808
    %v4438 = vunpack.c.0.s8 %v4437
    %v4439 = vlaneseq
    %v4440 = vshrl.u32 %v4439, 7
    %v4441 = vsub.s32 %v4438, %v4440
    %v4442 = vrot.slane %v4428, %v4441
    %v4443 = vcombine.high %v4435, %v4435
    %v4444 = vcombine.high %v4360, %v4360
    %v4446 = vunpack.c.l.s4 1983009808
    %v4447 = vunpack.c.0.s8 %v4446
    %v4448 = vlaneseq
    %v4449 = vshrl.u32 %v4448, 7
    %v4450 = vsub.s32 %v4447, %v4449
    %v4451 = vrot.slane %v4360, %v4450
    %v4453 = vunpack.c.l.s4 1983009808
    %v4454 = vunpack.c.0.s8 %v4453
    %v4455 = vlaneseq
    %v4456 = vshrl.u32 %v4455, 7
    %v4457 = vsub.s32 %v4454, %v4456
    %v4458 = vrot.slane %v4444, %v4457
    %v4459 = vcombine.high %v4451, %v4451
    %v4460 = vcombine.high %v4361, %v4361
    %v4462 = vunpack.c.l.s4 1983009808
    %v4463 = vunpack.c.0.s8 %v4462
    %v4464 = vlaneseq
    %v4465 = vshrl.u32 %v4464, 7
    %v4466 = vsub.s32 %v4463, %v4465
    %v4467 = vrot.slane %v4361, %v4466
    %v4469 = vunpack.c.l.s4 1983009808
    %v4470 = vunpack.c.0.s8 %v4469
    %v4471 = vlaneseq
    %v4472 = vshrl.u32 %v4471, 7
    %v4473 = vsub.s32 %v4470, %v4472
    %v4474 = vrot.slane %v4460, %v4473
    %v4475 = vcombine.high %v4467, %v4467
    %v4476 = vcombine.high %v4362, %v4362
    %v4478 = vunpack.c.l.s4 1983009808
    %v4479 = vunpack.c.0.s8 %v4478
    %v4480 = vlaneseq
    %v4481 = vshrl.u32 %v4480, 7
    %v4482 = vsub.s32 %v4479, %v4481
    %v4483 = vrot.slane %v4362, %v4482
    %v4485 = vunpack.c.l.s4 1983009808
    %v4486 = vunpack.c.0.s8 %v4485
    %v4487 = vlaneseq
    %v4488 = vshrl.u32 %v4487, 7
    %v4489 = vsub.s32 %v4486, %v4488
    %v4490 = vrot.slane %v4476, %v4489
    %v4491 = vcombine.high %v4483, %v4483
    %v4492 = vcombine.high %v4363, %v4363
    %v4494 = vunpack.c.l.s4 1983009808
    %v4495 = vunpack.c.0.s8 %v4494
    %v4496 = vlaneseq
    %v4497 = vshrl.u32 %v4496, 7
    %v4498 = vsub.s32 %v4495, %v4497
    %v4499 = vrot.slane %v4363, %v4498
    %v4501 = vunpack.c.l.s4 1983009808
    %v4502 = vunpack.c.0.s8 %v4501
    %v4503 = vlaneseq
    %v4504 = vshrl.u32 %v4503, 7
    %v4505 = vsub.s32 %v4502, %v4504
    %v4506 = vrot.slane %v4492, %v4505
    %v4507 = vcombine.high %v4499, %v4499
    %v4508 = vcombine.high %v4364, %v4364
    %v4510 = vunpack.c.l.s4 1983009808
    %v4511 = vunpack.c.0.s8 %v4510
    %v4512 = vlaneseq
    %v4513 = vshrl.u32 %v4512, 7
    %v4514 = vsub.s32 %v4511, %v4513
    %v4515 = vrot.slane %v4364, %v4514
    %v4517 = vunpack.c.l.s4 1983009808
    %v4518 = vunpack.c.0.s8 %v4517
    %v4519 = vlaneseq
    %v4520 = vshrl.u32 %v4519, 7
    %v4521 = vsub.s32 %v4518, %v4520
    %v4522 = vrot.slane %v4508, %v4521
    %v4523 = vcombine.high %v4515, %v4515
    %v4524 = vcombine.high %v4365, %v4365
    %v4526 = vunpack.c.l.s4 1983009808
    %v4527 = vunpack.c.0.s8 %v4526
    %v4528 = vlaneseq
    %v4529 = vshrl.u32 %v4528, 7
    %v4530 = vsub.s32 %v4527, %v4529
    %v4531 = vrot.slane %v4365, %v4530
    %v4533 = vunpack.c.l.s4 1983009808
    %v4534 = vunpack.c.0.s8 %v4533
    %v4535 = vlaneseq
    %v4536 = vshrl.u32 %v4535, 7
    %v4537 = vsub.s32 %v4534, %v4536
    %v4538 = vrot.slane %v4524, %v4537
    %v4539 = vcombine.high %v4531, %v4531
    %v4540 = vcombine.high %v4366, %v4366
    %v4542 = vunpack.c.l.s4 1983009808
    %v4543 = vunpack.c.0.s8 %v4542
    %v4544 = vlaneseq
    %v4545 = vshrl.u32 %v4544, 7
    %v4546 = vsub.s32 %v4543, %v4545
    %v4547 = vrot.slane %v4366, %v4546
    %v4549 = vunpack.c.l.s4 1983009808
    %v4550 = vunpack.c.0.s8 %v4549
    %v4551 = vlaneseq
    %v4552 = vshrl.u32 %v4551, 7
    %v4553 = vsub.s32 %v4550, %v4552
    %v4554 = vrot.slane %v4540, %v4553
    %v4555 = vcombine.high %v4547, %v4547
    %v4556 = vcombine.high %v4367, %v4367
    %v4558 = vunpack.c.l.s4 1983009808
    %v4559 = vunpack.c.0.s8 %v4558
    %v4560 = vlaneseq
    %v4561 = vshrl.u32 %v4560, 7
    %v4562 = vsub.s32 %v4559, %v4561
    %v4563 = vrot.slane %v4367, %v4562
    %v4565 = vunpack.c.l.s4 1983009808
    %v4566 = vunpack.c.0.s8 %v4565
    %v4567 = vlaneseq
    %v4568 = vshrl.u32 %v4567, 7
    %v4569 = vsub.s32 %v4566, %v4568
    %v4570 = vrot.slane %v4556, %v4569
    %v4571 = vcombine.high %v4563, %v4563
    %v4572 = vld [vmem:[%s3 + $0x100] sm:$0xff]
    %v4573 = vld [vmem:[%s3 + $0x108] sm:$0xff]
    %v4574 = vld [vmem:[%s3 + $0x110] sm:$0xff]
    %v4575 = vld [vmem:[%s3 + $0x118] sm:$0xff]
    %v4576 = vcombine.low %v4387, %v4395
    %v4577 = vcombine.low %v4394, %v4403
    %v4579 = vunpack.c.l.s4 1983009808
    %v4580 = vunpack.c.0.s8 %v4579
    %v4581 = vlaneseq
    %v4582 = vshrl.u32 %v4581, 7
    %v4583 = vsub.s32 %v4580, %v4582
    %v4584 = vrot.slane %v4576, %v4583
    %v4586 = vunpack.c.l.s4 1983009808
    %v4587 = vunpack.c.0.s8 %v4586
    %v4588 = vlaneseq
    %v4589 = vshrl.u32 %v4588, 7
    %v4590 = vsub.s32 %v4587, %v4589
    %v4591 = vrot.slane %v4577, %v4590
    %v4592 = vcombine.low %v4584, %v4591
    %v4593 = vcombine.low %v4411, %v4410
    %v4594 = vcombine.low %v4419, %v4427
    %v4596 = vunpack.c.l.s4 1983009808
    %v4597 = vunpack.c.0.s8 %v4596
    %v4598 = vlaneseq
    %v4599 = vshrl.u32 %v4598, 7
    %v4600 = vsub.s32 %v4597, %v4599
    %v4601 = vrot.slane %v4593, %v4600
    %v4603 = vunpack.c.l.s4 1983009808
    %v4604 = vunpack.c.0.s8 %v4603
    %v4605 = vlaneseq
    %v4606 = vshrl.u32 %v4605, 7
    %v4607 = vsub.s32 %v4604, %v4606
    %v4608 = vrot.slane %v4594, %v4607
    %v4609 = vcombine.low %v4601, %v4608
    %v4610 = vcombine.low %v4426, %v4435
    %v4611 = vcombine.low %v4443, %v4442
    %v4613 = vunpack.c.l.s4 1983009808
    %v4614 = vunpack.c.0.s8 %v4613
    %v4615 = vlaneseq
    %v4616 = vshrl.u32 %v4615, 7
    %v4617 = vsub.s32 %v4614, %v4616
    %v4618 = vrot.slane %v4610, %v4617
    %v4620 = vunpack.c.l.s4 1983009808
    %v4621 = vunpack.c.0.s8 %v4620
    %v4622 = vlaneseq
    %v4623 = vshrl.u32 %v4622, 7
    %v4624 = vsub.s32 %v4621, %v4623
    %v4625 = vrot.slane %v4611, %v4624
    %v4626 = vcombine.low %v4618, %v4625
    %v4627 = vcombine.low %v4451, %v4459
    %v4628 = vcombine.low %v4458, %v4467
    %v4630 = vunpack.c.l.s4 1983009808
    %v4631 = vunpack.c.0.s8 %v4630
    %v4632 = vlaneseq
    %v4633 = vshrl.u32 %v4632, 7
    %v4634 = vsub.s32 %v4631, %v4633
    %v4635 = vrot.slane %v4627, %v4634
    %v4637 = vunpack.c.l.s4 1983009808
    %v4638 = vunpack.c.0.s8 %v4637
    %v4639 = vlaneseq
    %v4640 = vshrl.u32 %v4639, 7
    %v4641 = vsub.s32 %v4638, %v4640
    %v4642 = vrot.slane %v4628, %v4641
    %v4643 = vcombine.low %v4635, %v4642
    %v4644 = vcombine.low %v4475, %v4474
    %v4645 = vcombine.low %v4483, %v4491
    %v4647 = vunpack.c.l.s4 1983009808
    %v4648 = vunpack.c.0.s8 %v4647
    %v4649 = vlaneseq
    %v4650 = vshrl.u32 %v4649, 7
    %v4651 = vsub.s32 %v4648, %v4650
    %v4652 = vrot.slane %v4644, %v4651
    %v4654 = vunpack.c.l.s4 1983009808
    %v4655 = vunpack.c.0.s8 %v4654
    %v4656 = vlaneseq
    %v4657 = vshrl.u32 %v4656, 7
    %v4658 = vsub.s32 %v4655, %v4657
    %v4659 = vrot.slane %v4645, %v4658
    %v4660 = vcombine.low %v4652, %v4659
    %v4661 = vcombine.low %v4490, %v4499
    %v4662 = vcombine.low %v4507, %v4506
    %v4664 = vunpack.c.l.s4 1983009808
    %v4665 = vunpack.c.0.s8 %v4664
    %v4666 = vlaneseq
    %v4667 = vshrl.u32 %v4666, 7
    %v4668 = vsub.s32 %v4665, %v4667
    %v4669 = vrot.slane %v4661, %v4668
    %v4671 = vunpack.c.l.s4 1983009808
    %v4672 = vunpack.c.0.s8 %v4671
    %v4673 = vlaneseq
    %v4674 = vshrl.u32 %v4673, 7
    %v4675 = vsub.s32 %v4672, %v4674
    %v4676 = vrot.slane %v4662, %v4675
    %v4677 = vcombine.low %v4669, %v4676
    %v4678 = vcombine.low %v4515, %v4523
    %v4679 = vcombine.low %v4522, %v4531
    %v4681 = vunpack.c.l.s4 1983009808
    %v4682 = vunpack.c.0.s8 %v4681
    %v4683 = vlaneseq
    %v4684 = vshrl.u32 %v4683, 7
    %v4685 = vsub.s32 %v4682, %v4684
    %v4686 = vrot.slane %v4678, %v4685
    %v4688 = vunpack.c.l.s4 1983009808
    %v4689 = vunpack.c.0.s8 %v4688
    %v4690 = vlaneseq
    %v4691 = vshrl.u32 %v4690, 7
    %v4692 = vsub.s32 %v4689, %v4691
    %v4693 = vrot.slane %v4679, %v4692
    %v4694 = vcombine.low %v4686, %v4693
    %v4695 = vcombine.low %v4539, %v4538
    %v4696 = vcombine.low %v4547, %v4555
    %v4698 = vunpack.c.l.s4 1983009808
    %v4699 = vunpack.c.0.s8 %v4698
    %v4700 = vlaneseq
    %v4701 = vshrl.u32 %v4700, 7
    %v4702 = vsub.s32 %v4699, %v4701
    %v4703 = vrot.slane %v4695, %v4702
    %v4705 = vunpack.c.l.s4 1983009808
    %v4706 = vunpack.c.0.s8 %v4705
    %v4707 = vlaneseq
    %v4708 = vshrl.u32 %v4707, 7
    %v4709 = vsub.s32 %v4706, %v4708
    %v4710 = vrot.slane %v4696, %v4709
    %v4711 = vcombine.low %v4703, %v4710
    %v4712 = vcombine.low %v4554, %v4563
    %v4713 = vcombine.low %v4571, %v4570
    %v4715 = vunpack.c.l.s4 1983009808
    %v4716 = vunpack.c.0.s8 %v4715
    %v4717 = vlaneseq
    %v4718 = vshrl.u32 %v4717, 7
    %v4719 = vsub.s32 %v4716, %v4718
    %v4720 = vrot.slane %v4712, %v4719
    %v4722 = vunpack.c.l.s4 1983009808
    %v4723 = vunpack.c.0.s8 %v4722
    %v4724 = vlaneseq
    %v4725 = vshrl.u32 %v4724, 7
    %v4726 = vsub.s32 %v4723, %v4725
    %v4727 = vrot.slane %v4713, %v4726
    %v4728 = vcombine.low %v4720, %v4727
    %v4729 = vsel %vm275, %v4592, 0
    %v4731 = vsel %vm275, %v4609, 0
    %v4733 = vsel %vm275, %v4626, 0
    %v4735 = vsel %vm275, %v4643, 0
    %v4737 = vsel %vm275, %v4660, 0
    %v4739 = vsel %vm275, %v4677, 0
    %v4741 = vsel %vm275, %v4694, 0
    %v4743 = vsel %vm275, %v4711, 0
    %v4745 = vsel %vm275, %v4728, 0
    %4747 = vmatprep.subr.mxu0 0.0
    %4748 = vmatpush1.msra.mxu0 0.0
    %4749 = vmatprep.subr.mxu0 0.0
    %4750 = vmatpush1.msra.mxu0 0.0
    %4751 = vmatprep.subr.mxu0 0.0
    %4752 = vmatpush1.msra.mxu0 0.0
    %4753 = vmatprep.subr.mxu0 0.0
    %4754 = vmatpush1.msra.mxu0 0.0
    %4755 = vmatprep.subr.mxu0 0.0
    %4756 = vmatpush1.msra.mxu0 0.0
    %4757 = vmatprep.subr.mxu0 0.0
    %4758 = vmatpush1.msra.mxu0 0.0
    %4759 = vmatprep.subr.mxu0 0.0
    %4760 = vmatpush1.msra.mxu0 0.0
    %4761 = vmatprep.subr.mxu0 0.0
    %4762 = vmatpush1.msra.mxu0 0.0
    %4763 = vmatprep.subr.mxu0 0.0
    %4764 = vmatpush1.msra.mxu0 0.0
    %4765 = vmatprep.subr.mxu0 0.0
    %4766 = vmatpush1.msra.mxu0 0.0
    %4767 = vmatprep.subr.mxu0 0.0
    %4768 = vmatpush1.msra.mxu0 0.0
    %4769 = vmatprep.subr.mxu0 0.0
    %4770 = vmatpush1.msra.mxu0 0.0
    %4771 = vmatprep.subr.mxu0 0.0
    %4772 = vmatpush1.msra.mxu0 %v4575
    %4773 = vmatprep.subr.mxu0 0.0
    %4774 = vmatpush1.msra.mxu0 %v4574
    %4775 = vmatprep.subr.mxu0 0.0
    %4776 = vmatpush1.msra.mxu0 %v4573
    %4777 = vmatprep.subr.mxu0 0.0
    %4778 = vmatpush1.msra.mxu0 %v4572
    %4779 = vmatprep.subr.mxu0 0.0
    %4780 = vmatpush2.msra.mxu0 0.0
    %4781 = vmatprep.subr.mxu0 0.0
    %4782 = vmatpush2.msra.mxu0 0.0
    %4783 = vmatprep.subr.mxu0 0.0
    %4784 = vmatpush2.msra.mxu0 0.0
    %4785 = vmatprep.subr.mxu0 0.0
    %4786 = vmatpush2.msra.mxu0 0.0
    %4787 = vmatprep.subr.mxu0 0.0
    %4788 = vmatpush2.msra.mxu0 0.0
    %4789 = vmatprep.subr.mxu0 0.0
    %4790 = vmatpush2.msra.mxu0 0.0
    %4791 = vmatprep.subr.mxu0 0.0
    %4792 = vmatpush2.msra.mxu0 0.0
    %4793 = vmatprep.subr.mxu0 0.0
    %4794 = vmatpush2.msra.mxu0 0.0
    %4795 = vmatprep.subr.mxu0 0.0
    %4796 = vmatpush2.msra.mxu0 0.0
    %4797 = vmatprep.subr.mxu0 0.0
    %4798 = vmatpush2.msra.mxu0 0.0
    %4799 = vmatprep.subr.mxu0 0.0
    %4800 = vmatpush2.msra.mxu0 0.0
    %4801 = vmatprep.subr.mxu0 0.0
    %4802 = vmatpush2.msra.mxu0 0.0
    %4803 = vmatprep.subr.mxu0 0.0
    %4804 = vmatpush2.msra.mxu0 0.0
    %4805 = vmatprep.subr.mxu0 0.0
    %4806 = vmatpush2.msra.mxu0 0.0
    %4807 = vmatprep.subr.mxu0 0.0
    %4808 = vmatpush2.msra.mxu0 0.0
    %4809 = vmatprep.subr.mxu0 0.0
    %4810 = vmatpush2.msra.mxu0 0.0
    %4811 = vmatprep.mubr.f32.mxu0 0.0
    %4812 = vmatmul.mubr.f32.gmra.mxu0 %v4729
    %v4813 = vpop.f32.mrf.mxu0
    %v4814 = vadd.f32 0.0, %v4813
    %v4815 = vpop.f32.mrf.mxu0
    %4816 = vmatprep.mubr.f32.mxu0 0.0
    %4817 = vmatmul.mubr.f32.gmra.mxu0 %v4731
    %v4818 = vpop.f32.mrf.mxu0
    %v4819 = vadd.f32 0.0, %v4818
    %v4820 = vpop.f32.mrf.mxu0
    %4821 = vmatprep.mubr.f32.mxu0 0.0
    %4822 = vmatmul.mubr.f32.gmra.mxu0 %v4733
    %v4823 = vpop.f32.mrf.mxu0
    %v4824 = vadd.f32 0.0, %v4823
    %v4825 = vpop.f32.mrf.mxu0
    %4826 = vmatprep.mubr.f32.mxu0 0.0
    %4827 = vmatmul.mubr.f32.gmra.mxu0 %v4735
    %v4828 = vpop.f32.mrf.mxu0
    %v4829 = vadd.f32 0.0, %v4828
    %v4830 = vpop.f32.mrf.mxu0
    %4831 = vmatprep.mubr.f32.mxu0 0.0
    %4832 = vmatmul.mubr.f32.gmra.mxu0 %v4737
    %v4833 = vpop.f32.mrf.mxu0
    %v4834 = vadd.f32 0.0, %v4833
    %v4835 = vpop.f32.mrf.mxu0
    %4836 = vmatprep.mubr.f32.mxu0 0.0
    %4837 = vmatmul.mubr.f32.gmra.mxu0 %v4739
    %v4838 = vpop.f32.mrf.mxu0
    %v4839 = vadd.f32 0.0, %v4838
    %v4840 = vpop.f32.mrf.mxu0
    %4841 = vmatprep.mubr.f32.mxu0 0.0
    %4842 = vmatmul.mubr.f32.gmra.mxu0 %v4741
    %v4843 = vpop.f32.mrf.mxu0
    %v4844 = vadd.f32 0.0, %v4843
    %v4845 = vpop.f32.mrf.mxu0
    %4846 = vmatprep.mubr.f32.mxu0 0.0
    %4847 = vmatmul.mubr.f32.gmra.mxu0 %v4743
    %v4848 = vpop.f32.mrf.mxu0
    %v4849 = vadd.f32 0.0, %v4848
    %v4850 = vpop.f32.mrf.mxu0
    %4851 = vmatprep.mubr.f32.mxu0 0.0
    %4852 = vmatmul.mubr.f32.gmra.mxu0 %v4745
    %v4853 = vpop.f32.mrf.mxu0
    %v4854 = vadd.f32 0.0, %v4853
    %v4855 = vpop.f32.mrf.mxu0
    %4856 = vdwg.mxu0
    %v4857 = vadd.f32 %v4347, %v4814
    %v4858 = vadd.f32 %v4348, %v4819
    %v4859 = vadd.f32 %v4349, %v4824
    %v4860 = vadd.f32 %v4350, %v4829
    %v4861 = vadd.f32 %v4351, %v4834
    %v4862 = vadd.f32 %v4352, %v4839
    %v4863 = vadd.f32 %v4353, %v4844
    %v4864 = vadd.f32 %v4354, %v4849
    %v4865 = vadd.f32 %v4355, %v4854
    %v4866 = vld [vmem:[%s4] sm:$0x1]
    %v4868 = vlaneseq
    %v4869 = vshrl.u32 %v4868, 7
    %v4870 = vsub.s32 0, %v4869
    %v4871 = vrot.slane %v4866, %v4870
    %v4873 = vadd.f32 %v4857, %v4871
    %v4874 = vadd.f32 %v4858, %v4871
    %v4875 = vadd.f32 %v4859, %v4871
    %v4876 = vadd.f32 %v4860, %v4871
    %v4877 = vadd.f32 %v4861, %v4871
    %v4878 = vadd.f32 %v4862, %v4871
    %v4879 = vadd.f32 %v4863, %v4871
    %v4880 = vadd.f32 %v4864, %v4871
    %v4881 = vadd.f32 %v4865, %v4871
    %v4882 = vmax.f32 %v4873, 0.0
    %v4883 = vmax.f32 %v4874, 0.0
    %v4884 = vmax.f32 %v4875, 0.0
    %v4885 = vmax.f32 %v4876, 0.0
    %v4886 = vmax.f32 %v4877, 0.0
    %v4887 = vmax.f32 %v4878, 0.0
    %v4888 = vmax.f32 %v4879, 0.0
    %v4889 = vmax.f32 %v4880, 0.0
    %v4890 = vmax.f32 %v4881, 0.0
    %v4900 = vcombine.high %v4882, %v4882
    %v4901 = vcombine.high %v4883, %v4883
    %v4902 = vcombine.high %v4884, %v4884
    %v4903 = vcombine.high %v4885, %v4885
    %v4904 = vcombine.high %v4886, %v4886
    %v4905 = vcombine.high %v4887, %v4887
    %v4906 = vcombine.high %v4888, %v4888
    %v4907 = vcombine.high %v4889, %v4889
    %v4908 = vcombine.high %v4890, %v4890
    %v4910 = vcombine.low %v4882, %v4900
    %v4911 = vcombine.low %v4883, %v4901
    %v4912 = vcombine.low %v4884, %v4902
    %v4913 = vcombine.low %v4885, %v4903
    %v4914 = vcombine.low %v4904, %v4887
    %v4915 = vcombine.low %v4905, %v4888
    %v4916 = vcombine.low %v4906, %v4889
    %v4917 = vcombine.low %v4907, %v4890
    %vm4926 = vcmask 523264
    %4927 = vst.msk [vmem:[#allocation3] sm:$0xff] %vm4926, %v4910
    %4928 = vst.msk [vmem:[#allocation3 + $0x8] sm:$0xff] %vm4926, %v4911
    %4929 = vst.msk [vmem:[#allocation3 + $0x10] sm:$0xff] %vm4926, %v4912
    %4930 = vst.msk [vmem:[#allocation3 + $0x18] sm:$0xff] %vm4926, %v4913
    %vm4931 = vcmask 519168
    %4932 = vst.msk [vmem:[#allocation3 + $0x20] sm:$0xf] %vm4931, %v4886
    %4933 = vst.msk [vmem:[#allocation3 + $0x28] sm:$0xff] %vm4926, %v4914
    %4934 = vst.msk [vmem:[#allocation3 + $0x30] sm:$0xff] %vm4926, %v4915
    %4935 = vst.msk [vmem:[#allocation3 + $0x38] sm:$0xff] %vm4926, %v4916
    %4936 = vst.msk [vmem:[#allocation3 + $0x40] sm:$0xff] %vm4926, %v4917
    %4937 = vst.msk [vmem:[#allocation3 + $0x48] sm:$0xf] %vm4931, %v4908
    %v4938 = vld [vmem:[#allocation3] sm:$0x1]
    %v4939 = vld [vmem:[#allocation3 + $0x28] sm:$0x1]
    %v4940 = vpack.c.bf16 %v4938, %v4938
    %v4941 = vpack.c.bf16 %v4939, %v4939
    %v4942 = vld [vmem:[%s5] sm:$0xf]
    %v4943 = vld [vmem:[%s5 + $0x4] sm:$0xf]
    %v4944 = vld [vmem:[%s5 + $0x8] sm:$0xf]
    %v4945 = vld [vmem:[%s5 + $0xc] sm:$0xf]
    %v4946 = vld [vmem:[%s5 + $0x10] sm:$0xf]
    %v4947 = vld [vmem:[%s5 + $0x14] sm:$0xf]
    %v4948 = vld [vmem:[%s5 + $0x18] sm:$0xf]
    %v4949 = vld [vmem:[%s5 + $0x1c] sm:$0xf]
    %v4950 = vld [vmem:[#allocation3 + $0x1] sm:$0x1]
    %v4951 = vld [vmem:[#allocation3 + $0x29] sm:$0x1]
    %v4952 = vpack.c.bf16 %v4950, %v4950
    %v4953 = vpack.c.bf16 %v4951, %v4951
    %v4954 = vld [vmem:[%s5 + $0x20] sm:$0xf]
    %v4955 = vld [vmem:[%s5 + $0x24] sm:$0xf]
    %v4956 = vld [vmem:[%s5 + $0x28] sm:$0xf]
    %v4957 = vld [vmem:[%s5 + $0x2c] sm:$0xf]
    %v4958 = vld [vmem:[%s5 + $0x30] sm:$0xf]
    %v4959 = vld [vmem:[%s5 + $0x34] sm:$0xf]
    %v4960 = vld [vmem:[%s5 + $0x38] sm:$0xf]
    %v4961 = vld [vmem:[%s5 + $0x3c] sm:$0xf]
    %v4964 = vunpack.c.l.b16 %v4952
    %v4965 = vunpack.c.l.b16 %v4953
    %v4966 = vrot.slane %v4965, 7
    %vm4967 = vcmask 1041409
    %v4968 = vsel %vm4967, %v4966, %v4964
    %v4969 = vpack.c.b16 %v4968, %v4968
    %v4978 = vunpack.c.l.b16 %v4954
    %v4979 = vunpack.c.l.b16 %v4955
    %v4980 = vunpack.c.l.b16 %v4956
    %v4981 = vunpack.c.l.b16 %v4957
    %v4982 = vunpack.c.l.b16 %v4958
    %v4983 = vunpack.c.l.b16 %v4959
    %v4984 = vunpack.c.l.b16 %v4960
    %v4985 = vunpack.c.l.b16 %v4961
    %v4986 = vpack.c.b16 %v4979, %v4978
    %v4987 = vpack.c.b16 %v4981, %v4980
    %v4988 = vpack.c.b16 %v4983, %v4982
    %v4989 = vpack.c.b16 %v4985, %v4984
    %v4995 = vsel %vm4926, %v4969, 0
    %4997 = vmatprep.subr.bf16.mxu0 0
    %4998 = vmatpush1.bf16.msra.mxu0 0
    %4999 = vmatprep.subr.bf16.mxu0 0
    %5000 = vmatpush1.bf16.msra.mxu0 0
    %5001 = vmatprep.subr.bf16.mxu0 0
    %5002 = vmatpush1.bf16.msra.mxu0 0
    %5003 = vmatprep.subr.bf16.mxu0 0
    %5004 = vmatpush1.bf16.msra.mxu0 0
    %5005 = vmatprep.subr.bf16.mxu0 0
    %5006 = vmatpush1.bf16.msra.mxu0 %v4989
    %5007 = vmatprep.subr.bf16.mxu0 0
    %5008 = vmatpush1.bf16.msra.mxu0 %v4988
    %5009 = vmatprep.subr.bf16.mxu0 0
    %5010 = vmatpush1.bf16.msra.mxu0 %v4987
    %5011 = vmatprep.subr.bf16.mxu0 0
    %5012 = vmatpush1.bf16.msra.mxu0 %v4986
    %5013 = vmatprep.subr.bf16.mxu0 0
    %5014 = vmatpush2.bf16.msra.mxu0 0
    %5015 = vmatprep.subr.bf16.mxu0 0
    %5016 = vmatpush2.bf16.msra.mxu0 0
    %5017 = vmatprep.subr.bf16.mxu0 0
    %5018 = vmatpush2.bf16.msra.mxu0 0
    %5019 = vmatprep.subr.bf16.mxu0 0
    %5020 = vmatpush2.bf16.msra.mxu0 0
    %5021 = vmatprep.subr.bf16.mxu0 0
    %5022 = vmatpush2.bf16.msra.mxu0 0
    %5023 = vmatprep.subr.bf16.mxu0 0
    %5024 = vmatpush2.bf16.msra.mxu0 0
    %5025 = vmatprep.subr.bf16.mxu0 0
    %5026 = vmatpush2.bf16.msra.mxu0 0
    %5027 = vmatprep.subr.bf16.mxu0 0
    %5028 = vmatpush2.bf16.msra.mxu0 0
    %5029 = vmatprep.mubr.bf16.mxu0 0
    %5030 = vmatmul.mubr.bf16.gmra.mxu0 %v4995
    %v5031 = vpop.f32.mrf.mxu0
    %v5032 = vadd.f32 0.0, %v5031
    %v5033 = vpop.f32.mrf.mxu0
    %v5034 = vpop.f32.mrf.mxu0
    %v5035 = vpop.f32.mrf.mxu0
    %5036 = vdwg.mxu0
    %v5039 = vunpack.c.l.b16 %v4940
    %v5040 = vunpack.c.l.b16 %v4941
    %v5041 = vrot.slane %v5040, 7
    %v5042 = vsel %vm4967, %v5041, %v5039
    %v5043 = vpack.c.b16 %v5042, %v5042
    %v5052 = vunpack.c.l.b16 %v4942
    %v5053 = vunpack.c.l.b16 %v4943
    %v5054 = vunpack.c.l.b16 %v4944
    %v5055 = vunpack.c.l.b16 %v4945
    %v5056 = vunpack.c.l.b16 %v4946
    %v5057 = vunpack.c.l.b16 %v4947
    %v5058 = vunpack.c.l.b16 %v4948
    %v5059 = vunpack.c.l.b16 %v4949
    %v5060 = vpack.c.b16 %v5053, %v5052
    %v5061 = vpack.c.b16 %v5055, %v5054
    %v5062 = vpack.c.b16 %v5057, %v5056
    %v5063 = vpack.c.b16 %v5059, %v5058
    %v5069 = vsel %vm4926, %v5043, 0
    %5071 = vmatprep.subr.bf16.mxu0 0
    %5072 = vmatpush1.bf16.msra.mxu0 0
    %5073 = vmatprep.subr.bf16.mxu0 0
    %5074 = vmatpush1.bf16.msra.mxu0 0
    %5075 = vmatprep.subr.bf16.mxu0 0
    %5076 = vmatpush1.bf16.msra.mxu0 0
    %5077 = vmatprep.subr.bf16.mxu0 0
    %5078 = vmatpush1.bf16.msra.mxu0 0
    %5079 = vmatprep.subr.bf16.mxu0 0
    %5080 = vmatpush1.bf16.msra.mxu0 %v5063
    %5081 = vmatprep.subr.bf16.mxu0 0
    %5082 = vmatpush1.bf16.msra.mxu0 %v5062
    %5083 = vmatprep.subr.bf16.mxu0 0
    %5084 = vmatpush1.bf16.msra.mxu0 %v5061
    %5085 = vmatprep.subr.bf16.mxu0 0
    %5086 = vmatpush1.bf16.msra.mxu0 %v5060
    %5087 = vmatprep.subr.bf16.mxu0 0
    %5088 = vmatpush2.bf16.msra.mxu0 0
    %5089 = vmatprep.subr.bf16.mxu0 0
    %5090 = vmatpush2.bf16.msra.mxu0 0
    %5091 = vmatprep.subr.bf16.mxu0 0
    %5092 = vmatpush2.bf16.msra.mxu0 0
    %5093 = vmatprep.subr.bf16.mxu0 0
    %5094 = vmatpush2.bf16.msra.mxu0 0
    %5095 = vmatprep.subr.bf16.mxu0 0
    %5096 = vmatpush2.bf16.msra.mxu0 0
    %5097 = vmatprep.subr.bf16.mxu0 0
    %5098 = vmatpush2.bf16.msra.mxu0 0
    %5099 = vmatprep.subr.bf16.mxu0 0
    %5100 = vmatpush2.bf16.msra.mxu0 0
    %5101 = vmatprep.subr.bf16.mxu0 0
    %5102 = vmatpush2.bf16.msra.mxu0 0
    %5103 = vmatprep.mubr.bf16.mxu0 0
    %5104 = vmatmul.mubr.bf16.gmra.mxu0 %v5069
    %v5105 = vpop.f32.mrf.mxu0
    %v5106 = vadd.f32 %v5032, %v5105
    %v5107 = vpop.f32.mrf.mxu0
    %v5108 = vpop.f32.mrf.mxu0
    %v5109 = vpop.f32.mrf.mxu0
    %5110 = vdwg.mxu0
    %v5111 = vld [vmem:[#allocation3 + $0x2] sm:$0x1]
    %v5112 = vld [vmem:[#allocation3 + $0x2a] sm:$0x1]
    %v5113 = vpack.c.bf16 %v5111, %v5111
    %v5114 = vpack.c.bf16 %v5112, %v5112
    %v5115 = vld [vmem:[%s5 + $0x40] sm:$0xf]
    %v5116 = vld [vmem:[%s5 + $0x44] sm:$0xf]
    %v5117 = vld [vmem:[%s5 + $0x48] sm:$0xf]
    %v5118 = vld [vmem:[%s5 + $0x4c] sm:$0xf]
    %v5119 = vld [vmem:[%s5 + $0x50] sm:$0xf]
    %v5120 = vld [vmem:[%s5 + $0x54] sm:$0xf]
    %v5121 = vld [vmem:[%s5 + $0x58] sm:$0xf]
    %v5122 = vld [vmem:[%s5 + $0x5c] sm:$0xf]
    %v5125 = vunpack.c.l.b16 %v5113
    %v5126 = vunpack.c.l.b16 %v5114
    %v5127 = vrot.slane %v5126, 7
    %v5128 = vsel %vm4967, %v5127, %v5125
    %v5129 = vpack.c.b16 %v5128, %v5128
    %v5138 = vunpack.c.l.b16 %v5115
    %v5139 = vunpack.c.l.b16 %v5116
    %v5140 = vunpack.c.l.b16 %v5117
    %v5141 = vunpack.c.l.b16 %v5118
    %v5142 = vunpack.c.l.b16 %v5119
    %v5143 = vunpack.c.l.b16 %v5120
    %v5144 = vunpack.c.l.b16 %v5121
    %v5145 = vunpack.c.l.b16 %v5122
    %v5146 = vpack.c.b16 %v5139, %v5138
    %v5147 = vpack.c.b16 %v5141, %v5140
    %v5148 = vpack.c.b16 %v5143, %v5142
    %v5149 = vpack.c.b16 %v5145, %v5144
    %v5155 = vsel %vm4926, %v5129, 0
    %5157 = vmatprep.subr.bf16.mxu0 0
    %5158 = vmatpush1.bf16.msra.mxu0 0
    %5159 = vmatprep.subr.bf16.mxu0 0
    %5160 = vmatpush1.bf16.msra.mxu0 0
    %5161 = vmatprep.subr.bf16.mxu0 0
    %5162 = vmatpush1.bf16.msra.mxu0 0
    %5163 = vmatprep.subr.bf16.mxu0 0
    %5164 = vmatpush1.bf16.msra.mxu0 0
    %5165 = vmatprep.subr.bf16.mxu0 0
    %5166 = vmatpush1.bf16.msra.mxu0 %v5149
    %5167 = vmatprep.subr.bf16.mxu0 0
    %5168 = vmatpush1.bf16.msra.mxu0 %v5148
    %5169 = vmatprep.subr.bf16.mxu0 0
    %5170 = vmatpush1.bf16.msra.mxu0 %v5147
    %5171 = vmatprep.subr.bf16.mxu0 0
    %5172 = vmatpush1.bf16.msra.mxu0 %v5146
    %5173 = vmatprep.subr.bf16.mxu0 0
    %5174 = vmatpush2.bf16.msra.mxu0 0
    %5175 = vmatprep.subr.bf16.mxu0 0
    %5176 = vmatpush2.bf16.msra.mxu0 0
    %5177 = vmatprep.subr.bf16.mxu0 0
    %5178 = vmatpush2.bf16.msra.mxu0 0
    %5179 = vmatprep.subr.bf16.mxu0 0
    %5180 = vmatpush2.bf16.msra.mxu0 0
    %5181 = vmatprep.subr.bf16.mxu0 0
    %5182 = vmatpush2.bf16.msra.mxu0 0
    %5183 = vmatprep.subr.bf16.mxu0 0
    %5184 = vmatpush2.bf16.msra.mxu0 0
    %5185 = vmatprep.subr.bf16.mxu0 0
    %5186 = vmatpush2.bf16.msra.mxu0 0
    %5187 = vmatprep.subr.bf16.mxu0 0
    %5188 = vmatpush2.bf16.msra.mxu0 0
    %5189 = vmatprep.mubr.bf16.mxu0 0
    %5190 = vmatmul.mubr.bf16.gmra.mxu0 %v5155
    %v5191 = vpop.f32.mrf.mxu0
    %v5192 = vadd.f32 0.0, %v5191
    %v5193 = vpop.f32.mrf.mxu0
    %v5194 = vpop.f32.mrf.mxu0
    %v5195 = vpop.f32.mrf.mxu0
    %5196 = vdwg.mxu0
    %v5197 = vadd.f32 %v5106, %v5192
    %v5198 = vld [vmem:[#allocation3 + $0x3] sm:$0x1]
    %v5199 = vld [vmem:[#allocation3 + $0x2b] sm:$0x1]
    %v5200 = vpack.c.bf16 %v5198, %v5198
    %v5201 = vpack.c.bf16 %v5199, %v5199
    %v5202 = vld [vmem:[%s5 + $0x60] sm:$0xf]
    %v5203 = vld [vmem:[%s5 + $0x64] sm:$0xf]
    %v5204 = vld [vmem:[%s5 + $0x68] sm:$0xf]
    %v5205 = vld [vmem:[%s5 + $0x6c] sm:$0xf]
    %v5206 = vld [vmem:[%s5 + $0x70] sm:$0xf]
    %v5207 = vld [vmem:[%s5 + $0x74] sm:$0xf]
    %v5208 = vld [vmem:[%s5 + $0x78] sm:$0xf]
    %v5209 = vld [vmem:[%s5 + $0x7c] sm:$0xf]
    %v5212 = vunpack.c.l.b16 %v5200
    %v5213 = vunpack.c.l.b16 %v5201
    %v5214 = vrot.slane %v5213, 7
    %v5215 = vsel %vm4967, %v5214, %v5212
    %v5216 = vpack.c.b16 %v5215, %v5215
    %v5225 = vunpack.c.l.b16 %v5202
    %v5226 = vunpack.c.l.b16 %v5203
    %v5227 = vunpack.c.l.b16 %v5204
    %v5228 = vunpack.c.l.b16 %v5205
    %v5229 = vunpack.c.l.b16 %v5206
    %v5230 = vunpack.c.l.b16 %v5207
    %v5231 = vunpack.c.l.b16 %v5208
    %v5232 = vunpack.c.l.b16 %v5209
    %v5233 = vpack.c.b16 %v5226, %v5225
    %v5234 = vpack.c.b16 %v5228, %v5227
    %v5235 = vpack.c.b16 %v5230, %v5229
    %v5236 = vpack.c.b16 %v5232, %v5231
    %v5242 = vsel %vm4926, %v5216, 0
    %5244 = vmatprep.subr.bf16.mxu0 0
    %5245 = vmatpush1.bf16.msra.mxu0 0
    %5246 = vmatprep.subr.bf16.mxu0 0
    %5247 = vmatpush1.bf16.msra.mxu0 0
    %5248 = vmatprep.subr.bf16.mxu0 0
    %5249 = vmatpush1.bf16.msra.mxu0 0
    %5250 = vmatprep.subr.bf16.mxu0 0
    %5251 = vmatpush1.bf16.msra.mxu0 0
    %5252 = vmatprep.subr.bf16.mxu0 0
    %5253 = vmatpush1.bf16.msra.mxu0 %v5236
    %5254 = vmatprep.subr.bf16.mxu0 0
    %5255 = vmatpush1.bf16.msra.mxu0 %v5235
    %5256 = vmatprep.subr.bf16.mxu0 0
    %5257 = vmatpush1.bf16.msra.mxu0 %v5234
    %5258 = vmatprep.subr.bf16.mxu0 0
    %5259 = vmatpush1.bf16.msra.mxu0 %v5233
    %5260 = vmatprep.subr.bf16.mxu0 0
    %5261 = vmatpush2.bf16.msra.mxu0 0
    %5262 = vmatprep.subr.bf16.mxu0 0
    %5263 = vmatpush2.bf16.msra.mxu0 0
    %5264 = vmatprep.subr.bf16.mxu0 0
    %5265 = vmatpush2.bf16.msra.mxu0 0
    %5266 = vmatprep.subr.bf16.mxu0 0
    %5267 = vmatpush2.bf16.msra.mxu0 0
    %5268 = vmatprep.subr.bf16.mxu0 0
    %5269 = vmatpush2.bf16.msra.mxu0 0
    %5270 = vmatprep.subr.bf16.mxu0 0
    %5271 = vmatpush2.bf16.msra.mxu0 0
    %5272 = vmatprep.subr.bf16.mxu0 0
    %5273 = vmatpush2.bf16.msra.mxu0 0
    %5274 = vmatprep.subr.bf16.mxu0 0
    %5275 = vmatpush2.bf16.msra.mxu0 0
    %5276 = vmatprep.mubr.bf16.mxu0 0
    %5277 = vmatmul.mubr.bf16.gmra.mxu0 %v5242
    %v5278 = vpop.f32.mrf.mxu0
    %v5279 = vadd.f32 0.0, %v5278
    %v5280 = vpop.f32.mrf.mxu0
    %v5281 = vpop.f32.mrf.mxu0
    %v5282 = vpop.f32.mrf.mxu0
    %5283 = vdwg.mxu0
    %v5284 = vadd.f32 %v5197, %v5279
    %v5285 = vld [vmem:[#allocation3 + $0x4] sm:$0x1]
    %v5286 = vld [vmem:[#allocation3 + $0x2c] sm:$0x1]
    %v5287 = vpack.c.bf16 %v5285, %v5285
    %v5288 = vpack.c.bf16 %v5286, %v5286
    %v5289 = vld [vmem:[%s5 + $0x80] sm:$0xf]
    %v5290 = vld [vmem:[%s5 + $0x84] sm:$0xf]
    %v5291 = vld [vmem:[%s5 + $0x88] sm:$0xf]
    %v5292 = vld [vmem:[%s5 + $0x8c] sm:$0xf]
    %v5293 = vld [vmem:[%s5 + $0x90] sm:$0xf]
    %v5294 = vld [vmem:[%s5 + $0x94] sm:$0xf]
    %v5295 = vld [vmem:[%s5 + $0x98] sm:$0xf]
    %v5296 = vld [vmem:[%s5 + $0x9c] sm:$0xf]
    %v5299 = vunpack.c.l.b16 %v5287
    %v5300 = vunpack.c.l.b16 %v5288
    %v5301 = vrot.slane %v5300, 7
    %v5302 = vsel %vm4967, %v5301, %v5299
    %v5303 = vpack.c.b16 %v5302, %v5302
    %v5312 = vunpack.c.l.b16 %v5289
    %v5313 = vunpack.c.l.b16 %v5290
    %v5314 = vunpack.c.l.b16 %v5291
    %v5315 = vunpack.c.l.b16 %v5292
    %v5316 = vunpack.c.l.b16 %v5293
    %v5317 = vunpack.c.l.b16 %v5294
    %v5318 = vunpack.c.l.b16 %v5295
    %v5319 = vunpack.c.l.b16 %v5296
    %v5320 = vpack.c.b16 %v5313, %v5312
    %v5321 = vpack.c.b16 %v5315, %v5314
    %v5322 = vpack.c.b16 %v5317, %v5316
    %v5323 = vpack.c.b16 %v5319, %v5318
    %v5329 = vsel %vm4926, %v5303, 0
    %5331 = vmatprep.subr.bf16.mxu0 0
    %5332 = vmatpush1.bf16.msra.mxu0 0
    %5333 = vmatprep.subr.bf16.mxu0 0
    %5334 = vmatpush1.bf16.msra.mxu0 0
    %5335 = vmatprep.subr.bf16.mxu0 0
    %5336 = vmatpush1.bf16.msra.mxu0 0
    %5337 = vmatprep.subr.bf16.mxu0 0
    %5338 = vmatpush1.bf16.msra.mxu0 0
    %5339 = vmatprep.subr.bf16.mxu0 0
    %5340 = vmatpush1.bf16.msra.mxu0 %v5323
    %5341 = vmatprep.subr.bf16.mxu0 0
    %5342 = vmatpush1.bf16.msra.mxu0 %v5322
    %5343 = vmatprep.subr.bf16.mxu0 0
    %5344 = vmatpush1.bf16.msra.mxu0 %v5321
    %5345 = vmatprep.subr.bf16.mxu0 0
    %5346 = vmatpush1.bf16.msra.mxu0 %v5320
    %5347 = vmatprep.subr.bf16.mxu0 0
    %5348 = vmatpush2.bf16.msra.mxu0 0
    %5349 = vmatprep.subr.bf16.mxu0 0
    %5350 = vmatpush2.bf16.msra.mxu0 0
    %5351 = vmatprep.subr.bf16.mxu0 0
    %5352 = vmatpush2.bf16.msra.mxu0 0
    %5353 = vmatprep.subr.bf16.mxu0 0
    %5354 = vmatpush2.bf16.msra.mxu0 0
    %5355 = vmatprep.subr.bf16.mxu0 0
    %5356 = vmatpush2.bf16.msra.mxu0 0
    %5357 = vmatprep.subr.bf16.mxu0 0
    %5358 = vmatpush2.bf16.msra.mxu0 0
    %5359 = vmatprep.subr.bf16.mxu0 0
    %5360 = vmatpush2.bf16.msra.mxu0 0
    %5361 = vmatprep.subr.bf16.mxu0 0
    %5362 = vmatpush2.bf16.msra.mxu0 0
    %5363 = vmatprep.mubr.bf16.mxu0 0
    %5364 = vmatmul.mubr.bf16.gmra.mxu0 %v5329
    %v5365 = vpop.f32.mrf.mxu0
    %v5366 = vadd.f32 0.0, %v5365
    %v5367 = vpop.f32.mrf.mxu0
    %v5368 = vpop.f32.mrf.mxu0
    %v5369 = vpop.f32.mrf.mxu0
    %5370 = vdwg.mxu0
    %v5371 = vadd.f32 %v5284, %v5366
    %v5372 = vld [vmem:[#allocation3 + $0x5] sm:$0x1]
    %v5373 = vld [vmem:[#allocation3 + $0x2d] sm:$0x1]
    %v5374 = vpack.c.bf16 %v5372, %v5372
    %v5375 = vpack.c.bf16 %v5373, %v5373
    %v5376 = vld [vmem:[%s5 + $0xa0] sm:$0xf]
    %v5377 = vld [vmem:[%s5 + $0xa4] sm:$0xf]
    %v5378 = vld [vmem:[%s5 + $0xa8] sm:$0xf]
    %v5379 = vld [vmem:[%s5 + $0xac] sm:$0xf]
    %v5380 = vld [vmem:[%s5 + $0xb0] sm:$0xf]
    %v5381 = vld [vmem:[%s5 + $0xb4] sm:$0xf]
    %v5382 = vld [vmem:[%s5 + $0xb8] sm:$0xf]
    %v5383 = vld [vmem:[%s5 + $0xbc] sm:$0xf]
    %v5386 = vunpack.c.l.b16 %v5374
    %v5387 = vunpack.c.l.b16 %v5375
    %v5388 = vrot.slane %v5387, 7
    %v5389 = vsel %vm4967, %v5388, %v5386
    %v5390 = vpack.c.b16 %v5389, %v5389
    %v5399 = vunpack.c.l.b16 %v5376
    %v5400 = vunpack.c.l.b16 %v5377
    %v5401 = vunpack.c.l.b16 %v5378
    %v5402 = vunpack.c.l.b16 %v5379
    %v5403 = vunpack.c.l.b16 %v5380
    %v5404 = vunpack.c.l.b16 %v5381
    %v5405 = vunpack.c.l.b16 %v5382
    %v5406 = vunpack.c.l.b16 %v5383
    %v5407 = vpack.c.b16 %v5400, %v5399
    %v5408 = vpack.c.b16 %v5402, %v5401
    %v5409 = vpack.c.b16 %v5404, %v5403
    %v5410 = vpack.c.b16 %v5406, %v5405
    %v5416 = vsel %vm4926, %v5390, 0
    %5418 = vmatprep.subr.bf16.mxu0 0
    %5419 = vmatpush1.bf16.msra.mxu0 0
    %5420 = vmatprep.subr.bf16.mxu0 0
    %5421 = vmatpush1.bf16.msra.mxu0 0
    %5422 = vmatprep.subr.bf16.mxu0 0
    %5423 = vmatpush1.bf16.msra.mxu0 0
    %5424 = vmatprep.subr.bf16.mxu0 0
    %5425 = vmatpush1.bf16.msra.mxu0 0
    %5426 = vmatprep.subr.bf16.mxu0 0
    %5427 = vmatpush1.bf16.msra.mxu0 %v5410
    %5428 = vmatprep.subr.bf16.mxu0 0
    %5429 = vmatpush1.bf16.msra.mxu0 %v5409
    %5430 = vmatprep.subr.bf16.mxu0 0
    %5431 = vmatpush1.bf16.msra.mxu0 %v5408
    %5432 = vmatprep.subr.bf16.mxu0 0
    %5433 = vmatpush1.bf16.msra.mxu0 %v5407
    %5434 = vmatprep.subr.bf16.mxu0 0
    %5435 = vmatpush2.bf16.msra.mxu0 0
    %5436 = vmatprep.subr.bf16.mxu0 0
    %5437 = vmatpush2.bf16.msra.mxu0 0
    %5438 = vmatprep.subr.bf16.mxu0 0
    %5439 = vmatpush2.bf16.msra.mxu0 0
    %5440 = vmatprep.subr.bf16.mxu0 0
    %5441 = vmatpush2.bf16.msra.mxu0 0
    %5442 = vmatprep.subr.bf16.mxu0 0
    %5443 = vmatpush2.bf16.msra.mxu0 0
    %5444 = vmatprep.subr.bf16.mxu0 0
    %5445 = vmatpush2.bf16.msra.mxu0 0
    %5446 = vmatprep.subr.bf16.mxu0 0
    %5447 = vmatpush2.bf16.msra.mxu0 0
    %5448 = vmatprep.subr.bf16.mxu0 0
    %5449 = vmatpush2.bf16.msra.mxu0 0
    %5450 = vmatprep.mubr.bf16.mxu0 0
    %5451 = vmatmul.mubr.bf16.gmra.mxu0 %v5416
    %v5452 = vpop.f32.mrf.mxu0
    %v5453 = vadd.f32 0.0, %v5452
    %v5454 = vpop.f32.mrf.mxu0
    %v5455 = vpop.f32.mrf.mxu0
    %v5456 = vpop.f32.mrf.mxu0
    %5457 = vdwg.mxu0
    %v5458 = vadd.f32 %v5371, %v5453
    %v5459 = vld [vmem:[#allocation3 + $0x6] sm:$0x1]
    %v5460 = vld [vmem:[#allocation3 + $0x2e] sm:$0x1]
    %v5461 = vpack.c.bf16 %v5459, %v5459
    %v5462 = vpack.c.bf16 %v5460, %v5460
    %v5463 = vld [vmem:[%s5 + $0xc0] sm:$0xf]
    %v5464 = vld [vmem:[%s5 + $0xc4] sm:$0xf]
    %v5465 = vld [vmem:[%s5 + $0xc8] sm:$0xf]
    %v5466 = vld [vmem:[%s5 + $0xcc] sm:$0xf]
    %v5467 = vld [vmem:[%s5 + $0xd0] sm:$0xf]
    %v5468 = vld [vmem:[%s5 + $0xd4] sm:$0xf]
    %v5469 = vld [vmem:[%s5 + $0xd8] sm:$0xf]
    %v5470 = vld [vmem:[%s5 + $0xdc] sm:$0xf]
    %v5473 = vunpack.c.l.b16 %v5461
    %v5474 = vunpack.c.l.b16 %v5462
    %v5475 = vrot.slane %v5474, 7
    %v5476 = vsel %vm4967, %v5475, %v5473
    %v5477 = vpack.c.b16 %v5476, %v5476
    %v5486 = vunpack.c.l.b16 %v5463
    %v5487 = vunpack.c.l.b16 %v5464
    %v5488 = vunpack.c.l.b16 %v5465
    %v5489 = vunpack.c.l.b16 %v5466
    %v5490 = vunpack.c.l.b16 %v5467
    %v5491 = vunpack.c.l.b16 %v5468
    %v5492 = vunpack.c.l.b16 %v5469
    %v5493 = vunpack.c.l.b16 %v5470
    %v5494 = vpack.c.b16 %v5487, %v5486
    %v5495 = vpack.c.b16 %v5489, %v5488
    %v5496 = vpack.c.b16 %v5491, %v5490
    %v5497 = vpack.c.b16 %v5493, %v5492
    %v5503 = vsel %vm4926, %v5477, 0
    %5505 = vmatprep.subr.bf16.mxu0 0
    %5506 = vmatpush1.bf16.msra.mxu0 0
    %5507 = vmatprep.subr.bf16.mxu0 0
    %5508 = vmatpush1.bf16.msra.mxu0 0
    %5509 = vmatprep.subr.bf16.mxu0 0
    %5510 = vmatpush1.bf16.msra.mxu0 0
    %5511 = vmatprep.subr.bf16.mxu0 0
    %5512 = vmatpush1.bf16.msra.mxu0 0
    %5513 = vmatprep.subr.bf16.mxu0 0
    %5514 = vmatpush1.bf16.msra.mxu0 %v5497
    %5515 = vmatprep.subr.bf16.mxu0 0
    %5516 = vmatpush1.bf16.msra.mxu0 %v5496
    %5517 = vmatprep.subr.bf16.mxu0 0
    %5518 = vmatpush1.bf16.msra.mxu0 %v5495
    %5519 = vmatprep.subr.bf16.mxu0 0
    %5520 = vmatpush1.bf16.msra.mxu0 %v5494
    %5521 = vmatprep.subr.bf16.mxu0 0
    %5522 = vmatpush2.bf16.msra.mxu0 0
    %5523 = vmatprep.subr.bf16.mxu0 0
    %5524 = vmatpush2.bf16.msra.mxu0 0
    %5525 = vmatprep.subr.bf16.mxu0 0
    %5526 = vmatpush2.bf16.msra.mxu0 0
    %5527 = vmatprep.subr.bf16.mxu0 0
    %5528 = vmatpush2.bf16.msra.mxu0 0
    %5529 = vmatprep.subr.bf16.mxu0 0
    %5530 = vmatpush2.bf16.msra.mxu0 0
    %5531 = vmatprep.subr.bf16.mxu0 0
    %5532 = vmatpush2.bf16.msra.mxu0 0
    %5533 = vmatprep.subr.bf16.mxu0 0
    %5534 = vmatpush2.bf16.msra.mxu0 0
    %5535 = vmatprep.subr.bf16.mxu0 0
    %5536 = vmatpush2.bf16.msra.mxu0 0
    %5537 = vmatprep.mubr.bf16.mxu0 0
    %5538 = vmatmul.mubr.bf16.gmra.mxu0 %v5503
    %v5539 = vpop.f32.mrf.mxu0
    %v5540 = vadd.f32 0.0, %v5539
    %v5541 = vpop.f32.mrf.mxu0
    %v5542 = vpop.f32.mrf.mxu0
    %v5543 = vpop.f32.mrf.mxu0
    %5544 = vdwg.mxu0
    %v5545 = vadd.f32 %v5458, %v5540
    %v5546 = vld [vmem:[#allocation3 + $0x7] sm:$0x1]
    %v5547 = vld [vmem:[#allocation3 + $0x2f] sm:$0x1]
    %v5548 = vpack.c.bf16 %v5546, %v5546
    %v5549 = vpack.c.bf16 %v5547, %v5547
    %v5550 = vld [vmem:[%s5 + $0xe0] sm:$0xf]
    %v5551 = vld [vmem:[%s5 + $0xe4] sm:$0xf]
    %v5552 = vld [vmem:[%s5 + $0xe8] sm:$0xf]
    %v5553 = vld [vmem:[%s5 + $0xec] sm:$0xf]
    %v5554 = vld [vmem:[%s5 + $0xf0] sm:$0xf]
    %v5555 = vld [vmem:[%s5 + $0xf4] sm:$0xf]
    %v5556 = vld [vmem:[%s5 + $0xf8] sm:$0xf]
    %v5557 = vld [vmem:[%s5 + $0xfc] sm:$0xf]
    %v5560 = vunpack.c.l.b16 %v5548
    %v5561 = vunpack.c.l.b16 %v5549
    %v5562 = vrot.slane %v5561, 7
    %v5563 = vsel %vm4967, %v5562, %v5560
    %v5564 = vpack.c.b16 %v5563, %v5563
    %v5573 = vunpack.c.l.b16 %v5550
    %v5574 = vunpack.c.l.b16 %v5551
    %v5575 = vunpack.c.l.b16 %v5552
    %v5576 = vunpack.c.l.b16 %v5553
    %v5577 = vunpack.c.l.b16 %v5554
    %v5578 = vunpack.c.l.b16 %v5555
    %v5579 = vunpack.c.l.b16 %v5556
    %v5580 = vunpack.c.l.b16 %v5557
    %v5581 = vpack.c.b16 %v5574, %v5573
    %v5582 = vpack.c.b16 %v5576, %v5575
    %v5583 = vpack.c.b16 %v5578, %v5577
    %v5584 = vpack.c.b16 %v5580, %v5579
    %v5590 = vsel %vm4926, %v5564, 0
    %5592 = vmatprep.subr.bf16.mxu0 0
    %5593 = vmatpush1.bf16.msra.mxu0 0
    %5594 = vmatprep.subr.bf16.mxu0 0
    %5595 = vmatpush1.bf16.msra.mxu0 0
    %5596 = vmatprep.subr.bf16.mxu0 0
    %5597 = vmatpush1.bf16.msra.mxu0 0
    %5598 = vmatprep.subr.bf16.mxu0 0
    %5599 = vmatpush1.bf16.msra.mxu0 0
    %5600 = vmatprep.subr.bf16.mxu0 0
    %5601 = vmatpush1.bf16.msra.mxu0 %v5584
    %5602 = vmatprep.subr.bf16.mxu0 0
    %5603 = vmatpush1.bf16.msra.mxu0 %v5583
    %5604 = vmatprep.subr.bf16.mxu0 0
    %5605 = vmatpush1.bf16.msra.mxu0 %v5582
    %5606 = vmatprep.subr.bf16.mxu0 0
    %5607 = vmatpush1.bf16.msra.mxu0 %v5581
    %5608 = vmatprep.subr.bf16.mxu0 0
    %5609 = vmatpush2.bf16.msra.mxu0 0
    %5610 = vmatprep.subr.bf16.mxu0 0
    %5611 = vmatpush2.bf16.msra.mxu0 0
    %5612 = vmatprep.subr.bf16.mxu0 0
    %5613 = vmatpush2.bf16.msra.mxu0 0
    %5614 = vmatprep.subr.bf16.mxu0 0
    %5615 = vmatpush2.bf16.msra.mxu0 0
    %5616 = vmatprep.subr.bf16.mxu0 0
    %5617 = vmatpush2.bf16.msra.mxu0 0
    %5618 = vmatprep.subr.bf16.mxu0 0
    %5619 = vmatpush2.bf16.msra.mxu0 0
    %5620 = vmatprep.subr.bf16.mxu0 0
    %5621 = vmatpush2.bf16.msra.mxu0 0
    %5622 = vmatprep.subr.bf16.mxu0 0
    %5623 = vmatpush2.bf16.msra.mxu0 0
    %5624 = vmatprep.mubr.bf16.mxu0 0
    %5625 = vmatmul.mubr.bf16.gmra.mxu0 %v5590
    %v5626 = vpop.f32.mrf.mxu0
    %v5627 = vadd.f32 0.0, %v5626
    %v5628 = vpop.f32.mrf.mxu0
    %v5629 = vpop.f32.mrf.mxu0
    %v5630 = vpop.f32.mrf.mxu0
    %5631 = vdwg.mxu0
    %v5632 = vadd.f32 %v5545, %v5627
    %v5633 = vld [vmem:[#allocation3 + $0x8] sm:$0x1]
    %v5634 = vld [vmem:[#allocation3 + $0x30] sm:$0x1]
    %v5635 = vpack.c.bf16 %v5633, %v5633
    %v5636 = vpack.c.bf16 %v5634, %v5634
    %v5637 = vld [vmem:[%s5 + $0x100] sm:$0xf]
    %v5638 = vld [vmem:[%s5 + $0x104] sm:$0xf]
    %v5639 = vld [vmem:[%s5 + $0x108] sm:$0xf]
    %v5640 = vld [vmem:[%s5 + $0x10c] sm:$0xf]
    %v5641 = vld [vmem:[%s5 + $0x110] sm:$0xf]
    %v5642 = vld [vmem:[%s5 + $0x114] sm:$0xf]
    %v5643 = vld [vmem:[%s5 + $0x118] sm:$0xf]
    %v5644 = vld [vmem:[%s5 + $0x11c] sm:$0xf]
    %v5647 = vunpack.c.l.b16 %v5635
    %v5648 = vunpack.c.l.b16 %v5636
    %v5649 = vrot.slane %v5648, 7
    %v5650 = vsel %vm4967, %v5649, %v5647
    %v5651 = vpack.c.b16 %v5650, %v5650
    %v5660 = vunpack.c.l.b16 %v5637
    %v5661 = vunpack.c.l.b16 %v5638
    %v5662 = vunpack.c.l.b16 %v5639
    %v5663 = vunpack.c.l.b16 %v5640
    %v5664 = vunpack.c.l.b16 %v5641
    %v5665 = vunpack.c.l.b16 %v5642
    %v5666 = vunpack.c.l.b16 %v5643
    %v5667 = vunpack.c.l.b16 %v5644
    %v5668 = vpack.c.b16 %v5661, %v5660
    %v5669 = vpack.c.b16 %v5663, %v5662
    %v5670 = vpack.c.b16 %v5665, %v5664
    %v5671 = vpack.c.b16 %v5667, %v5666
    %v5677 = vsel %vm4926, %v5651, 0
    %5679 = vmatprep.subr.bf16.mxu0 0
    %5680 = vmatpush1.bf16.msra.mxu0 0
    %5681 = vmatprep.subr.bf16.mxu0 0
    %5682 = vmatpush1.bf16.msra.mxu0 0
    %5683 = vmatprep.subr.bf16.mxu0 0
    %5684 = vmatpush1.bf16.msra.mxu0 0
    %5685 = vmatprep.subr.bf16.mxu0 0
    %5686 = vmatpush1.bf16.msra.mxu0 0
    %5687 = vmatprep.subr.bf16.mxu0 0
    %5688 = vmatpush1.bf16.msra.mxu0 %v5671
    %5689 = vmatprep.subr.bf16.mxu0 0
    %5690 = vmatpush1.bf16.msra.mxu0 %v5670
    %5691 = vmatprep.subr.bf16.mxu0 0
    %5692 = vmatpush1.bf16.msra.mxu0 %v5669
    %5693 = vmatprep.subr.bf16.mxu0 0
    %5694 = vmatpush1.bf16.msra.mxu0 %v5668
    %5695 = vmatprep.subr.bf16.mxu0 0
    %5696 = vmatpush2.bf16.msra.mxu0 0
    %5697 = vmatprep.subr.bf16.mxu0 0
    %5698 = vmatpush2.bf16.msra.mxu0 0
    %5699 = vmatprep.subr.bf16.mxu0 0
    %5700 = vmatpush2.bf16.msra.mxu0 0
    %5701 = vmatprep.subr.bf16.mxu0 0
    %5702 = vmatpush2.bf16.msra.mxu0 0
    %5703 = vmatprep.subr.bf16.mxu0 0
    %5704 = vmatpush2.bf16.msra.mxu0 0
    %5705 = vmatprep.subr.bf16.mxu0 0
    %5706 = vmatpush2.bf16.msra.mxu0 0
    %5707 = vmatprep.subr.bf16.mxu0 0
    %5708 = vmatpush2.bf16.msra.mxu0 0
    %5709 = vmatprep.subr.bf16.mxu0 0
    %5710 = vmatpush2.bf16.msra.mxu0 0
    %5711 = vmatprep.mubr.bf16.mxu0 0
    %5712 = vmatmul.mubr.bf16.gmra.mxu0 %v5677
    %v5713 = vpop.f32.mrf.mxu0
    %v5714 = vadd.f32 0.0, %v5713
    %v5715 = vpop.f32.mrf.mxu0
    %v5716 = vpop.f32.mrf.mxu0
    %v5717 = vpop.f32.mrf.mxu0
    %5718 = vdwg.mxu0
    %v5719 = vadd.f32 %v5632, %v5714
    %v5720 = vld [vmem:[#allocation3 + $0x9] sm:$0x1]
    %v5721 = vld [vmem:[#allocation3 + $0x31] sm:$0x1]
    %v5722 = vpack.c.bf16 %v5720, %v5720
    %v5723 = vpack.c.bf16 %v5721, %v5721
    %v5724 = vld [vmem:[%s5 + $0x120] sm:$0xf]
    %v5725 = vld [vmem:[%s5 + $0x124] sm:$0xf]
    %v5726 = vld [vmem:[%s5 + $0x128] sm:$0xf]
    %v5727 = vld [vmem:[%s5 + $0x12c] sm:$0xf]
    %v5728 = vld [vmem:[%s5 + $0x130] sm:$0xf]
    %v5729 = vld [vmem:[%s5 + $0x134] sm:$0xf]
    %v5730 = vld [vmem:[%s5 + $0x138] sm:$0xf]
    %v5731 = vld [vmem:[%s5 + $0x13c] sm:$0xf]
    %v5734 = vunpack.c.l.b16 %v5722
    %v5735 = vunpack.c.l.b16 %v5723
    %v5736 = vrot.slane %v5735, 7
    %v5737 = vsel %vm4967, %v5736, %v5734
    %v5738 = vpack.c.b16 %v5737, %v5737
    %v5747 = vunpack.c.l.b16 %v5724
    %v5748 = vunpack.c.l.b16 %v5725
    %v5749 = vunpack.c.l.b16 %v5726
    %v5750 = vunpack.c.l.b16 %v5727
    %v5751 = vunpack.c.l.b16 %v5728
    %v5752 = vunpack.c.l.b16 %v5729
    %v5753 = vunpack.c.l.b16 %v5730
    %v5754 = vunpack.c.l.b16 %v5731
    %v5755 = vpack.c.b16 %v5748, %v5747
    %v5756 = vpack.c.b16 %v5750, %v5749
    %v5757 = vpack.c.b16 %v5752, %v5751
    %v5758 = vpack.c.b16 %v5754, %v5753
    %v5764 = vsel %vm4926, %v5738, 0
    %5766 = vmatprep.subr.bf16.mxu0 0
    %5767 = vmatpush1.bf16.msra.mxu0 0
    %5768 = vmatprep.subr.bf16.mxu0 0
    %5769 = vmatpush1.bf16.msra.mxu0 0
    %5770 = vmatprep.subr.bf16.mxu0 0
    %5771 = vmatpush1.bf16.msra.mxu0 0
    %5772 = vmatprep.subr.bf16.mxu0 0
    %5773 = vmatpush1.bf16.msra.mxu0 0
    %5774 = vmatprep.subr.bf16.mxu0 0
    %5775 = vmatpush1.bf16.msra.mxu0 %v5758
    %5776 = vmatprep.subr.bf16.mxu0 0
    %5777 = vmatpush1.bf16.msra.mxu0 %v5757
    %5778 = vmatprep.subr.bf16.mxu0 0
    %5779 = vmatpush1.bf16.msra.mxu0 %v5756
    %5780 = vmatprep.subr.bf16.mxu0 0
    %5781 = vmatpush1.bf16.msra.mxu0 %v5755
    %5782 = vmatprep.subr.bf16.mxu0 0
    %5783 = vmatpush2.bf16.msra.mxu0 0
    %5784 = vmatprep.subr.bf16.mxu0 0
    %5785 = vmatpush2.bf16.msra.mxu0 0
    %5786 = vmatprep.subr.bf16.mxu0 0
    %5787 = vmatpush2.bf16.msra.mxu0 0
    %5788 = vmatprep.subr.bf16.mxu0 0
    %5789 = vmatpush2.bf16.msra.mxu0 0
    %5790 = vmatprep.subr.bf16.mxu0 0
    %5791 = vmatpush2.bf16.msra.mxu0 0
    %5792 = vmatprep.subr.bf16.mxu0 0
    %5793 = vmatpush2.bf16.msra.mxu0 0
    %5794 = vmatprep.subr.bf16.mxu0 0
    %5795 = vmatpush2.bf16.msra.mxu0 0
    %5796 = vmatprep.subr.bf16.mxu0 0
    %5797 = vmatpush2.bf16.msra.mxu0 0
    %5798 = vmatprep.mubr.bf16.mxu0 0
    %5799 = vmatmul.mubr.bf16.gmra.mxu0 %v5764
    %v5800 = vpop.f32.mrf.mxu0
    %v5801 = vadd.f32 0.0, %v5800
    %v5802 = vpop.f32.mrf.mxu0
    %v5803 = vpop.f32.mrf.mxu0
    %v5804 = vpop.f32.mrf.mxu0
    %5805 = vdwg.mxu0
    %v5806 = vadd.f32 %v5719, %v5801
    %v5807 = vld [vmem:[#allocation3 + $0xa] sm:$0x1]
    %v5808 = vld [vmem:[#allocation3 + $0x32] sm:$0x1]
    %v5809 = vpack.c.bf16 %v5807, %v5807
    %v5810 = vpack.c.bf16 %v5808, %v5808
    %v5811 = vld [vmem:[%s5 + $0x140] sm:$0xf]
    %v5812 = vld [vmem:[%s5 + $0x144] sm:$0xf]
    %v5813 = vld [vmem:[%s5 + $0x148] sm:$0xf]
    %v5814 = vld [vmem:[%s5 + $0x14c] sm:$0xf]
    %v5815 = vld [vmem:[%s5 + $0x150] sm:$0xf]
    %v5816 = vld [vmem:[%s5 + $0x154] sm:$0xf]
    %v5817 = vld [vmem:[%s5 + $0x158] sm:$0xf]
    %v5818 = vld [vmem:[%s5 + $0x15c] sm:$0xf]
    %v5821 = vunpack.c.l.b16 %v5809
    %v5822 = vunpack.c.l.b16 %v5810
    %v5823 = vrot.slane %v5822, 7
    %v5824 = vsel %vm4967, %v5823, %v5821
    %v5825 = vpack.c.b16 %v5824, %v5824
    %v5834 = vunpack.c.l.b16 %v5811
    %v5835 = vunpack.c.l.b16 %v5812
    %v5836 = vunpack.c.l.b16 %v5813
    %v5837 = vunpack.c.l.b16 %v5814
    %v5838 = vunpack.c.l.b16 %v5815
    %v5839 = vunpack.c.l.b16 %v5816
    %v5840 = vunpack.c.l.b16 %v5817
    %v5841 = vunpack.c.l.b16 %v5818
    %v5842 = vpack.c.b16 %v5835, %v5834
    %v5843 = vpack.c.b16 %v5837, %v5836
    %v5844 = vpack.c.b16 %v5839, %v5838
    %v5845 = vpack.c.b16 %v5841, %v5840
    %v5851 = vsel %vm4926, %v5825, 0
    %5853 = vmatprep.subr.bf16.mxu0 0
    %5854 = vmatpush1.bf16.msra.mxu0 0
    %5855 = vmatprep.subr.bf16.mxu0 0
    %5856 = vmatpush1.bf16.msra.mxu0 0
    %5857 = vmatprep.subr.bf16.mxu0 0
    %5858 = vmatpush1.bf16.msra.mxu0 0
    %5859 = vmatprep.subr.bf16.mxu0 0
    %5860 = vmatpush1.bf16.msra.mxu0 0
    %5861 = vmatprep.subr.bf16.mxu0 0
    %5862 = vmatpush1.bf16.msra.mxu0 %v5845
    %5863 = vmatprep.subr.bf16.mxu0 0
    %5864 = vmatpush1.bf16.msra.mxu0 %v5844
    %5865 = vmatprep.subr.bf16.mxu0 0
    %5866 = vmatpush1.bf16.msra.mxu0 %v5843
    %5867 = vmatprep.subr.bf16.mxu0 0
    %5868 = vmatpush1.bf16.msra.mxu0 %v5842
    %5869 = vmatprep.subr.bf16.mxu0 0
    %5870 = vmatpush2.bf16.msra.mxu0 0
    %5871 = vmatprep.subr.bf16.mxu0 0
    %5872 = vmatpush2.bf16.msra.mxu0 0
    %5873 = vmatprep.subr.bf16.mxu0 0
    %5874 = vmatpush2.bf16.msra.mxu0 0
    %5875 = vmatprep.subr.bf16.mxu0 0
    %5876 = vmatpush2.bf16.msra.mxu0 0
    %5877 = vmatprep.subr.bf16.mxu0 0
    %5878 = vmatpush2.bf16.msra.mxu0 0
    %5879 = vmatprep.subr.bf16.mxu0 0
    %5880 = vmatpush2.bf16.msra.mxu0 0
    %5881 = vmatprep.subr.bf16.mxu0 0
    %5882 = vmatpush2.bf16.msra.mxu0 0
    %5883 = vmatprep.subr.bf16.mxu0 0
    %5884 = vmatpush2.bf16.msra.mxu0 0
    %5885 = vmatprep.mubr.bf16.mxu0 0
    %5886 = vmatmul.mubr.bf16.gmra.mxu0 %v5851
    %v5887 = vpop.f32.mrf.mxu0
    %v5888 = vadd.f32 0.0, %v5887
    %v5889 = vpop.f32.mrf.mxu0
    %v5890 = vpop.f32.mrf.mxu0
    %v5891 = vpop.f32.mrf.mxu0
    %5892 = vdwg.mxu0
    %v5893 = vadd.f32 %v5806, %v5888
    %v5894 = vld [vmem:[#allocation3 + $0xb] sm:$0x1]
    %v5895 = vld [vmem:[#allocation3 + $0x33] sm:$0x1]
    %v5896 = vpack.c.bf16 %v5894, %v5894
    %v5897 = vpack.c.bf16 %v5895, %v5895
    %v5898 = vld [vmem:[%s5 + $0x160] sm:$0xf]
    %v5899 = vld [vmem:[%s5 + $0x164] sm:$0xf]
    %v5900 = vld [vmem:[%s5 + $0x168] sm:$0xf]
    %v5901 = vld [vmem:[%s5 + $0x16c] sm:$0xf]
    %v5902 = vld [vmem:[%s5 + $0x170] sm:$0xf]
    %v5903 = vld [vmem:[%s5 + $0x174] sm:$0xf]
    %v5904 = vld [vmem:[%s5 + $0x178] sm:$0xf]
    %v5905 = vld [vmem:[%s5 + $0x17c] sm:$0xf]
    %v5908 = vunpack.c.l.b16 %v5896
    %v5909 = vunpack.c.l.b16 %v5897
    %v5910 = vrot.slane %v5909, 7
    %v5911 = vsel %vm4967, %v5910, %v5908
    %v5912 = vpack.c.b16 %v5911, %v5911
    %v5921 = vunpack.c.l.b16 %v5898
    %v5922 = vunpack.c.l.b16 %v5899
    %v5923 = vunpack.c.l.b16 %v5900
    %v5924 = vunpack.c.l.b16 %v5901
    %v5925 = vunpack.c.l.b16 %v5902
    %v5926 = vunpack.c.l.b16 %v5903
    %v5927 = vunpack.c.l.b16 %v5904
    %v5928 = vunpack.c.l.b16 %v5905
    %v5929 = vpack.c.b16 %v5922, %v5921
    %v5930 = vpack.c.b16 %v5924, %v5923
    %v5931 = vpack.c.b16 %v5926, %v5925
    %v5932 = vpack.c.b16 %v5928, %v5927
    %v5938 = vsel %vm4926, %v5912, 0
    %5940 = vmatprep.subr.bf16.mxu0 0
    %5941 = vmatpush1.bf16.msra.mxu0 0
    %5942 = vmatprep.subr.bf16.mxu0 0
    %5943 = vmatpush1.bf16.msra.mxu0 0
    %5944 = vmatprep.subr.bf16.mxu0 0
    %5945 = vmatpush1.bf16.msra.mxu0 0
    %5946 = vmatprep.subr.bf16.mxu0 0
    %5947 = vmatpush1.bf16.msra.mxu0 0
    %5948 = vmatprep.subr.bf16.mxu0 0
    %5949 = vmatpush1.bf16.msra.mxu0 %v5932
    %5950 = vmatprep.subr.bf16.mxu0 0
    %5951 = vmatpush1.bf16.msra.mxu0 %v5931
    %5952 = vmatprep.subr.bf16.mxu0 0
    %5953 = vmatpush1.bf16.msra.mxu0 %v5930
    %5954 = vmatprep.subr.bf16.mxu0 0
    %5955 = vmatpush1.bf16.msra.mxu0 %v5929
    %5956 = vmatprep.subr.bf16.mxu0 0
    %5957 = vmatpush2.bf16.msra.mxu0 0
    %5958 = vmatprep.subr.bf16.mxu0 0
    %5959 = vmatpush2.bf16.msra.mxu0 0
    %5960 = vmatprep.subr.bf16.mxu0 0
    %5961 = vmatpush2.bf16.msra.mxu0 0
    %5962 = vmatprep.subr.bf16.mxu0 0
    %5963 = vmatpush2.bf16.msra.mxu0 0
    %5964 = vmatprep.subr.bf16.mxu0 0
    %5965 = vmatpush2.bf16.msra.mxu0 0
    %5966 = vmatprep.subr.bf16.mxu0 0
    %5967 = vmatpush2.bf16.msra.mxu0 0
    %5968 = vmatprep.subr.bf16.mxu0 0
    %5969 = vmatpush2.bf16.msra.mxu0 0
    %5970 = vmatprep.subr.bf16.mxu0 0
    %5971 = vmatpush2.bf16.msra.mxu0 0
    %5972 = vmatprep.mubr.bf16.mxu0 0
    %5973 = vmatmul.mubr.bf16.gmra.mxu0 %v5938
    %v5974 = vpop.f32.mrf.mxu0
    %v5975 = vadd.f32 0.0, %v5974
    %v5976 = vpop.f32.mrf.mxu0
    %v5977 = vpop.f32.mrf.mxu0
    %v5978 = vpop.f32.mrf.mxu0
    %5979 = vdwg.mxu0
    %v5980 = vadd.f32 %v5893, %v5975
    %v5981 = vld [vmem:[#allocation3 + $0xc] sm:$0x1]
    %v5982 = vld [vmem:[#allocation3 + $0x34] sm:$0x1]
    %v5983 = vpack.c.bf16 %v5981, %v5981
    %v5984 = vpack.c.bf16 %v5982, %v5982
    %v5985 = vld [vmem:[%s5 + $0x180] sm:$0xf]
    %v5986 = vld [vmem:[%s5 + $0x184] sm:$0xf]
    %v5987 = vld [vmem:[%s5 + $0x188] sm:$0xf]
    %v5988 = vld [vmem:[%s5 + $0x18c] sm:$0xf]
    %v5989 = vld [vmem:[%s5 + $0x190] sm:$0xf]
    %v5990 = vld [vmem:[%s5 + $0x194] sm:$0xf]
    %v5991 = vld [vmem:[%s5 + $0x198] sm:$0xf]
    %v5992 = vld [vmem:[%s5 + $0x19c] sm:$0xf]
    %v5995 = vunpack.c.l.b16 %v5983
    %v5996 = vunpack.c.l.b16 %v5984
    %v5997 = vrot.slane %v5996, 7
    %v5998 = vsel %vm4967, %v5997, %v5995
    %v5999 = vpack.c.b16 %v5998, %v5998
    %v6008 = vunpack.c.l.b16 %v5985
    %v6009 = vunpack.c.l.b16 %v5986
    %v6010 = vunpack.c.l.b16 %v5987
    %v6011 = vunpack.c.l.b16 %v5988
    %v6012 = vunpack.c.l.b16 %v5989
    %v6013 = vunpack.c.l.b16 %v5990
    %v6014 = vunpack.c.l.b16 %v5991
    %v6015 = vunpack.c.l.b16 %v5992
    %v6016 = vpack.c.b16 %v6009, %v6008
    %v6017 = vpack.c.b16 %v6011, %v6010
    %v6018 = vpack.c.b16 %v6013, %v6012
    %v6019 = vpack.c.b16 %v6015, %v6014
    %v6025 = vsel %vm4926, %v5999, 0
    %6027 = vmatprep.subr.bf16.mxu0 0
    %6028 = vmatpush1.bf16.msra.mxu0 0
    %6029 = vmatprep.subr.bf16.mxu0 0
    %6030 = vmatpush1.bf16.msra.mxu0 0
    %6031 = vmatprep.subr.bf16.mxu0 0
    %6032 = vmatpush1.bf16.msra.mxu0 0
    %6033 = vmatprep.subr.bf16.mxu0 0
    %6034 = vmatpush1.bf16.msra.mxu0 0
    %6035 = vmatprep.subr.bf16.mxu0 0
    %6036 = vmatpush1.bf16.msra.mxu0 %v6019
    %6037 = vmatprep.subr.bf16.mxu0 0
    %6038 = vmatpush1.bf16.msra.mxu0 %v6018
    %6039 = vmatprep.subr.bf16.mxu0 0
    %6040 = vmatpush1.bf16.msra.mxu0 %v6017
    %6041 = vmatprep.subr.bf16.mxu0 0
    %6042 = vmatpush1.bf16.msra.mxu0 %v6016
    %6043 = vmatprep.subr.bf16.mxu0 0
    %6044 = vmatpush2.bf16.msra.mxu0 0
    %6045 = vmatprep.subr.bf16.mxu0 0
    %6046 = vmatpush2.bf16.msra.mxu0 0
    %6047 = vmatprep.subr.bf16.mxu0 0
    %6048 = vmatpush2.bf16.msra.mxu0 0
    %6049 = vmatprep.subr.bf16.mxu0 0
    %6050 = vmatpush2.bf16.msra.mxu0 0
    %6051 = vmatprep.subr.bf16.mxu0 0
    %6052 = vmatpush2.bf16.msra.mxu0 0
    %6053 = vmatprep.subr.bf16.mxu0 0
    %6054 = vmatpush2.bf16.msra.mxu0 0
    %6055 = vmatprep.subr.bf16.mxu0 0
    %6056 = vmatpush2.bf16.msra.mxu0 0
    %6057 = vmatprep.subr.bf16.mxu0 0
    %6058 = vmatpush2.bf16.msra.mxu0 0
    %6059 = vmatprep.mubr.bf16.mxu0 0
    %6060 = vmatmul.mubr.bf16.gmra.mxu0 %v6025
    %v6061 = vpop.f32.mrf.mxu0
    %v6062 = vadd.f32 0.0, %v6061
    %v6063 = vpop.f32.mrf.mxu0
    %v6064 = vpop.f32.mrf.mxu0
    %v6065 = vpop.f32.mrf.mxu0
    %6066 = vdwg.mxu0
    %v6067 = vadd.f32 %v5980, %v6062
    %v6068 = vld [vmem:[#allocation3 + $0xd] sm:$0x1]
    %v6069 = vld [vmem:[#allocation3 + $0x35] sm:$0x1]
    %v6070 = vpack.c.bf16 %v6068, %v6068
    %v6071 = vpack.c.bf16 %v6069, %v6069
    %v6072 = vld [vmem:[%s5 + $0x1a0] sm:$0xf]
    %v6073 = vld [vmem:[%s5 + $0x1a4] sm:$0xf]
    %v6074 = vld [vmem:[%s5 + $0x1a8] sm:$0xf]
    %v6075 = vld [vmem:[%s5 + $0x1ac] sm:$0xf]
    %v6076 = vld [vmem:[%s5 + $0x1b0] sm:$0xf]
    %v6077 = vld [vmem:[%s5 + $0x1b4] sm:$0xf]
    %v6078 = vld [vmem:[%s5 + $0x1b8] sm:$0xf]
    %v6079 = vld [vmem:[%s5 + $0x1bc] sm:$0xf]
    %v6082 = vunpack.c.l.b16 %v6070
    %v6083 = vunpack.c.l.b16 %v6071
    %v6084 = vrot.slane %v6083, 7
    %v6085 = vsel %vm4967, %v6084, %v6082
    %v6086 = vpack.c.b16 %v6085, %v6085
    %v6095 = vunpack.c.l.b16 %v6072
    %v6096 = vunpack.c.l.b16 %v6073
    %v6097 = vunpack.c.l.b16 %v6074
    %v6098 = vunpack.c.l.b16 %v6075
    %v6099 = vunpack.c.l.b16 %v6076
    %v6100 = vunpack.c.l.b16 %v6077
    %v6101 = vunpack.c.l.b16 %v6078
    %v6102 = vunpack.c.l.b16 %v6079
    %v6103 = vpack.c.b16 %v6096, %v6095
    %v6104 = vpack.c.b16 %v6098, %v6097
    %v6105 = vpack.c.b16 %v6100, %v6099
    %v6106 = vpack.c.b16 %v6102, %v6101
    %v6112 = vsel %vm4926, %v6086, 0
    %6114 = vmatprep.subr.bf16.mxu0 0
    %6115 = vmatpush1.bf16.msra.mxu0 0
    %6116 = vmatprep.subr.bf16.mxu0 0
    %6117 = vmatpush1.bf16.msra.mxu0 0
    %6118 = vmatprep.subr.bf16.mxu0 0
    %6119 = vmatpush1.bf16.msra.mxu0 0
    %6120 = vmatprep.subr.bf16.mxu0 0
    %6121 = vmatpush1.bf16.msra.mxu0 0
    %6122 = vmatprep.subr.bf16.mxu0 0
    %6123 = vmatpush1.bf16.msra.mxu0 %v6106
    %6124 = vmatprep.subr.bf16.mxu0 0
    %6125 = vmatpush1.bf16.msra.mxu0 %v6105
    %6126 = vmatprep.subr.bf16.mxu0 0
    %6127 = vmatpush1.bf16.msra.mxu0 %v6104
    %6128 = vmatprep.subr.bf16.mxu0 0
    %6129 = vmatpush1.bf16.msra.mxu0 %v6103
    %6130 = vmatprep.subr.bf16.mxu0 0
    %6131 = vmatpush2.bf16.msra.mxu0 0
    %6132 = vmatprep.subr.bf16.mxu0 0
    %6133 = vmatpush2.bf16.msra.mxu0 0
    %6134 = vmatprep.subr.bf16.mxu0 0
    %6135 = vmatpush2.bf16.msra.mxu0 0
    %6136 = vmatprep.subr.bf16.mxu0 0
    %6137 = vmatpush2.bf16.msra.mxu0 0
    %6138 = vmatprep.subr.bf16.mxu0 0
    %6139 = vmatpush2.bf16.msra.mxu0 0
    %6140 = vmatprep.subr.bf16.mxu0 0
    %6141 = vmatpush2.bf16.msra.mxu0 0
    %6142 = vmatprep.subr.bf16.mxu0 0
    %6143 = vmatpush2.bf16.msra.mxu0 0
    %6144 = vmatprep.subr.bf16.mxu0 0
    %6145 = vmatpush2.bf16.msra.mxu0 0
    %6146 = vmatprep.mubr.bf16.mxu0 0
    %6147 = vmatmul.mubr.bf16.gmra.mxu0 %v6112
    %v6148 = vpop.f32.mrf.mxu0
    %v6149 = vadd.f32 0.0, %v6148
    %v6150 = vpop.f32.mrf.mxu0
    %v6151 = vpop.f32.mrf.mxu0
    %v6152 = vpop.f32.mrf.mxu0
    %6153 = vdwg.mxu0
    %v6154 = vadd.f32 %v6067, %v6149
    %v6155 = vld [vmem:[#allocation3 + $0xe] sm:$0x1]
    %v6156 = vld [vmem:[#allocation3 + $0x36] sm:$0x1]
    %v6157 = vpack.c.bf16 %v6155, %v6155
    %v6158 = vpack.c.bf16 %v6156, %v6156
    %v6159 = vld [vmem:[%s5 + $0x1c0] sm:$0xf]
    %v6160 = vld [vmem:[%s5 + $0x1c4] sm:$0xf]
    %v6161 = vld [vmem:[%s5 + $0x1c8] sm:$0xf]
    %v6162 = vld [vmem:[%s5 + $0x1cc] sm:$0xf]
    %v6163 = vld [vmem:[%s5 + $0x1d0] sm:$0xf]
    %v6164 = vld [vmem:[%s5 + $0x1d4] sm:$0xf]
    %v6165 = vld [vmem:[%s5 + $0x1d8] sm:$0xf]
    %v6166 = vld [vmem:[%s5 + $0x1dc] sm:$0xf]
    %v6169 = vunpack.c.l.b16 %v6157
    %v6170 = vunpack.c.l.b16 %v6158
    %v6171 = vrot.slane %v6170, 7
    %v6172 = vsel %vm4967, %v6171, %v6169
    %v6173 = vpack.c.b16 %v6172, %v6172
    %v6182 = vunpack.c.l.b16 %v6159
    %v6183 = vunpack.c.l.b16 %v6160
    %v6184 = vunpack.c.l.b16 %v6161
    %v6185 = vunpack.c.l.b16 %v6162
    %v6186 = vunpack.c.l.b16 %v6163
    %v6187 = vunpack.c.l.b16 %v6164
    %v6188 = vunpack.c.l.b16 %v6165
    %v6189 = vunpack.c.l.b16 %v6166
    %v6190 = vpack.c.b16 %v6183, %v6182
    %v6191 = vpack.c.b16 %v6185, %v6184
    %v6192 = vpack.c.b16 %v6187, %v6186
    %v6193 = vpack.c.b16 %v6189, %v6188
    %v6199 = vsel %vm4926, %v6173, 0
    %6201 = vmatprep.subr.bf16.mxu0 0
    %6202 = vmatpush1.bf16.msra.mxu0 0
    %6203 = vmatprep.subr.bf16.mxu0 0
    %6204 = vmatpush1.bf16.msra.mxu0 0
    %6205 = vmatprep.subr.bf16.mxu0 0
    %6206 = vmatpush1.bf16.msra.mxu0 0
    %6207 = vmatprep.subr.bf16.mxu0 0
    %6208 = vmatpush1.bf16.msra.mxu0 0
    %6209 = vmatprep.subr.bf16.mxu0 0
    %6210 = vmatpush1.bf16.msra.mxu0 %v6193
    %6211 = vmatprep.subr.bf16.mxu0 0
    %6212 = vmatpush1.bf16.msra.mxu0 %v6192
    %6213 = vmatprep.subr.bf16.mxu0 0
    %6214 = vmatpush1.bf16.msra.mxu0 %v6191
    %6215 = vmatprep.subr.bf16.mxu0 0
    %6216 = vmatpush1.bf16.msra.mxu0 %v6190
    %6217 = vmatprep.subr.bf16.mxu0 0
    %6218 = vmatpush2.bf16.msra.mxu0 0
    %6219 = vmatprep.subr.bf16.mxu0 0
    %6220 = vmatpush2.bf16.msra.mxu0 0
    %6221 = vmatprep.subr.bf16.mxu0 0
    %6222 = vmatpush2.bf16.msra.mxu0 0
    %6223 = vmatprep.subr.bf16.mxu0 0
    %6224 = vmatpush2.bf16.msra.mxu0 0
    %6225 = vmatprep.subr.bf16.mxu0 0
    %6226 = vmatpush2.bf16.msra.mxu0 0
    %6227 = vmatprep.subr.bf16.mxu0 0
    %6228 = vmatpush2.bf16.msra.mxu0 0
    %6229 = vmatprep.subr.bf16.mxu0 0
    %6230 = vmatpush2.bf16.msra.mxu0 0
    %6231 = vmatprep.subr.bf16.mxu0 0
    %6232 = vmatpush2.bf16.msra.mxu0 0
    %6233 = vmatprep.mubr.bf16.mxu0 0
    %6234 = vmatmul.mubr.bf16.gmra.mxu0 %v6199
    %v6235 = vpop.f32.mrf.mxu0
    %v6236 = vadd.f32 0.0, %v6235
    %v6237 = vpop.f32.mrf.mxu0
    %v6238 = vpop.f32.mrf.mxu0
    %v6239 = vpop.f32.mrf.mxu0
    %6240 = vdwg.mxu0
    %v6241 = vadd.f32 %v6154, %v6236
    %v6242 = vld [vmem:[#allocation3 + $0xf] sm:$0x1]
    %v6243 = vld [vmem:[#allocation3 + $0x37] sm:$0x1]
    %v6244 = vpack.c.bf16 %v6242, %v6242
    %v6245 = vpack.c.bf16 %v6243, %v6243
    %v6246 = vld [vmem:[%s5 + $0x1e0] sm:$0xf]
    %v6247 = vld [vmem:[%s5 + $0x1e4] sm:$0xf]
    %v6248 = vld [vmem:[%s5 + $0x1e8] sm:$0xf]
    %v6249 = vld [vmem:[%s5 + $0x1ec] sm:$0xf]
    %v6250 = vld [vmem:[%s5 + $0x1f0] sm:$0xf]
    %v6251 = vld [vmem:[%s5 + $0x1f4] sm:$0xf]
    %v6252 = vld [vmem:[%s5 + $0x1f8] sm:$0xf]
    %v6253 = vld [vmem:[%s5 + $0x1fc] sm:$0xf]
    %v6256 = vunpack.c.l.b16 %v6244
    %v6257 = vunpack.c.l.b16 %v6245
    %v6258 = vrot.slane %v6257, 7
    %v6259 = vsel %vm4967, %v6258, %v6256
    %v6260 = vpack.c.b16 %v6259, %v6259
    %v6269 = vunpack.c.l.b16 %v6246
    %v6270 = vunpack.c.l.b16 %v6247
    %v6271 = vunpack.c.l.b16 %v6248
    %v6272 = vunpack.c.l.b16 %v6249
    %v6273 = vunpack.c.l.b16 %v6250
    %v6274 = vunpack.c.l.b16 %v6251
    %v6275 = vunpack.c.l.b16 %v6252
    %v6276 = vunpack.c.l.b16 %v6253
    %v6277 = vpack.c.b16 %v6270, %v6269
    %v6278 = vpack.c.b16 %v6272, %v6271
    %v6279 = vpack.c.b16 %v6274, %v6273
    %v6280 = vpack.c.b16 %v6276, %v6275
    %v6286 = vsel %vm4926, %v6260, 0
    %6288 = vmatprep.subr.bf16.mxu0 0
    %6289 = vmatpush1.bf16.msra.mxu0 0
    %6290 = vmatprep.subr.bf16.mxu0 0
    %6291 = vmatpush1.bf16.msra.mxu0 0
    %6292 = vmatprep.subr.bf16.mxu0 0
    %6293 = vmatpush1.bf16.msra.mxu0 0
    %6294 = vmatprep.subr.bf16.mxu0 0
    %6295 = vmatpush1.bf16.msra.mxu0 0
    %6296 = vmatprep.subr.bf16.mxu0 0
    %6297 = vmatpush1.bf16.msra.mxu0 %v6280
    %6298 = vmatprep.subr.bf16.mxu0 0
    %6299 = vmatpush1.bf16.msra.mxu0 %v6279
    %6300 = vmatprep.subr.bf16.mxu0 0
    %6301 = vmatpush1.bf16.msra.mxu0 %v6278
    %6302 = vmatprep.subr.bf16.mxu0 0
    %6303 = vmatpush1.bf16.msra.mxu0 %v6277
    %6304 = vmatprep.subr.bf16.mxu0 0
    %6305 = vmatpush2.bf16.msra.mxu0 0
    %6306 = vmatprep.subr.bf16.mxu0 0
    %6307 = vmatpush2.bf16.msra.mxu0 0
    %6308 = vmatprep.subr.bf16.mxu0 0
    %6309 = vmatpush2.bf16.msra.mxu0 0
    %6310 = vmatprep.subr.bf16.mxu0 0
    %6311 = vmatpush2.bf16.msra.mxu0 0
    %6312 = vmatprep.subr.bf16.mxu0 0
    %6313 = vmatpush2.bf16.msra.mxu0 0
    %6314 = vmatprep.subr.bf16.mxu0 0
    %6315 = vmatpush2.bf16.msra.mxu0 0
    %6316 = vmatprep.subr.bf16.mxu0 0
    %6317 = vmatpush2.bf16.msra.mxu0 0
    %6318 = vmatprep.subr.bf16.mxu0 0
    %6319 = vmatpush2.bf16.msra.mxu0 0
    %6320 = vmatprep.mubr.bf16.mxu0 0
    %6321 = vmatmul.mubr.bf16.gmra.mxu0 %v6286
    %v6322 = vpop.f32.mrf.mxu0
    %v6323 = vadd.f32 0.0, %v6322
    %v6324 = vpop.f32.mrf.mxu0
    %v6325 = vpop.f32.mrf.mxu0
    %v6326 = vpop.f32.mrf.mxu0
    %6327 = vdwg.mxu0
    %v6328 = vadd.f32 %v6241, %v6323
    %v6329 = vld [vmem:[#allocation3 + $0x10] sm:$0x1]
    %v6330 = vld [vmem:[#allocation3 + $0x38] sm:$0x1]
    %v6331 = vpack.c.bf16 %v6329, %v6329
    %v6332 = vpack.c.bf16 %v6330, %v6330
    %v6333 = vld [vmem:[%s5 + $0x200] sm:$0xf]
    %v6334 = vld [vmem:[%s5 + $0x204] sm:$0xf]
    %v6335 = vld [vmem:[%s5 + $0x208] sm:$0xf]
    %v6336 = vld [vmem:[%s5 + $0x20c] sm:$0xf]
    %v6337 = vld [vmem:[%s5 + $0x210] sm:$0xf]
    %v6338 = vld [vmem:[%s5 + $0x214] sm:$0xf]
    %v6339 = vld [vmem:[%s5 + $0x218] sm:$0xf]
    %v6340 = vld [vmem:[%s5 + $0x21c] sm:$0xf]
    %v6343 = vunpack.c.l.b16 %v6331
    %v6344 = vunpack.c.l.b16 %v6332
    %v6345 = vrot.slane %v6344, 7
    %v6346 = vsel %vm4967, %v6345, %v6343
    %v6347 = vpack.c.b16 %v6346, %v6346
    %v6356 = vunpack.c.l.b16 %v6333
    %v6357 = vunpack.c.l.b16 %v6334
    %v6358 = vunpack.c.l.b16 %v6335
    %v6359 = vunpack.c.l.b16 %v6336
    %v6360 = vunpack.c.l.b16 %v6337
    %v6361 = vunpack.c.l.b16 %v6338
    %v6362 = vunpack.c.l.b16 %v6339
    %v6363 = vunpack.c.l.b16 %v6340
    %v6364 = vpack.c.b16 %v6357, %v6356
    %v6365 = vpack.c.b16 %v6359, %v6358
    %v6366 = vpack.c.b16 %v6361, %v6360
    %v6367 = vpack.c.b16 %v6363, %v6362
    %v6373 = vsel %vm4926, %v6347, 0
    %6375 = vmatprep.subr.bf16.mxu0 0
    %6376 = vmatpush1.bf16.msra.mxu0 0
    %6377 = vmatprep.subr.bf16.mxu0 0
    %6378 = vmatpush1.bf16.msra.mxu0 0
    %6379 = vmatprep.subr.bf16.mxu0 0
    %6380 = vmatpush1.bf16.msra.mxu0 0
    %6381 = vmatprep.subr.bf16.mxu0 0
    %6382 = vmatpush1.bf16.msra.mxu0 0
    %6383 = vmatprep.subr.bf16.mxu0 0
    %6384 = vmatpush1.bf16.msra.mxu0 %v6367
    %6385 = vmatprep.subr.bf16.mxu0 0
    %6386 = vmatpush1.bf16.msra.mxu0 %v6366
    %6387 = vmatprep.subr.bf16.mxu0 0
    %6388 = vmatpush1.bf16.msra.mxu0 %v6365
    %6389 = vmatprep.subr.bf16.mxu0 0
    %6390 = vmatpush1.bf16.msra.mxu0 %v6364
    %6391 = vmatprep.subr.bf16.mxu0 0
    %6392 = vmatpush2.bf16.msra.mxu0 0
    %6393 = vmatprep.subr.bf16.mxu0 0
    %6394 = vmatpush2.bf16.msra.mxu0 0
    %6395 = vmatprep.subr.bf16.mxu0 0
    %6396 = vmatpush2.bf16.msra.mxu0 0
    %6397 = vmatprep.subr.bf16.mxu0 0
    %6398 = vmatpush2.bf16.msra.mxu0 0
    %6399 = vmatprep.subr.bf16.mxu0 0
    %6400 = vmatpush2.bf16.msra.mxu0 0
    %6401 = vmatprep.subr.bf16.mxu0 0
    %6402 = vmatpush2.bf16.msra.mxu0 0
    %6403 = vmatprep.subr.bf16.mxu0 0
    %6404 = vmatpush2.bf16.msra.mxu0 0
    %6405 = vmatprep.subr.bf16.mxu0 0
    %6406 = vmatpush2.bf16.msra.mxu0 0
    %6407 = vmatprep.mubr.bf16.mxu0 0
    %6408 = vmatmul.mubr.bf16.gmra.mxu0 %v6373
    %v6409 = vpop.f32.mrf.mxu0
    %v6410 = vadd.f32 0.0, %v6409
    %v6411 = vpop.f32.mrf.mxu0
    %v6412 = vpop.f32.mrf.mxu0
    %v6413 = vpop.f32.mrf.mxu0
    %6414 = vdwg.mxu0
    %v6415 = vadd.f32 %v6328, %v6410
    %v6416 = vld [vmem:[#allocation3 + $0x11] sm:$0x1]
    %v6417 = vld [vmem:[#allocation3 + $0x39] sm:$0x1]
    %v6418 = vpack.c.bf16 %v6416, %v6416
    %v6419 = vpack.c.bf16 %v6417, %v6417
    %v6420 = vld [vmem:[%s5 + $0x220] sm:$0xf]
    %v6421 = vld [vmem:[%s5 + $0x224] sm:$0xf]
    %v6422 = vld [vmem:[%s5 + $0x228] sm:$0xf]
    %v6423 = vld [vmem:[%s5 + $0x22c] sm:$0xf]
    %v6424 = vld [vmem:[%s5 + $0x230] sm:$0xf]
    %v6425 = vld [vmem:[%s5 + $0x234] sm:$0xf]
    %v6426 = vld [vmem:[%s5 + $0x238] sm:$0xf]
    %v6427 = vld [vmem:[%s5 + $0x23c] sm:$0xf]
    %v6430 = vunpack.c.l.b16 %v6418
    %v6431 = vunpack.c.l.b16 %v6419
    %v6432 = vrot.slane %v6431, 7
    %v6433 = vsel %vm4967, %v6432, %v6430
    %v6434 = vpack.c.b16 %v6433, %v6433
    %v6443 = vunpack.c.l.b16 %v6420
    %v6444 = vunpack.c.l.b16 %v6421
    %v6445 = vunpack.c.l.b16 %v6422
    %v6446 = vunpack.c.l.b16 %v6423
    %v6447 = vunpack.c.l.b16 %v6424
    %v6448 = vunpack.c.l.b16 %v6425
    %v6449 = vunpack.c.l.b16 %v6426
    %v6450 = vunpack.c.l.b16 %v6427
    %v6451 = vpack.c.b16 %v6444, %v6443
    %v6452 = vpack.c.b16 %v6446, %v6445
    %v6453 = vpack.c.b16 %v6448, %v6447
    %v6454 = vpack.c.b16 %v6450, %v6449
    %v6460 = vsel %vm4926, %v6434, 0
    %6462 = vmatprep.subr.bf16.mxu0 0
    %6463 = vmatpush1.bf16.msra.mxu0 0
    %6464 = vmatprep.subr.bf16.mxu0 0
    %6465 = vmatpush1.bf16.msra.mxu0 0
    %6466 = vmatprep.subr.bf16.mxu0 0
    %6467 = vmatpush1.bf16.msra.mxu0 0
    %6468 = vmatprep.subr.bf16.mxu0 0
    %6469 = vmatpush1.bf16.msra.mxu0 0
    %6470 = vmatprep.subr.bf16.mxu0 0
    %6471 = vmatpush1.bf16.msra.mxu0 %v6454
    %6472 = vmatprep.subr.bf16.mxu0 0
    %6473 = vmatpush1.bf16.msra.mxu0 %v6453
    %6474 = vmatprep.subr.bf16.mxu0 0
    %6475 = vmatpush1.bf16.msra.mxu0 %v6452
    %6476 = vmatprep.subr.bf16.mxu0 0
    %6477 = vmatpush1.bf16.msra.mxu0 %v6451
    %6478 = vmatprep.subr.bf16.mxu0 0
    %6479 = vmatpush2.bf16.msra.mxu0 0
    %6480 = vmatprep.subr.bf16.mxu0 0
    %6481 = vmatpush2.bf16.msra.mxu0 0
    %6482 = vmatprep.subr.bf16.mxu0 0
    %6483 = vmatpush2.bf16.msra.mxu0 0
    %6484 = vmatprep.subr.bf16.mxu0 0
    %6485 = vmatpush2.bf16.msra.mxu0 0
    %6486 = vmatprep.subr.bf16.mxu0 0
    %6487 = vmatpush2.bf16.msra.mxu0 0
    %6488 = vmatprep.subr.bf16.mxu0 0
    %6489 = vmatpush2.bf16.msra.mxu0 0
    %6490 = vmatprep.subr.bf16.mxu0 0
    %6491 = vmatpush2.bf16.msra.mxu0 0
    %6492 = vmatprep.subr.bf16.mxu0 0
    %6493 = vmatpush2.bf16.msra.mxu0 0
    %6494 = vmatprep.mubr.bf16.mxu0 0
    %6495 = vmatmul.mubr.bf16.gmra.mxu0 %v6460
    %v6496 = vpop.f32.mrf.mxu0
    %v6497 = vadd.f32 0.0, %v6496
    %v6498 = vpop.f32.mrf.mxu0
    %v6499 = vpop.f32.mrf.mxu0
    %v6500 = vpop.f32.mrf.mxu0
    %6501 = vdwg.mxu0
    %v6502 = vadd.f32 %v6415, %v6497
    %v6503 = vld [vmem:[#allocation3 + $0x12] sm:$0x1]
    %v6504 = vld [vmem:[#allocation3 + $0x3a] sm:$0x1]
    %v6505 = vpack.c.bf16 %v6503, %v6503
    %v6506 = vpack.c.bf16 %v6504, %v6504
    %v6507 = vld [vmem:[%s5 + $0x240] sm:$0xf]
    %v6508 = vld [vmem:[%s5 + $0x244] sm:$0xf]
    %v6509 = vld [vmem:[%s5 + $0x248] sm:$0xf]
    %v6510 = vld [vmem:[%s5 + $0x24c] sm:$0xf]
    %v6511 = vld [vmem:[%s5 + $0x250] sm:$0xf]
    %v6512 = vld [vmem:[%s5 + $0x254] sm:$0xf]
    %v6513 = vld [vmem:[%s5 + $0x258] sm:$0xf]
    %v6514 = vld [vmem:[%s5 + $0x25c] sm:$0xf]
    %v6517 = vunpack.c.l.b16 %v6505
    %v6518 = vunpack.c.l.b16 %v6506
    %v6519 = vrot.slane %v6518, 7
    %v6520 = vsel %vm4967, %v6519, %v6517
    %v6521 = vpack.c.b16 %v6520, %v6520
    %v6530 = vunpack.c.l.b16 %v6507
    %v6531 = vunpack.c.l.b16 %v6508
    %v6532 = vunpack.c.l.b16 %v6509
    %v6533 = vunpack.c.l.b16 %v6510
    %v6534 = vunpack.c.l.b16 %v6511
    %v6535 = vunpack.c.l.b16 %v6512
    %v6536 = vunpack.c.l.b16 %v6513
    %v6537 = vunpack.c.l.b16 %v6514
    %v6538 = vpack.c.b16 %v6531, %v6530
    %v6539 = vpack.c.b16 %v6533, %v6532
    %v6540 = vpack.c.b16 %v6535, %v6534
    %v6541 = vpack.c.b16 %v6537, %v6536
    %v6547 = vsel %vm4926, %v6521, 0
    %6549 = vmatprep.subr.bf16.mxu0 0
    %6550 = vmatpush1.bf16.msra.mxu0 0
    %6551 = vmatprep.subr.bf16.mxu0 0
    %6552 = vmatpush1.bf16.msra.mxu0 0
    %6553 = vmatprep.subr.bf16.mxu0 0
    %6554 = vmatpush1.bf16.msra.mxu0 0
    %6555 = vmatprep.subr.bf16.mxu0 0
    %6556 = vmatpush1.bf16.msra.mxu0 0
    %6557 = vmatprep.subr.bf16.mxu0 0
    %6558 = vmatpush1.bf16.msra.mxu0 %v6541
    %6559 = vmatprep.subr.bf16.mxu0 0
    %6560 = vmatpush1.bf16.msra.mxu0 %v6540
    %6561 = vmatprep.subr.bf16.mxu0 0
    %6562 = vmatpush1.bf16.msra.mxu0 %v6539
    %6563 = vmatprep.subr.bf16.mxu0 0
    %6564 = vmatpush1.bf16.msra.mxu0 %v6538
    %6565 = vmatprep.subr.bf16.mxu0 0
    %6566 = vmatpush2.bf16.msra.mxu0 0
    %6567 = vmatprep.subr.bf16.mxu0 0
    %6568 = vmatpush2.bf16.msra.mxu0 0
    %6569 = vmatprep.subr.bf16.mxu0 0
    %6570 = vmatpush2.bf16.msra.mxu0 0
    %6571 = vmatprep.subr.bf16.mxu0 0
    %6572 = vmatpush2.bf16.msra.mxu0 0
    %6573 = vmatprep.subr.bf16.mxu0 0
    %6574 = vmatpush2.bf16.msra.mxu0 0
    %6575 = vmatprep.subr.bf16.mxu0 0
    %6576 = vmatpush2.bf16.msra.mxu0 0
    %6577 = vmatprep.subr.bf16.mxu0 0
    %6578 = vmatpush2.bf16.msra.mxu0 0
    %6579 = vmatprep.subr.bf16.mxu0 0
    %6580 = vmatpush2.bf16.msra.mxu0 0
    %6581 = vmatprep.mubr.bf16.mxu0 0
    %6582 = vmatmul.mubr.bf16.gmra.mxu0 %v6547
    %v6583 = vpop.f32.mrf.mxu0
    %v6584 = vadd.f32 0.0, %v6583
    %v6585 = vpop.f32.mrf.mxu0
    %v6586 = vpop.f32.mrf.mxu0
    %v6587 = vpop.f32.mrf.mxu0
    %6588 = vdwg.mxu0
    %v6589 = vadd.f32 %v6502, %v6584
    %v6590 = vld [vmem:[#allocation3 + $0x13] sm:$0x1]
    %v6591 = vld [vmem:[#allocation3 + $0x3b] sm:$0x1]
    %v6592 = vpack.c.bf16 %v6590, %v6590
    %v6593 = vpack.c.bf16 %v6591, %v6591
    %v6594 = vld [vmem:[%s5 + $0x260] sm:$0xf]
    %v6595 = vld [vmem:[%s5 + $0x264] sm:$0xf]
    %v6596 = vld [vmem:[%s5 + $0x268] sm:$0xf]
    %v6597 = vld [vmem:[%s5 + $0x26c] sm:$0xf]
    %v6598 = vld [vmem:[%s5 + $0x270] sm:$0xf]
    %v6599 = vld [vmem:[%s5 + $0x274] sm:$0xf]
    %v6600 = vld [vmem:[%s5 + $0x278] sm:$0xf]
    %v6601 = vld [vmem:[%s5 + $0x27c] sm:$0xf]
    %v6604 = vunpack.c.l.b16 %v6592
    %v6605 = vunpack.c.l.b16 %v6593
    %v6606 = vrot.slane %v6605, 7
    %v6607 = vsel %vm4967, %v6606, %v6604
    %v6608 = vpack.c.b16 %v6607, %v6607
    %v6617 = vunpack.c.l.b16 %v6594
    %v6618 = vunpack.c.l.b16 %v6595
    %v6619 = vunpack.c.l.b16 %v6596
    %v6620 = vunpack.c.l.b16 %v6597
    %v6621 = vunpack.c.l.b16 %v6598
    %v6622 = vunpack.c.l.b16 %v6599
    %v6623 = vunpack.c.l.b16 %v6600
    %v6624 = vunpack.c.l.b16 %v6601
    %v6625 = vpack.c.b16 %v6618, %v6617
    %v6626 = vpack.c.b16 %v6620, %v6619
    %v6627 = vpack.c.b16 %v6622, %v6621
    %v6628 = vpack.c.b16 %v6624, %v6623
    %v6634 = vsel %vm4926, %v6608, 0
    %6636 = vmatprep.subr.bf16.mxu0 0
    %6637 = vmatpush1.bf16.msra.mxu0 0
    %6638 = vmatprep.subr.bf16.mxu0 0
    %6639 = vmatpush1.bf16.msra.mxu0 0
    %6640 = vmatprep.subr.bf16.mxu0 0
    %6641 = vmatpush1.bf16.msra.mxu0 0
    %6642 = vmatprep.subr.bf16.mxu0 0
    %6643 = vmatpush1.bf16.msra.mxu0 0
    %6644 = vmatprep.subr.bf16.mxu0 0
    %6645 = vmatpush1.bf16.msra.mxu0 %v6628
    %6646 = vmatprep.subr.bf16.mxu0 0
    %6647 = vmatpush1.bf16.msra.mxu0 %v6627
    %6648 = vmatprep.subr.bf16.mxu0 0
    %6649 = vmatpush1.bf16.msra.mxu0 %v6626
    %6650 = vmatprep.subr.bf16.mxu0 0
    %6651 = vmatpush1.bf16.msra.mxu0 %v6625
    %6652 = vmatprep.subr.bf16.mxu0 0
    %6653 = vmatpush2.bf16.msra.mxu0 0
    %6654 = vmatprep.subr.bf16.mxu0 0
    %6655 = vmatpush2.bf16.msra.mxu0 0
    %6656 = vmatprep.subr.bf16.mxu0 0
    %6657 = vmatpush2.bf16.msra.mxu0 0
    %6658 = vmatprep.subr.bf16.mxu0 0
    %6659 = vmatpush2.bf16.msra.mxu0 0
    %6660 = vmatprep.subr.bf16.mxu0 0
    %6661 = vmatpush2.bf16.msra.mxu0 0
    %6662 = vmatprep.subr.bf16.mxu0 0
    %6663 = vmatpush2.bf16.msra.mxu0 0
    %6664 = vmatprep.subr.bf16.mxu0 0
    %6665 = vmatpush2.bf16.msra.mxu0 0
    %6666 = vmatprep.subr.bf16.mxu0 0
    %6667 = vmatpush2.bf16.msra.mxu0 0
    %6668 = vmatprep.mubr.bf16.mxu0 0
    %6669 = vmatmul.mubr.bf16.gmra.mxu0 %v6634
    %v6670 = vpop.f32.mrf.mxu0
    %v6671 = vadd.f32 0.0, %v6670
    %v6672 = vpop.f32.mrf.mxu0
    %v6673 = vpop.f32.mrf.mxu0
    %v6674 = vpop.f32.mrf.mxu0
    %6675 = vdwg.mxu0
    %v6676 = vadd.f32 %v6589, %v6671
    %v6677 = vld [vmem:[#allocation3 + $0x14] sm:$0x1]
    %v6678 = vld [vmem:[#allocation3 + $0x3c] sm:$0x1]
    %v6679 = vpack.c.bf16 %v6677, %v6677
    %v6680 = vpack.c.bf16 %v6678, %v6678
    %v6681 = vld [vmem:[%s5 + $0x280] sm:$0xf]
    %v6682 = vld [vmem:[%s5 + $0x284] sm:$0xf]
    %v6683 = vld [vmem:[%s5 + $0x288] sm:$0xf]
    %v6684 = vld [vmem:[%s5 + $0x28c] sm:$0xf]
    %v6685 = vld [vmem:[%s5 + $0x290] sm:$0xf]
    %v6686 = vld [vmem:[%s5 + $0x294] sm:$0xf]
    %v6687 = vld [vmem:[%s5 + $0x298] sm:$0xf]
    %v6688 = vld [vmem:[%s5 + $0x29c] sm:$0xf]
    %v6691 = vunpack.c.l.b16 %v6679
    %v6692 = vunpack.c.l.b16 %v6680
    %v6693 = vrot.slane %v6692, 7
    %v6694 = vsel %vm4967, %v6693, %v6691
    %v6695 = vpack.c.b16 %v6694, %v6694
    %v6704 = vunpack.c.l.b16 %v6681
    %v6705 = vunpack.c.l.b16 %v6682
    %v6706 = vunpack.c.l.b16 %v6683
    %v6707 = vunpack.c.l.b16 %v6684
    %v6708 = vunpack.c.l.b16 %v6685
    %v6709 = vunpack.c.l.b16 %v6686
    %v6710 = vunpack.c.l.b16 %v6687
    %v6711 = vunpack.c.l.b16 %v6688
    %v6712 = vpack.c.b16 %v6705, %v6704
    %v6713 = vpack.c.b16 %v6707, %v6706
    %v6714 = vpack.c.b16 %v6709, %v6708
    %v6715 = vpack.c.b16 %v6711, %v6710
    %v6721 = vsel %vm4926, %v6695, 0
    %6723 = vmatprep.subr.bf16.mxu0 0
    %6724 = vmatpush1.bf16.msra.mxu0 0
    %6725 = vmatprep.subr.bf16.mxu0 0
    %6726 = vmatpush1.bf16.msra.mxu0 0
    %6727 = vmatprep.subr.bf16.mxu0 0
    %6728 = vmatpush1.bf16.msra.mxu0 0
    %6729 = vmatprep.subr.bf16.mxu0 0
    %6730 = vmatpush1.bf16.msra.mxu0 0
    %6731 = vmatprep.subr.bf16.mxu0 0
    %6732 = vmatpush1.bf16.msra.mxu0 %v6715
    %6733 = vmatprep.subr.bf16.mxu0 0
    %6734 = vmatpush1.bf16.msra.mxu0 %v6714
    %6735 = vmatprep.subr.bf16.mxu0 0
    %6736 = vmatpush1.bf16.msra.mxu0 %v6713
    %6737 = vmatprep.subr.bf16.mxu0 0
    %6738 = vmatpush1.bf16.msra.mxu0 %v6712
    %6739 = vmatprep.subr.bf16.mxu0 0
    %6740 = vmatpush2.bf16.msra.mxu0 0
    %6741 = vmatprep.subr.bf16.mxu0 0
    %6742 = vmatpush2.bf16.msra.mxu0 0
    %6743 = vmatprep.subr.bf16.mxu0 0
    %6744 = vmatpush2.bf16.msra.mxu0 0
    %6745 = vmatprep.subr.bf16.mxu0 0
    %6746 = vmatpush2.bf16.msra.mxu0 0
    %6747 = vmatprep.subr.bf16.mxu0 0
    %6748 = vmatpush2.bf16.msra.mxu0 0
    %6749 = vmatprep.subr.bf16.mxu0 0
    %6750 = vmatpush2.bf16.msra.mxu0 0
    %6751 = vmatprep.subr.bf16.mxu0 0
    %6752 = vmatpush2.bf16.msra.mxu0 0
    %6753 = vmatprep.subr.bf16.mxu0 0
    %6754 = vmatpush2.bf16.msra.mxu0 0
    %6755 = vmatprep.mubr.bf16.mxu0 0
    %6756 = vmatmul.mubr.bf16.gmra.mxu0 %v6721
    %v6757 = vpop.f32.mrf.mxu0
    %v6758 = vadd.f32 0.0, %v6757
    %v6759 = vpop.f32.mrf.mxu0
    %v6760 = vpop.f32.mrf.mxu0
    %v6761 = vpop.f32.mrf.mxu0
    %6762 = vdwg.mxu0
    %v6763 = vadd.f32 %v6676, %v6758
    %v6764 = vld [vmem:[#allocation3 + $0x15] sm:$0x1]
    %v6765 = vld [vmem:[#allocation3 + $0x3d] sm:$0x1]
    %v6766 = vpack.c.bf16 %v6764, %v6764
    %v6767 = vpack.c.bf16 %v6765, %v6765
    %v6768 = vld [vmem:[%s5 + $0x2a0] sm:$0xf]
    %v6769 = vld [vmem:[%s5 + $0x2a4] sm:$0xf]
    %v6770 = vld [vmem:[%s5 + $0x2a8] sm:$0xf]
    %v6771 = vld [vmem:[%s5 + $0x2ac] sm:$0xf]
    %v6772 = vld [vmem:[%s5 + $0x2b0] sm:$0xf]
    %v6773 = vld [vmem:[%s5 + $0x2b4] sm:$0xf]
    %v6774 = vld [vmem:[%s5 + $0x2b8] sm:$0xf]
    %v6775 = vld [vmem:[%s5 + $0x2bc] sm:$0xf]
    %v6778 = vunpack.c.l.b16 %v6766
    %v6779 = vunpack.c.l.b16 %v6767
    %v6780 = vrot.slane %v6779, 7
    %v6781 = vsel %vm4967, %v6780, %v6778
    %v6782 = vpack.c.b16 %v6781, %v6781
    %v6791 = vunpack.c.l.b16 %v6768
    %v6792 = vunpack.c.l.b16 %v6769
    %v6793 = vunpack.c.l.b16 %v6770
    %v6794 = vunpack.c.l.b16 %v6771
    %v6795 = vunpack.c.l.b16 %v6772
    %v6796 = vunpack.c.l.b16 %v6773
    %v6797 = vunpack.c.l.b16 %v6774
    %v6798 = vunpack.c.l.b16 %v6775
    %v6799 = vpack.c.b16 %v6792, %v6791
    %v6800 = vpack.c.b16 %v6794, %v6793
    %v6801 = vpack.c.b16 %v6796, %v6795
    %v6802 = vpack.c.b16 %v6798, %v6797
    %v6808 = vsel %vm4926, %v6782, 0
    %6810 = vmatprep.subr.bf16.mxu0 0
    %6811 = vmatpush1.bf16.msra.mxu0 0
    %6812 = vmatprep.subr.bf16.mxu0 0
    %6813 = vmatpush1.bf16.msra.mxu0 0
    %6814 = vmatprep.subr.bf16.mxu0 0
    %6815 = vmatpush1.bf16.msra.mxu0 0
    %6816 = vmatprep.subr.bf16.mxu0 0
    %6817 = vmatpush1.bf16.msra.mxu0 0
    %6818 = vmatprep.subr.bf16.mxu0 0
    %6819 = vmatpush1.bf16.msra.mxu0 %v6802
    %6820 = vmatprep.subr.bf16.mxu0 0
    %6821 = vmatpush1.bf16.msra.mxu0 %v6801
    %6822 = vmatprep.subr.bf16.mxu0 0
    %6823 = vmatpush1.bf16.msra.mxu0 %v6800
    %6824 = vmatprep.subr.bf16.mxu0 0
    %6825 = vmatpush1.bf16.msra.mxu0 %v6799
    %6826 = vmatprep.subr.bf16.mxu0 0
    %6827 = vmatpush2.bf16.msra.mxu0 0
    %6828 = vmatprep.subr.bf16.mxu0 0
    %6829 = vmatpush2.bf16.msra.mxu0 0
    %6830 = vmatprep.subr.bf16.mxu0 0
    %6831 = vmatpush2.bf16.msra.mxu0 0
    %6832 = vmatprep.subr.bf16.mxu0 0
    %6833 = vmatpush2.bf16.msra.mxu0 0
    %6834 = vmatprep.subr.bf16.mxu0 0
    %6835 = vmatpush2.bf16.msra.mxu0 0
    %6836 = vmatprep.subr.bf16.mxu0 0
    %6837 = vmatpush2.bf16.msra.mxu0 0
    %6838 = vmatprep.subr.bf16.mxu0 0
    %6839 = vmatpush2.bf16.msra.mxu0 0
    %6840 = vmatprep.subr.bf16.mxu0 0
    %6841 = vmatpush2.bf16.msra.mxu0 0
    %6842 = vmatprep.mubr.bf16.mxu0 0
    %6843 = vmatmul.mubr.bf16.gmra.mxu0 %v6808
    %v6844 = vpop.f32.mrf.mxu0
    %v6845 = vadd.f32 0.0, %v6844
    %v6846 = vpop.f32.mrf.mxu0
    %v6847 = vpop.f32.mrf.mxu0
    %v6848 = vpop.f32.mrf.mxu0
    %6849 = vdwg.mxu0
    %v6850 = vadd.f32 %v6763, %v6845
    %v6851 = vld [vmem:[#allocation3 + $0x16] sm:$0x1]
    %v6852 = vld [vmem:[#allocation3 + $0x3e] sm:$0x1]
    %v6853 = vpack.c.bf16 %v6851, %v6851
    %v6854 = vpack.c.bf16 %v6852, %v6852
    %v6855 = vld [vmem:[%s5 + $0x2c0] sm:$0xf]
    %v6856 = vld [vmem:[%s5 + $0x2c4] sm:$0xf]
    %v6857 = vld [vmem:[%s5 + $0x2c8] sm:$0xf]
    %v6858 = vld [vmem:[%s5 + $0x2cc] sm:$0xf]
    %v6859 = vld [vmem:[%s5 + $0x2d0] sm:$0xf]
    %v6860 = vld [vmem:[%s5 + $0x2d4] sm:$0xf]
    %v6861 = vld [vmem:[%s5 + $0x2d8] sm:$0xf]
    %v6862 = vld [vmem:[%s5 + $0x2dc] sm:$0xf]
    %v6865 = vunpack.c.l.b16 %v6853
    %v6866 = vunpack.c.l.b16 %v6854
    %v6867 = vrot.slane %v6866, 7
    %v6868 = vsel %vm4967, %v6867, %v6865
    %v6869 = vpack.c.b16 %v6868, %v6868
    %v6878 = vunpack.c.l.b16 %v6855
    %v6879 = vunpack.c.l.b16 %v6856
    %v6880 = vunpack.c.l.b16 %v6857
    %v6881 = vunpack.c.l.b16 %v6858
    %v6882 = vunpack.c.l.b16 %v6859
    %v6883 = vunpack.c.l.b16 %v6860
    %v6884 = vunpack.c.l.b16 %v6861
    %v6885 = vunpack.c.l.b16 %v6862
    %v6886 = vpack.c.b16 %v6879, %v6878
    %v6887 = vpack.c.b16 %v6881, %v6880
    %v6888 = vpack.c.b16 %v6883, %v6882
    %v6889 = vpack.c.b16 %v6885, %v6884
    %v6895 = vsel %vm4926, %v6869, 0
    %6897 = vmatprep.subr.bf16.mxu0 0
    %6898 = vmatpush1.bf16.msra.mxu0 0
    %6899 = vmatprep.subr.bf16.mxu0 0
    %6900 = vmatpush1.bf16.msra.mxu0 0
    %6901 = vmatprep.subr.bf16.mxu0 0
    %6902 = vmatpush1.bf16.msra.mxu0 0
    %6903 = vmatprep.subr.bf16.mxu0 0
    %6904 = vmatpush1.bf16.msra.mxu0 0
    %6905 = vmatprep.subr.bf16.mxu0 0
    %6906 = vmatpush1.bf16.msra.mxu0 %v6889
    %6907 = vmatprep.subr.bf16.mxu0 0
    %6908 = vmatpush1.bf16.msra.mxu0 %v6888
    %6909 = vmatprep.subr.bf16.mxu0 0
    %6910 = vmatpush1.bf16.msra.mxu0 %v6887
    %6911 = vmatprep.subr.bf16.mxu0 0
    %6912 = vmatpush1.bf16.msra.mxu0 %v6886
    %6913 = vmatprep.subr.bf16.mxu0 0
    %6914 = vmatpush2.bf16.msra.mxu0 0
    %6915 = vmatprep.subr.bf16.mxu0 0
    %6916 = vmatpush2.bf16.msra.mxu0 0
    %6917 = vmatprep.subr.bf16.mxu0 0
    %6918 = vmatpush2.bf16.msra.mxu0 0
    %6919 = vmatprep.subr.bf16.mxu0 0
    %6920 = vmatpush2.bf16.msra.mxu0 0
    %6921 = vmatprep.subr.bf16.mxu0 0
    %6922 = vmatpush2.bf16.msra.mxu0 0
    %6923 = vmatprep.subr.bf16.mxu0 0
    %6924 = vmatpush2.bf16.msra.mxu0 0
    %6925 = vmatprep.subr.bf16.mxu0 0
    %6926 = vmatpush2.bf16.msra.mxu0 0
    %6927 = vmatprep.subr.bf16.mxu0 0
    %6928 = vmatpush2.bf16.msra.mxu0 0
    %6929 = vmatprep.mubr.bf16.mxu0 0
    %6930 = vmatmul.mubr.bf16.gmra.mxu0 %v6895
    %v6931 = vpop.f32.mrf.mxu0
    %v6932 = vadd.f32 0.0, %v6931
    %v6933 = vpop.f32.mrf.mxu0
    %v6934 = vpop.f32.mrf.mxu0
    %v6935 = vpop.f32.mrf.mxu0
    %6936 = vdwg.mxu0
    %v6937 = vadd.f32 %v6850, %v6932
    %v6938 = vld [vmem:[#allocation3 + $0x17] sm:$0x1]
    %v6939 = vld [vmem:[#allocation3 + $0x3f] sm:$0x1]
    %v6940 = vpack.c.bf16 %v6938, %v6938
    %v6941 = vpack.c.bf16 %v6939, %v6939
    %v6942 = vld [vmem:[%s5 + $0x2e0] sm:$0xf]
    %v6943 = vld [vmem:[%s5 + $0x2e4] sm:$0xf]
    %v6944 = vld [vmem:[%s5 + $0x2e8] sm:$0xf]
    %v6945 = vld [vmem:[%s5 + $0x2ec] sm:$0xf]
    %v6946 = vld [vmem:[%s5 + $0x2f0] sm:$0xf]
    %v6947 = vld [vmem:[%s5 + $0x2f4] sm:$0xf]
    %v6948 = vld [vmem:[%s5 + $0x2f8] sm:$0xf]
    %v6949 = vld [vmem:[%s5 + $0x2fc] sm:$0xf]
    %v6952 = vunpack.c.l.b16 %v6940
    %v6953 = vunpack.c.l.b16 %v6941
    %v6954 = vrot.slane %v6953, 7
    %v6955 = vsel %vm4967, %v6954, %v6952
    %v6956 = vpack.c.b16 %v6955, %v6955
    %v6965 = vunpack.c.l.b16 %v6942
    %v6966 = vunpack.c.l.b16 %v6943
    %v6967 = vunpack.c.l.b16 %v6944
    %v6968 = vunpack.c.l.b16 %v6945
    %v6969 = vunpack.c.l.b16 %v6946
    %v6970 = vunpack.c.l.b16 %v6947
    %v6971 = vunpack.c.l.b16 %v6948
    %v6972 = vunpack.c.l.b16 %v6949
    %v6973 = vpack.c.b16 %v6966, %v6965
    %v6974 = vpack.c.b16 %v6968, %v6967
    %v6975 = vpack.c.b16 %v6970, %v6969
    %v6976 = vpack.c.b16 %v6972, %v6971
    %v6982 = vsel %vm4926, %v6956, 0
    %6984 = vmatprep.subr.bf16.mxu0 0
    %6985 = vmatpush1.bf16.msra.mxu0 0
    %6986 = vmatprep.subr.bf16.mxu0 0
    %6987 = vmatpush1.bf16.msra.mxu0 0
    %6988 = vmatprep.subr.bf16.mxu0 0
    %6989 = vmatpush1.bf16.msra.mxu0 0
    %6990 = vmatprep.subr.bf16.mxu0 0
    %6991 = vmatpush1.bf16.msra.mxu0 0
    %6992 = vmatprep.subr.bf16.mxu0 0
    %6993 = vmatpush1.bf16.msra.mxu0 %v6976
    %6994 = vmatprep.subr.bf16.mxu0 0
    %6995 = vmatpush1.bf16.msra.mxu0 %v6975
    %6996 = vmatprep.subr.bf16.mxu0 0
    %6997 = vmatpush1.bf16.msra.mxu0 %v6974
    %6998 = vmatprep.subr.bf16.mxu0 0
    %6999 = vmatpush1.bf16.msra.mxu0 %v6973
    %7000 = vmatprep.subr.bf16.mxu0 0
    %7001 = vmatpush2.bf16.msra.mxu0 0
    %7002 = vmatprep.subr.bf16.mxu0 0
    %7003 = vmatpush2.bf16.msra.mxu0 0
    %7004 = vmatprep.subr.bf16.mxu0 0
    %7005 = vmatpush2.bf16.msra.mxu0 0
    %7006 = vmatprep.subr.bf16.mxu0 0
    %7007 = vmatpush2.bf16.msra.mxu0 0
    %7008 = vmatprep.subr.bf16.mxu0 0
    %7009 = vmatpush2.bf16.msra.mxu0 0
    %7010 = vmatprep.subr.bf16.mxu0 0
    %7011 = vmatpush2.bf16.msra.mxu0 0
    %7012 = vmatprep.subr.bf16.mxu0 0
    %7013 = vmatpush2.bf16.msra.mxu0 0
    %7014 = vmatprep.subr.bf16.mxu0 0
    %7015 = vmatpush2.bf16.msra.mxu0 0
    %7016 = vmatprep.mubr.bf16.mxu0 0
    %7017 = vmatmul.mubr.bf16.gmra.mxu0 %v6982
    %v7018 = vpop.f32.mrf.mxu0
    %v7019 = vadd.f32 0.0, %v7018
    %v7020 = vpop.f32.mrf.mxu0
    %v7021 = vpop.f32.mrf.mxu0
    %v7022 = vpop.f32.mrf.mxu0
    %7023 = vdwg.mxu0
    %v7024 = vadd.f32 %v6937, %v7019
    %v7025 = vld [vmem:[#allocation3 + $0x18] sm:$0x1]
    %v7026 = vld [vmem:[#allocation3 + $0x40] sm:$0x1]
    %v7027 = vpack.c.bf16 %v7025, %v7025
    %v7028 = vpack.c.bf16 %v7026, %v7026
    %v7029 = vld [vmem:[%s5 + $0x300] sm:$0xf]
    %v7030 = vld [vmem:[%s5 + $0x304] sm:$0xf]
    %v7031 = vld [vmem:[%s5 + $0x308] sm:$0xf]
    %v7032 = vld [vmem:[%s5 + $0x30c] sm:$0xf]
    %v7033 = vld [vmem:[%s5 + $0x310] sm:$0xf]
    %v7034 = vld [vmem:[%s5 + $0x314] sm:$0xf]
    %v7035 = vld [vmem:[%s5 + $0x318] sm:$0xf]
    %v7036 = vld [vmem:[%s5 + $0x31c] sm:$0xf]
    %v7039 = vunpack.c.l.b16 %v7027
    %v7040 = vunpack.c.l.b16 %v7028
    %v7041 = vrot.slane %v7040, 7
    %v7042 = vsel %vm4967, %v7041, %v7039
    %v7043 = vpack.c.b16 %v7042, %v7042
    %v7052 = vunpack.c.l.b16 %v7029
    %v7053 = vunpack.c.l.b16 %v7030
    %v7054 = vunpack.c.l.b16 %v7031
    %v7055 = vunpack.c.l.b16 %v7032
    %v7056 = vunpack.c.l.b16 %v7033
    %v7057 = vunpack.c.l.b16 %v7034
    %v7058 = vunpack.c.l.b16 %v7035
    %v7059 = vunpack.c.l.b16 %v7036
    %v7060 = vpack.c.b16 %v7053, %v7052
    %v7061 = vpack.c.b16 %v7055, %v7054
    %v7062 = vpack.c.b16 %v7057, %v7056
    %v7063 = vpack.c.b16 %v7059, %v7058
    %v7069 = vsel %vm4926, %v7043, 0
    %7071 = vmatprep.subr.bf16.mxu0 0
    %7072 = vmatpush1.bf16.msra.mxu0 0
    %7073 = vmatprep.subr.bf16.mxu0 0
    %7074 = vmatpush1.bf16.msra.mxu0 0
    %7075 = vmatprep.subr.bf16.mxu0 0
    %7076 = vmatpush1.bf16.msra.mxu0 0
    %7077 = vmatprep.subr.bf16.mxu0 0
    %7078 = vmatpush1.bf16.msra.mxu0 0
    %7079 = vmatprep.subr.bf16.mxu0 0
    %7080 = vmatpush1.bf16.msra.mxu0 %v7063
    %7081 = vmatprep.subr.bf16.mxu0 0
    %7082 = vmatpush1.bf16.msra.mxu0 %v7062
    %7083 = vmatprep.subr.bf16.mxu0 0
    %7084 = vmatpush1.bf16.msra.mxu0 %v7061
    %7085 = vmatprep.subr.bf16.mxu0 0
    %7086 = vmatpush1.bf16.msra.mxu0 %v7060
    %7087 = vmatprep.subr.bf16.mxu0 0
    %7088 = vmatpush2.bf16.msra.mxu0 0
    %7089 = vmatprep.subr.bf16.mxu0 0
    %7090 = vmatpush2.bf16.msra.mxu0 0
    %7091 = vmatprep.subr.bf16.mxu0 0
    %7092 = vmatpush2.bf16.msra.mxu0 0
    %7093 = vmatprep.subr.bf16.mxu0 0
    %7094 = vmatpush2.bf16.msra.mxu0 0
    %7095 = vmatprep.subr.bf16.mxu0 0
    %7096 = vmatpush2.bf16.msra.mxu0 0
    %7097 = vmatprep.subr.bf16.mxu0 0
    %7098 = vmatpush2.bf16.msra.mxu0 0
    %7099 = vmatprep.subr.bf16.mxu0 0
    %7100 = vmatpush2.bf16.msra.mxu0 0
    %7101 = vmatprep.subr.bf16.mxu0 0
    %7102 = vmatpush2.bf16.msra.mxu0 0
    %7103 = vmatprep.mubr.bf16.mxu0 0
    %7104 = vmatmul.mubr.bf16.gmra.mxu0 %v7069
    %v7105 = vpop.f32.mrf.mxu0
    %v7106 = vadd.f32 0.0, %v7105
    %v7107 = vpop.f32.mrf.mxu0
    %v7108 = vpop.f32.mrf.mxu0
    %v7109 = vpop.f32.mrf.mxu0
    %7110 = vdwg.mxu0
    %v7111 = vadd.f32 %v7024, %v7106
    %v7112 = vld [vmem:[#allocation3 + $0x19] sm:$0x1]
    %v7113 = vld [vmem:[#allocation3 + $0x41] sm:$0x1]
    %v7114 = vpack.c.bf16 %v7112, %v7112
    %v7115 = vpack.c.bf16 %v7113, %v7113
    %v7116 = vld [vmem:[%s5 + $0x320] sm:$0xf]
    %v7117 = vld [vmem:[%s5 + $0x324] sm:$0xf]
    %v7118 = vld [vmem:[%s5 + $0x328] sm:$0xf]
    %v7119 = vld [vmem:[%s5 + $0x32c] sm:$0xf]
    %v7120 = vld [vmem:[%s5 + $0x330] sm:$0xf]
    %v7121 = vld [vmem:[%s5 + $0x334] sm:$0xf]
    %v7122 = vld [vmem:[%s5 + $0x338] sm:$0xf]
    %v7123 = vld [vmem:[%s5 + $0x33c] sm:$0xf]
    %v7126 = vunpack.c.l.b16 %v7114
    %v7127 = vunpack.c.l.b16 %v7115
    %v7128 = vrot.slane %v7127, 7
    %v7129 = vsel %vm4967, %v7128, %v7126
    %v7130 = vpack.c.b16 %v7129, %v7129
    %v7139 = vunpack.c.l.b16 %v7116
    %v7140 = vunpack.c.l.b16 %v7117
    %v7141 = vunpack.c.l.b16 %v7118
    %v7142 = vunpack.c.l.b16 %v7119
    %v7143 = vunpack.c.l.b16 %v7120
    %v7144 = vunpack.c.l.b16 %v7121
    %v7145 = vunpack.c.l.b16 %v7122
    %v7146 = vunpack.c.l.b16 %v7123
    %v7147 = vpack.c.b16 %v7140, %v7139
    %v7148 = vpack.c.b16 %v7142, %v7141
    %v7149 = vpack.c.b16 %v7144, %v7143
    %v7150 = vpack.c.b16 %v7146, %v7145
    %v7156 = vsel %vm4926, %v7130, 0
    %7158 = vmatprep.subr.bf16.mxu0 0
    %7159 = vmatpush1.bf16.msra.mxu0 0
    %7160 = vmatprep.subr.bf16.mxu0 0
    %7161 = vmatpush1.bf16.msra.mxu0 0
    %7162 = vmatprep.subr.bf16.mxu0 0
    %7163 = vmatpush1.bf16.msra.mxu0 0
    %7164 = vmatprep.subr.bf16.mxu0 0
    %7165 = vmatpush1.bf16.msra.mxu0 0
    %7166 = vmatprep.subr.bf16.mxu0 0
    %7167 = vmatpush1.bf16.msra.mxu0 %v7150
    %7168 = vmatprep.subr.bf16.mxu0 0
    %7169 = vmatpush1.bf16.msra.mxu0 %v7149
    %7170 = vmatprep.subr.bf16.mxu0 0
    %7171 = vmatpush1.bf16.msra.mxu0 %v7148
    %7172 = vmatprep.subr.bf16.mxu0 0
    %7173 = vmatpush1.bf16.msra.mxu0 %v7147
    %7174 = vmatprep.subr.bf16.mxu0 0
    %7175 = vmatpush2.bf16.msra.mxu0 0
    %7176 = vmatprep.subr.bf16.mxu0 0
    %7177 = vmatpush2.bf16.msra.mxu0 0
    %7178 = vmatprep.subr.bf16.mxu0 0
    %7179 = vmatpush2.bf16.msra.mxu0 0
    %7180 = vmatprep.subr.bf16.mxu0 0
    %7181 = vmatpush2.bf16.msra.mxu0 0
    %7182 = vmatprep.subr.bf16.mxu0 0
    %7183 = vmatpush2.bf16.msra.mxu0 0
    %7184 = vmatprep.subr.bf16.mxu0 0
    %7185 = vmatpush2.bf16.msra.mxu0 0
    %7186 = vmatprep.subr.bf16.mxu0 0
    %7187 = vmatpush2.bf16.msra.mxu0 0
    %7188 = vmatprep.subr.bf16.mxu0 0
    %7189 = vmatpush2.bf16.msra.mxu0 0
    %7190 = vmatprep.mubr.bf16.mxu0 0
    %7191 = vmatmul.mubr.bf16.gmra.mxu0 %v7156
    %v7192 = vpop.f32.mrf.mxu0
    %v7193 = vadd.f32 0.0, %v7192
    %v7194 = vpop.f32.mrf.mxu0
    %v7195 = vpop.f32.mrf.mxu0
    %v7196 = vpop.f32.mrf.mxu0
    %7197 = vdwg.mxu0
    %v7198 = vadd.f32 %v7111, %v7193
    %v7199 = vld [vmem:[#allocation3 + $0x1a] sm:$0x1]
    %v7200 = vld [vmem:[#allocation3 + $0x42] sm:$0x1]
    %v7201 = vpack.c.bf16 %v7199, %v7199
    %v7202 = vpack.c.bf16 %v7200, %v7200
    %v7203 = vld [vmem:[%s5 + $0x340] sm:$0xf]
    %v7204 = vld [vmem:[%s5 + $0x344] sm:$0xf]
    %v7205 = vld [vmem:[%s5 + $0x348] sm:$0xf]
    %v7206 = vld [vmem:[%s5 + $0x34c] sm:$0xf]
    %v7207 = vld [vmem:[%s5 + $0x350] sm:$0xf]
    %v7208 = vld [vmem:[%s5 + $0x354] sm:$0xf]
    %v7209 = vld [vmem:[%s5 + $0x358] sm:$0xf]
    %v7210 = vld [vmem:[%s5 + $0x35c] sm:$0xf]
    %v7213 = vunpack.c.l.b16 %v7201
    %v7214 = vunpack.c.l.b16 %v7202
    %v7215 = vrot.slane %v7214, 7
    %v7216 = vsel %vm4967, %v7215, %v7213
    %v7217 = vpack.c.b16 %v7216, %v7216
    %v7226 = vunpack.c.l.b16 %v7203
    %v7227 = vunpack.c.l.b16 %v7204
    %v7228 = vunpack.c.l.b16 %v7205
    %v7229 = vunpack.c.l.b16 %v7206
    %v7230 = vunpack.c.l.b16 %v7207
    %v7231 = vunpack.c.l.b16 %v7208
    %v7232 = vunpack.c.l.b16 %v7209
    %v7233 = vunpack.c.l.b16 %v7210
    %v7234 = vpack.c.b16 %v7227, %v7226
    %v7235 = vpack.c.b16 %v7229, %v7228
    %v7236 = vpack.c.b16 %v7231, %v7230
    %v7237 = vpack.c.b16 %v7233, %v7232
    %v7243 = vsel %vm4926, %v7217, 0
    %7245 = vmatprep.subr.bf16.mxu0 0
    %7246 = vmatpush1.bf16.msra.mxu0 0
    %7247 = vmatprep.subr.bf16.mxu0 0
    %7248 = vmatpush1.bf16.msra.mxu0 0
    %7249 = vmatprep.subr.bf16.mxu0 0
    %7250 = vmatpush1.bf16.msra.mxu0 0
    %7251 = vmatprep.subr.bf16.mxu0 0
    %7252 = vmatpush1.bf16.msra.mxu0 0
    %7253 = vmatprep.subr.bf16.mxu0 0
    %7254 = vmatpush1.bf16.msra.mxu0 %v7237
    %7255 = vmatprep.subr.bf16.mxu0 0
    %7256 = vmatpush1.bf16.msra.mxu0 %v7236
    %7257 = vmatprep.subr.bf16.mxu0 0
    %7258 = vmatpush1.bf16.msra.mxu0 %v7235
    %7259 = vmatprep.subr.bf16.mxu0 0
    %7260 = vmatpush1.bf16.msra.mxu0 %v7234
    %7261 = vmatprep.subr.bf16.mxu0 0
    %7262 = vmatpush2.bf16.msra.mxu0 0
    %7263 = vmatprep.subr.bf16.mxu0 0
    %7264 = vmatpush2.bf16.msra.mxu0 0
    %7265 = vmatprep.subr.bf16.mxu0 0
    %7266 = vmatpush2.bf16.msra.mxu0 0
    %7267 = vmatprep.subr.bf16.mxu0 0
    %7268 = vmatpush2.bf16.msra.mxu0 0
    %7269 = vmatprep.subr.bf16.mxu0 0
    %7270 = vmatpush2.bf16.msra.mxu0 0
    %7271 = vmatprep.subr.bf16.mxu0 0
    %7272 = vmatpush2.bf16.msra.mxu0 0
    %7273 = vmatprep.subr.bf16.mxu0 0
    %7274 = vmatpush2.bf16.msra.mxu0 0
    %7275 = vmatprep.subr.bf16.mxu0 0
    %7276 = vmatpush2.bf16.msra.mxu0 0
    %7277 = vmatprep.mubr.bf16.mxu0 0
    %7278 = vmatmul.mubr.bf16.gmra.mxu0 %v7243
    %v7279 = vpop.f32.mrf.mxu0
    %v7280 = vadd.f32 0.0, %v7279
    %v7281 = vpop.f32.mrf.mxu0
    %v7282 = vpop.f32.mrf.mxu0
    %v7283 = vpop.f32.mrf.mxu0
    %7284 = vdwg.mxu0
    %v7285 = vadd.f32 %v7198, %v7280
    %v7286 = vld [vmem:[#allocation3 + $0x1b] sm:$0x1]
    %v7287 = vld [vmem:[#allocation3 + $0x43] sm:$0x1]
    %v7288 = vpack.c.bf16 %v7286, %v7286
    %v7289 = vpack.c.bf16 %v7287, %v7287
    %v7290 = vld [vmem:[%s5 + $0x360] sm:$0xf]
    %v7291 = vld [vmem:[%s5 + $0x364] sm:$0xf]
    %v7292 = vld [vmem:[%s5 + $0x368] sm:$0xf]
    %v7293 = vld [vmem:[%s5 + $0x36c] sm:$0xf]
    %v7294 = vld [vmem:[%s5 + $0x370] sm:$0xf]
    %v7295 = vld [vmem:[%s5 + $0x374] sm:$0xf]
    %v7296 = vld [vmem:[%s5 + $0x378] sm:$0xf]
    %v7297 = vld [vmem:[%s5 + $0x37c] sm:$0xf]
    %v7300 = vunpack.c.l.b16 %v7288
    %v7301 = vunpack.c.l.b16 %v7289
    %v7302 = vrot.slane %v7301, 7
    %v7303 = vsel %vm4967, %v7302, %v7300
    %v7304 = vpack.c.b16 %v7303, %v7303
    %v7313 = vunpack.c.l.b16 %v7290
    %v7314 = vunpack.c.l.b16 %v7291
    %v7315 = vunpack.c.l.b16 %v7292
    %v7316 = vunpack.c.l.b16 %v7293
    %v7317 = vunpack.c.l.b16 %v7294
    %v7318 = vunpack.c.l.b16 %v7295
    %v7319 = vunpack.c.l.b16 %v7296
    %v7320 = vunpack.c.l.b16 %v7297
    %v7321 = vpack.c.b16 %v7314, %v7313
    %v7322 = vpack.c.b16 %v7316, %v7315
    %v7323 = vpack.c.b16 %v7318, %v7317
    %v7324 = vpack.c.b16 %v7320, %v7319
    %v7330 = vsel %vm4926, %v7304, 0
    %7332 = vmatprep.subr.bf16.mxu0 0
    %7333 = vmatpush1.bf16.msra.mxu0 0
    %7334 = vmatprep.subr.bf16.mxu0 0
    %7335 = vmatpush1.bf16.msra.mxu0 0
    %7336 = vmatprep.subr.bf16.mxu0 0
    %7337 = vmatpush1.bf16.msra.mxu0 0
    %7338 = vmatprep.subr.bf16.mxu0 0
    %7339 = vmatpush1.bf16.msra.mxu0 0
    %7340 = vmatprep.subr.bf16.mxu0 0
    %7341 = vmatpush1.bf16.msra.mxu0 %v7324
    %7342 = vmatprep.subr.bf16.mxu0 0
    %7343 = vmatpush1.bf16.msra.mxu0 %v7323
    %7344 = vmatprep.subr.bf16.mxu0 0
    %7345 = vmatpush1.bf16.msra.mxu0 %v7322
    %7346 = vmatprep.subr.bf16.mxu0 0
    %7347 = vmatpush1.bf16.msra.mxu0 %v7321
    %7348 = vmatprep.subr.bf16.mxu0 0
    %7349 = vmatpush2.bf16.msra.mxu0 0
    %7350 = vmatprep.subr.bf16.mxu0 0
    %7351 = vmatpush2.bf16.msra.mxu0 0
    %7352 = vmatprep.subr.bf16.mxu0 0
    %7353 = vmatpush2.bf16.msra.mxu0 0
    %7354 = vmatprep.subr.bf16.mxu0 0
    %7355 = vmatpush2.bf16.msra.mxu0 0
    %7356 = vmatprep.subr.bf16.mxu0 0
    %7357 = vmatpush2.bf16.msra.mxu0 0
    %7358 = vmatprep.subr.bf16.mxu0 0
    %7359 = vmatpush2.bf16.msra.mxu0 0
    %7360 = vmatprep.subr.bf16.mxu0 0
    %7361 = vmatpush2.bf16.msra.mxu0 0
    %7362 = vmatprep.subr.bf16.mxu0 0
    %7363 = vmatpush2.bf16.msra.mxu0 0
    %7364 = vmatprep.mubr.bf16.mxu0 0
    %7365 = vmatmul.mubr.bf16.gmra.mxu0 %v7330
    %v7366 = vpop.f32.mrf.mxu0
    %v7367 = vadd.f32 0.0, %v7366
    %v7368 = vpop.f32.mrf.mxu0
    %v7369 = vpop.f32.mrf.mxu0
    %v7370 = vpop.f32.mrf.mxu0
    %7371 = vdwg.mxu0
    %v7372 = vadd.f32 %v7285, %v7367
    %v7373 = vld [vmem:[#allocation3 + $0x1c] sm:$0x1]
    %v7374 = vld [vmem:[#allocation3 + $0x44] sm:$0x1]
    %v7375 = vpack.c.bf16 %v7373, %v7373
    %v7376 = vpack.c.bf16 %v7374, %v7374
    %v7377 = vld [vmem:[%s5 + $0x380] sm:$0xf]
    %v7378 = vld [vmem:[%s5 + $0x384] sm:$0xf]
    %v7379 = vld [vmem:[%s5 + $0x388] sm:$0xf]
    %v7380 = vld [vmem:[%s5 + $0x38c] sm:$0xf]
    %v7381 = vld [vmem:[%s5 + $0x390] sm:$0xf]
    %v7382 = vld [vmem:[%s5 + $0x394] sm:$0xf]
    %v7383 = vld [vmem:[%s5 + $0x398] sm:$0xf]
    %v7384 = vld [vmem:[%s5 + $0x39c] sm:$0xf]
    %v7387 = vunpack.c.l.b16 %v7375
    %v7388 = vunpack.c.l.b16 %v7376
    %v7389 = vrot.slane %v7388, 7
    %v7390 = vsel %vm4967, %v7389, %v7387
    %v7391 = vpack.c.b16 %v7390, %v7390
    %v7400 = vunpack.c.l.b16 %v7377
    %v7401 = vunpack.c.l.b16 %v7378
    %v7402 = vunpack.c.l.b16 %v7379
    %v7403 = vunpack.c.l.b16 %v7380
    %v7404 = vunpack.c.l.b16 %v7381
    %v7405 = vunpack.c.l.b16 %v7382
    %v7406 = vunpack.c.l.b16 %v7383
    %v7407 = vunpack.c.l.b16 %v7384
    %v7408 = vpack.c.b16 %v7401, %v7400
    %v7409 = vpack.c.b16 %v7403, %v7402
    %v7410 = vpack.c.b16 %v7405, %v7404
    %v7411 = vpack.c.b16 %v7407, %v7406
    %v7417 = vsel %vm4926, %v7391, 0
    %7419 = vmatprep.subr.bf16.mxu0 0
    %7420 = vmatpush1.bf16.msra.mxu0 0
    %7421 = vmatprep.subr.bf16.mxu0 0
    %7422 = vmatpush1.bf16.msra.mxu0 0
    %7423 = vmatprep.subr.bf16.mxu0 0
    %7424 = vmatpush1.bf16.msra.mxu0 0
    %7425 = vmatprep.subr.bf16.mxu0 0
    %7426 = vmatpush1.bf16.msra.mxu0 0
    %7427 = vmatprep.subr.bf16.mxu0 0
    %7428 = vmatpush1.bf16.msra.mxu0 %v7411
    %7429 = vmatprep.subr.bf16.mxu0 0
    %7430 = vmatpush1.bf16.msra.mxu0 %v7410
    %7431 = vmatprep.subr.bf16.mxu0 0
    %7432 = vmatpush1.bf16.msra.mxu0 %v7409
    %7433 = vmatprep.subr.bf16.mxu0 0
    %7434 = vmatpush1.bf16.msra.mxu0 %v7408
    %7435 = vmatprep.subr.bf16.mxu0 0
    %7436 = vmatpush2.bf16.msra.mxu0 0
    %7437 = vmatprep.subr.bf16.mxu0 0
    %7438 = vmatpush2.bf16.msra.mxu0 0
    %7439 = vmatprep.subr.bf16.mxu0 0
    %7440 = vmatpush2.bf16.msra.mxu0 0
    %7441 = vmatprep.subr.bf16.mxu0 0
    %7442 = vmatpush2.bf16.msra.mxu0 0
    %7443 = vmatprep.subr.bf16.mxu0 0
    %7444 = vmatpush2.bf16.msra.mxu0 0
    %7445 = vmatprep.subr.bf16.mxu0 0
    %7446 = vmatpush2.bf16.msra.mxu0 0
    %7447 = vmatprep.subr.bf16.mxu0 0
    %7448 = vmatpush2.bf16.msra.mxu0 0
    %7449 = vmatprep.subr.bf16.mxu0 0
    %7450 = vmatpush2.bf16.msra.mxu0 0
    %7451 = vmatprep.mubr.bf16.mxu0 0
    %7452 = vmatmul.mubr.bf16.gmra.mxu0 %v7417
    %v7453 = vpop.f32.mrf.mxu0
    %v7454 = vadd.f32 0.0, %v7453
    %v7455 = vpop.f32.mrf.mxu0
    %v7456 = vpop.f32.mrf.mxu0
    %v7457 = vpop.f32.mrf.mxu0
    %7458 = vdwg.mxu0
    %v7459 = vadd.f32 %v7372, %v7454
    %v7460 = vld [vmem:[#allocation3 + $0x1d] sm:$0x1]
    %v7461 = vld [vmem:[#allocation3 + $0x45] sm:$0x1]
    %v7462 = vpack.c.bf16 %v7460, %v7460
    %v7463 = vpack.c.bf16 %v7461, %v7461
    %v7464 = vld [vmem:[%s5 + $0x3a0] sm:$0xf]
    %v7465 = vld [vmem:[%s5 + $0x3a4] sm:$0xf]
    %v7466 = vld [vmem:[%s5 + $0x3a8] sm:$0xf]
    %v7467 = vld [vmem:[%s5 + $0x3ac] sm:$0xf]
    %v7468 = vld [vmem:[%s5 + $0x3b0] sm:$0xf]
    %v7469 = vld [vmem:[%s5 + $0x3b4] sm:$0xf]
    %v7470 = vld [vmem:[%s5 + $0x3b8] sm:$0xf]
    %v7471 = vld [vmem:[%s5 + $0x3bc] sm:$0xf]
    %v7474 = vunpack.c.l.b16 %v7462
    %v7475 = vunpack.c.l.b16 %v7463
    %v7476 = vrot.slane %v7475, 7
    %v7477 = vsel %vm4967, %v7476, %v7474
    %v7478 = vpack.c.b16 %v7477, %v7477
    %v7487 = vunpack.c.l.b16 %v7464
    %v7488 = vunpack.c.l.b16 %v7465
    %v7489 = vunpack.c.l.b16 %v7466
    %v7490 = vunpack.c.l.b16 %v7467
    %v7491 = vunpack.c.l.b16 %v7468
    %v7492 = vunpack.c.l.b16 %v7469
    %v7493 = vunpack.c.l.b16 %v7470
    %v7494 = vunpack.c.l.b16 %v7471
    %v7495 = vpack.c.b16 %v7488, %v7487
    %v7496 = vpack.c.b16 %v7490, %v7489
    %v7497 = vpack.c.b16 %v7492, %v7491
    %v7498 = vpack.c.b16 %v7494, %v7493
    %v7504 = vsel %vm4926, %v7478, 0
    %7506 = vmatprep.subr.bf16.mxu0 0
    %7507 = vmatpush1.bf16.msra.mxu0 0
    %7508 = vmatprep.subr.bf16.mxu0 0
    %7509 = vmatpush1.bf16.msra.mxu0 0
    %7510 = vmatprep.subr.bf16.mxu0 0
    %7511 = vmatpush1.bf16.msra.mxu0 0
    %7512 = vmatprep.subr.bf16.mxu0 0
    %7513 = vmatpush1.bf16.msra.mxu0 0
    %7514 = vmatprep.subr.bf16.mxu0 0
    %7515 = vmatpush1.bf16.msra.mxu0 %v7498
    %7516 = vmatprep.subr.bf16.mxu0 0
    %7517 = vmatpush1.bf16.msra.mxu0 %v7497
    %7518 = vmatprep.subr.bf16.mxu0 0
    %7519 = vmatpush1.bf16.msra.mxu0 %v7496
    %7520 = vmatprep.subr.bf16.mxu0 0
    %7521 = vmatpush1.bf16.msra.mxu0 %v7495
    %7522 = vmatprep.subr.bf16.mxu0 0
    %7523 = vmatpush2.bf16.msra.mxu0 0
    %7524 = vmatprep.subr.bf16.mxu0 0
    %7525 = vmatpush2.bf16.msra.mxu0 0
    %7526 = vmatprep.subr.bf16.mxu0 0
    %7527 = vmatpush2.bf16.msra.mxu0 0
    %7528 = vmatprep.subr.bf16.mxu0 0
    %7529 = vmatpush2.bf16.msra.mxu0 0
    %7530 = vmatprep.subr.bf16.mxu0 0
    %7531 = vmatpush2.bf16.msra.mxu0 0
    %7532 = vmatprep.subr.bf16.mxu0 0
    %7533 = vmatpush2.bf16.msra.mxu0 0
    %7534 = vmatprep.subr.bf16.mxu0 0
    %7535 = vmatpush2.bf16.msra.mxu0 0
    %7536 = vmatprep.subr.bf16.mxu0 0
    %7537 = vmatpush2.bf16.msra.mxu0 0
    %7538 = vmatprep.mubr.bf16.mxu0 0
    %7539 = vmatmul.mubr.bf16.gmra.mxu0 %v7504
    %v7540 = vpop.f32.mrf.mxu0
    %v7541 = vadd.f32 0.0, %v7540
    %v7542 = vpop.f32.mrf.mxu0
    %v7543 = vpop.f32.mrf.mxu0
    %v7544 = vpop.f32.mrf.mxu0
    %7545 = vdwg.mxu0
    %v7546 = vadd.f32 %v7459, %v7541
    %v7547 = vld [vmem:[#allocation3 + $0x1e] sm:$0x1]
    %v7548 = vld [vmem:[#allocation3 + $0x46] sm:$0x1]
    %v7549 = vpack.c.bf16 %v7547, %v7547
    %v7550 = vpack.c.bf16 %v7548, %v7548
    %v7551 = vld [vmem:[%s5 + $0x3c0] sm:$0xf]
    %v7552 = vld [vmem:[%s5 + $0x3c4] sm:$0xf]
    %v7553 = vld [vmem:[%s5 + $0x3c8] sm:$0xf]
    %v7554 = vld [vmem:[%s5 + $0x3cc] sm:$0xf]
    %v7555 = vld [vmem:[%s5 + $0x3d0] sm:$0xf]
    %v7556 = vld [vmem:[%s5 + $0x3d4] sm:$0xf]
    %v7557 = vld [vmem:[%s5 + $0x3d8] sm:$0xf]
    %v7558 = vld [vmem:[%s5 + $0x3dc] sm:$0xf]
    %v7561 = vunpack.c.l.b16 %v7549
    %v7562 = vunpack.c.l.b16 %v7550
    %v7563 = vrot.slane %v7562, 7
    %v7564 = vsel %vm4967, %v7563, %v7561
    %v7565 = vpack.c.b16 %v7564, %v7564
    %v7574 = vunpack.c.l.b16 %v7551
    %v7575 = vunpack.c.l.b16 %v7552
    %v7576 = vunpack.c.l.b16 %v7553
    %v7577 = vunpack.c.l.b16 %v7554
    %v7578 = vunpack.c.l.b16 %v7555
    %v7579 = vunpack.c.l.b16 %v7556
    %v7580 = vunpack.c.l.b16 %v7557
    %v7581 = vunpack.c.l.b16 %v7558
    %v7582 = vpack.c.b16 %v7575, %v7574
    %v7583 = vpack.c.b16 %v7577, %v7576
    %v7584 = vpack.c.b16 %v7579, %v7578
    %v7585 = vpack.c.b16 %v7581, %v7580
    %v7591 = vsel %vm4926, %v7565, 0
    %7593 = vmatprep.subr.bf16.mxu0 0
    %7594 = vmatpush1.bf16.msra.mxu0 0
    %7595 = vmatprep.subr.bf16.mxu0 0
    %7596 = vmatpush1.bf16.msra.mxu0 0
    %7597 = vmatprep.subr.bf16.mxu0 0
    %7598 = vmatpush1.bf16.msra.mxu0 0
    %7599 = vmatprep.subr.bf16.mxu0 0
    %7600 = vmatpush1.bf16.msra.mxu0 0
    %7601 = vmatprep.subr.bf16.mxu0 0
    %7602 = vmatpush1.bf16.msra.mxu0 %v7585
    %7603 = vmatprep.subr.bf16.mxu0 0
    %7604 = vmatpush1.bf16.msra.mxu0 %v7584
    %7605 = vmatprep.subr.bf16.mxu0 0
    %7606 = vmatpush1.bf16.msra.mxu0 %v7583
    %7607 = vmatprep.subr.bf16.mxu0 0
    %7608 = vmatpush1.bf16.msra.mxu0 %v7582
    %7609 = vmatprep.subr.bf16.mxu0 0
    %7610 = vmatpush2.bf16.msra.mxu0 0
    %7611 = vmatprep.subr.bf16.mxu0 0
    %7612 = vmatpush2.bf16.msra.mxu0 0
    %7613 = vmatprep.subr.bf16.mxu0 0
    %7614 = vmatpush2.bf16.msra.mxu0 0
    %7615 = vmatprep.subr.bf16.mxu0 0
    %7616 = vmatpush2.bf16.msra.mxu0 0
    %7617 = vmatprep.subr.bf16.mxu0 0
    %7618 = vmatpush2.bf16.msra.mxu0 0
    %7619 = vmatprep.subr.bf16.mxu0 0
    %7620 = vmatpush2.bf16.msra.mxu0 0
    %7621 = vmatprep.subr.bf16.mxu0 0
    %7622 = vmatpush2.bf16.msra.mxu0 0
    %7623 = vmatprep.subr.bf16.mxu0 0
    %7624 = vmatpush2.bf16.msra.mxu0 0
    %7625 = vmatprep.mubr.bf16.mxu0 0
    %7626 = vmatmul.mubr.bf16.gmra.mxu0 %v7591
    %v7627 = vpop.f32.mrf.mxu0
    %v7628 = vadd.f32 0.0, %v7627
    %v7629 = vpop.f32.mrf.mxu0
    %v7630 = vpop.f32.mrf.mxu0
    %v7631 = vpop.f32.mrf.mxu0
    %7632 = vdwg.mxu0
    %v7633 = vadd.f32 %v7546, %v7628
    %v7634 = vld [vmem:[#allocation3 + $0x1f] sm:$0x1]
    %v7635 = vld [vmem:[#allocation3 + $0x47] sm:$0x1]
    %v7636 = vpack.c.bf16 %v7634, %v7634
    %v7637 = vpack.c.bf16 %v7635, %v7635
    %v7638 = vld [vmem:[%s5 + $0x3e0] sm:$0xf]
    %v7639 = vld [vmem:[%s5 + $0x3e4] sm:$0xf]
    %v7640 = vld [vmem:[%s5 + $0x3e8] sm:$0xf]
    %v7641 = vld [vmem:[%s5 + $0x3ec] sm:$0xf]
    %v7642 = vld [vmem:[%s5 + $0x3f0] sm:$0xf]
    %v7643 = vld [vmem:[%s5 + $0x3f4] sm:$0xf]
    %v7644 = vld [vmem:[%s5 + $0x3f8] sm:$0xf]
    %v7645 = vld [vmem:[%s5 + $0x3fc] sm:$0xf]
    %v7648 = vunpack.c.l.b16 %v7636
    %v7649 = vunpack.c.l.b16 %v7637
    %v7650 = vrot.slane %v7649, 7
    %v7651 = vsel %vm4967, %v7650, %v7648
    %v7652 = vpack.c.b16 %v7651, %v7651
    %v7661 = vunpack.c.l.b16 %v7638
    %v7662 = vunpack.c.l.b16 %v7639
    %v7663 = vunpack.c.l.b16 %v7640
    %v7664 = vunpack.c.l.b16 %v7641
    %v7665 = vunpack.c.l.b16 %v7642
    %v7666 = vunpack.c.l.b16 %v7643
    %v7667 = vunpack.c.l.b16 %v7644
    %v7668 = vunpack.c.l.b16 %v7645
    %v7669 = vpack.c.b16 %v7662, %v7661
    %v7670 = vpack.c.b16 %v7664, %v7663
    %v7671 = vpack.c.b16 %v7666, %v7665
    %v7672 = vpack.c.b16 %v7668, %v7667
    %v7678 = vsel %vm4926, %v7652, 0
    %7680 = vmatprep.subr.bf16.mxu0 0
    %7681 = vmatpush1.bf16.msra.mxu0 0
    %7682 = vmatprep.subr.bf16.mxu0 0
    %7683 = vmatpush1.bf16.msra.mxu0 0
    %7684 = vmatprep.subr.bf16.mxu0 0
    %7685 = vmatpush1.bf16.msra.mxu0 0
    %7686 = vmatprep.subr.bf16.mxu0 0
    %7687 = vmatpush1.bf16.msra.mxu0 0
    %7688 = vmatprep.subr.bf16.mxu0 0
    %7689 = vmatpush1.bf16.msra.mxu0 %v7672
    %7690 = vmatprep.subr.bf16.mxu0 0
    %7691 = vmatpush1.bf16.msra.mxu0 %v7671
    %7692 = vmatprep.subr.bf16.mxu0 0
    %7693 = vmatpush1.bf16.msra.mxu0 %v7670
    %7694 = vmatprep.subr.bf16.mxu0 0
    %7695 = vmatpush1.bf16.msra.mxu0 %v7669
    %7696 = vmatprep.subr.bf16.mxu0 0
    %7697 = vmatpush2.bf16.msra.mxu0 0
    %7698 = vmatprep.subr.bf16.mxu0 0
    %7699 = vmatpush2.bf16.msra.mxu0 0
    %7700 = vmatprep.subr.bf16.mxu0 0
    %7701 = vmatpush2.bf16.msra.mxu0 0
    %7702 = vmatprep.subr.bf16.mxu0 0
    %7703 = vmatpush2.bf16.msra.mxu0 0
    %7704 = vmatprep.subr.bf16.mxu0 0
    %7705 = vmatpush2.bf16.msra.mxu0 0
    %7706 = vmatprep.subr.bf16.mxu0 0
    %7707 = vmatpush2.bf16.msra.mxu0 0
    %7708 = vmatprep.subr.bf16.mxu0 0
    %7709 = vmatpush2.bf16.msra.mxu0 0
    %7710 = vmatprep.subr.bf16.mxu0 0
    %7711 = vmatpush2.bf16.msra.mxu0 0
    %7712 = vmatprep.mubr.bf16.mxu0 0
    %7713 = vmatmul.mubr.bf16.gmra.mxu0 %v7678
    %v7714 = vpop.f32.mrf.mxu0
    %v7715 = vadd.f32 0.0, %v7714
    %v7716 = vpop.f32.mrf.mxu0
    %v7717 = vpop.f32.mrf.mxu0
    %v7718 = vpop.f32.mrf.mxu0
    %7719 = vdwg.mxu0
    %v7720 = vadd.f32 %v7633, %v7715
    %v7721 = vld [vmem:[#allocation3 + $0x20] sm:$0x1]
    %v7722 = vld [vmem:[#allocation3 + $0x48] sm:$0x1]
    %v7723 = vpack.c.bf16 %v7721, %v7721
    %v7724 = vpack.c.bf16 %v7722, %v7722
    %v7725 = vld [vmem:[%s5 + $0x400] sm:$0xf]
    %v7726 = vld [vmem:[%s5 + $0x404] sm:$0xf]
    %v7727 = vld [vmem:[%s5 + $0x408] sm:$0xf]
    %v7728 = vld [vmem:[%s5 + $0x40c] sm:$0xf]
    %v7729 = vld [vmem:[%s5 + $0x410] sm:$0xf]
    %v7730 = vld [vmem:[%s5 + $0x414] sm:$0xf]
    %v7731 = vld [vmem:[%s5 + $0x418] sm:$0xf]
    %v7732 = vld [vmem:[%s5 + $0x41c] sm:$0xf]
    %v7735 = vunpack.c.l.b16 %v7723
    %v7736 = vunpack.c.l.b16 %v7724
    %v7737 = vrot.slane %v7736, 7
    %v7738 = vsel %vm4967, %v7737, %v7735
    %v7739 = vpack.c.b16 %v7738, %v7738
    %v7748 = vunpack.c.l.b16 %v7725
    %v7749 = vunpack.c.l.b16 %v7726
    %v7750 = vunpack.c.l.b16 %v7727
    %v7751 = vunpack.c.l.b16 %v7728
    %v7752 = vunpack.c.l.b16 %v7729
    %v7753 = vunpack.c.l.b16 %v7730
    %v7754 = vunpack.c.l.b16 %v7731
    %v7755 = vunpack.c.l.b16 %v7732
    %v7756 = vpack.c.b16 %v7749, %v7748
    %v7757 = vpack.c.b16 %v7751, %v7750
    %v7758 = vpack.c.b16 %v7753, %v7752
    %v7759 = vpack.c.b16 %v7755, %v7754
    %v7765 = vsel %vm4926, %v7739, 0
    %7767 = vmatprep.subr.bf16.mxu0 0
    %7768 = vmatpush1.bf16.msra.mxu0 0
    %7769 = vmatprep.subr.bf16.mxu0 0
    %7770 = vmatpush1.bf16.msra.mxu0 0
    %7771 = vmatprep.subr.bf16.mxu0 0
    %7772 = vmatpush1.bf16.msra.mxu0 0
    %7773 = vmatprep.subr.bf16.mxu0 0
    %7774 = vmatpush1.bf16.msra.mxu0 0
    %7775 = vmatprep.subr.bf16.mxu0 0
    %7776 = vmatpush1.bf16.msra.mxu0 %v7759
    %7777 = vmatprep.subr.bf16.mxu0 0
    %7778 = vmatpush1.bf16.msra.mxu0 %v7758
    %7779 = vmatprep.subr.bf16.mxu0 0
    %7780 = vmatpush1.bf16.msra.mxu0 %v7757
    %7781 = vmatprep.subr.bf16.mxu0 0
    %7782 = vmatpush1.bf16.msra.mxu0 %v7756
    %7783 = vmatprep.subr.bf16.mxu0 0
    %7784 = vmatpush2.bf16.msra.mxu0 0
    %7785 = vmatprep.subr.bf16.mxu0 0
    %7786 = vmatpush2.bf16.msra.mxu0 0
    %7787 = vmatprep.subr.bf16.mxu0 0
    %7788 = vmatpush2.bf16.msra.mxu0 0
    %7789 = vmatprep.subr.bf16.mxu0 0
    %7790 = vmatpush2.bf16.msra.mxu0 0
    %7791 = vmatprep.subr.bf16.mxu0 0
    %7792 = vmatpush2.bf16.msra.mxu0 0
    %7793 = vmatprep.subr.bf16.mxu0 0
    %7794 = vmatpush2.bf16.msra.mxu0 0
    %7795 = vmatprep.subr.bf16.mxu0 0
    %7796 = vmatpush2.bf16.msra.mxu0 0
    %7797 = vmatprep.subr.bf16.mxu0 0
    %7798 = vmatpush2.bf16.msra.mxu0 0
    %7799 = vmatprep.mubr.bf16.mxu0 0
    %7800 = vmatmul.mubr.bf16.gmra.mxu0 %v7765
    %v7801 = vpop.f32.mrf.mxu0
    %v7802 = vadd.f32 0.0, %v7801
    %v7803 = vpop.f32.mrf.mxu0
    %v7804 = vpop.f32.mrf.mxu0
    %v7805 = vpop.f32.mrf.mxu0
    %7806 = vdwg.mxu0
    %v7807 = vadd.f32 %v7720, %v7802
    %v7808 = vld [vmem:[#allocation3 + $0x21] sm:$0x1]
    %v7809 = vld [vmem:[#allocation3 + $0x49] sm:$0x1]
    %v7810 = vpack.c.bf16 %v7808, %v7808
    %v7811 = vpack.c.bf16 %v7809, %v7809
    %v7812 = vld [vmem:[%s5 + $0x420] sm:$0xf]
    %v7813 = vld [vmem:[%s5 + $0x424] sm:$0xf]
    %v7814 = vld [vmem:[%s5 + $0x428] sm:$0xf]
    %v7815 = vld [vmem:[%s5 + $0x42c] sm:$0xf]
    %v7816 = vld [vmem:[%s5 + $0x430] sm:$0xf]
    %v7817 = vld [vmem:[%s5 + $0x434] sm:$0xf]
    %v7818 = vld [vmem:[%s5 + $0x438] sm:$0xf]
    %v7819 = vld [vmem:[%s5 + $0x43c] sm:$0xf]
    %v7822 = vunpack.c.l.b16 %v7810
    %v7823 = vunpack.c.l.b16 %v7811
    %v7824 = vrot.slane %v7823, 7
    %v7825 = vsel %vm4967, %v7824, %v7822
    %v7826 = vpack.c.b16 %v7825, %v7825
    %v7835 = vunpack.c.l.b16 %v7812
    %v7836 = vunpack.c.l.b16 %v7813
    %v7837 = vunpack.c.l.b16 %v7814
    %v7838 = vunpack.c.l.b16 %v7815
    %v7839 = vunpack.c.l.b16 %v7816
    %v7840 = vunpack.c.l.b16 %v7817
    %v7841 = vunpack.c.l.b16 %v7818
    %v7842 = vunpack.c.l.b16 %v7819
    %v7843 = vpack.c.b16 %v7836, %v7835
    %v7844 = vpack.c.b16 %v7838, %v7837
    %v7845 = vpack.c.b16 %v7840, %v7839
    %v7846 = vpack.c.b16 %v7842, %v7841
    %v7852 = vsel %vm4926, %v7826, 0
    %7854 = vmatprep.subr.bf16.mxu0 0
    %7855 = vmatpush1.bf16.msra.mxu0 0
    %7856 = vmatprep.subr.bf16.mxu0 0
    %7857 = vmatpush1.bf16.msra.mxu0 0
    %7858 = vmatprep.subr.bf16.mxu0 0
    %7859 = vmatpush1.bf16.msra.mxu0 0
    %7860 = vmatprep.subr.bf16.mxu0 0
    %7861 = vmatpush1.bf16.msra.mxu0 0
    %7862 = vmatprep.subr.bf16.mxu0 0
    %7863 = vmatpush1.bf16.msra.mxu0 %v7846
    %7864 = vmatprep.subr.bf16.mxu0 0
    %7865 = vmatpush1.bf16.msra.mxu0 %v7845
    %7866 = vmatprep.subr.bf16.mxu0 0
    %7867 = vmatpush1.bf16.msra.mxu0 %v7844
    %7868 = vmatprep.subr.bf16.mxu0 0
    %7869 = vmatpush1.bf16.msra.mxu0 %v7843
    %7870 = vmatprep.subr.bf16.mxu0 0
    %7871 = vmatpush2.bf16.msra.mxu0 0
    %7872 = vmatprep.subr.bf16.mxu0 0
    %7873 = vmatpush2.bf16.msra.mxu0 0
    %7874 = vmatprep.subr.bf16.mxu0 0
    %7875 = vmatpush2.bf16.msra.mxu0 0
    %7876 = vmatprep.subr.bf16.mxu0 0
    %7877 = vmatpush2.bf16.msra.mxu0 0
    %7878 = vmatprep.subr.bf16.mxu0 0
    %7879 = vmatpush2.bf16.msra.mxu0 0
    %7880 = vmatprep.subr.bf16.mxu0 0
    %7881 = vmatpush2.bf16.msra.mxu0 0
    %7882 = vmatprep.subr.bf16.mxu0 0
    %7883 = vmatpush2.bf16.msra.mxu0 0
    %7884 = vmatprep.subr.bf16.mxu0 0
    %7885 = vmatpush2.bf16.msra.mxu0 0
    %7886 = vmatprep.mubr.bf16.mxu0 0
    %7887 = vmatmul.mubr.bf16.gmra.mxu0 %v7852
    %v7888 = vpop.f32.mrf.mxu0
    %v7889 = vadd.f32 0.0, %v7888
    %v7890 = vpop.f32.mrf.mxu0
    %v7891 = vpop.f32.mrf.mxu0
    %v7892 = vpop.f32.mrf.mxu0
    %7893 = vdwg.mxu0
    %v7894 = vadd.f32 %v7807, %v7889
    %v7895 = vld [vmem:[#allocation3 + $0x22] sm:$0x1]
    %v7896 = vld [vmem:[#allocation3 + $0x4a] sm:$0x1]
    %v7897 = vpack.c.bf16 %v7895, %v7895
    %v7898 = vpack.c.bf16 %v7896, %v7896
    %v7899 = vld [vmem:[%s5 + $0x440] sm:$0xf]
    %v7900 = vld [vmem:[%s5 + $0x444] sm:$0xf]
    %v7901 = vld [vmem:[%s5 + $0x448] sm:$0xf]
    %v7902 = vld [vmem:[%s5 + $0x44c] sm:$0xf]
    %v7903 = vld [vmem:[%s5 + $0x450] sm:$0xf]
    %v7904 = vld [vmem:[%s5 + $0x454] sm:$0xf]
    %v7905 = vld [vmem:[%s5 + $0x458] sm:$0xf]
    %v7906 = vld [vmem:[%s5 + $0x45c] sm:$0xf]
    %v7909 = vunpack.c.l.b16 %v7897
    %v7910 = vunpack.c.l.b16 %v7898
    %v7911 = vrot.slane %v7910, 7
    %v7912 = vsel %vm4967, %v7911, %v7909
    %v7913 = vpack.c.b16 %v7912, %v7912
    %v7922 = vunpack.c.l.b16 %v7899
    %v7923 = vunpack.c.l.b16 %v7900
    %v7924 = vunpack.c.l.b16 %v7901
    %v7925 = vunpack.c.l.b16 %v7902
    %v7926 = vunpack.c.l.b16 %v7903
    %v7927 = vunpack.c.l.b16 %v7904
    %v7928 = vunpack.c.l.b16 %v7905
    %v7929 = vunpack.c.l.b16 %v7906
    %v7930 = vpack.c.b16 %v7923, %v7922
    %v7931 = vpack.c.b16 %v7925, %v7924
    %v7932 = vpack.c.b16 %v7927, %v7926
    %v7933 = vpack.c.b16 %v7929, %v7928
    %v7939 = vsel %vm4926, %v7913, 0
    %7941 = vmatprep.subr.bf16.mxu0 0
    %7942 = vmatpush1.bf16.msra.mxu0 0
    %7943 = vmatprep.subr.bf16.mxu0 0
    %7944 = vmatpush1.bf16.msra.mxu0 0
    %7945 = vmatprep.subr.bf16.mxu0 0
    %7946 = vmatpush1.bf16.msra.mxu0 0
    %7947 = vmatprep.subr.bf16.mxu0 0
    %7948 = vmatpush1.bf16.msra.mxu0 0
    %7949 = vmatprep.subr.bf16.mxu0 0
    %7950 = vmatpush1.bf16.msra.mxu0 %v7933
    %7951 = vmatprep.subr.bf16.mxu0 0
    %7952 = vmatpush1.bf16.msra.mxu0 %v7932
    %7953 = vmatprep.subr.bf16.mxu0 0
    %7954 = vmatpush1.bf16.msra.mxu0 %v7931
    %7955 = vmatprep.subr.bf16.mxu0 0
    %7956 = vmatpush1.bf16.msra.mxu0 %v7930
    %7957 = vmatprep.subr.bf16.mxu0 0
    %7958 = vmatpush2.bf16.msra.mxu0 0
    %7959 = vmatprep.subr.bf16.mxu0 0
    %7960 = vmatpush2.bf16.msra.mxu0 0
    %7961 = vmatprep.subr.bf16.mxu0 0
    %7962 = vmatpush2.bf16.msra.mxu0 0
    %7963 = vmatprep.subr.bf16.mxu0 0
    %7964 = vmatpush2.bf16.msra.mxu0 0
    %7965 = vmatprep.subr.bf16.mxu0 0
    %7966 = vmatpush2.bf16.msra.mxu0 0
    %7967 = vmatprep.subr.bf16.mxu0 0
    %7968 = vmatpush2.bf16.msra.mxu0 0
    %7969 = vmatprep.subr.bf16.mxu0 0
    %7970 = vmatpush2.bf16.msra.mxu0 0
    %7971 = vmatprep.subr.bf16.mxu0 0
    %7972 = vmatpush2.bf16.msra.mxu0 0
    %7973 = vmatprep.mubr.bf16.mxu0 0
    %7974 = vmatmul.mubr.bf16.gmra.mxu0 %v7939
    %v7975 = vpop.f32.mrf.mxu0
    %v7976 = vadd.f32 0.0, %v7975
    %v7977 = vpop.f32.mrf.mxu0
    %v7978 = vpop.f32.mrf.mxu0
    %v7979 = vpop.f32.mrf.mxu0
    %7980 = vdwg.mxu0
    %v7981 = vadd.f32 %v7894, %v7976
    %v7982 = vld [vmem:[#allocation3 + $0x23] sm:$0x1]
    %v7983 = vld [vmem:[#allocation3 + $0x4b] sm:$0x1]
    %v7984 = vpack.c.bf16 %v7982, %v7982
    %v7985 = vpack.c.bf16 %v7983, %v7983
    %v7986 = vld [vmem:[%s5 + $0x460] sm:$0xf]
    %v7987 = vld [vmem:[%s5 + $0x464] sm:$0xf]
    %v7988 = vld [vmem:[%s5 + $0x468] sm:$0xf]
    %v7989 = vld [vmem:[%s5 + $0x46c] sm:$0xf]
    %v7990 = vld [vmem:[%s5 + $0x470] sm:$0xf]
    %v7991 = vld [vmem:[%s5 + $0x474] sm:$0xf]
    %v7992 = vld [vmem:[%s5 + $0x478] sm:$0xf]
    %v7993 = vld [vmem:[%s5 + $0x47c] sm:$0xf]
    %v7996 = vunpack.c.l.b16 %v7984
    %v7997 = vunpack.c.l.b16 %v7985
    %v7998 = vrot.slane %v7997, 7
    %v7999 = vsel %vm4967, %v7998, %v7996
    %v8000 = vpack.c.b16 %v7999, %v7999
    %v8009 = vunpack.c.l.b16 %v7986
    %v8010 = vunpack.c.l.b16 %v7987
    %v8011 = vunpack.c.l.b16 %v7988
    %v8012 = vunpack.c.l.b16 %v7989
    %v8013 = vunpack.c.l.b16 %v7990
    %v8014 = vunpack.c.l.b16 %v7991
    %v8015 = vunpack.c.l.b16 %v7992
    %v8016 = vunpack.c.l.b16 %v7993
    %v8017 = vpack.c.b16 %v8010, %v8009
    %v8018 = vpack.c.b16 %v8012, %v8011
    %v8019 = vpack.c.b16 %v8014, %v8013
    %v8020 = vpack.c.b16 %v8016, %v8015
    %v8026 = vsel %vm4926, %v8000, 0
    %8028 = vmatprep.subr.bf16.mxu0 0
    %8029 = vmatpush1.bf16.msra.mxu0 0
    %8030 = vmatprep.subr.bf16.mxu0 0
    %8031 = vmatpush1.bf16.msra.mxu0 0
    %8032 = vmatprep.subr.bf16.mxu0 0
    %8033 = vmatpush1.bf16.msra.mxu0 0
    %8034 = vmatprep.subr.bf16.mxu0 0
    %8035 = vmatpush1.bf16.msra.mxu0 0
    %8036 = vmatprep.subr.bf16.mxu0 0
    %8037 = vmatpush1.bf16.msra.mxu0 %v8020
    %8038 = vmatprep.subr.bf16.mxu0 0
    %8039 = vmatpush1.bf16.msra.mxu0 %v8019
    %8040 = vmatprep.subr.bf16.mxu0 0
    %8041 = vmatpush1.bf16.msra.mxu0 %v8018
    %8042 = vmatprep.subr.bf16.mxu0 0
    %8043 = vmatpush1.bf16.msra.mxu0 %v8017
    %8044 = vmatprep.subr.bf16.mxu0 0
    %8045 = vmatpush2.bf16.msra.mxu0 0
    %8046 = vmatprep.subr.bf16.mxu0 0
    %8047 = vmatpush2.bf16.msra.mxu0 0
    %8048 = vmatprep.subr.bf16.mxu0 0
    %8049 = vmatpush2.bf16.msra.mxu0 0
    %8050 = vmatprep.subr.bf16.mxu0 0
    %8051 = vmatpush2.bf16.msra.mxu0 0
    %8052 = vmatprep.subr.bf16.mxu0 0
    %8053 = vmatpush2.bf16.msra.mxu0 0
    %8054 = vmatprep.subr.bf16.mxu0 0
    %8055 = vmatpush2.bf16.msra.mxu0 0
    %8056 = vmatprep.subr.bf16.mxu0 0
    %8057 = vmatpush2.bf16.msra.mxu0 0
    %8058 = vmatprep.subr.bf16.mxu0 0
    %8059 = vmatpush2.bf16.msra.mxu0 0
    %8060 = vmatprep.mubr.bf16.mxu0 0
    %8061 = vmatmul.mubr.bf16.gmra.mxu0 %v8026
    %v8062 = vpop.f32.mrf.mxu0
    %v8063 = vadd.f32 0.0, %v8062
    %v8064 = vpop.f32.mrf.mxu0
    %v8065 = vpop.f32.mrf.mxu0
    %v8066 = vpop.f32.mrf.mxu0
    %8067 = vdwg.mxu0
    %v8068 = vadd.f32 %v7981, %v8063
    %v8069 = vld [vmem:[%s6] sm:$0x1]
    %v8071 = vlaneseq
    %v8072 = vshrl.u32 %v8071, 7
    %v8073 = vsub.s32 0, %v8072
    %v8074 = vrot.slane %v8069, %v8073
    %v8076 = vadd.f32 %v8068, %v8074
    %v8077 = vmax.f32 %v8076, 0.0
    %v8078 = vld [vmem:[%s7] sm:$0xff]
    %v8079 = vld [vmem:[%s7 + $0x8] sm:$0xff]
    %v8080 = vld [vmem:[%s7 + $0x10] sm:$0xff]
    %v8081 = vld [vmem:[%s7 + $0x18] sm:$0xff]
    %v8082 = vld [vmem:[%s7 + $0x20] sm:$0xff]
    %v8083 = vld [vmem:[%s7 + $0x28] sm:$0xff]
    %v8084 = vld [vmem:[%s7 + $0x30] sm:$0xff]
    %v8085 = vld [vmem:[%s7 + $0x38] sm:$0xff]
    %v8086 = vld [vmem:[%s7 + $0x40] sm:$0xff]
    %v8087 = vld [vmem:[%s7 + $0x48] sm:$0xff]
    %v8088 = vld [vmem:[%s7 + $0x50] sm:$0xff]
    %v8089 = vld [vmem:[%s7 + $0x58] sm:$0xff]
    %v8090 = vld [vmem:[%s7 + $0x60] sm:$0xff]
    %v8091 = vld [vmem:[%s7 + $0x68] sm:$0xff]
    %v8092 = vld [vmem:[%s7 + $0x70] sm:$0xff]
    %v8093 = vld [vmem:[%s7 + $0x78] sm:$0xff]
    %v8094 = vld [vmem:[%s8] sm:$0x1]
    %v8096 = vlaneseq
    %v8097 = vshrl.u32 %v8096, 7
    %v8098 = vsub.s32 0, %v8097
    %v8099 = vrot.slane %v8094, %v8098
    %8101 = vmatprep.subr.mxu0 0.0
    %8102 = vmatpush1.msra.mxu0 %v8093
    %8103 = vmatprep.subr.mxu0 0.0
    %8104 = vmatpush1.msra.mxu0 %v8092
    %8105 = vmatprep.subr.mxu0 0.0
    %8106 = vmatpush1.msra.mxu0 %v8091
    %8107 = vmatprep.subr.mxu0 0.0
    %8108 = vmatpush1.msra.mxu0 %v8090
    %8109 = vmatprep.subr.mxu0 0.0
    %8110 = vmatpush1.msra.mxu0 %v8089
    %8111 = vmatprep.subr.mxu0 0.0
    %8112 = vmatpush1.msra.mxu0 %v8088
    %8113 = vmatprep.subr.mxu0 0.0
    %8114 = vmatpush1.msra.mxu0 %v8087
    %8115 = vmatprep.subr.mxu0 0.0
    %8116 = vmatpush1.msra.mxu0 %v8086
    %8117 = vmatprep.subr.mxu0 0.0
    %8118 = vmatpush1.msra.mxu0 %v8085
    %8119 = vmatprep.subr.mxu0 0.0
    %8120 = vmatpush1.msra.mxu0 %v8084
    %8121 = vmatprep.subr.mxu0 0.0
    %8122 = vmatpush1.msra.mxu0 %v8083
    %8123 = vmatprep.subr.mxu0 0.0
    %8124 = vmatpush1.msra.mxu0 %v8082
    %8125 = vmatprep.subr.mxu0 0.0
    %8126 = vmatpush1.msra.mxu0 %v8081
    %8127 = vmatprep.subr.mxu0 0.0
    %8128 = vmatpush1.msra.mxu0 %v8080
    %8129 = vmatprep.subr.mxu0 0.0
    %8130 = vmatpush1.msra.mxu0 %v8079
    %8131 = vmatprep.subr.mxu0 0.0
    %8132 = vmatpush1.msra.mxu0 %v8078
    %8133 = vmatprep.subr.mxu0 0.0
    %8134 = vmatpush2.msra.mxu0 0.0
    %8135 = vmatprep.subr.mxu0 0.0
    %8136 = vmatpush2.msra.mxu0 0.0
    %8137 = vmatprep.subr.mxu0 0.0
    %8138 = vmatpush2.msra.mxu0 0.0
    %8139 = vmatprep.subr.mxu0 0.0
    %8140 = vmatpush2.msra.mxu0 0.0
    %8141 = vmatprep.subr.mxu0 0.0
    %8142 = vmatpush2.msra.mxu0 0.0
    %8143 = vmatprep.subr.mxu0 0.0
    %8144 = vmatpush2.msra.mxu0 0.0
    %8145 = vmatprep.subr.mxu0 0.0
    %8146 = vmatpush2.msra.mxu0 0.0
    %8147 = vmatprep.subr.mxu0 0.0
    %8148 = vmatpush2.msra.mxu0 0.0
    %8149 = vmatprep.subr.mxu0 0.0
    %8150 = vmatpush2.msra.mxu0 0.0
    %8151 = vmatprep.subr.mxu0 0.0
    %8152 = vmatpush2.msra.mxu0 0.0
    %8153 = vmatprep.subr.mxu0 0.0
    %8154 = vmatpush2.msra.mxu0 0.0
    %8155 = vmatprep.subr.mxu0 0.0
    %8156 = vmatpush2.msra.mxu0 0.0
    %8157 = vmatprep.subr.mxu0 0.0
    %8158 = vmatpush2.msra.mxu0 0.0
    %8159 = vmatprep.subr.mxu0 0.0
    %8160 = vmatpush2.msra.mxu0 0.0
    %8161 = vmatprep.subr.mxu0 0.0
    %8162 = vmatpush2.msra.mxu0 0.0
    %8163 = vmatprep.subr.mxu0 0.0
    %8164 = vmatpush2.msra.mxu0 0.0
    %8165 = vmatprep.mubr.f32.mxu0 0.0
    %8166 = vmatmul.mubr.f32.gmra.mxu0 %v8077
    %v8167 = vpop.f32.mrf.mxu0
    %v8168 = vadd.f32 %v8099, %v8167
    %v8169 = vpop.f32.mrf.mxu0
    %8170 = vdwg.mxu0
    %vm8171 = vcmask 74752
    %8172 = vst.msk [vmem:[#allocation4] sm:$0x3] %vm8171, %v8168
    // Predicated region
    $region38: #{cnn_forward.1} parent=1 // pred_check
      _
    $region39: #{cnn_forward.1} parent=1 // pred_check_branch
      %8174 = sbr.rel (0) target = $region41
    $region40: #{cnn_forward.1} parent=1 // pred_region
      %s8176 = ssub.s32 32, 32
      %8177 = vsyncadd [#allocation5], %s8176
      %s8179 = sshll.u32 [#allocation4], 4
      %s8180 = int_to_ptr.vmem [resolvable:$true] %s8179
      %8182 = dma.vmem_to_hbm [thread:$0]  %s8180, 32, %s9, [#allocation5]
    $region41: #{cnn_forward.1} parent=1 // pred_fallthru
      _
    // Predicated region
    $region42: #{cnn_forward.1} parent=1 // pred_check
      _
    $region43: #{cnn_forward.1} parent=1 // pred_check_branch
      %8184 = sbr.rel (0) target = $region45
    $region44: #{cnn_forward.1} parent=1 // pred_region
      %8185 = dma.done [#allocation5], 32
    $region45: #{cnn_forward.1} parent=1 // pred_fallthru
      _
    %8186 = vsyncpa [#allocation5], 1

</llo_original>
